<compile_context>
chip_gen: v5e
topology: v5e:2x2
jax: 0.10.0
libtpu: 0.0.40
codegen_flags: <defaults>
</compile_context>

<pallas_src>
import functools

import jax
import jax.numpy as jnp
from jax import lax
from jax.experimental import pallas as pl
from jax.experimental.pallas import tpu as pltpu


def _layernorm(x, gamma, beta, eps=1e-5):
    # x: (N, C) fp32, gamma/beta: (1, C) fp32
    mean = jnp.mean(x, axis=-1, keepdims=True)
    var = jnp.mean((x - mean) ** 2, axis=-1, keepdims=True)
    return (x - mean) * lax.rsqrt(var + eps) * gamma + beta


def _cheby_basis_to(ref, x, degree, dtype):
    """Write T_0..T_degree(tanh(x)) into `ref` along lanes, degree-major.

    PyTorch computes cos(d * acos(tanh(x))), which equals the Chebyshev
    polynomial T_d(tanh(x)); here the stable recurrence is used in fp32 and
    each degree slab is stored (cast to the matmul dtype) at lane offset d*w,
    so a single MXU matmul against degree-major-flattened coefficients does the
    whole ChebyKAN contraction.  ref shape: (rows, (degree+1) * x.shape[-1]).
    """
    w = x.shape[-1]
    t = jnp.tanh(x)
    ref[:, 0:w] = jnp.ones(t.shape, dtype=dtype)
    if degree >= 1:
        ref[:, w:2 * w] = t.astype(dtype)
    t_prev, t_cur = jnp.ones_like(t), t
    for d in range(2, degree + 1):
        t_next = 2.0 * t * t_cur - t_prev
        ref[:, d * w:(d + 1) * w] = t_next.astype(dtype)
        t_prev, t_cur = t_cur, t_next


def block_kernel(x_ref, g1_ref, b1_ref, wqkv_ref, wp_ref, bp_ref,
                 g2_ref, b2_ref, c1_ref, c2_ref, out_ref,
                 basis1_ref, basis2_ref, *, degree, num_heads, n_real):
    hm = pl.program_id(1)                    # Hm-tile index ('arbitrary' axis)
    cdt = wqkv_ref.dtype                     # matmul compute dtype (bfloat16)
    Np, C = x_ref.shape                      # batch dim squeezed; Np = padded N
    H = num_heads
    hd = C // H
    Dp1 = degree + 1
    tHm = c1_ref.shape[1]

    # --- attention + residual-1 + LayerNorm2 + basis1: once per batch elem ---
    @pl.when(hm == 0)
    def _():
        x = x_ref[...]                                           # (Np, C) fp32
        h = _layernorm(x, g1_ref[...], b1_ref[...]).astype(cdt)

        # fused QKV projection (softmax scale pre-folded into the Q columns).
        qkv = jnp.dot(h, wqkv_ref[...],
                      preferred_element_type=jnp.float32).astype(cdt)  # (Np,3C)

        def split_heads(off):                # (Np, 3C) -> (H, Np, hd)
            return jnp.stack(
                [qkv[:, off + i * hd: off + (i + 1) * hd] for i in range(H)],
                axis=0)

        q = split_heads(0)
        k = split_heads(C)
        v = split_heads(2 * C)

        s = jnp.einsum('hnd,hmd->hnm', q, k,
                       preferred_element_type=jnp.float32)       # (H, Np, Np)
        if n_real < Np:                      # mask padded key columns
            key_ok = lax.broadcasted_iota(jnp.int32, (1, 1, Np), 2) < n_real
            s = jnp.where(key_ok, s, jnp.float32(-1e30))
        m = jnp.max(s, axis=-1, keepdims=True)
        e = jnp.exp(s - m)
        inv = pl.reciprocal(jnp.sum(e, axis=-1, keepdims=True), approx=True)
        p = (e * inv).astype(cdt)                                 # (H, Np, Np)

        o = jnp.einsum('hnm,hmd->hnd', p, v,
                       preferred_element_type=jnp.float32).astype(cdt)
        # head-major concat -> single lane-dense (Np, C) @ (C, C) projection
        o_nc = jnp.concatenate([o[i] for i in range(H)], axis=-1)
        attn = jnp.dot(o_nc, wp_ref[...],
                       preferred_element_type=jnp.float32) + bp_ref[...]

        x1 = x + attn                                             # residual 1
        out_ref[...] = x1

        h2 = _layernorm(x1, g2_ref[...], b2_ref[...])
        _cheby_basis_to(basis1_ref, h2, degree, cdt)              # (Np, Dp1*C)

    # --- ChebyKAN for the current Hm tile, accumulated into the output -------
    y1 = jnp.dot(basis1_ref[...], c1_ref[...],
                 preferred_element_type=jnp.float32)              # (Np, tHm)
    _cheby_basis_to(basis2_ref, y1, degree, cdt)                  # (Np, Dp1*tHm)
    c2_flat = c2_ref[...].reshape(Dp1 * tHm, C)                   # degree-major
    y2 = jnp.dot(basis2_ref[...], c2_flat,
                 preferred_element_type=jnp.float32)              # (Np, C)
    out_ref[...] += y2                                            # residual 2


def _pick_hm_tile(hm_dim):
    for t in (512, 256, 128):
        if hm_dim > t and hm_dim % t == 0:
            return t
    return hm_dim


def block_forward(x, params, *, num_heads, degree,
                  compute_dtype=jnp.bfloat16):
    B, N, C = x.shape
    hd = C // num_heads
    Dp1 = degree + 1
    Hm = params["c1"].shape[2]
    scale = hd ** (-0.5)

    # pad tokens to a multiple of 128 (lane dim of the score/softmax tensors)
    Np = ((N + 127) // 128) * 128
    x_p = jnp.pad(x, ((0, 0), (0, Np - N), (0, 0))) if Np != N else x

    tHm = _pick_hm_tile(Hm)
    n_hm = Hm // tHm

    # ---- wrapper-side weight preparation -------------------------------------
    col_scale = jnp.concatenate(
        [jnp.full((1, C), scale, jnp.float32),
         jnp.ones((1, 2 * C), jnp.float32)], axis=1)
    wqkv = (params["wqkv"] * col_scale).astype(compute_dtype)     # (C, 3C)
    wproj = params["wproj"].astype(compute_dtype)                 # (C, C)
    # layer-1 coeffs flattened degree-major: ((degree+1)*C, Hm), tiled over Hm
    c1_f = params["c1"].reshape(Dp1 * C, Hm).astype(compute_dtype)
    # layer-2 coeffs kept (Dp1, Hm, C) so an Hm tile is a contiguous block
    c2_3d = params["c2"].astype(compute_dtype)

    kernel = functools.partial(block_kernel, degree=degree,
                               num_heads=num_heads, n_real=N)

    def wspec(shape):            # constant-index weight block, single buffer
        return pl.BlockSpec(shape, lambda b, h, n=len(shape): (0,) * n,
                            pipeline_mode=pl.Buffered(1))

    # ---- generation-aware VMEM budget ----------------------------------------
    try:
        vmem_cap = int(pltpu.get_tpu_info().vmem_capacity_bytes)
    except Exception:
        vmem_cap = 64 << 20
    itm = jnp.dtype(compute_dtype).itemsize
    H = num_heads
    est = (
        (3 * C * C + C * C) * itm                      # wqkv + wproj, Buffered(1)
        + 6 * C * 4                                    # LN params + proj bias
        + (Dp1 * C * tHm + Dp1 * tHm * C) * itm * 2    # KAN coeff tiles, 2-buf
        + (Np * Dp1 * C + Np * Dp1 * tHm) * itm        # basis scratch
        + 2 * 2 * Np * C * 4                           # x / out blocks, 2-buf fp32
        + Np * 3 * C * (4 + itm)                       # qkv fp32 + bf16
        + H * Np * Np * (8 + itm)                      # s, e fp32 + p bf16
        + 4 * Np * C * 4 + Np * tHm * 4                # o/attn/x1/h2, y1
    )
    vmem_limit = int(min(vmem_cap - (2 << 20), max(2 * est, 32 << 20)))

    out = pl.pallas_call(
        kernel,
        out_shape=jax.ShapeDtypeStruct((B, Np, C), jnp.float32),
        grid_spec=pltpu.PrefetchScalarGridSpec(
            num_scalar_prefetch=0,
            grid=(B, n_hm),
            in_specs=[
                pl.BlockSpec((None, Np, C), lambda b, h: (b, 0, 0)),   # x
                wspec((1, C)),                                         # gamma1
                wspec((1, C)),                                         # beta1
                wspec((C, 3 * C)),                                     # Wqkv
                wspec((C, C)),                                         # Wproj
                wspec((1, C)),                                         # bproj
                wspec((1, C)),                                         # gamma2
                wspec((1, C)),                                         # beta2
                pl.BlockSpec((Dp1 * C, tHm), lambda b, h: (0, h)),     # c1 tile
                pl.BlockSpec((Dp1, tHm, C), lambda b, h: (0, h, 0)),   # c2 tile
            ],
            out_specs=pl.BlockSpec((None, Np, C), lambda b, h: (b, 0, 0)),
            scratch_shapes=[
                pltpu.VMEM((Np, Dp1 * C), compute_dtype),    # basis1 (full)
                pltpu.VMEM((Np, Dp1 * tHm), compute_dtype),  # basis2 (per tile)
            ],
        ),
        compiler_params=pltpu.CompilerParams(
            dimension_semantics=("parallel", "arbitrary"),
            vmem_limit_bytes=vmem_limit),
    )(x_p, params["g1"], params["b1"], wqkv, wproj, params["bproj"],
      params["g2"], params["b2"], c1_f, c2_3d)

    return out[:, :N, :] if Np != N else out


# ------------------------- pure-JAX fp32 reference ---------------------------
def block_reference(x, params, *, num_heads, degree):
    B, N, C = x.shape
    hd = C // num_heads
    scale = hd ** (-0.5)

    def ln(v, g, b):
        m = jnp.mean(v, axis=-1, keepdims=True)
        var = jnp.mean((v - m) ** 2, axis=-1, keepdims=True)
        return (v - m) / jnp.sqrt(var + 1e-5) * g + b

    h = ln(x, params["g1"], params["b1"])
    qkv = h @ params["wqkv"]                                    # (B, N, 3C)
    qkv = qkv.reshape(B, N, 3, num_heads, hd).transpose(2, 0, 3, 1, 4)
    q, k, v = qkv[0], qkv[1], qkv[2]
    a = jnp.einsum("bhnd,bhmd->bhnm", q, k) * scale
    a = jax.nn.softmax(a, axis=-1)
    o = jnp.einsum("bhnm,bhmd->bhnd", a, v).transpose(0, 2, 1, 3).reshape(B, N, C)
    o = o @ params["wproj"] + params["bproj"]
    x1 = x + o

    def cheby(v, coeffs):
        t = jnp.tanh(v)
        basis = jnp.cos(jnp.arccos(t)[..., None] * jnp.arange(degree + 1))
        return jnp.einsum("bnid,dio->bno", basis, coeffs)       # (D+1, I, O)

    h2 = ln(x1, params["g2"], params["b2"])
    y = cheby(cheby(h2, params["c1"]), params["c2"])
    return x1 + y


if __name__ == "__main__":
    B, N, C = 2, 8, 128          # N is padded to 128 inside the wrapper
    num_heads = 4
    mlp_ratio = 4.0
    degree = 3
    Hm = int(C * mlp_ratio)      # 512 -> two 256-wide Hm tiles (streamed path)

    key = jax.random.PRNGKey(0)
    ks = jax.random.split(key, 10)

    params = {
        "g1": 1.0 + 0.1 * jax.random.normal(ks[0], (1, C), jnp.float32),
        "b1": 0.1 * jax.random.normal(ks[1], (1, C), jnp.float32),
        "wqkv": 0.05 * jax.random.normal(ks[2], (C, 3 * C), jnp.float32),
        "wproj": 0.05 * jax.random.normal(ks[3], (C, C), jnp.float32),
        "bproj": 0.05 * jax.random.normal(ks[4], (1, C), jnp.float32),
        "g2": 1.0 + 0.1 * jax.random.normal(ks[5], (1, C), jnp.float32),
        "b2": 0.1 * jax.random.normal(ks[6], (1, C), jnp.float32),
        # ChebyKAN init: std = 1 / (input_dim * (degree + 1))
        "c1": (1.0 / (C * (degree + 1))) *
              jax.random.normal(ks[7], (degree + 1, C, Hm), jnp.float32),
        "c2": (1.0 / (Hm * (degree + 1))) *
              jax.random.normal(ks[8], (degree + 1, Hm, C), jnp.float32),
    }

    x = jax.random.normal(ks[9], (B, N, C), jnp.float32)

    out = block_forward(x, params, num_heads=num_heads, degree=degree)
    out = jax.block_until_ready(out)

    ref = block_reference(x, params, num_heads=num_heads, degree=degree)
    assert out.shape == (B, N, C)
    max_err = float(jnp.max(jnp.abs(out - ref)))
    # bf16 matmul operands with fp32 accumulation -> loose-but-meaningful tol
    assert jnp.allclose(out, ref, rtol=2e-2, atol=2e-2), max_err

    print("KERNEL_OK")
</pallas_src>

<mosaic_0001>
module attributes {stable_mosaic.version = 11 : i64} {
  func.func @block_kernel(%arg0: i32, %arg1: i32, %arg2: memref<1x128x128xf32, #tpu.memory_space<vmem>>, %arg3: memref<1x128xf32, #tpu.memory_space<vmem>>, %arg4: memref<1x128xf32, #tpu.memory_space<vmem>>, %arg5: memref<128x384xbf16, #tpu.memory_space<vmem>>, %arg6: memref<128x128xbf16, #tpu.memory_space<vmem>>, %arg7: memref<1x128xf32, #tpu.memory_space<vmem>>, %arg8: memref<1x128xf32, #tpu.memory_space<vmem>>, %arg9: memref<1x128xf32, #tpu.memory_space<vmem>>, %arg10: memref<512x256xbf16, #tpu.memory_space<vmem>>, %arg11: memref<4x256x128xbf16, #tpu.memory_space<vmem>>, %arg12: memref<1x128x128xf32, #tpu.memory_space<vmem>>, %arg13: memref<128x512xbf16, #tpu.memory_space<vmem>>, %arg14: memref<128x1024xbf16, #tpu.memory_space<vmem>>) attributes {dimension_semantics = [#tpu.dimension_semantics<parallel>, #tpu.dimension_semantics<arbitrary>], iteration_bounds = array<i64: 2, 2>, scalar_prefetch = 0 : i64, scratch_operands = 2 : i64, tpu.core_type = #tpu.core_type<tc>, window_params = [{transform_indices = @transform_0, window_bounds = array<i64: 1, 128, 128>}, {pipeline_mode = #tpu.pipeline_mode<synchronous>, transform_indices = @transform_1, window_bounds = array<i64: 1, 128>}, {pipeline_mode = #tpu.pipeline_mode<synchronous>, transform_indices = @transform_2, window_bounds = array<i64: 1, 128>}, {pipeline_mode = #tpu.pipeline_mode<synchronous>, transform_indices = @transform_3, window_bounds = array<i64: 128, 384>}, {pipeline_mode = #tpu.pipeline_mode<synchronous>, transform_indices = @transform_4, window_bounds = array<i64: 128, 128>}, {pipeline_mode = #tpu.pipeline_mode<synchronous>, transform_indices = @transform_5, window_bounds = array<i64: 1, 128>}, {pipeline_mode = #tpu.pipeline_mode<synchronous>, transform_indices = @transform_6, window_bounds = array<i64: 1, 128>}, {pipeline_mode = #tpu.pipeline_mode<synchronous>, transform_indices = @transform_7, window_bounds = array<i64: 1, 128>}, {transform_indices = @transform_8, window_bounds = array<i64: 512, 256>}, {transform_indices = @transform_9, window_bounds = array<i64: 4, 256, 128>}, {transform_indices = @transform_10, window_bounds = array<i64: 1, 128, 128>}]} {
    %c0_i32 = arith.constant 0 : i32
    %0 = arith.cmpi eq, %arg1, %c0_i32 : i32
    %1 = arith.extui %0 : i1 to i32
    %c0_i32_0 = arith.constant 0 : i32
    %2 = arith.cmpi ne, %1, %c0_i32_0 : i32
    scf.if %2 {
      %c0_25 = arith.constant 0 : index
      %c0_26 = arith.constant 0 : index
      %c0_27 = arith.constant 0 : index
      %34 = vector.load %arg2[%c0_25, %c0_26, %c0_27] : memref<1x128x128xf32, #tpu.memory_space<vmem>>, vector<1x128x128xf32>
      %35 = vector.shape_cast %34 : vector<1x128x128xf32> to vector<128x128xf32>
      %c0_28 = arith.constant 0 : index
      %c0_29 = arith.constant 0 : index
      %36 = vector.load %arg3[%c0_28, %c0_29] : memref<1x128xf32, #tpu.memory_space<vmem>>, vector<1x128xf32>
      %c0_30 = arith.constant 0 : index
      %c0_31 = arith.constant 0 : index
      %37 = vector.load %arg4[%c0_30, %c0_31] : memref<1x128xf32, #tpu.memory_space<vmem>>, vector<1x128xf32>
      %cst_32 = arith.constant dense<0.000000e+00> : vector<128xf32>
      %38 = vector.multi_reduction <add>, %35, %cst_32 [1] : vector<128x128xf32> to vector<128xf32>
      %39 = vector.shape_cast %38 : vector<128xf32> to vector<128x1xf32>
      %cst_33 = arith.constant 1.280000e+02 : f32
      %40 = vector.broadcast %cst_33 : f32 to vector<128x1xf32>
      %41 = arith.divf %39, %40 : vector<128x1xf32>
      %42 = vector.broadcast %41 : vector<128x1xf32> to vector<128x128xf32>
      %43 = arith.subf %35, %42 : vector<128x128xf32>
      %44 = arith.mulf %43, %43 : vector<128x128xf32>
      %cst_34 = arith.constant dense<0.000000e+00> : vector<128xf32>
      %45 = vector.multi_reduction <add>, %44, %cst_34 [1] : vector<128x128xf32> to vector<128xf32>
      %46 = vector.shape_cast %45 : vector<128xf32> to vector<128x1xf32>
      %cst_35 = arith.constant 1.280000e+02 : f32
      %47 = vector.broadcast %cst_35 : f32 to vector<128x1xf32>
      %48 = arith.divf %46, %47 : vector<128x1xf32>
      %49 = vector.broadcast %41 : vector<128x1xf32> to vector<128x128xf32>
      %50 = arith.subf %35, %49 : vector<128x128xf32>
      %cst_36 = arith.constant 9.99999974E-6 : f32
      %51 = vector.broadcast %cst_36 : f32 to vector<128x1xf32>
      %52 = arith.addf %48, %51 : vector<128x1xf32>
      %53 = math.rsqrt %52 : vector<128x1xf32>
      %54 = vector.broadcast %53 : vector<128x1xf32> to vector<128x128xf32>
      %55 = arith.mulf %50, %54 : vector<128x128xf32>
      %56 = vector.broadcast %36 : vector<1x128xf32> to vector<128x128xf32>
      %57 = arith.mulf %55, %56 : vector<128x128xf32>
      %58 = vector.broadcast %37 : vector<1x128xf32> to vector<128x128xf32>
      %59 = arith.addf %57, %58 : vector<128x128xf32>
      %60 = arith.truncf %59 : vector<128x128xf32> to vector<128x128xbf16>
      %c0_37 = arith.constant 0 : index
      %c0_38 = arith.constant 0 : index
      %61 = vector.load %arg5[%c0_37, %c0_38] : memref<128x384xbf16, #tpu.memory_space<vmem>>, vector<128x384xbf16>
      %cst_39 = arith.constant dense<0.000000e+00> : vector<128x384xf32>
      %62 = tpu.matmul %60, %61, %cst_39 {dimension_numbers = #tpu.dot_dimension_numbers<[1], [0], [0], [1], [0, 0, 1, 1], [], []>} : vector<128x128xbf16>, vector<128x384xbf16>, vector<128x384xf32> -> vector<128x384xf32>
      %63 = arith.truncf %62 : vector<128x384xf32> to vector<128x384xbf16>
      %64 = vector.extract_strided_slice %63 {offsets = [0, 0], sizes = [128, 32], strides = [1, 1]} : vector<128x384xbf16> to vector<128x32xbf16>
      %65 = vector.extract_strided_slice %63 {offsets = [0, 32], sizes = [128, 32], strides = [1, 1]} : vector<128x384xbf16> to vector<128x32xbf16>
      %66 = vector.extract_strided_slice %63 {offsets = [0, 64], sizes = [128, 32], strides = [1, 1]} : vector<128x384xbf16> to vector<128x32xbf16>
      %67 = vector.extract_strided_slice %63 {offsets = [0, 96], sizes = [128, 32], strides = [1, 1]} : vector<128x384xbf16> to vector<128x32xbf16>
      %68 = vector.shape_cast %64 : vector<128x32xbf16> to vector<1x128x32xbf16>
      %69 = vector.shape_cast %65 : vector<128x32xbf16> to vector<1x128x32xbf16>
      %70 = vector.shape_cast %66 : vector<128x32xbf16> to vector<1x128x32xbf16>
      %71 = vector.shape_cast %67 : vector<128x32xbf16> to vector<1x128x32xbf16>
      %72 = tpu.concatenate %68, %69, %70, %71 in 0 : vector<1x128x32xbf16>, vector<1x128x32xbf16>, vector<1x128x32xbf16>, vector<1x128x32xbf16> -> vector<4x128x32xbf16>
      %73 = vector.extract_strided_slice %63 {offsets = [0, 128], sizes = [128, 32], strides = [1, 1]} : vector<128x384xbf16> to vector<128x32xbf16>
      %74 = vector.extract_strided_slice %63 {offsets = [0, 160], sizes = [128, 32], strides = [1, 1]} : vector<128x384xbf16> to vector<128x32xbf16>
      %75 = vector.extract_strided_slice %63 {offsets = [0, 192], sizes = [128, 32], strides = [1, 1]} : vector<128x384xbf16> to vector<128x32xbf16>
      %76 = vector.extract_strided_slice %63 {offsets = [0, 224], sizes = [128, 32], strides = [1, 1]} : vector<128x384xbf16> to vector<128x32xbf16>
      %77 = vector.shape_cast %73 : vector<128x32xbf16> to vector<1x128x32xbf16>
      %78 = vector.shape_cast %74 : vector<128x32xbf16> to vector<1x128x32xbf16>
      %79 = vector.shape_cast %75 : vector<128x32xbf16> to vector<1x128x32xbf16>
      %80 = vector.shape_cast %76 : vector<128x32xbf16> to vector<1x128x32xbf16>
      %81 = tpu.concatenate %77, %78, %79, %80 in 0 : vector<1x128x32xbf16>, vector<1x128x32xbf16>, vector<1x128x32xbf16>, vector<1x128x32xbf16> -> vector<4x128x32xbf16>
      %82 = vector.extract_strided_slice %63 {offsets = [0, 256], sizes = [128, 32], strides = [1, 1]} : vector<128x384xbf16> to vector<128x32xbf16>
      %83 = vector.extract_strided_slice %63 {offsets = [0, 288], sizes = [128, 32], strides = [1, 1]} : vector<128x384xbf16> to vector<128x32xbf16>
      %84 = vector.extract_strided_slice %63 {offsets = [0, 320], sizes = [128, 32], strides = [1, 1]} : vector<128x384xbf16> to vector<128x32xbf16>
      %85 = vector.extract_strided_slice %63 {offsets = [0, 352], sizes = [128, 32], strides = [1, 1]} : vector<128x384xbf16> to vector<128x32xbf16>
      %86 = vector.shape_cast %82 : vector<128x32xbf16> to vector<1x128x32xbf16>
      %87 = vector.shape_cast %83 : vector<128x32xbf16> to vector<1x128x32xbf16>
      %88 = vector.shape_cast %84 : vector<128x32xbf16> to vector<1x128x32xbf16>
      %89 = vector.shape_cast %85 : vector<128x32xbf16> to vector<1x128x32xbf16>
      %90 = tpu.concatenate %86, %87, %88, %89 in 0 : vector<1x128x32xbf16>, vector<1x128x32xbf16>, vector<1x128x32xbf16>, vector<1x128x32xbf16> -> vector<4x128x32xbf16>
      "tpu.trace_start"() <{level = 10 : i32, message = "hnd,hmd->hnm"}> : () -> ()
      %cst_40 = arith.constant dense<0.000000e+00> : vector<4x128x128xf32>
      %91 = tpu.matmul %72, %81, %cst_40 {dimension_numbers = #tpu.dot_dimension_numbers<[2], [2], [1], [1], [0, 0, 0, 1, 1, 1], [0], [0]>} : vector<4x128x32xbf16>, vector<4x128x32xbf16>, vector<4x128x128xf32> -> vector<4x128x128xf32>
      "tpu.trace_stop"() : () -> ()
      %92 = tpu.iota {dimensions = array<i32: 2>} : vector<1x1x128xi32>
      %c8_i32 = arith.constant 8 : i32
      %93 = vector.broadcast %c8_i32 : i32 to vector<1x1x128xi32>
      %94 = arith.cmpi slt, %92, %93 : vector<1x1x128xi32>
      %cst_41 = arith.constant -1.000000e+30 : f32
      %95 = vector.shape_cast %94 : vector<1x1x128xi1> to vector<1x1x128xi1>
      %96 = vector.broadcast %95 : vector<1x1x128xi1> to vector<4x128x128xi1>
      %97 = vector.broadcast %cst_41 : f32 to vector<4x128x128xf32>
      %98 = arith.select %96, %91, %97 : vector<4x128x128xi1>, vector<4x128x128xf32>
      %cst_42 = arith.constant dense<0xFF800000> : vector<4x128xf32>
      %99 = vector.multi_reduction <maximumf>, %98, %cst_42 [2] : vector<4x128x128xf32> to vector<4x128xf32>
      %100 = vector.shape_cast %99 : vector<4x128xf32> to vector<4x128x1xf32>
      %101 = vector.broadcast %100 : vector<4x128x1xf32> to vector<4x128x128xf32>
      %102 = arith.subf %98, %101 : vector<4x128x128xf32>
      %103 = math.exp %102 : vector<4x128x128xf32>
      %cst_43 = arith.constant dense<0.000000e+00> : vector<4x128xf32>
      %104 = vector.multi_reduction <add>, %103, %cst_43 [2] : vector<4x128x128xf32> to vector<4x128xf32>
      %105 = vector.shape_cast %104 : vector<4x128xf32> to vector<4x128x1xf32>
      %106 = tpu.reciprocal %105 {approx = true} : vector<4x128x1xf32> -> vector<4x128x1xf32>
      %107 = vector.broadcast %106 : vector<4x128x1xf32> to vector<4x128x128xf32>
      %108 = arith.mulf %103, %107 : vector<4x128x128xf32>
      %109 = arith.truncf %108 : vector<4x128x128xf32> to vector<4x128x128xbf16>
      "tpu.trace_start"() <{level = 10 : i32, message = "hnm,hmd->hnd"}> : () -> ()
      %cst_44 = arith.constant dense<0.000000e+00> : vector<4x128x32xf32>
      %110 = tpu.matmul %109, %90, %cst_44 {dimension_numbers = #tpu.dot_dimension_numbers<[2], [1], [1], [2], [0, 0, 0, 1, 1, 2], [0], [0]>} : vector<4x128x128xbf16>, vector<4x128x32xbf16>, vector<4x128x32xf32> -> vector<4x128x32xf32>
      "tpu.trace_stop"() : () -> ()
      %111 = arith.truncf %110 : vector<4x128x32xf32> to vector<4x128x32xbf16>
      %112 = vector.extract_strided_slice %111 {offsets = [0, 0, 0], sizes = [1, 128, 32], strides = [1, 1, 1]} : vector<4x128x32xbf16> to vector<1x128x32xbf16>
      %113 = vector.shape_cast %112 : vector<1x128x32xbf16> to vector<128x32xbf16>
      %114 = vector.extract_strided_slice %111 {offsets = [1, 0, 0], sizes = [1, 128, 32], strides = [1, 1, 1]} : vector<4x128x32xbf16> to vector<1x128x32xbf16>
      %115 = vector.shape_cast %114 : vector<1x128x32xbf16> to vector<128x32xbf16>
      %116 = vector.extract_strided_slice %111 {offsets = [2, 0, 0], sizes = [1, 128, 32], strides = [1, 1, 1]} : vector<4x128x32xbf16> to vector<1x128x32xbf16>
      %117 = vector.shape_cast %116 : vector<1x128x32xbf16> to vector<128x32xbf16>
      %118 = vector.extract_strided_slice %111 {offsets = [3, 0, 0], sizes = [1, 128, 32], strides = [1, 1, 1]} : vector<4x128x32xbf16> to vector<1x128x32xbf16>
      %119 = vector.shape_cast %118 : vector<1x128x32xbf16> to vector<128x32xbf16>
      %120 = tpu.concatenate %113, %115, %117, %119 in 1 : vector<128x32xbf16>, vector<128x32xbf16>, vector<128x32xbf16>, vector<128x32xbf16> -> vector<128x128xbf16>
      %c0_45 = arith.constant 0 : index
      %c0_46 = arith.constant 0 : index
      %121 = vector.load %arg6[%c0_45, %c0_46] : memref<128x128xbf16, #tpu.memory_space<vmem>>, vector<128x128xbf16>
      %cst_47 = arith.constant dense<0.000000e+00> : vector<128x128xf32>
      %122 = tpu.matmul %120, %121, %cst_47 {dimension_numbers = #tpu.dot_dimension_numbers<[1], [0], [0], [1], [0, 0, 1, 1], [], []>} : vector<128x128xbf16>, vector<128x128xbf16>, vector<128x128xf32> -> vector<128x128xf32>
      %c0_48 = arith.constant 0 : index
      %c0_49 = arith.constant 0 : index
      %123 = vector.load %arg7[%c0_48, %c0_49] : memref<1x128xf32, #tpu.memory_space<vmem>>, vector<1x128xf32>
      %124 = vector.broadcast %123 : vector<1x128xf32> to vector<128x128xf32>
      %125 = arith.addf %122, %124 : vector<128x128xf32>
      %126 = arith.addf %35, %125 : vector<128x128xf32>
      %c0_50 = arith.constant 0 : index
      %c0_51 = arith.constant 0 : index
      %c0_52 = arith.constant 0 : index
      %127 = vector.load %arg12[%c0_50, %c0_51, %c0_52] : memref<1x128x128xf32, #tpu.memory_space<vmem>>, vector<1x128x128xf32>
      %128 = vector.shape_cast %127 : vector<1x128x128xf32> to vector<128x128xf32>
      %129 = vector.shape_cast %126 : vector<128x128xf32> to vector<1x128x128xf32>
      tpu.vector_store %arg12[%c0_50, %c0_51, %c0_52], %129 {strides = array<i32>} : memref<1x128x128xf32, #tpu.memory_space<vmem>>, vector<1x128x128xf32>,
      %c0_53 = arith.constant 0 : index
      %c0_54 = arith.constant 0 : index
      %130 = vector.load %arg8[%c0_53, %c0_54] : memref<1x128xf32, #tpu.memory_space<vmem>>, vector<1x128xf32>
      %c0_55 = arith.constant 0 : index
      %c0_56 = arith.constant 0 : index
      %131 = vector.load %arg9[%c0_55, %c0_56] : memref<1x128xf32, #tpu.memory_space<vmem>>, vector<1x128xf32>
      %cst_57 = arith.constant dense<0.000000e+00> : vector<128xf32>
      %132 = vector.multi_reduction <add>, %126, %cst_57 [1] : vector<128x128xf32> to vector<128xf32>
      %133 = vector.shape_cast %132 : vector<128xf32> to vector<128x1xf32>
      %cst_58 = arith.constant 1.280000e+02 : f32
      %134 = vector.broadcast %cst_58 : f32 to vector<128x1xf32>
      %135 = arith.divf %133, %134 : vector<128x1xf32>
      %136 = vector.broadcast %135 : vector<128x1xf32> to vector<128x128xf32>
      %137 = arith.subf %126, %136 : vector<128x128xf32>
      %138 = arith.mulf %137, %137 : vector<128x128xf32>
      %cst_59 = arith.constant dense<0.000000e+00> : vector<128xf32>
      %139 = vector.multi_reduction <add>, %138, %cst_59 [1] : vector<128x128xf32> to vector<128xf32>
      %140 = vector.shape_cast %139 : vector<128xf32> to vector<128x1xf32>
      %cst_60 = arith.constant 1.280000e+02 : f32
      %141 = vector.broadcast %cst_60 : f32 to vector<128x1xf32>
      %142 = arith.divf %140, %141 : vector<128x1xf32>
      %143 = vector.broadcast %135 : vector<128x1xf32> to vector<128x128xf32>
      %144 = arith.subf %126, %143 : vector<128x128xf32>
      %cst_61 = arith.constant 9.99999974E-6 : f32
      %145 = vector.broadcast %cst_61 : f32 to vector<128x1xf32>
      %146 = arith.addf %142, %145 : vector<128x1xf32>
      %147 = math.rsqrt %146 : vector<128x1xf32>
      %148 = vector.broadcast %147 : vector<128x1xf32> to vector<128x128xf32>
      %149 = arith.mulf %144, %148 : vector<128x128xf32>
      %150 = vector.broadcast %130 : vector<1x128xf32> to vector<128x128xf32>
      %151 = arith.mulf %149, %150 : vector<128x128xf32>
      %152 = vector.broadcast %131 : vector<1x128xf32> to vector<128x128xf32>
      %153 = arith.addf %151, %152 : vector<128x128xf32>
      %154 = math.tanh %153 : vector<128x128xf32>
      %cst_62 = arith.constant 1.000000e+00 : bf16
      %155 = vector.broadcast %cst_62 : bf16 to vector<128x128xbf16>
      %c0_63 = arith.constant 0 : index
      %c0_64 = arith.constant 0 : index
      %156 = vector.load %arg13[%c0_63, %c0_64] : memref<128x512xbf16, #tpu.memory_space<vmem>>, vector<128x128xbf16>
      tpu.vector_store %arg13[%c0_63, %c0_64], %155 {strides = array<i32>} : memref<128x512xbf16, #tpu.memory_space<vmem>>, vector<128x128xbf16>,
      %157 = arith.truncf %154 : vector<128x128xf32> to vector<128x128xbf16>
      %c0_65 = arith.constant 0 : index
      %c128 = arith.constant 128 : index
      %158 = vector.load %arg13[%c0_65, %c128] : memref<128x512xbf16, #tpu.memory_space<vmem>>, vector<128x128xbf16>
      tpu.vector_store %arg13[%c0_65, %c128], %157 {strides = array<i32>} : memref<128x512xbf16, #tpu.memory_space<vmem>>, vector<128x128xbf16>,
      %cst_66 = arith.constant 1.000000e+00 : f32
      %159 = vector.broadcast %cst_66 : f32 to vector<128x128xf32>
      %cst_67 = arith.constant 2.000000e+00 : f32
      %160 = vector.broadcast %cst_67 : f32 to vector<128x128xf32>
      %161 = arith.mulf %160, %154 : vector<128x128xf32>
      %162 = arith.mulf %161, %154 : vector<128x128xf32>
      %163 = arith.subf %162, %159 : vector<128x128xf32>
      %164 = arith.truncf %163 : vector<128x128xf32> to vector<128x128xbf16>
      %c0_68 = arith.constant 0 : index
      %c256_69 = arith.constant 256 : index
      %165 = vector.load %arg13[%c0_68, %c256_69] : memref<128x512xbf16, #tpu.memory_space<vmem>>, vector<128x128xbf16>
      tpu.vector_store %arg13[%c0_68, %c256_69], %164 {strides = array<i32>} : memref<128x512xbf16, #tpu.memory_space<vmem>>, vector<128x128xbf16>,
      %cst_70 = arith.constant 2.000000e+00 : f32
      %166 = vector.broadcast %cst_70 : f32 to vector<128x128xf32>
      %167 = arith.mulf %166, %154 : vector<128x128xf32>
      %168 = arith.mulf %167, %163 : vector<128x128xf32>
      %169 = arith.subf %168, %154 : vector<128x128xf32>
      %170 = arith.truncf %169 : vector<128x128xf32> to vector<128x128xbf16>
      %c0_71 = arith.constant 0 : index
      %c384 = arith.constant 384 : index
      %171 = vector.load %arg13[%c0_71, %c384] : memref<128x512xbf16, #tpu.memory_space<vmem>>, vector<128x128xbf16>
      tpu.vector_store %arg13[%c0_71, %c384], %170 {strides = array<i32>} : memref<128x512xbf16, #tpu.memory_space<vmem>>, vector<128x128xbf16>,
    } else {
    }
    %c0 = arith.constant 0 : index
    %c0_1 = arith.constant 0 : index
    %3 = vector.load %arg13[%c0, %c0_1] : memref<128x512xbf16, #tpu.memory_space<vmem>>, vector<128x512xbf16>
    %c0_2 = arith.constant 0 : index
    %c0_3 = arith.constant 0 : index
    %4 = vector.load %arg10[%c0_2, %c0_3] : memref<512x256xbf16, #tpu.memory_space<vmem>>, vector<512x256xbf16>
    %cst = arith.constant dense<0.000000e+00> : vector<128x256xf32>
    %5 = tpu.matmul %3, %4, %cst {dimension_numbers = #tpu.dot_dimension_numbers<[1], [0], [0], [1], [0, 0, 1, 1], [], []>} : vector<128x512xbf16>, vector<512x256xbf16>, vector<128x256xf32> -> vector<128x256xf32>
    %6 = math.tanh %5 : vector<128x256xf32>
    %cst_4 = arith.constant 1.000000e+00 : bf16
    %7 = vector.broadcast %cst_4 : bf16 to vector<128x256xbf16>
    %c0_5 = arith.constant 0 : index
    %c0_6 = arith.constant 0 : index
    %8 = vector.load %arg14[%c0_5, %c0_6] : memref<128x1024xbf16, #tpu.memory_space<vmem>>, vector<128x256xbf16>
    tpu.vector_store %arg14[%c0_5, %c0_6], %7 {strides = array<i32>} : memref<128x1024xbf16, #tpu.memory_space<vmem>>, vector<128x256xbf16>,
    %9 = arith.truncf %6 : vector<128x256xf32> to vector<128x256xbf16>
    %c0_7 = arith.constant 0 : index
    %c256 = arith.constant 256 : index
    %10 = vector.load %arg14[%c0_7, %c256] : memref<128x1024xbf16, #tpu.memory_space<vmem>>, vector<128x256xbf16>
    tpu.vector_store %arg14[%c0_7, %c256], %9 {strides = array<i32>} : memref<128x1024xbf16, #tpu.memory_space<vmem>>, vector<128x256xbf16>,
    %cst_8 = arith.constant 1.000000e+00 : f32
    %11 = vector.broadcast %cst_8 : f32 to vector<128x256xf32>
    %cst_9 = arith.constant 2.000000e+00 : f32
    %12 = vector.broadcast %cst_9 : f32 to vector<128x256xf32>
    %13 = arith.mulf %12, %6 : vector<128x256xf32>
    %14 = arith.mulf %13, %6 : vector<128x256xf32>
    %15 = arith.subf %14, %11 : vector<128x256xf32>
    %16 = arith.truncf %15 : vector<128x256xf32> to vector<128x256xbf16>
    %c0_10 = arith.constant 0 : index
    %c512 = arith.constant 512 : index
    %17 = vector.load %arg14[%c0_10, %c512] : memref<128x1024xbf16, #tpu.memory_space<vmem>>, vector<128x256xbf16>
    tpu.vector_store %arg14[%c0_10, %c512], %16 {strides = array<i32>} : memref<128x1024xbf16, #tpu.memory_space<vmem>>, vector<128x256xbf16>,
    %cst_11 = arith.constant 2.000000e+00 : f32
    %18 = vector.broadcast %cst_11 : f32 to vector<128x256xf32>
    %19 = arith.mulf %18, %6 : vector<128x256xf32>
    %20 = arith.mulf %19, %15 : vector<128x256xf32>
    %21 = arith.subf %20, %6 : vector<128x256xf32>
    %22 = arith.truncf %21 : vector<128x256xf32> to vector<128x256xbf16>
    %c0_12 = arith.constant 0 : index
    %c768 = arith.constant 768 : index
    %23 = vector.load %arg14[%c0_12, %c768] : memref<128x1024xbf16, #tpu.memory_space<vmem>>, vector<128x256xbf16>
    tpu.vector_store %arg14[%c0_12, %c768], %22 {strides = array<i32>} : memref<128x1024xbf16, #tpu.memory_space<vmem>>, vector<128x256xbf16>,
    %c0_13 = arith.constant 0 : index
    %c0_14 = arith.constant 0 : index
    %c0_15 = arith.constant 0 : index
    %24 = vector.load %arg11[%c0_13, %c0_14, %c0_15] : memref<4x256x128xbf16, #tpu.memory_space<vmem>>, vector<4x256x128xbf16>
    %25 = vector.shape_cast %24 : vector<4x256x128xbf16> to vector<1024x128xbf16>
    %c0_16 = arith.constant 0 : index
    %c0_17 = arith.constant 0 : index
    %26 = vector.load %arg14[%c0_16, %c0_17] : memref<128x1024xbf16, #tpu.memory_space<vmem>>, vector<128x1024xbf16>
    %cst_18 = arith.constant dense<0.000000e+00> : vector<128x128xf32>
    %27 = tpu.matmul %26, %25, %cst_18 {dimension_numbers = #tpu.dot_dimension_numbers<[1], [0], [0], [1], [0, 0, 1, 1], [], []>} : vector<128x1024xbf16>, vector<1024x128xbf16>, vector<128x128xf32> -> vector<128x128xf32>
    %c0_19 = arith.constant 0 : index
    %c0_20 = arith.constant 0 : index
    %c0_21 = arith.constant 0 : index
    %28 = vector.load %arg12[%c0_19, %c0_20, %c0_21] : memref<1x128x128xf32, #tpu.memory_space<vmem>>, vector<1x128x128xf32>
    %29 = vector.shape_cast %28 : vector<1x128x128xf32> to vector<128x128xf32>
    %30 = arith.addf %29, %27 : vector<128x128xf32>
    %c0_22 = arith.constant 0 : index
    %c0_23 = arith.constant 0 : index
    %c0_24 = arith.constant 0 : index
    %31 = vector.load %arg12[%c0_22, %c0_23, %c0_24] : memref<1x128x128xf32, #tpu.memory_space<vmem>>, vector<1x128x128xf32>
    %32 = vector.shape_cast %31 : vector<1x128x128xf32> to vector<128x128xf32>
    %33 = vector.shape_cast %30 : vector<128x128xf32> to vector<1x128x128xf32>
    tpu.vector_store %arg12[%c0_22, %c0_23, %c0_24], %33 {strides = array<i32>} : memref<1x128x128xf32, #tpu.memory_space<vmem>>, vector<1x128x128xf32>,
    return
  }
  func.func @transform_0(%arg0: i32, %arg1: i32) -> (i32, i32, i32) {
    %c0_i32 = arith.constant 0 : i32
    %c0_i32_0 = arith.constant 0 : i32
    %c0_i32_1 = arith.constant 0 : i32
    return %arg0, %c0_i32, %c0_i32_0 : i32, i32, i32
  }
  func.func @transform_1(%arg0: i32, %arg1: i32) -> (i32, i32) {
    %c0_i32 = arith.constant 0 : i32
    %c0_i32_0 = arith.constant 0 : i32
    %c0_i32_1 = arith.constant 0 : i32
    return %c0_i32, %c0_i32_0 : i32, i32
  }
  func.func @transform_2(%arg0: i32, %arg1: i32) -> (i32, i32) {
    %c0_i32 = arith.constant 0 : i32
    %c0_i32_0 = arith.constant 0 : i32
    %c0_i32_1 = arith.constant 0 : i32
    return %c0_i32, %c0_i32_0 : i32, i32
  }
  func.func @transform_3(%arg0: i32, %arg1: i32) -> (i32, i32) {
    %c0_i32 = arith.constant 0 : i32
    %c0_i32_0 = arith.constant 0 : i32
    %c0_i32_1 = arith.constant 0 : i32
    return %c0_i32, %c0_i32_0 : i32, i32
  }
  func.func @transform_4(%arg0: i32, %arg1: i32) -> (i32, i32) {
    %c0_i32 = arith.constant 0 : i32
    %c0_i32_0 = arith.constant 0 : i32
    %c0_i32_1 = arith.constant 0 : i32
    return %c0_i32, %c0_i32_0 : i32, i32
  }
  func.func @transform_5(%arg0: i32, %arg1: i32) -> (i32, i32) {
    %c0_i32 = arith.constant 0 : i32
    %c0_i32_0 = arith.constant 0 : i32
    %c0_i32_1 = arith.constant 0 : i32
    return %c0_i32, %c0_i32_0 : i32, i32
  }
  func.func @transform_6(%arg0: i32, %arg1: i32) -> (i32, i32) {
    %c0_i32 = arith.constant 0 : i32
    %c0_i32_0 = arith.constant 0 : i32
    %c0_i32_1 = arith.constant 0 : i32
    return %c0_i32, %c0_i32_0 : i32, i32
  }
  func.func @transform_7(%arg0: i32, %arg1: i32) -> (i32, i32) {
    %c0_i32 = arith.constant 0 : i32
    %c0_i32_0 = arith.constant 0 : i32
    %c0_i32_1 = arith.constant 0 : i32
    return %c0_i32, %c0_i32_0 : i32, i32
  }
  func.func @transform_8(%arg0: i32, %arg1: i32) -> (i32, i32) {
    %c0_i32 = arith.constant 0 : i32
    %c0_i32_0 = arith.constant 0 : i32
    return %c0_i32, %arg1 : i32, i32
  }
  func.func @transform_9(%arg0: i32, %arg1: i32) -> (i32, i32, i32) {
    %c0_i32 = arith.constant 0 : i32
    %c0_i32_0 = arith.constant 0 : i32
    %c0_i32_1 = arith.constant 0 : i32
    return %c0_i32, %arg1, %c0_i32_0 : i32, i32, i32
  }
  func.func @transform_10(%arg0: i32, %arg1: i32) -> (i32, i32, i32) {
    %c0_i32 = arith.constant 0 : i32
    %c0_i32_0 = arith.constant 0 : i32
    %c0_i32_1 = arith.constant 0 : i32
    return %arg0, %c0_i32, %c0_i32_0 : i32, i32, i32
  }
}

</mosaic_0001>

<llo_original>
// kernel: tpu_custom_call.1
$region0: #{tpu_custom_call.1}
  #allocation0 [shape = 'u32[]', space=smem, size = 0x4, offset = 0x4, fixed_abs, tag = 'smem constant byte address 0x4 - core index']
  #allocation1 [shape = 'u32[72,128]{1,0:T(1,128)}', space=vmem, size = 0x9000, scoped, tag = 'internal scratch']
  #allocation2 [shape = 'bf16[128,512]{1,0:T(8,128)(2,1)}', space=vmem, size = 0x20000, scoped, tag = 'scratch operand']
  #allocation3 [shape = 'bf16[128,1024]{1,0:T(8,128)(2,1)}', space=vmem, size = 0x40000, scoped, tag = 'scratch operand']
  #allocation15 [shape = 's32[]', space=sflag, size = 0x4, offset = 0, fixed_abs, tag = 'sflag constant byte address 0x0 - dummy sync flag']
  %s0 = inlined_call_operand.hbm [shape: f32[2,128,128], index: 0, kind: input, shape index: {}]
  %s1 = inlined_call_operand.hbm [shape: f32[1,128], index: 1, kind: input, shape index: {}]
  %s2 = inlined_call_operand.vmem [shape: f32[1,128], index: 2, kind: input, shape index: {}]
  %s3 = inlined_call_operand.hbm [shape: bf16[128,384], index: 3, kind: input, shape index: {}]
  %s4 = inlined_call_operand.hbm [shape: bf16[128,128], index: 4, kind: input, shape index: {}]
  %s5 = inlined_call_operand.vmem [shape: f32[1,128], index: 5, kind: input, shape index: {}]
  %s6 = inlined_call_operand.vmem [shape: f32[1,128], index: 6, kind: input, shape index: {}]
  %s7 = inlined_call_operand.vmem [shape: f32[1,128], index: 7, kind: input, shape index: {}]
  %s8 = inlined_call_operand.hbm [shape: bf16[512,512], index: 8, kind: input, shape index: {}]
  %s9 = inlined_call_operand.hbm [shape: bf16[4,512,128], index: 9, kind: input, shape index: {}]
  %s10 = inlined_call_operand.hbm [shape: f32[2,128,128], index: 10, kind: output, shape index: {}]
  %s11 = sld [smem:[#allocation0]]
  $region101: #{tpu_custom_call.1} parent=0
    _
  %s13 = ssub.s32 1, %s11
  %s14 = scalar_select 0, %s13, %s11
  $region1: #{tpu_custom_call.1} parent=0
    #allocation4 [shape = 'u8[131072]{0}', space=vmem, size = 0x20000, scoped, tag = 'input window, operand 0']
    #allocation5 [shape = 's32[2]{0}', space=sflag, size = 0x8, scoped, tag = 'scoped memory for tpu_custom_call.1']
    #allocation6 [shape = 's32[2]{0}', space=sflag, size = 0x8, scoped, tag = 'scoped memory for tpu_custom_call.1']
    #allocation7 [shape = 'u8[512]{0}', space=vmem, size = 0x400, scoped, tag = 'input window, operand 1, single buffered']
    #allocation8 [shape = 's32[1]{0}', space=sflag, size = 0x4, scoped, tag = 'scoped memory for tpu_custom_call.1']
    #allocation9 [shape = 'u8[98304]{0}', space=vmem, size = 0x18000, scoped, tag = 'input window, operand 3, single buffered']
    #allocation10 [shape = 'u8[32768]{0}', space=vmem, size = 0x8000, scoped, tag = 'input window, operand 4, single buffered']
    #allocation11 [shape = 's32[1]{0}', space=sflag, size = 0x4, scoped, tag = 'scoped memory for tpu_custom_call.1']
    #allocation12 [shape = 'u8[524288]{0}', space=vmem, size = 0x80000, scoped, tag = 'input window, operand 8']
    #allocation13 [shape = 'u8[524288]{0}', space=vmem, size = 0x80000, scoped, tag = 'input window, operand 9']
    #allocation14 [shape = 'u8[131072]{0}', space=vmem, size = 0x20000, scoped, tag = 'output window, operand 0']
    %15 = vsyncpa [#allocation5], 0
    %s16 = scalar_lea.sflag [#allocation5], 1
    %17 = vsyncpa %s16, 0
    %18 = vsyncpa [#allocation8], 0
    %19 = vsyncpa [#allocation11], 0
    %20 = vsyncpa [#allocation6], 0
    %s21 = scalar_lea.sflag [#allocation6], 1
    %22 = vsyncpa %s21, 0
    loop: start=0, step=1, limit=6
    $region2: #{tpu_custom_call.1} parent=1 // loop_pre_header
      _
    $region3: #{tpu_custom_call.1} parent=1 // loop_header
      %s24 = sphi 0, %s28
      %p25 = scmp.ge.s32.totalorder %s24, 6
      %s31 = sphi 0, %s43
      %s32 = sphi 0, %s39
      %s33 = sphi 0, %s31
      %s34 = sphi 0, %s32
      %s35 = sphi 0, %s33
      %s36 = sphi 0, %s34
      %s46 = sphi 0, %s48
      %s49 = sphi 0, %s46
      %s50 = sphi 0, %s49
      %s66 = sphi 0, %s50
      %s70 = sphi 0, %s70
      %s72 = sphi 0, %s70
      %s73 = sphi 0, %s72
      %s87 = sphi 0, %s73
      %s91 = sphi 0, %s91
      %s93 = sphi 0, %s91
      %s94 = sphi 0, %s93
      %s108 = sphi 0, %s94
      %s112 = sphi 0, %s112
      %s114 = sphi 0, %s112
      %s115 = sphi 0, %s114
      %s129 = sphi 0, %s115
      %s133 = sphi 0, %s133
      %s135 = sphi 0, %s133
      %s136 = sphi 0, %s135
      %s150 = sphi 0, %s136
      %s154 = sphi 0, %s154
      %s156 = sphi 0, %s154
      %s157 = sphi 0, %s156
      %s171 = sphi 0, %s157
      %s175 = sphi 0, %s175
      %s177 = sphi 0, %s175
      %s178 = sphi 0, %s177
      %s192 = sphi 0, %s178
      %s196 = sphi 0, %s196
      %s198 = sphi 0, %s196
      %s199 = sphi 0, %s198
      %s213 = sphi 0, %s199
      %s219 = sphi 0, %s221
      %s222 = sphi 0, %s219
      %s223 = sphi 0, %s222
      %s239 = sphi 0, %s223
      %s245 = sphi 0, %s247
      %s248 = sphi 0, %s245
      %s249 = sphi 0, %s248
      %s265 = sphi 0, %s249
      %s271 = sphi 0, %s273
      %s274 = sphi 0, %s271
      %s275 = sphi 0, %s274
      %s291 = sphi 0, %s275
    $region4: #{tpu_custom_call.1} parent=1 // loop_header_branch
      %27 = sbr.rel (%p25) target = $region8
    $region5: #{tpu_custom_call.1} parent=1 // loop_body
      %s29 = ssub.s32 %s24, 1
      %s30 = ssub.s32 %s24, 2
      %s37 = sadd.s32 1, %s32
      %p38 = scmp.ge.s32.totalorder %s37, 2
      %s39 = scalar_select %p38, 0, %s37
      %s40 = sadd.s32 1, %s31
      %s41 = scalar_select %p38, %s40, %s31
      %p42 = scmp.ge.s32.totalorder %s41, 2
      %s43 = scalar_select %p42, 0, %s41
      %s44 = ssub.s32 %s31, %s43
      %p45 = scmp.eq.s32.totalorder %s44, 0
      %s47 = sadd.s32 %s46, 1
      %s48 = scalar_select %p45, %s46, %s47
      %p51 = pneg %p45
      %p52 = scmp.eq.s32.totalorder %s24, 3
      %p53 = por %p51, %p52
      %p54 = scmp.ne.s32.totalorder %s46, %s49
      %p55 = scmp.eq.s32.totalorder %s24, 0
      %p56 = por %p54, %p55
      %p57 = scmp.ne.s32.totalorder %s46, %s49
      %p58 = scmp.eq.s32.totalorder %s29, 3
      %p59 = por %p57, %p58
      %p60 = scmp.ne.s32.totalorder %s49, %s50
      %p61 = scmp.eq.s32.totalorder %s29, 0
      %p62 = por %p60, %p61
      %p63 = scmp.ne.s32.totalorder %s49, %s50
      %p64 = scmp.eq.s32.totalorder %s30, 3
      %p65 = por %p63, %p64
      %p67 = scmp.ne.s32.totalorder %s50, %s66
      %p68 = scmp.eq.s32.totalorder %s30, 0
      %p69 = por %p67, %p68
      %s71 = sadd.s32 %s70, 1
      %p74 = scmp.eq.s32.totalorder %s24, 3
      %p75 = scmp.ne.s32.totalorder %s70, %s72
      %p76 = scmp.eq.s32.totalorder %s24, 0
      %p77 = por %p75, %p76
      %p78 = scmp.ne.s32.totalorder %s70, %s72
      %p79 = scmp.eq.s32.totalorder %s29, 3
      %p80 = por %p78, %p79
      %p81 = scmp.ne.s32.totalorder %s72, %s73
      %p82 = scmp.eq.s32.totalorder %s29, 0
      %p83 = por %p81, %p82
      %p84 = scmp.ne.s32.totalorder %s72, %s73
      %p85 = scmp.eq.s32.totalorder %s30, 3
      %p86 = por %p84, %p85
      %p88 = scmp.ne.s32.totalorder %s73, %s87
      %p89 = scmp.eq.s32.totalorder %s30, 0
      %p90 = por %p88, %p89
      %s92 = sadd.s32 %s91, 1
      %p95 = scmp.eq.s32.totalorder %s24, 3
      %p96 = scmp.ne.s32.totalorder %s91, %s93
      %p97 = scmp.eq.s32.totalorder %s24, 0
      %p98 = por %p96, %p97
      %p99 = scmp.ne.s32.totalorder %s91, %s93
      %p100 = scmp.eq.s32.totalorder %s29, 3
      %p101 = por %p99, %p100
      %p102 = scmp.ne.s32.totalorder %s93, %s94
      %p103 = scmp.eq.s32.totalorder %s29, 0
      %p104 = por %p102, %p103
      %p105 = scmp.ne.s32.totalorder %s93, %s94
      %p106 = scmp.eq.s32.totalorder %s30, 3
      %p107 = por %p105, %p106
      %p109 = scmp.ne.s32.totalorder %s94, %s108
      %p110 = scmp.eq.s32.totalorder %s30, 0
      %p111 = por %p109, %p110
      %s113 = sadd.s32 %s112, 1
      %p116 = scmp.eq.s32.totalorder %s24, 3
      %p117 = scmp.ne.s32.totalorder %s112, %s114
      %p118 = scmp.eq.s32.totalorder %s24, 0
      %p119 = por %p117, %p118
      %p120 = scmp.ne.s32.totalorder %s112, %s114
      %p121 = scmp.eq.s32.totalorder %s29, 3
      %p122 = por %p120, %p121
      %p123 = scmp.ne.s32.totalorder %s114, %s115
      %p124 = scmp.eq.s32.totalorder %s29, 0
      %p125 = por %p123, %p124
      %p126 = scmp.ne.s32.totalorder %s114, %s115
      %p127 = scmp.eq.s32.totalorder %s30, 3
      %p128 = por %p126, %p127
      %p130 = scmp.ne.s32.totalorder %s115, %s129
      %p131 = scmp.eq.s32.totalorder %s30, 0
      %p132 = por %p130, %p131
      %s134 = sadd.s32 %s133, 1
      %p137 = scmp.eq.s32.totalorder %s24, 3
      %p138 = scmp.ne.s32.totalorder %s133, %s135
      %p139 = scmp.eq.s32.totalorder %s24, 0
      %p140 = por %p138, %p139
      %p141 = scmp.ne.s32.totalorder %s133, %s135
      %p142 = scmp.eq.s32.totalorder %s29, 3
      %p143 = por %p141, %p142
      %p144 = scmp.ne.s32.totalorder %s135, %s136
      %p145 = scmp.eq.s32.totalorder %s29, 0
      %p146 = por %p144, %p145
      %p147 = scmp.ne.s32.totalorder %s135, %s136
      %p148 = scmp.eq.s32.totalorder %s30, 3
      %p149 = por %p147, %p148
      %p151 = scmp.ne.s32.totalorder %s136, %s150
      %p152 = scmp.eq.s32.totalorder %s30, 0
      %p153 = por %p151, %p152
      %s155 = sadd.s32 %s154, 1
      %p158 = scmp.eq.s32.totalorder %s24, 3
      %p159 = scmp.ne.s32.totalorder %s154, %s156
      %p160 = scmp.eq.s32.totalorder %s24, 0
      %p161 = por %p159, %p160
      %p162 = scmp.ne.s32.totalorder %s154, %s156
      %p163 = scmp.eq.s32.totalorder %s29, 3
      %p164 = por %p162, %p163
      %p165 = scmp.ne.s32.totalorder %s156, %s157
      %p166 = scmp.eq.s32.totalorder %s29, 0
      %p167 = por %p165, %p166
      %p168 = scmp.ne.s32.totalorder %s156, %s157
      %p169 = scmp.eq.s32.totalorder %s30, 3
      %p170 = por %p168, %p169
      %p172 = scmp.ne.s32.totalorder %s157, %s171
      %p173 = scmp.eq.s32.totalorder %s30, 0
      %p174 = por %p172, %p173
      %s176 = sadd.s32 %s175, 1
      %p179 = scmp.eq.s32.totalorder %s24, 3
      %p180 = scmp.ne.s32.totalorder %s175, %s177
      %p181 = scmp.eq.s32.totalorder %s24, 0
      %p182 = por %p180, %p181
      %p183 = scmp.ne.s32.totalorder %s175, %s177
      %p184 = scmp.eq.s32.totalorder %s29, 3
      %p185 = por %p183, %p184
      %p186 = scmp.ne.s32.totalorder %s177, %s178
      %p187 = scmp.eq.s32.totalorder %s29, 0
      %p188 = por %p186, %p187
      %p189 = scmp.ne.s32.totalorder %s177, %s178
      %p190 = scmp.eq.s32.totalorder %s30, 3
      %p191 = por %p189, %p190
      %p193 = scmp.ne.s32.totalorder %s178, %s192
      %p194 = scmp.eq.s32.totalorder %s30, 0
      %p195 = por %p193, %p194
      %s197 = sadd.s32 %s196, 1
      %p200 = scmp.eq.s32.totalorder %s24, 3
      %p201 = scmp.ne.s32.totalorder %s196, %s198
      %p202 = scmp.eq.s32.totalorder %s24, 0
      %p203 = por %p201, %p202
      %p204 = scmp.ne.s32.totalorder %s196, %s198
      %p205 = scmp.eq.s32.totalorder %s29, 3
      %p206 = por %p204, %p205
      %p207 = scmp.ne.s32.totalorder %s198, %s199
      %p208 = scmp.eq.s32.totalorder %s29, 0
      %p209 = por %p207, %p208
      %p210 = scmp.ne.s32.totalorder %s198, %s199
      %p211 = scmp.eq.s32.totalorder %s30, 3
      %p212 = por %p210, %p211
      %p214 = scmp.ne.s32.totalorder %s199, %s213
      %p215 = scmp.eq.s32.totalorder %s30, 0
      %p216 = por %p214, %p215
      %s217 = ssub.s32 %s32, %s39
      %p218 = scmp.eq.s32.totalorder %s217, 0
      %s220 = sadd.s32 %s219, 1
      %s221 = scalar_select %p218, %s219, %s220
      %p224 = pneg %p218
      %p225 = scmp.eq.s32.totalorder %s24, 3
      %p226 = por %p224, %p225
      %p227 = scmp.ne.s32.totalorder %s219, %s222
      %p228 = scmp.eq.s32.totalorder %s24, 0
      %p229 = por %p227, %p228
      %p230 = scmp.ne.s32.totalorder %s219, %s222
      %p231 = scmp.eq.s32.totalorder %s29, 3
      %p232 = por %p230, %p231
      %p233 = scmp.ne.s32.totalorder %s222, %s223
      %p234 = scmp.eq.s32.totalorder %s29, 0
      %p235 = por %p233, %p234
      %p236 = scmp.ne.s32.totalorder %s222, %s223
      %p237 = scmp.eq.s32.totalorder %s30, 3
      %p238 = por %p236, %p237
      %p240 = scmp.ne.s32.totalorder %s223, %s239
      %p241 = scmp.eq.s32.totalorder %s30, 0
      %p242 = por %p240, %p241
      %s243 = ssub.s32 %s32, %s39
      %p244 = scmp.eq.s32.totalorder %s243, 0
      %s246 = sadd.s32 %s245, 1
      %s247 = scalar_select %p244, %s245, %s246
      %p250 = pneg %p244
      %p251 = scmp.eq.s32.totalorder %s24, 3
      %p252 = por %p250, %p251
      %p253 = scmp.ne.s32.totalorder %s245, %s248
      %p254 = scmp.eq.s32.totalorder %s24, 0
      %p255 = por %p253, %p254
      %p256 = scmp.ne.s32.totalorder %s245, %s248
      %p257 = scmp.eq.s32.totalorder %s29, 3
      %p258 = por %p256, %p257
      %p259 = scmp.ne.s32.totalorder %s248, %s249
      %p260 = scmp.eq.s32.totalorder %s29, 0
      %p261 = por %p259, %p260
      %p262 = scmp.ne.s32.totalorder %s248, %s249
      %p263 = scmp.eq.s32.totalorder %s30, 3
      %p264 = por %p262, %p263
      %p266 = scmp.ne.s32.totalorder %s249, %s265
      %p267 = scmp.eq.s32.totalorder %s30, 0
      %p268 = por %p266, %p267
      %s269 = ssub.s32 %s31, %s43
      %p270 = scmp.eq.s32.totalorder %s269, 0
      %s272 = sadd.s32 %s271, 1
      %s273 = scalar_select %p270, %s271, %s272
      %p276 = pneg %p270
      %p277 = scmp.eq.s32.totalorder %s24, 3
      %p278 = por %p276, %p277
      %p279 = scmp.ne.s32.totalorder %s271, %s274
      %p280 = scmp.eq.s32.totalorder %s24, 0
      %p281 = por %p279, %p280
      %p282 = scmp.ne.s32.totalorder %s271, %s274
      %p283 = scmp.eq.s32.totalorder %s29, 3
      %p284 = por %p282, %p283
      %p285 = scmp.ne.s32.totalorder %s274, %s275
      %p286 = scmp.eq.s32.totalorder %s29, 0
      %p287 = por %p285, %p286
      %p288 = scmp.ne.s32.totalorder %s274, %s275
      %p289 = scmp.eq.s32.totalorder %s30, 3
      %p290 = por %p288, %p289
      %p292 = scmp.ne.s32.totalorder %s275, %s291
      %p293 = scmp.eq.s32.totalorder %s30, 0
      %p294 = por %p292, %p293
      %p295 = scmp.le.s32.totalorder 1, %s24
      %p296 = scmp.lt.s32.totalorder %s24, 5
      %p297 = pnand %p295, %p296
      %p298 = pneg %p297
      // Predicated region
      $region9: #{tpu_custom_call.1} parent=5 // pred_check
        _
      $region10: #{tpu_custom_call.1} parent=5 // pred_check_branch
        %300 = sbr.rel (%p297) target = $region12
      $region11: #{tpu_custom_call.1} parent=5 // pred_region
        %s301 = ssub.s32 %s24, 1
        // Predicated region
        $region13: #{tpu_custom_call.1} parent=11 // pred_check
          %p302 = pneg %p83
        $region14: #{tpu_custom_call.1} parent=11 // pred_check_branch
          %304 = sbr.rel (%p302) target = $region16
        $region15: #{tpu_custom_call.1} parent=11 // pred_region
          %306 = vsyncadd [#allocation8], 0
          %s308 = sshll.u32 %s1, 4
          %s309 = int_to_ptr.hbm [resolvable:$true] %s308
          %s310 = sshll.u32 [#allocation7], 4
          %s311 = int_to_ptr.vmem [resolvable:$true] %s310
          %313 = dma.hbm_to_vmem [thread:$0]  %s309, 16, %s311, [#allocation8]
        $region16: #{tpu_custom_call.1} parent=11 // pred_fallthru
          _
        // Predicated region
        $region17: #{tpu_custom_call.1} parent=11 // pred_check
          %p314 = pneg %p104
        $region18: #{tpu_custom_call.1} parent=11 // pred_check_branch
          %316 = sbr.rel (%p314) target = $region20
        $region19: #{tpu_custom_call.1} parent=11 // pred_region
          _
        $region20: #{tpu_custom_call.1} parent=11 // pred_fallthru
          _
        // Predicated region
        $region21: #{tpu_custom_call.1} parent=11 // pred_check
          %p317 = pneg %p125
        $region22: #{tpu_custom_call.1} parent=11 // pred_check_branch
          %319 = sbr.rel (%p317) target = $region24
        $region23: #{tpu_custom_call.1} parent=11 // pred_region
          %321 = vsyncadd [#allocation8], 0
          %s322 = sshll.u32 %s3, 4
          %s323 = int_to_ptr.hbm [resolvable:$true] %s322
          %s324 = sshll.u32 [#allocation9], 4
          %s325 = int_to_ptr.vmem [resolvable:$true] %s324
          %330 = dma.hbm_to_vmem [thread:$0]  %s323, 3072, %s325, [#allocation8], 192, 192, 12
        $region24: #{tpu_custom_call.1} parent=11 // pred_fallthru
          _
        // Predicated region
        $region25: #{tpu_custom_call.1} parent=11 // pred_check
          %p331 = pneg %p146
        $region26: #{tpu_custom_call.1} parent=11 // pred_check_branch
          %333 = sbr.rel (%p331) target = $region28
        $region27: #{tpu_custom_call.1} parent=11 // pred_region
          %335 = vsyncadd [#allocation11], 0
          %s336 = sshll.u32 %s4, 4
          %s337 = int_to_ptr.hbm [resolvable:$true] %s336
          %s338 = sshll.u32 [#allocation10], 4
          %s339 = int_to_ptr.vmem [resolvable:$true] %s338
          %344 = dma.hbm_to_vmem [thread:$0]  %s337, 1024, %s339, [#allocation11], 64, 64, 4
        $region28: #{tpu_custom_call.1} parent=11 // pred_fallthru
          _
        // Predicated region
        $region29: #{tpu_custom_call.1} parent=11 // pred_check
          %p345 = pneg %p167
        $region30: #{tpu_custom_call.1} parent=11 // pred_check_branch
          %347 = sbr.rel (%p345) target = $region32
        $region31: #{tpu_custom_call.1} parent=11 // pred_region
          _
        $region32: #{tpu_custom_call.1} parent=11 // pred_fallthru
          _
        // Predicated region
        $region33: #{tpu_custom_call.1} parent=11 // pred_check
          %p348 = pneg %p188
        $region34: #{tpu_custom_call.1} parent=11 // pred_check_branch
          %350 = sbr.rel (%p348) target = $region36
        $region35: #{tpu_custom_call.1} parent=11 // pred_region
          _
        $region36: #{tpu_custom_call.1} parent=11 // pred_fallthru
          _
        // Predicated region
        $region37: #{tpu_custom_call.1} parent=11 // pred_check
          %p351 = pneg %p209
        $region38: #{tpu_custom_call.1} parent=11 // pred_check_branch
          %353 = sbr.rel (%p351) target = $region40
        $region39: #{tpu_custom_call.1} parent=11 // pred_region
          _
        $region40: #{tpu_custom_call.1} parent=11 // pred_fallthru
          _
      $region12: #{tpu_custom_call.1} parent=5 // pred_fallthru
        _
      %p354 = scmp.lt.s32.totalorder %s24, 4
      // Predicated region
      $region41: #{tpu_custom_call.1} parent=5 // pred_check
        %p355 = pneg %p354
      $region42: #{tpu_custom_call.1} parent=5 // pred_check_branch
        %357 = sbr.rel (%p355) target = $region44
      $region43: #{tpu_custom_call.1} parent=5 // pred_region
        // Predicated region
        $region45: #{tpu_custom_call.1} parent=43 // pred_check
          %p358 = pneg %p56
        $region46: #{tpu_custom_call.1} parent=43 // pred_check_branch
          %360 = sbr.rel (%p358) target = $region48
        $region47: #{tpu_custom_call.1} parent=43 // pred_region
          %s361 = sand.u32 %s24, 1
          %s362 = scalar_lea.sflag [#allocation5], %s361
          %s363 = sand.u32 %s46, 1
          %s364 = smul.addr %s363, 128
          %s365 = scalar_lea.vmem [#allocation4], %s364
          %367 = vsyncadd %s362, 0
          %s368 = smul.addr %s31, 16
          %s369 = smul.addr %s368, 8
          %s370 = scalar_lea.hbm %s0, %s369
          %s371 = sshll.u32 %s370, 4
          %s372 = int_to_ptr.hbm [resolvable:$true] %s371
          %s373 = sshll.u32 %s365, 4
          %s374 = int_to_ptr.vmem [resolvable:$true] %s373
          %379 = dma.hbm_to_vmem [thread:$0]  %s372, 2048, %s374, %s362, 128, 128, 8
        $region48: #{tpu_custom_call.1} parent=43 // pred_fallthru
          _
        // Predicated region
        $region49: #{tpu_custom_call.1} parent=43 // pred_check
          %p380 = pneg %p229
        $region50: #{tpu_custom_call.1} parent=43 // pred_check_branch
          %382 = sbr.rel (%p380) target = $region52
        $region51: #{tpu_custom_call.1} parent=43 // pred_region
          %s383 = sand.u32 %s24, 1
          %s384 = scalar_lea.sflag [#allocation5], %s383
          %s385 = sand.u32 %s219, 1
          %s386 = smul.addr %s385, 512
          %s387 = scalar_lea.vmem [#allocation12], %s386
          %s388 = smul.u32 2, %s32
          %390 = vsyncadd %s384, 0
          %s391 = smul.addr %s388, 4
          %s392 = scalar_lea.hbm %s8, %s391
          %s393 = sshll.u32 %s392, 4
          %s394 = int_to_ptr.hbm [resolvable:$true] %s393
          %s395 = sshll.u32 %s387, 4
          %s396 = int_to_ptr.vmem [resolvable:$true] %s395
          %401 = dma.hbm_to_vmem [thread:$0]  %s394, 8192, %s396, %s384, 256, 128, 8
        $region52: #{tpu_custom_call.1} parent=43 // pred_fallthru
          _
        // Predicated region
        $region53: #{tpu_custom_call.1} parent=43 // pred_check
          %p402 = pneg %p255
        $region54: #{tpu_custom_call.1} parent=43 // pred_check_branch
          %404 = sbr.rel (%p402) target = $region56
        $region55: #{tpu_custom_call.1} parent=43 // pred_region
          #allocation16 [shape = 'u32[6]{0}', space=smem, size = 0x18, scoped, tag = 'DMA stride descriptor']
          %s405 = sand.u32 %s24, 1
          %s406 = scalar_lea.sflag [#allocation5], %s405
          %s407 = sand.u32 %s245, 1
          %s408 = smul.addr %s407, 512
          %s409 = scalar_lea.vmem [#allocation13], %s408
          %s410 = smul.u32 32, %s32
          %412 = vsyncadd %s406, 0
          %s413 = smul.addr %s410, 4
          %s414 = scalar_lea.hbm %s9, %s413
          %s416 = sshll.u32 1, 14
          %s417 = sxor.u32 4294967295, %s416
          %s419 = sld [smem:[#allocation0]]
          %s420 = sadd.s32 2, %s419
          %s422 = sshll.u32 7, 26
          %s423 = sxor.u32 4294967295, %s422
          %s424 = sand.u32 0, %s423
          %s425 = sshll.u32 %s420, 26
          %s426 = sor.u32 %s424, %s425
          %s427 = sshll.u32 %s414, 4
          %s428 = int_to_ptr.hbm [resolvable:$true] %s427
          %s429 = sshll.u32 %s409, 4
          %s430 = int_to_ptr.vmem [resolvable:$true] %s429
          %436 = sst [smem:[#allocation16]] 4096
          %s437 = scalar_lea.smem [#allocation16], 1
          %438 = sst [smem:[%s437]] 2048
          %s439 = scalar_lea.smem [#allocation16], 2
          %440 = sst [smem:[%s439]] 32
          %s441 = scalar_lea.smem [#allocation16], 3
          %442 = sst [smem:[%s441]] 64
          %s443 = scalar_lea.smem [#allocation16], 4
          %444 = sst [smem:[%s443]] 64
          %s445 = scalar_lea.smem [#allocation16], 5
          %446 = sst [smem:[%s445]] 4
          %448 = dma.general %s428, 8192, %s430, %s406, [#allocation15], [#allocation16], %s426, 0
        $region56: #{tpu_custom_call.1} parent=43 // pred_fallthru
          _
      $region44: #{tpu_custom_call.1} parent=5 // pred_fallthru
        _
      %p449 = scmp.le.s32.totalorder 1, %s24
      %p450 = scmp.lt.s32.totalorder %s24, 5
      %p451 = pnand %p449, %p450
      %p452 = pneg %p451
      // Predicated region
      $region57: #{tpu_custom_call.1} parent=5 // pred_check
        _
      $region58: #{tpu_custom_call.1} parent=5 // pred_check_branch
        %454 = sbr.rel (%p451) target = $region60
      $region59: #{tpu_custom_call.1} parent=5 // pred_region
        %s455 = ssub.s32 %s24, 1
        %s456 = sand.u32 %s29, 1
        %s457 = scalar_lea.sflag [#allocation5], %s456
        %s458 = sand.u32 %s49, 1
        %s459 = smul.addr %s458, 128
        %s460 = scalar_lea.vmem [#allocation4], %s459
        // Predicated region
        $region61: #{tpu_custom_call.1} parent=59 // pred_check
          %p461 = pneg %p62
        $region62: #{tpu_custom_call.1} parent=59 // pred_check_branch
          %463 = sbr.rel (%p461) target = $region64
        $region63: #{tpu_custom_call.1} parent=59 // pred_region
          %465 = dma.done %s457, 2048
        $region64: #{tpu_custom_call.1} parent=59 // pred_fallthru
          _
        // Predicated region
        $region65: #{tpu_custom_call.1} parent=59 // pred_check
          %p466 = pneg %p83
        $region66: #{tpu_custom_call.1} parent=59 // pred_check_branch
          %468 = sbr.rel (%p466) target = $region68
        $region67: #{tpu_custom_call.1} parent=59 // pred_region
          %470 = dma.done [#allocation8], 16
        $region68: #{tpu_custom_call.1} parent=59 // pred_fallthru
          _
        // Predicated region
        $region69: #{tpu_custom_call.1} parent=59 // pred_check
          %p471 = pneg %p125
        $region70: #{tpu_custom_call.1} parent=59 // pred_check_branch
          %473 = sbr.rel (%p471) target = $region72
        $region71: #{tpu_custom_call.1} parent=59 // pred_region
          %475 = dma.done [#allocation8], 3072
        $region72: #{tpu_custom_call.1} parent=59 // pred_fallthru
          _
        // Predicated region
        $region73: #{tpu_custom_call.1} parent=59 // pred_check
          %p476 = pneg %p146
        $region74: #{tpu_custom_call.1} parent=59 // pred_check_branch
          %478 = sbr.rel (%p476) target = $region76
        $region75: #{tpu_custom_call.1} parent=59 // pred_region
          %480 = dma.done [#allocation11], 1024
        $region76: #{tpu_custom_call.1} parent=59 // pred_fallthru
          _
        %s481 = sand.u32 %s29, 1
        %s482 = scalar_lea.sflag [#allocation5], %s481
        %s483 = sand.u32 %s222, 1
        %s484 = smul.addr %s483, 512
        %s485 = scalar_lea.vmem [#allocation12], %s484
        // Predicated region
        $region77: #{tpu_custom_call.1} parent=59 // pred_check
          %p486 = pneg %p235
        $region78: #{tpu_custom_call.1} parent=59 // pred_check_branch
          %488 = sbr.rel (%p486) target = $region80
        $region79: #{tpu_custom_call.1} parent=59 // pred_region
          %490 = dma.done %s482, 8192
        $region80: #{tpu_custom_call.1} parent=59 // pred_fallthru
          _
        %s491 = sand.u32 %s29, 1
        %s492 = scalar_lea.sflag [#allocation5], %s491
        %s493 = sand.u32 %s248, 1
        %s494 = smul.addr %s493, 512
        %s495 = scalar_lea.vmem [#allocation13], %s494
        // Predicated region
        $region81: #{tpu_custom_call.1} parent=59 // pred_check
          %p496 = pneg %p261
        $region82: #{tpu_custom_call.1} parent=59 // pred_check_branch
          %498 = sbr.rel (%p496) target = $region84
        $region83: #{tpu_custom_call.1} parent=59 // pred_region
          %500 = dma.done %s492, 8192
        $region84: #{tpu_custom_call.1} parent=59 // pred_fallthru
          _
        %s501 = sand.u32 %s29, 1
        %s502 = scalar_lea.sflag [#allocation5], %s501
        %s503 = sand.u32 %s49, 1
        %s504 = smul.addr %s503, 128
        %s505 = scalar_lea.vmem [#allocation4], %s504
        %p506 = pneg %p62
        %p507 = pneg %p59
        %p508 = pneg %p83
        %p509 = pneg %p80
        %p510 = pneg %p104
        %p511 = pneg %p101
        %p512 = pneg %p125
        %p513 = pneg %p122
        %p514 = pneg %p146
        %p515 = pneg %p143
        %p516 = pneg %p167
        %p517 = pneg %p164
        %p518 = pneg %p188
        %p519 = pneg %p185
        %p520 = pneg %p209
        %p521 = pneg %p206
        %s522 = sand.u32 %s29, 1
        %s523 = scalar_lea.sflag [#allocation5], %s522
        %s524 = sand.u32 %s222, 1
        %s525 = smul.addr %s524, 512
        %s526 = scalar_lea.vmem [#allocation12], %s525
        %p527 = pneg %p235
        %p528 = pneg %p232
        %s529 = sand.u32 %s29, 1
        %s530 = scalar_lea.sflag [#allocation5], %s529
        %s531 = sand.u32 %s248, 1
        %s532 = smul.addr %s531, 512
        %s533 = scalar_lea.vmem [#allocation13], %s532
        %p534 = pneg %p261
        %p535 = pneg %p258
        %p536 = pneg %p287
        %p537 = pneg %p284
        %s538 = sand.u32 %s274, 1
        %s539 = scalar_lea.sflag [#allocation6], %s538
        %s540 = sand.u32 %s274, 1
        %s541 = smul.addr %s540, 128
        %s542 = scalar_lea.vmem [#allocation14], %s541
        %s543 = smul.u32 2, %s34
        %s544 = smul.u32 32, %s34
        %p546 = scmp.eq.s32.totalorder %s34, 0
        // Predicated region
        $region85: #{tpu_custom_call.1} parent=59 // pred_check
          %p547 = pneg %p546
        $region86: #{tpu_custom_call.1} parent=59 // pred_check_branch
          %549 = sbr.rel (%p547) target = $region88
        $region87: #{tpu_custom_call.1} parent=59 // pred_region
          %v550 = vld [vmem:[%s460] sm:$0xff]
          %v551 = vld [vmem:[%s460 + $0x8] sm:$0xff]
          %v552 = vld [vmem:[%s460 + $0x10] sm:$0xff]
          %v553 = vld [vmem:[%s460 + $0x18] sm:$0xff]
          %v554 = vld [vmem:[%s460 + $0x20] sm:$0xff]
          %v555 = vld [vmem:[%s460 + $0x28] sm:$0xff]
          %v556 = vld [vmem:[%s460 + $0x30] sm:$0xff]
          %v557 = vld [vmem:[%s460 + $0x38] sm:$0xff]
          %v558 = vld [vmem:[%s460 + $0x40] sm:$0xff]
          %v559 = vld [vmem:[%s460 + $0x48] sm:$0xff]
          %v560 = vld [vmem:[%s460 + $0x50] sm:$0xff]
          %v561 = vld [vmem:[%s460 + $0x58] sm:$0xff]
          %v562 = vld [vmem:[%s460 + $0x60] sm:$0xff]
          %v563 = vld [vmem:[%s460 + $0x68] sm:$0xff]
          %v564 = vld [vmem:[%s460 + $0x70] sm:$0xff]
          %v565 = vld [vmem:[%s460 + $0x78] sm:$0xff]
          %v566 = vld [vmem:[#allocation7] sm:$0x1]
          %v567 = vld [vmem:[%s2] sm:$0x1]
          %568 = vadd.xlane.f32.xlu0 %v550
          %v569 = vpop.xlane.xlu0 %568
          %570 = vadd.xlane.f32.xlu0 %v551
          %v571 = vpop.xlane.xlu0 %570
          %572 = vadd.xlane.f32.xlu0 %v552
          %v573 = vpop.xlane.xlu0 %572
          %574 = vadd.xlane.f32.xlu0 %v553
          %v575 = vpop.xlane.xlu0 %574
          %576 = vadd.xlane.f32.xlu0 %v554
          %v577 = vpop.xlane.xlu0 %576
          %578 = vadd.xlane.f32.xlu0 %v555
          %v579 = vpop.xlane.xlu0 %578
          %580 = vadd.xlane.f32.xlu0 %v556
          %v581 = vpop.xlane.xlu0 %580
          %582 = vadd.xlane.f32.xlu0 %v557
          %v583 = vpop.xlane.xlu0 %582
          %584 = vadd.xlane.f32.xlu0 %v558
          %v585 = vpop.xlane.xlu0 %584
          %586 = vadd.xlane.f32.xlu0 %v559
          %v587 = vpop.xlane.xlu0 %586
          %588 = vadd.xlane.f32.xlu0 %v560
          %v589 = vpop.xlane.xlu0 %588
          %590 = vadd.xlane.f32.xlu0 %v561
          %v591 = vpop.xlane.xlu0 %590
          %592 = vadd.xlane.f32.xlu0 %v562
          %v593 = vpop.xlane.xlu0 %592
          %594 = vadd.xlane.f32.xlu0 %v563
          %v595 = vpop.xlane.xlu0 %594
          %596 = vadd.xlane.f32.xlu0 %v564
          %v597 = vpop.xlane.xlu0 %596
          %598 = vadd.xlane.f32.xlu0 %v565
          %v599 = vpop.xlane.xlu0 %598
          %v600 = vrcp.pop 128.0
          %v601 = vmul.f32 128.0, %v600
          %v602 = vsub.f32 1.0, %v601
          %v603 = vmul.f32 %v600, %v602
          %v604 = vadd.f32 %v600, %v603
          %vm605 = vweird.f32 %v600
          %v606 = vsel %vm605, %v600, %v604
          %v607 = vmul.f32 %v569, %v606
          %v608 = vmul.f32 %v571, %v606
          %v609 = vmul.f32 %v573, %v606
          %v610 = vmul.f32 %v575, %v606
          %v611 = vmul.f32 %v577, %v606
          %v612 = vmul.f32 %v579, %v606
          %v613 = vmul.f32 %v581, %v606
          %v614 = vmul.f32 %v583, %v606
          %v615 = vmul.f32 %v585, %v606
          %v616 = vmul.f32 %v587, %v606
          %v617 = vmul.f32 %v589, %v606
          %v618 = vmul.f32 %v591, %v606
          %v619 = vmul.f32 %v593, %v606
          %v620 = vmul.f32 %v595, %v606
          %v621 = vmul.f32 %v597, %v606
          %v622 = vmul.f32 %v599, %v606
          %v623 = vsub.f32 %v550, %v607
          %v624 = vsub.f32 %v551, %v608
          %v625 = vsub.f32 %v552, %v609
          %v626 = vsub.f32 %v553, %v610
          %v627 = vsub.f32 %v554, %v611
          %v628 = vsub.f32 %v555, %v612
          %v629 = vsub.f32 %v556, %v613
          %v630 = vsub.f32 %v557, %v614
          %v631 = vsub.f32 %v558, %v615
          %v632 = vsub.f32 %v559, %v616
          %v633 = vsub.f32 %v560, %v617
          %v634 = vsub.f32 %v561, %v618
          %v635 = vsub.f32 %v562, %v619
          %v636 = vsub.f32 %v563, %v620
          %v637 = vsub.f32 %v564, %v621
          %v638 = vsub.f32 %v565, %v622
          %v639 = vmul.f32 %v623, %v623
          %v640 = vmul.f32 %v624, %v624
          %v641 = vmul.f32 %v625, %v625
          %v642 = vmul.f32 %v626, %v626
          %v643 = vmul.f32 %v627, %v627
          %v644 = vmul.f32 %v628, %v628
          %v645 = vmul.f32 %v629, %v629
          %v646 = vmul.f32 %v630, %v630
          %v647 = vmul.f32 %v631, %v631
          %v648 = vmul.f32 %v632, %v632
          %v649 = vmul.f32 %v633, %v633
          %v650 = vmul.f32 %v634, %v634
          %v651 = vmul.f32 %v635, %v635
          %v652 = vmul.f32 %v636, %v636
          %v653 = vmul.f32 %v637, %v637
          %v654 = vmul.f32 %v638, %v638
          %655 = vadd.xlane.f32.xlu0 %v639
          %v656 = vpop.xlane.xlu0 %655
          %657 = vadd.xlane.f32.xlu0 %v640
          %v658 = vpop.xlane.xlu0 %657
          %659 = vadd.xlane.f32.xlu0 %v641
          %v660 = vpop.xlane.xlu0 %659
          %661 = vadd.xlane.f32.xlu0 %v642
          %v662 = vpop.xlane.xlu0 %661
          %663 = vadd.xlane.f32.xlu0 %v643
          %v664 = vpop.xlane.xlu0 %663
          %665 = vadd.xlane.f32.xlu0 %v644
          %v666 = vpop.xlane.xlu0 %665
          %667 = vadd.xlane.f32.xlu0 %v645
          %v668 = vpop.xlane.xlu0 %667
          %669 = vadd.xlane.f32.xlu0 %v646
          %v670 = vpop.xlane.xlu0 %669
          %671 = vadd.xlane.f32.xlu0 %v647
          %v672 = vpop.xlane.xlu0 %671
          %673 = vadd.xlane.f32.xlu0 %v648
          %v674 = vpop.xlane.xlu0 %673
          %675 = vadd.xlane.f32.xlu0 %v649
          %v676 = vpop.xlane.xlu0 %675
          %677 = vadd.xlane.f32.xlu0 %v650
          %v678 = vpop.xlane.xlu0 %677
          %679 = vadd.xlane.f32.xlu0 %v651
          %v680 = vpop.xlane.xlu0 %679
          %681 = vadd.xlane.f32.xlu0 %v652
          %v682 = vpop.xlane.xlu0 %681
          %683 = vadd.xlane.f32.xlu0 %v653
          %v684 = vpop.xlane.xlu0 %683
          %685 = vadd.xlane.f32.xlu0 %v654
          %v686 = vpop.xlane.xlu0 %685
          %v687 = vmul.f32 %v656, %v606
          %v688 = vmul.f32 %v658, %v606
          %v689 = vmul.f32 %v660, %v606
          %v690 = vmul.f32 %v662, %v606
          %v691 = vmul.f32 %v664, %v606
          %v692 = vmul.f32 %v666, %v606
          %v693 = vmul.f32 %v668, %v606
          %v694 = vmul.f32 %v670, %v606
          %v695 = vmul.f32 %v672, %v606
          %v696 = vmul.f32 %v674, %v606
          %v697 = vmul.f32 %v676, %v606
          %v698 = vmul.f32 %v678, %v606
          %v699 = vmul.f32 %v680, %v606
          %v700 = vmul.f32 %v682, %v606
          %v701 = vmul.f32 %v684, %v606
          %v702 = vmul.f32 %v686, %v606
          %v703 = vadd.f32 %v687, 1e-05
          %v704 = vadd.f32 %v688, 1e-05
          %v705 = vadd.f32 %v689, 1e-05
          %v706 = vadd.f32 %v690, 1e-05
          %v707 = vadd.f32 %v691, 1e-05
          %v708 = vadd.f32 %v692, 1e-05
          %v709 = vadd.f32 %v693, 1e-05
          %v710 = vadd.f32 %v694, 1e-05
          %v711 = vadd.f32 %v695, 1e-05
          %v712 = vadd.f32 %v696, 1e-05
          %v713 = vadd.f32 %v697, 1e-05
          %v714 = vadd.f32 %v698, 1e-05
          %v715 = vadd.f32 %v699, 1e-05
          %v716 = vadd.f32 %v700, 1e-05
          %v717 = vadd.f32 %v701, 1e-05
          %v718 = vadd.f32 %v702, 1e-05
          %v719 = vrsqrt.pop %v703
          %v720 = vmul.f32 %v719, %v703
          %v721 = vmul.f32 %v720, %v719
          %v722 = vmul.f32 0.5, %v721
          %v723 = vsub.f32 1.5, %v722
          %v724 = vmul.f32 %v719, %v723
          %vm725 = vweird.f32 %v703
          %vm726 = vweird.f32 %v719
          %vm727 = vmor %vm725, %vm726
          %v728 = vsel %vm727, %v719, %v724
          %v729 = vrsqrt.pop %v704
          %v730 = vmul.f32 %v729, %v704
          %v731 = vmul.f32 %v730, %v729
          %v732 = vmul.f32 0.5, %v731
          %v733 = vsub.f32 1.5, %v732
          %v734 = vmul.f32 %v729, %v733
          %vm735 = vweird.f32 %v704
          %vm736 = vweird.f32 %v729
          %vm737 = vmor %vm735, %vm736
          %v738 = vsel %vm737, %v729, %v734
          %v739 = vrsqrt.pop %v705
          %v740 = vmul.f32 %v739, %v705
          %v741 = vmul.f32 %v740, %v739
          %v742 = vmul.f32 0.5, %v741
          %v743 = vsub.f32 1.5, %v742
          %v744 = vmul.f32 %v739, %v743
          %vm745 = vweird.f32 %v705
          %vm746 = vweird.f32 %v739
          %vm747 = vmor %vm745, %vm746
          %v748 = vsel %vm747, %v739, %v744
          %v749 = vrsqrt.pop %v706
          %v750 = vmul.f32 %v749, %v706
          %v751 = vmul.f32 %v750, %v749
          %v752 = vmul.f32 0.5, %v751
          %v753 = vsub.f32 1.5, %v752
          %v754 = vmul.f32 %v749, %v753
          %vm755 = vweird.f32 %v706
          %vm756 = vweird.f32 %v749
          %vm757 = vmor %vm755, %vm756
          %v758 = vsel %vm757, %v749, %v754
          %v759 = vrsqrt.pop %v707
          %v760 = vmul.f32 %v759, %v707
          %v761 = vmul.f32 %v760, %v759
          %v762 = vmul.f32 0.5, %v761
          %v763 = vsub.f32 1.5, %v762
          %v764 = vmul.f32 %v759, %v763
          %vm765 = vweird.f32 %v707
          %vm766 = vweird.f32 %v759
          %vm767 = vmor %vm765, %vm766
          %v768 = vsel %vm767, %v759, %v764
          %v769 = vrsqrt.pop %v708
          %v770 = vmul.f32 %v769, %v708
          %v771 = vmul.f32 %v770, %v769
          %v772 = vmul.f32 0.5, %v771
          %v773 = vsub.f32 1.5, %v772
          %v774 = vmul.f32 %v769, %v773
          %vm775 = vweird.f32 %v708
          %vm776 = vweird.f32 %v769
          %vm777 = vmor %vm775, %vm776
          %v778 = vsel %vm777, %v769, %v774
          %v779 = vrsqrt.pop %v709
          %v780 = vmul.f32 %v779, %v709
          %v781 = vmul.f32 %v780, %v779
          %v782 = vmul.f32 0.5, %v781
          %v783 = vsub.f32 1.5, %v782
          %v784 = vmul.f32 %v779, %v783
          %vm785 = vweird.f32 %v709
          %vm786 = vweird.f32 %v779
          %vm787 = vmor %vm785, %vm786
          %v788 = vsel %vm787, %v779, %v784
          %v789 = vrsqrt.pop %v710
          %v790 = vmul.f32 %v789, %v710
          %v791 = vmul.f32 %v790, %v789
          %v792 = vmul.f32 0.5, %v791
          %v793 = vsub.f32 1.5, %v792
          %v794 = vmul.f32 %v789, %v793
          %vm795 = vweird.f32 %v710
          %vm796 = vweird.f32 %v789
          %vm797 = vmor %vm795, %vm796
          %v798 = vsel %vm797, %v789, %v794
          %v799 = vrsqrt.pop %v711
          %v800 = vmul.f32 %v799, %v711
          %v801 = vmul.f32 %v800, %v799
          %v802 = vmul.f32 0.5, %v801
          %v803 = vsub.f32 1.5, %v802
          %v804 = vmul.f32 %v799, %v803
          %vm805 = vweird.f32 %v711
          %vm806 = vweird.f32 %v799
          %vm807 = vmor %vm805, %vm806
          %v808 = vsel %vm807, %v799, %v804
          %v809 = vrsqrt.pop %v712
          %v810 = vmul.f32 %v809, %v712
          %v811 = vmul.f32 %v810, %v809
          %v812 = vmul.f32 0.5, %v811
          %v813 = vsub.f32 1.5, %v812
          %v814 = vmul.f32 %v809, %v813
          %vm815 = vweird.f32 %v712
          %vm816 = vweird.f32 %v809
          %vm817 = vmor %vm815, %vm816
          %v818 = vsel %vm817, %v809, %v814
          %v819 = vrsqrt.pop %v713
          %v820 = vmul.f32 %v819, %v713
          %v821 = vmul.f32 %v820, %v819
          %v822 = vmul.f32 0.5, %v821
          %v823 = vsub.f32 1.5, %v822
          %v824 = vmul.f32 %v819, %v823
          %vm825 = vweird.f32 %v713
          %vm826 = vweird.f32 %v819
          %vm827 = vmor %vm825, %vm826
          %v828 = vsel %vm827, %v819, %v824
          %v829 = vrsqrt.pop %v714
          %v830 = vmul.f32 %v829, %v714
          %v831 = vmul.f32 %v830, %v829
          %v832 = vmul.f32 0.5, %v831
          %v833 = vsub.f32 1.5, %v832
          %v834 = vmul.f32 %v829, %v833
          %vm835 = vweird.f32 %v714
          %vm836 = vweird.f32 %v829
          %vm837 = vmor %vm835, %vm836
          %v838 = vsel %vm837, %v829, %v834
          %v839 = vrsqrt.pop %v715
          %v840 = vmul.f32 %v839, %v715
          %v841 = vmul.f32 %v840, %v839
          %v842 = vmul.f32 0.5, %v841
          %v843 = vsub.f32 1.5, %v842
          %v844 = vmul.f32 %v839, %v843
          %vm845 = vweird.f32 %v715
          %vm846 = vweird.f32 %v839
          %vm847 = vmor %vm845, %vm846
          %v848 = vsel %vm847, %v839, %v844
          %v849 = vrsqrt.pop %v716
          %v850 = vmul.f32 %v849, %v716
          %v851 = vmul.f32 %v850, %v849
          %v852 = vmul.f32 0.5, %v851
          %v853 = vsub.f32 1.5, %v852
          %v854 = vmul.f32 %v849, %v853
          %vm855 = vweird.f32 %v716
          %vm856 = vweird.f32 %v849
          %vm857 = vmor %vm855, %vm856
          %v858 = vsel %vm857, %v849, %v854
          %v859 = vrsqrt.pop %v717
          %v860 = vmul.f32 %v859, %v717
          %v861 = vmul.f32 %v860, %v859
          %v862 = vmul.f32 0.5, %v861
          %v863 = vsub.f32 1.5, %v862
          %v864 = vmul.f32 %v859, %v863
          %vm865 = vweird.f32 %v717
          %vm866 = vweird.f32 %v859
          %vm867 = vmor %vm865, %vm866
          %v868 = vsel %vm867, %v859, %v864
          %v869 = vrsqrt.pop %v718
          %v870 = vmul.f32 %v869, %v718
          %v871 = vmul.f32 %v870, %v869
          %v872 = vmul.f32 0.5, %v871
          %v873 = vsub.f32 1.5, %v872
          %v874 = vmul.f32 %v869, %v873
          %vm875 = vweird.f32 %v718
          %vm876 = vweird.f32 %v869
          %vm877 = vmor %vm875, %vm876
          %v878 = vsel %vm877, %v869, %v874
          %v879 = vmul.f32 %v623, %v728
          %v880 = vmul.f32 %v624, %v738
          %v881 = vmul.f32 %v625, %v748
          %v882 = vmul.f32 %v626, %v758
          %v883 = vmul.f32 %v627, %v768
          %v884 = vmul.f32 %v628, %v778
          %v885 = vmul.f32 %v629, %v788
          %v886 = vmul.f32 %v630, %v798
          %v887 = vmul.f32 %v631, %v808
          %v888 = vmul.f32 %v632, %v818
          %v889 = vmul.f32 %v633, %v828
          %v890 = vmul.f32 %v634, %v838
          %v891 = vmul.f32 %v635, %v848
          %v892 = vmul.f32 %v636, %v858
          %v893 = vmul.f32 %v637, %v868
          %v894 = vmul.f32 %v638, %v878
          %v896 = vperm.slane %v566, 0
          %v898 = vmul.f32 %v879, %v896
          %v899 = vmul.f32 %v880, %v896
          %v900 = vmul.f32 %v881, %v896
          %v901 = vmul.f32 %v882, %v896
          %v902 = vmul.f32 %v883, %v896
          %v903 = vmul.f32 %v884, %v896
          %v904 = vmul.f32 %v885, %v896
          %v905 = vmul.f32 %v886, %v896
          %v906 = vmul.f32 %v887, %v896
          %v907 = vmul.f32 %v888, %v896
          %v908 = vmul.f32 %v889, %v896
          %v909 = vmul.f32 %v890, %v896
          %v910 = vmul.f32 %v891, %v896
          %v911 = vmul.f32 %v892, %v896
          %v912 = vmul.f32 %v893, %v896
          %v913 = vmul.f32 %v894, %v896
          %v915 = vperm.slane %v567, 0
          %v917 = vadd.f32 %v898, %v915
          %v918 = vadd.f32 %v899, %v915
          %v919 = vadd.f32 %v900, %v915
          %v920 = vadd.f32 %v901, %v915
          %v921 = vadd.f32 %v902, %v915
          %v922 = vadd.f32 %v903, %v915
          %v923 = vadd.f32 %v904, %v915
          %v924 = vadd.f32 %v905, %v915
          %v925 = vadd.f32 %v906, %v915
          %v926 = vadd.f32 %v907, %v915
          %v927 = vadd.f32 %v908, %v915
          %v928 = vadd.f32 %v909, %v915
          %v929 = vadd.f32 %v910, %v915
          %v930 = vadd.f32 %v911, %v915
          %v931 = vadd.f32 %v912, %v915
          %v932 = vadd.f32 %v913, %v915
          %v933 = vpack.c.bf16 %v918, %v917
          %v934 = vpack.c.bf16 %v920, %v919
          %v935 = vpack.c.bf16 %v922, %v921
          %v936 = vpack.c.bf16 %v924, %v923
          %v937 = vpack.c.bf16 %v926, %v925
          %v938 = vpack.c.bf16 %v928, %v927
          %v939 = vpack.c.bf16 %v930, %v929
          %v940 = vpack.c.bf16 %v932, %v931
          %v941 = vld [vmem:[#allocation9] sm:$0xff]
          %v942 = vld [vmem:[#allocation9 + $0x8] sm:$0xf]
          %v943 = vld [vmem:[#allocation9 + $0xc] sm:$0xff]
          %v944 = vld [vmem:[#allocation9 + $0x14] sm:$0xf]
          %v945 = vld [vmem:[#allocation9 + $0x18] sm:$0xff]
          %v946 = vld [vmem:[#allocation9 + $0x20] sm:$0xf]
          %v947 = vld [vmem:[#allocation9 + $0x24] sm:$0xff]
          %v948 = vld [vmem:[#allocation9 + $0x2c] sm:$0xf]
          %v949 = vld [vmem:[#allocation9 + $0x30] sm:$0xff]
          %v950 = vld [vmem:[#allocation9 + $0x38] sm:$0xf]
          %v951 = vld [vmem:[#allocation9 + $0x3c] sm:$0xff]
          %v952 = vld [vmem:[#allocation9 + $0x44] sm:$0xf]
          %v953 = vld [vmem:[#allocation9 + $0x48] sm:$0xff]
          %v954 = vld [vmem:[#allocation9 + $0x50] sm:$0xf]
          %v955 = vld [vmem:[#allocation9 + $0x54] sm:$0xff]
          %v956 = vld [vmem:[#allocation9 + $0x5c] sm:$0xf]
          %v957 = vld [vmem:[#allocation9 + $0x60] sm:$0xff]
          %v958 = vld [vmem:[#allocation9 + $0x68] sm:$0xf]
          %v959 = vld [vmem:[#allocation9 + $0x6c] sm:$0xff]
          %v960 = vld [vmem:[#allocation9 + $0x74] sm:$0xf]
          %v961 = vld [vmem:[#allocation9 + $0x78] sm:$0xff]
          %v962 = vld [vmem:[#allocation9 + $0x80] sm:$0xf]
          %v963 = vld [vmem:[#allocation9 + $0x84] sm:$0xff]
          %v964 = vld [vmem:[#allocation9 + $0x8c] sm:$0xf]
          %v965 = vld [vmem:[#allocation9 + $0x90] sm:$0xff]
          %v966 = vld [vmem:[#allocation9 + $0x98] sm:$0xf]
          %v967 = vld [vmem:[#allocation9 + $0x9c] sm:$0xff]
          %v968 = vld [vmem:[#allocation9 + $0xa4] sm:$0xf]
          %v969 = vld [vmem:[#allocation9 + $0xa8] sm:$0xff]
          %v970 = vld [vmem:[#allocation9 + $0xb0] sm:$0xf]
          %v971 = vld [vmem:[#allocation9 + $0xb4] sm:$0xff]
          %v972 = vld [vmem:[#allocation9 + $0xbc] sm:$0xf]
          %v1005 = vunpack.c.l.b16 %v941
          %v1006 = vunpack.c.h.b16 %v941
          %v1007 = vunpack.c.l.b16 %v942
          %v1008 = vunpack.c.l.b16 %v943
          %v1009 = vunpack.c.h.b16 %v943
          %v1010 = vunpack.c.l.b16 %v944
          %v1011 = vunpack.c.l.b16 %v945
          %v1012 = vunpack.c.h.b16 %v945
          %v1013 = vunpack.c.l.b16 %v946
          %v1014 = vunpack.c.l.b16 %v947
          %v1015 = vunpack.c.h.b16 %v947
          %v1016 = vunpack.c.l.b16 %v948
          %v1017 = vunpack.c.l.b16 %v949
          %v1018 = vunpack.c.h.b16 %v949
          %v1019 = vunpack.c.l.b16 %v950
          %v1020 = vunpack.c.l.b16 %v951
          %v1021 = vunpack.c.h.b16 %v951
          %v1022 = vunpack.c.l.b16 %v952
          %v1023 = vunpack.c.l.b16 %v953
          %v1024 = vunpack.c.h.b16 %v953
          %v1025 = vunpack.c.l.b16 %v954
          %v1026 = vunpack.c.l.b16 %v955
          %v1027 = vunpack.c.h.b16 %v955
          %v1028 = vunpack.c.l.b16 %v956
          %v1029 = vunpack.c.l.b16 %v957
          %v1030 = vunpack.c.h.b16 %v957
          %v1031 = vunpack.c.l.b16 %v958
          %v1032 = vunpack.c.l.b16 %v959
          %v1033 = vunpack.c.h.b16 %v959
          %v1034 = vunpack.c.l.b16 %v960
          %v1035 = vunpack.c.l.b16 %v961
          %v1036 = vunpack.c.h.b16 %v961
          %v1037 = vunpack.c.l.b16 %v962
          %v1038 = vunpack.c.l.b16 %v963
          %v1039 = vunpack.c.h.b16 %v963
          %v1040 = vunpack.c.l.b16 %v964
          %v1041 = vunpack.c.l.b16 %v965
          %v1042 = vunpack.c.h.b16 %v965
          %v1043 = vunpack.c.l.b16 %v966
          %v1044 = vunpack.c.l.b16 %v967
          %v1045 = vunpack.c.h.b16 %v967
          %v1046 = vunpack.c.l.b16 %v968
          %v1047 = vunpack.c.l.b16 %v969
          %v1048 = vunpack.c.h.b16 %v969
          %v1049 = vunpack.c.l.b16 %v970
          %v1050 = vunpack.c.l.b16 %v971
          %v1051 = vunpack.c.h.b16 %v971
          %v1052 = vunpack.c.l.b16 %v972
          %v1053 = vpack.c.b16 %v1008, %v1005
          %v1054 = vpack.c.b16 %v1009, %v1006
          %v1055 = vpack.c.b16 %v1010, %v1007
          %v1056 = vpack.c.b16 %v1014, %v1011
          %v1057 = vpack.c.b16 %v1015, %v1012
          %v1058 = vpack.c.b16 %v1016, %v1013
          %v1059 = vpack.c.b16 %v1020, %v1017
          %v1060 = vpack.c.b16 %v1021, %v1018
          %v1061 = vpack.c.b16 %v1022, %v1019
          %v1062 = vpack.c.b16 %v1026, %v1023
          %v1063 = vpack.c.b16 %v1027, %v1024
          %v1064 = vpack.c.b16 %v1028, %v1025
          %v1065 = vpack.c.b16 %v1032, %v1029
          %v1066 = vpack.c.b16 %v1033, %v1030
          %v1067 = vpack.c.b16 %v1034, %v1031
          %v1068 = vpack.c.b16 %v1038, %v1035
          %v1069 = vpack.c.b16 %v1039, %v1036
          %v1070 = vpack.c.b16 %v1040, %v1037
          %v1071 = vpack.c.b16 %v1044, %v1041
          %v1072 = vpack.c.b16 %v1045, %v1042
          %v1073 = vpack.c.b16 %v1046, %v1043
          %v1074 = vpack.c.b16 %v1050, %v1047
          %v1075 = vpack.c.b16 %v1051, %v1048
          %v1076 = vpack.c.b16 %v1052, %v1049
          %1101 = vmatpush.bf16.msra.mxu0 %v1074
          %1102 = vmatpush.bf16.msra.mxu0 %v1071
          %1103 = vmatpush.bf16.msra.mxu0 %v1068
          %1104 = vmatpush.bf16.msra.mxu0 %v1065
          %1105 = vmatpush.bf16.msra.mxu0 %v1062
          %1106 = vmatpush.bf16.msra.mxu0 %v1059
          %1107 = vmatpush.bf16.msra.mxu0 %v1056
          %1108 = vmatpush.bf16.msra.mxu0 %v1053
          %1109 = vmatmul.bf16.gmra.mxu0 %v933
          %v1110 = vpop.f32.mrf.mxu0
          %v1111 = vadd.f32 0.0, %v1110
          %v1112 = vpop.f32.mrf.mxu0
          %v1113 = vadd.f32 0.0, %v1112
          %1114 = vmatmul.bf16.gmra.mxu0 %v934
          %v1115 = vpop.f32.mrf.mxu0
          %v1116 = vadd.f32 0.0, %v1115
          %v1117 = vpop.f32.mrf.mxu0
          %v1118 = vadd.f32 0.0, %v1117
          %1119 = vmatmul.bf16.gmra.mxu0 %v935
          %v1120 = vpop.f32.mrf.mxu0
          %v1121 = vadd.f32 0.0, %v1120
          %v1122 = vpop.f32.mrf.mxu0
          %v1123 = vadd.f32 0.0, %v1122
          %1124 = vmatmul.bf16.gmra.mxu0 %v936
          %v1125 = vpop.f32.mrf.mxu0
          %v1126 = vadd.f32 0.0, %v1125
          %v1127 = vpop.f32.mrf.mxu0
          %v1128 = vadd.f32 0.0, %v1127
          %1129 = vmatmul.bf16.gmra.mxu0 %v937
          %v1130 = vpop.f32.mrf.mxu0
          %v1131 = vadd.f32 0.0, %v1130
          %v1132 = vpop.f32.mrf.mxu0
          %v1133 = vadd.f32 0.0, %v1132
          %1134 = vmatmul.bf16.gmra.mxu0 %v938
          %v1135 = vpop.f32.mrf.mxu0
          %v1136 = vadd.f32 0.0, %v1135
          %v1137 = vpop.f32.mrf.mxu0
          %v1138 = vadd.f32 0.0, %v1137
          %1139 = vmatmul.bf16.gmra.mxu0 %v939
          %v1140 = vpop.f32.mrf.mxu0
          %v1141 = vadd.f32 0.0, %v1140
          %v1142 = vpop.f32.mrf.mxu0
          %v1143 = vadd.f32 0.0, %v1142
          %1144 = vmatmul.bf16.gmra.mxu0 %v940
          %v1145 = vpop.f32.mrf.mxu0
          %v1146 = vadd.f32 0.0, %v1145
          %v1147 = vpop.f32.mrf.mxu0
          %v1148 = vadd.f32 0.0, %v1147
          %1149 = vdwg.mxu0
          %1150 = vmatpush.bf16.msra.mxu0 %v1075
          %1151 = vmatpush.bf16.msra.mxu0 %v1072
          %1152 = vmatpush.bf16.msra.mxu0 %v1069
          %1153 = vmatpush.bf16.msra.mxu0 %v1066
          %1154 = vmatpush.bf16.msra.mxu0 %v1063
          %1155 = vmatpush.bf16.msra.mxu0 %v1060
          %1156 = vmatpush.bf16.msra.mxu0 %v1057
          %1157 = vmatpush.bf16.msra.mxu0 %v1054
          %1158 = vmatmul.bf16.gmra.mxu0 %v933
          %v1159 = vpop.f32.mrf.mxu0
          %v1160 = vadd.f32 0.0, %v1159
          %v1161 = vpop.f32.mrf.mxu0
          %v1162 = vadd.f32 0.0, %v1161
          %1163 = vmatmul.bf16.gmra.mxu0 %v934
          %v1164 = vpop.f32.mrf.mxu0
          %v1165 = vadd.f32 0.0, %v1164
          %v1166 = vpop.f32.mrf.mxu0
          %v1167 = vadd.f32 0.0, %v1166
          %1168 = vmatmul.bf16.gmra.mxu0 %v935
          %v1169 = vpop.f32.mrf.mxu0
          %v1170 = vadd.f32 0.0, %v1169
          %v1171 = vpop.f32.mrf.mxu0
          %v1172 = vadd.f32 0.0, %v1171
          %1173 = vmatmul.bf16.gmra.mxu0 %v936
          %v1174 = vpop.f32.mrf.mxu0
          %v1175 = vadd.f32 0.0, %v1174
          %v1176 = vpop.f32.mrf.mxu0
          %v1177 = vadd.f32 0.0, %v1176
          %1178 = vmatmul.bf16.gmra.mxu0 %v937
          %v1179 = vpop.f32.mrf.mxu0
          %v1180 = vadd.f32 0.0, %v1179
          %v1181 = vpop.f32.mrf.mxu0
          %v1182 = vadd.f32 0.0, %v1181
          %1183 = vmatmul.bf16.gmra.mxu0 %v938
          %v1184 = vpop.f32.mrf.mxu0
          %v1185 = vadd.f32 0.0, %v1184
          %v1186 = vpop.f32.mrf.mxu0
          %v1187 = vadd.f32 0.0, %v1186
          %1188 = vmatmul.bf16.gmra.mxu0 %v939
          %v1189 = vpop.f32.mrf.mxu0
          %v1190 = vadd.f32 0.0, %v1189
          %v1191 = vpop.f32.mrf.mxu0
          %v1192 = vadd.f32 0.0, %v1191
          %1193 = vmatmul.bf16.gmra.mxu0 %v940
          %v1194 = vpop.f32.mrf.mxu0
          %v1195 = vadd.f32 0.0, %v1194
          %v1196 = vpop.f32.mrf.mxu0
          %v1197 = vadd.f32 0.0, %v1196
          %1198 = vdwg.mxu0
          %1199 = vmatpush.bf16.msra.mxu0 %v1076
          %1200 = vmatpush.bf16.msra.mxu0 %v1073
          %1201 = vmatpush.bf16.msra.mxu0 %v1070
          %1202 = vmatpush.bf16.msra.mxu0 %v1067
          %1203 = vmatpush.bf16.msra.mxu0 %v1064
          %1204 = vmatpush.bf16.msra.mxu0 %v1061
          %1205 = vmatpush.bf16.msra.mxu0 %v1058
          %1206 = vmatpush.bf16.msra.mxu0 %v1055
          %1207 = vmatmul.bf16.gmra.mxu0 %v933
          %v1208 = vpop.f32.mrf.mxu0
          %v1209 = vadd.f32 0.0, %v1208
          %v1210 = vpop.f32.mrf.mxu0
          %v1211 = vadd.f32 0.0, %v1210
          %1212 = vmatmul.bf16.gmra.mxu0 %v934
          %v1213 = vpop.f32.mrf.mxu0
          %v1214 = vadd.f32 0.0, %v1213
          %v1215 = vpop.f32.mrf.mxu0
          %v1216 = vadd.f32 0.0, %v1215
          %1217 = vmatmul.bf16.gmra.mxu0 %v935
          %v1218 = vpop.f32.mrf.mxu0
          %v1219 = vadd.f32 0.0, %v1218
          %v1220 = vpop.f32.mrf.mxu0
          %v1221 = vadd.f32 0.0, %v1220
          %1222 = vmatmul.bf16.gmra.mxu0 %v936
          %v1223 = vpop.f32.mrf.mxu0
          %v1224 = vadd.f32 0.0, %v1223
          %v1225 = vpop.f32.mrf.mxu0
          %v1226 = vadd.f32 0.0, %v1225
          %1227 = vmatmul.bf16.gmra.mxu0 %v937
          %v1228 = vpop.f32.mrf.mxu0
          %v1229 = vadd.f32 0.0, %v1228
          %v1230 = vpop.f32.mrf.mxu0
          %v1231 = vadd.f32 0.0, %v1230
          %1232 = vmatmul.bf16.gmra.mxu0 %v938
          %v1233 = vpop.f32.mrf.mxu0
          %v1234 = vadd.f32 0.0, %v1233
          %v1235 = vpop.f32.mrf.mxu0
          %v1236 = vadd.f32 0.0, %v1235
          %1237 = vmatmul.bf16.gmra.mxu0 %v939
          %v1238 = vpop.f32.mrf.mxu0
          %v1239 = vadd.f32 0.0, %v1238
          %v1240 = vpop.f32.mrf.mxu0
          %v1241 = vadd.f32 0.0, %v1240
          %1242 = vmatmul.bf16.gmra.mxu0 %v940
          %v1243 = vpop.f32.mrf.mxu0
          %v1244 = vadd.f32 0.0, %v1243
          %v1245 = vpop.f32.mrf.mxu0
          %v1246 = vadd.f32 0.0, %v1245
          %1247 = vdwg.mxu0
          %v1248 = vpack.c.bf16 %v1160, %v1111
          %v1249 = vpack.c.bf16 %v1209, %v1209
          %v1250 = vpack.c.bf16 %v1162, %v1113
          %v1251 = vpack.c.bf16 %v1211, %v1211
          %v1252 = vpack.c.bf16 %v1165, %v1116
          %v1253 = vpack.c.bf16 %v1214, %v1214
          %v1254 = vpack.c.bf16 %v1167, %v1118
          %v1255 = vpack.c.bf16 %v1216, %v1216
          %v1256 = vpack.c.bf16 %v1170, %v1121
          %v1257 = vpack.c.bf16 %v1219, %v1219
          %v1258 = vpack.c.bf16 %v1172, %v1123
          %v1259 = vpack.c.bf16 %v1221, %v1221
          %v1260 = vpack.c.bf16 %v1175, %v1126
          %v1261 = vpack.c.bf16 %v1224, %v1224
          %v1262 = vpack.c.bf16 %v1177, %v1128
          %v1263 = vpack.c.bf16 %v1226, %v1226
          %v1264 = vpack.c.bf16 %v1180, %v1131
          %v1265 = vpack.c.bf16 %v1229, %v1229
          %v1266 = vpack.c.bf16 %v1182, %v1133
          %v1267 = vpack.c.bf16 %v1231, %v1231
          %v1268 = vpack.c.bf16 %v1185, %v1136
          %v1269 = vpack.c.bf16 %v1234, %v1234
          %v1270 = vpack.c.bf16 %v1187, %v1138
          %v1271 = vpack.c.bf16 %v1236, %v1236
          %v1272 = vpack.c.bf16 %v1190, %v1141
          %v1273 = vpack.c.bf16 %v1239, %v1239
          %v1274 = vpack.c.bf16 %v1192, %v1143
          %v1275 = vpack.c.bf16 %v1241, %v1241
          %v1276 = vpack.c.bf16 %v1195, %v1146
          %v1277 = vpack.c.bf16 %v1244, %v1244
          %v1278 = vpack.c.bf16 %v1197, %v1148
          %v1279 = vpack.c.bf16 %v1246, %v1246
          %1296 = vrot.lane.b32.xlu0 %v1248, 96
          %v1297 = vpop.permute.xlu0 %1296
          %1298 = vrot.lane.b32.xlu0 %v1250, 96
          %v1299 = vpop.permute.xlu0 %1298
          %1300 = vrot.lane.b32.xlu0 %v1252, 96
          %v1301 = vpop.permute.xlu0 %1300
          %1302 = vrot.lane.b32.xlu0 %v1254, 96
          %v1303 = vpop.permute.xlu0 %1302
          %1304 = vrot.lane.b32.xlu0 %v1256, 96
          %v1305 = vpop.permute.xlu0 %1304
          %1306 = vrot.lane.b32.xlu0 %v1258, 96
          %v1307 = vpop.permute.xlu0 %1306
          %1308 = vrot.lane.b32.xlu0 %v1260, 96
          %v1309 = vpop.permute.xlu0 %1308
          %1310 = vrot.lane.b32.xlu0 %v1262, 96
          %v1311 = vpop.permute.xlu0 %1310
          %1312 = vrot.lane.b32.xlu0 %v1264, 96
          %v1313 = vpop.permute.xlu0 %1312
          %1314 = vrot.lane.b32.xlu0 %v1266, 96
          %v1315 = vpop.permute.xlu0 %1314
          %1316 = vrot.lane.b32.xlu0 %v1268, 96
          %v1317 = vpop.permute.xlu0 %1316
          %1318 = vrot.lane.b32.xlu0 %v1270, 96
          %v1319 = vpop.permute.xlu0 %1318
          %1320 = vrot.lane.b32.xlu0 %v1272, 96
          %v1321 = vpop.permute.xlu0 %1320
          %1322 = vrot.lane.b32.xlu0 %v1274, 96
          %v1323 = vpop.permute.xlu0 %1322
          %1324 = vrot.lane.b32.xlu0 %v1276, 96
          %v1325 = vpop.permute.xlu0 %1324
          %1326 = vrot.lane.b32.xlu0 %v1278, 96
          %v1327 = vpop.permute.xlu0 %1326
          %1328 = vrot.lane.b32.xlu0 %v1248, 64
          %v1329 = vpop.permute.xlu0 %1328
          %1330 = vrot.lane.b32.xlu0 %v1250, 64
          %v1331 = vpop.permute.xlu0 %1330
          %1332 = vrot.lane.b32.xlu0 %v1252, 64
          %v1333 = vpop.permute.xlu0 %1332
          %1334 = vrot.lane.b32.xlu0 %v1254, 64
          %v1335 = vpop.permute.xlu0 %1334
          %1336 = vrot.lane.b32.xlu0 %v1256, 64
          %v1337 = vpop.permute.xlu0 %1336
          %1338 = vrot.lane.b32.xlu0 %v1258, 64
          %v1339 = vpop.permute.xlu0 %1338
          %1340 = vrot.lane.b32.xlu0 %v1260, 64
          %v1341 = vpop.permute.xlu0 %1340
          %1342 = vrot.lane.b32.xlu0 %v1262, 64
          %v1343 = vpop.permute.xlu0 %1342
          %1344 = vrot.lane.b32.xlu0 %v1264, 64
          %v1345 = vpop.permute.xlu0 %1344
          %1346 = vrot.lane.b32.xlu0 %v1266, 64
          %v1347 = vpop.permute.xlu0 %1346
          %1348 = vrot.lane.b32.xlu0 %v1268, 64
          %v1349 = vpop.permute.xlu0 %1348
          %1350 = vrot.lane.b32.xlu0 %v1270, 64
          %v1351 = vpop.permute.xlu0 %1350
          %1352 = vrot.lane.b32.xlu0 %v1272, 64
          %v1353 = vpop.permute.xlu0 %1352
          %1354 = vrot.lane.b32.xlu0 %v1274, 64
          %v1355 = vpop.permute.xlu0 %1354
          %1356 = vrot.lane.b32.xlu0 %v1276, 64
          %v1357 = vpop.permute.xlu0 %1356
          %1358 = vrot.lane.b32.xlu0 %v1278, 64
          %v1359 = vpop.permute.xlu0 %1358
          %1360 = vrot.lane.b32.xlu0 %v1248, 32
          %v1361 = vpop.permute.xlu0 %1360
          %1362 = vrot.lane.b32.xlu0 %v1250, 32
          %v1363 = vpop.permute.xlu0 %1362
          %1364 = vrot.lane.b32.xlu0 %v1252, 32
          %v1365 = vpop.permute.xlu0 %1364
          %1366 = vrot.lane.b32.xlu0 %v1254, 32
          %v1367 = vpop.permute.xlu0 %1366
          %1368 = vrot.lane.b32.xlu0 %v1256, 32
          %v1369 = vpop.permute.xlu0 %1368
          %1370 = vrot.lane.b32.xlu0 %v1258, 32
          %v1371 = vpop.permute.xlu0 %1370
          %1372 = vrot.lane.b32.xlu0 %v1260, 32
          %v1373 = vpop.permute.xlu0 %1372
          %1374 = vrot.lane.b32.xlu0 %v1262, 32
          %v1375 = vpop.permute.xlu0 %1374
          %1376 = vrot.lane.b32.xlu0 %v1264, 32
          %v1377 = vpop.permute.xlu0 %1376
          %1378 = vrot.lane.b32.xlu0 %v1266, 32
          %v1379 = vpop.permute.xlu0 %1378
          %1380 = vrot.lane.b32.xlu0 %v1268, 32
          %v1381 = vpop.permute.xlu0 %1380
          %1382 = vrot.lane.b32.xlu0 %v1270, 32
          %v1383 = vpop.permute.xlu0 %1382
          %1384 = vrot.lane.b32.xlu0 %v1272, 32
          %v1385 = vpop.permute.xlu0 %1384
          %1386 = vrot.lane.b32.xlu0 %v1274, 32
          %v1387 = vpop.permute.xlu0 %1386
          %1388 = vrot.lane.b32.xlu0 %v1276, 32
          %v1389 = vpop.permute.xlu0 %1388
          %1390 = vrot.lane.b32.xlu0 %v1278, 32
          %v1391 = vpop.permute.xlu0 %1390
          %v1392 = vrot.slane %v1248, 4
          %v1393 = vrot.slane %v1250, 4
          %v1394 = vrot.slane %v1252, 4
          %v1395 = vrot.slane %v1254, 4
          %v1396 = vrot.slane %v1256, 4
          %v1397 = vrot.slane %v1258, 4
          %v1398 = vrot.slane %v1260, 4
          %v1399 = vrot.slane %v1262, 4
          %v1400 = vrot.slane %v1264, 4
          %v1401 = vrot.slane %v1266, 4
          %v1402 = vrot.slane %v1268, 4
          %v1403 = vrot.slane %v1270, 4
          %v1404 = vrot.slane %v1272, 4
          %v1405 = vrot.slane %v1274, 4
          %v1406 = vrot.slane %v1276, 4
          %v1407 = vrot.slane %v1278, 4
          %v1408 = vrot.slane %v1297, 4
          %v1409 = vrot.slane %v1299, 4
          %v1410 = vrot.slane %v1301, 4
          %v1411 = vrot.slane %v1303, 4
          %v1412 = vrot.slane %v1305, 4
          %v1413 = vrot.slane %v1307, 4
          %v1414 = vrot.slane %v1309, 4
          %v1415 = vrot.slane %v1311, 4
          %v1416 = vrot.slane %v1313, 4
          %v1417 = vrot.slane %v1315, 4
          %v1418 = vrot.slane %v1317, 4
          %v1419 = vrot.slane %v1319, 4
          %v1420 = vrot.slane %v1321, 4
          %v1421 = vrot.slane %v1323, 4
          %v1422 = vrot.slane %v1325, 4
          %v1423 = vrot.slane %v1327, 4
          %v1424 = vrot.slane %v1329, 4
          %v1425 = vrot.slane %v1331, 4
          %v1426 = vrot.slane %v1333, 4
          %v1427 = vrot.slane %v1335, 4
          %v1428 = vrot.slane %v1337, 4
          %v1429 = vrot.slane %v1339, 4
          %v1430 = vrot.slane %v1341, 4
          %v1431 = vrot.slane %v1343, 4
          %v1432 = vrot.slane %v1345, 4
          %v1433 = vrot.slane %v1347, 4
          %v1434 = vrot.slane %v1349, 4
          %v1435 = vrot.slane %v1351, 4
          %v1436 = vrot.slane %v1353, 4
          %v1437 = vrot.slane %v1355, 4
          %v1438 = vrot.slane %v1357, 4
          %v1439 = vrot.slane %v1359, 4
          %v1440 = vrot.slane %v1361, 4
          %v1441 = vrot.slane %v1363, 4
          %v1442 = vrot.slane %v1365, 4
          %v1443 = vrot.slane %v1367, 4
          %v1444 = vrot.slane %v1369, 4
          %v1445 = vrot.slane %v1371, 4
          %v1446 = vrot.slane %v1373, 4
          %v1447 = vrot.slane %v1375, 4
          %v1448 = vrot.slane %v1377, 4
          %v1449 = vrot.slane %v1379, 4
          %v1450 = vrot.slane %v1381, 4
          %v1451 = vrot.slane %v1383, 4
          %v1452 = vrot.slane %v1385, 4
          %v1453 = vrot.slane %v1387, 4
          %v1454 = vrot.slane %v1389, 4
          %v1455 = vrot.slane %v1391, 4
          %1472 = vrot.lane.b32.xlu0 %v1249, 96
          %v1473 = vpop.permute.xlu0 %1472
          %1474 = vrot.lane.b32.xlu0 %v1251, 96
          %v1475 = vpop.permute.xlu0 %1474
          %1476 = vrot.lane.b32.xlu0 %v1253, 96
          %v1477 = vpop.permute.xlu0 %1476
          %1478 = vrot.lane.b32.xlu0 %v1255, 96
          %v1479 = vpop.permute.xlu0 %1478
          %1480 = vrot.lane.b32.xlu0 %v1257, 96
          %v1481 = vpop.permute.xlu0 %1480
          %1482 = vrot.lane.b32.xlu0 %v1259, 96
          %v1483 = vpop.permute.xlu0 %1482
          %1484 = vrot.lane.b32.xlu0 %v1261, 96
          %v1485 = vpop.permute.xlu0 %1484
          %1486 = vrot.lane.b32.xlu0 %v1263, 96
          %v1487 = vpop.permute.xlu0 %1486
          %1488 = vrot.lane.b32.xlu0 %v1265, 96
          %v1489 = vpop.permute.xlu0 %1488
          %1490 = vrot.lane.b32.xlu0 %v1267, 96
          %v1491 = vpop.permute.xlu0 %1490
          %1492 = vrot.lane.b32.xlu0 %v1269, 96
          %v1493 = vpop.permute.xlu0 %1492
          %1494 = vrot.lane.b32.xlu0 %v1271, 96
          %v1495 = vpop.permute.xlu0 %1494
          %1496 = vrot.lane.b32.xlu0 %v1273, 96
          %v1497 = vpop.permute.xlu0 %1496
          %1498 = vrot.lane.b32.xlu0 %v1275, 96
          %v1499 = vpop.permute.xlu0 %1498
          %1500 = vrot.lane.b32.xlu0 %v1277, 96
          %v1501 = vpop.permute.xlu0 %1500
          %1502 = vrot.lane.b32.xlu0 %v1279, 96
          %v1503 = vpop.permute.xlu0 %1502
          %1504 = vrot.lane.b32.xlu0 %v1249, 64
          %v1505 = vpop.permute.xlu0 %1504
          %1506 = vrot.lane.b32.xlu0 %v1251, 64
          %v1507 = vpop.permute.xlu0 %1506
          %1508 = vrot.lane.b32.xlu0 %v1253, 64
          %v1509 = vpop.permute.xlu0 %1508
          %1510 = vrot.lane.b32.xlu0 %v1255, 64
          %v1511 = vpop.permute.xlu0 %1510
          %1512 = vrot.lane.b32.xlu0 %v1257, 64
          %v1513 = vpop.permute.xlu0 %1512
          %1514 = vrot.lane.b32.xlu0 %v1259, 64
          %v1515 = vpop.permute.xlu0 %1514
          %1516 = vrot.lane.b32.xlu0 %v1261, 64
          %v1517 = vpop.permute.xlu0 %1516
          %1518 = vrot.lane.b32.xlu0 %v1263, 64
          %v1519 = vpop.permute.xlu0 %1518
          %1520 = vrot.lane.b32.xlu0 %v1265, 64
          %v1521 = vpop.permute.xlu0 %1520
          %1522 = vrot.lane.b32.xlu0 %v1267, 64
          %v1523 = vpop.permute.xlu0 %1522
          %1524 = vrot.lane.b32.xlu0 %v1269, 64
          %v1525 = vpop.permute.xlu0 %1524
          %1526 = vrot.lane.b32.xlu0 %v1271, 64
          %v1527 = vpop.permute.xlu0 %1526
          %1528 = vrot.lane.b32.xlu0 %v1273, 64
          %v1529 = vpop.permute.xlu0 %1528
          %1530 = vrot.lane.b32.xlu0 %v1275, 64
          %v1531 = vpop.permute.xlu0 %1530
          %1532 = vrot.lane.b32.xlu0 %v1277, 64
          %v1533 = vpop.permute.xlu0 %1532
          %1534 = vrot.lane.b32.xlu0 %v1279, 64
          %v1535 = vpop.permute.xlu0 %1534
          %1536 = vrot.lane.b32.xlu0 %v1249, 32
          %v1537 = vpop.permute.xlu0 %1536
          %1538 = vrot.lane.b32.xlu0 %v1251, 32
          %v1539 = vpop.permute.xlu0 %1538
          %1540 = vrot.lane.b32.xlu0 %v1253, 32
          %v1541 = vpop.permute.xlu0 %1540
          %1542 = vrot.lane.b32.xlu0 %v1255, 32
          %v1543 = vpop.permute.xlu0 %1542
          %1544 = vrot.lane.b32.xlu0 %v1257, 32
          %v1545 = vpop.permute.xlu0 %1544
          %1546 = vrot.lane.b32.xlu0 %v1259, 32
          %v1547 = vpop.permute.xlu0 %1546
          %1548 = vrot.lane.b32.xlu0 %v1261, 32
          %v1549 = vpop.permute.xlu0 %1548
          %1550 = vrot.lane.b32.xlu0 %v1263, 32
          %v1551 = vpop.permute.xlu0 %1550
          %1552 = vrot.lane.b32.xlu0 %v1265, 32
          %v1553 = vpop.permute.xlu0 %1552
          %1554 = vrot.lane.b32.xlu0 %v1267, 32
          %v1555 = vpop.permute.xlu0 %1554
          %1556 = vrot.lane.b32.xlu0 %v1269, 32
          %v1557 = vpop.permute.xlu0 %1556
          %1558 = vrot.lane.b32.xlu0 %v1271, 32
          %v1559 = vpop.permute.xlu0 %1558
          %1560 = vrot.lane.b32.xlu0 %v1273, 32
          %v1561 = vpop.permute.xlu0 %1560
          %1562 = vrot.lane.b32.xlu0 %v1275, 32
          %v1563 = vpop.permute.xlu0 %1562
          %1564 = vrot.lane.b32.xlu0 %v1277, 32
          %v1565 = vpop.permute.xlu0 %1564
          %1566 = vrot.lane.b32.xlu0 %v1279, 32
          %v1567 = vpop.permute.xlu0 %1566
          %v1568 = vunpack.c.l.b16 %v1248
          %v1569 = vunpack.c.l.b16 %v1250
          %v1570 = vunpack.c.l.b16 %v1252
          %v1571 = vunpack.c.l.b16 %v1254
          %v1572 = vunpack.c.l.b16 %v1256
          %v1573 = vunpack.c.l.b16 %v1258
          %v1574 = vunpack.c.l.b16 %v1260
          %v1575 = vunpack.c.l.b16 %v1262
          %v1576 = vunpack.c.l.b16 %v1264
          %v1577 = vunpack.c.l.b16 %v1266
          %v1578 = vunpack.c.l.b16 %v1268
          %v1579 = vunpack.c.l.b16 %v1270
          %v1580 = vunpack.c.l.b16 %v1272
          %v1581 = vunpack.c.l.b16 %v1274
          %v1582 = vunpack.c.l.b16 %v1276
          %v1583 = vunpack.c.l.b16 %v1278
          %v1584 = vpack.c.b16 %v1569, %v1568
          %v1585 = vpack.c.b16 %v1571, %v1570
          %v1586 = vpack.c.b16 %v1573, %v1572
          %v1587 = vpack.c.b16 %v1575, %v1574
          %v1588 = vpack.c.b16 %v1577, %v1576
          %v1589 = vpack.c.b16 %v1579, %v1578
          %v1590 = vpack.c.b16 %v1581, %v1580
          %v1591 = vpack.c.b16 %v1583, %v1582
          %v1592 = vunpack.c.l.b16 %v1392
          %v1593 = vunpack.c.l.b16 %v1393
          %v1594 = vunpack.c.l.b16 %v1394
          %v1595 = vunpack.c.l.b16 %v1395
          %v1596 = vunpack.c.l.b16 %v1396
          %v1597 = vunpack.c.l.b16 %v1397
          %v1598 = vunpack.c.l.b16 %v1398
          %v1599 = vunpack.c.l.b16 %v1399
          %v1600 = vunpack.c.l.b16 %v1400
          %v1601 = vunpack.c.l.b16 %v1401
          %v1602 = vunpack.c.l.b16 %v1402
          %v1603 = vunpack.c.l.b16 %v1403
          %v1604 = vunpack.c.l.b16 %v1404
          %v1605 = vunpack.c.l.b16 %v1405
          %v1606 = vunpack.c.l.b16 %v1406
          %v1607 = vunpack.c.l.b16 %v1407
          %v1608 = vpack.c.b16 %v1593, %v1592
          %v1609 = vpack.c.b16 %v1595, %v1594
          %v1610 = vpack.c.b16 %v1597, %v1596
          %v1611 = vpack.c.b16 %v1599, %v1598
          %v1612 = vpack.c.b16 %v1601, %v1600
          %v1613 = vpack.c.b16 %v1603, %v1602
          %v1614 = vpack.c.b16 %v1605, %v1604
          %v1615 = vpack.c.b16 %v1607, %v1606
          %vm1616 = vcmask 261120
          %v1618 = vsel %vm1616, %v1584, 0
          %v1621 = vsel %vm1616, %v1585, 0
          %v1624 = vsel %vm1616, %v1586, 0
          %v1627 = vsel %vm1616, %v1587, 0
          %v1630 = vsel %vm1616, %v1588, 0
          %v1633 = vsel %vm1616, %v1589, 0
          %v1636 = vsel %vm1616, %v1590, 0
          %v1639 = vsel %vm1616, %v1591, 0
          %v1642 = vsel %vm1616, %v1608, 0
          %v1645 = vsel %vm1616, %v1609, 0
          %v1648 = vsel %vm1616, %v1610, 0
          %v1651 = vsel %vm1616, %v1611, 0
          %v1654 = vsel %vm1616, %v1612, 0
          %v1657 = vsel %vm1616, %v1613, 0
          %v1660 = vsel %vm1616, %v1614, 0
          %v1663 = vsel %vm1616, %v1615, 0
          %1665 = vmatpush.bf16.xpose.msra.mxu0 %v1663
          %1666 = vmatpush.bf16.xpose.msra.mxu0 %v1660
          %1667 = vmatpush.bf16.xpose.msra.mxu0 %v1657
          %1668 = vmatpush.bf16.xpose.msra.mxu0 %v1654
          %1669 = vmatpush.bf16.xpose.msra.mxu0 %v1651
          %1670 = vmatpush.bf16.xpose.msra.mxu0 %v1648
          %1671 = vmatpush.bf16.xpose.msra.mxu0 %v1645
          %1672 = vmatpush.bf16.xpose.msra.mxu0 %v1642
          %1673 = vmatmul.bf16.gmra.mxu0 %v1618
          %v1674 = vpop.f32.mrf.mxu0
          %v1675 = vadd.f32 0.0, %v1674
          %v1676 = vpop.f32.mrf.mxu0
          %v1677 = vadd.f32 0.0, %v1676
          %1678 = vmatmul.bf16.gmra.mxu0 %v1621
          %v1679 = vpop.f32.mrf.mxu0
          %v1680 = vadd.f32 0.0, %v1679
          %v1681 = vpop.f32.mrf.mxu0
          %v1682 = vadd.f32 0.0, %v1681
          %1683 = vmatmul.bf16.gmra.mxu0 %v1624
          %v1684 = vpop.f32.mrf.mxu0
          %v1685 = vadd.f32 0.0, %v1684
          %v1686 = vpop.f32.mrf.mxu0
          %v1687 = vadd.f32 0.0, %v1686
          %1688 = vmatmul.bf16.gmra.mxu0 %v1627
          %v1689 = vpop.f32.mrf.mxu0
          %v1690 = vadd.f32 0.0, %v1689
          %v1691 = vpop.f32.mrf.mxu0
          %v1692 = vadd.f32 0.0, %v1691
          %1693 = vmatmul.bf16.gmra.mxu0 %v1630
          %v1694 = vpop.f32.mrf.mxu0
          %v1695 = vadd.f32 0.0, %v1694
          %v1696 = vpop.f32.mrf.mxu0
          %v1697 = vadd.f32 0.0, %v1696
          %1698 = vmatmul.bf16.gmra.mxu0 %v1633
          %v1699 = vpop.f32.mrf.mxu0
          %v1700 = vadd.f32 0.0, %v1699
          %v1701 = vpop.f32.mrf.mxu0
          %v1702 = vadd.f32 0.0, %v1701
          %1703 = vmatmul.bf16.gmra.mxu0 %v1636
          %v1704 = vpop.f32.mrf.mxu0
          %v1705 = vadd.f32 0.0, %v1704
          %v1706 = vpop.f32.mrf.mxu0
          %v1707 = vadd.f32 0.0, %v1706
          %1708 = vmatmul.bf16.gmra.mxu0 %v1639
          %v1709 = vpop.f32.mrf.mxu0
          %v1710 = vadd.f32 0.0, %v1709
          %v1711 = vpop.f32.mrf.mxu0
          %v1712 = vadd.f32 0.0, %v1711
          %1713 = vdwg.mxu0
          %v1714 = vunpack.c.l.b16 %v1297
          %v1715 = vunpack.c.l.b16 %v1299
          %v1716 = vunpack.c.l.b16 %v1301
          %v1717 = vunpack.c.l.b16 %v1303
          %v1718 = vunpack.c.l.b16 %v1305
          %v1719 = vunpack.c.l.b16 %v1307
          %v1720 = vunpack.c.l.b16 %v1309
          %v1721 = vunpack.c.l.b16 %v1311
          %v1722 = vunpack.c.l.b16 %v1313
          %v1723 = vunpack.c.l.b16 %v1315
          %v1724 = vunpack.c.l.b16 %v1317
          %v1725 = vunpack.c.l.b16 %v1319
          %v1726 = vunpack.c.l.b16 %v1321
          %v1727 = vunpack.c.l.b16 %v1323
          %v1728 = vunpack.c.l.b16 %v1325
          %v1729 = vunpack.c.l.b16 %v1327
          %v1730 = vpack.c.b16 %v1715, %v1714
          %v1731 = vpack.c.b16 %v1717, %v1716
          %v1732 = vpack.c.b16 %v1719, %v1718
          %v1733 = vpack.c.b16 %v1721, %v1720
          %v1734 = vpack.c.b16 %v1723, %v1722
          %v1735 = vpack.c.b16 %v1725, %v1724
          %v1736 = vpack.c.b16 %v1727, %v1726
          %v1737 = vpack.c.b16 %v1729, %v1728
          %v1738 = vunpack.c.l.b16 %v1408
          %v1739 = vunpack.c.l.b16 %v1409
          %v1740 = vunpack.c.l.b16 %v1410
          %v1741 = vunpack.c.l.b16 %v1411
          %v1742 = vunpack.c.l.b16 %v1412
          %v1743 = vunpack.c.l.b16 %v1413
          %v1744 = vunpack.c.l.b16 %v1414
          %v1745 = vunpack.c.l.b16 %v1415
          %v1746 = vunpack.c.l.b16 %v1416
          %v1747 = vunpack.c.l.b16 %v1417
          %v1748 = vunpack.c.l.b16 %v1418
          %v1749 = vunpack.c.l.b16 %v1419
          %v1750 = vunpack.c.l.b16 %v1420
          %v1751 = vunpack.c.l.b16 %v1421
          %v1752 = vunpack.c.l.b16 %v1422
          %v1753 = vunpack.c.l.b16 %v1423
          %v1754 = vpack.c.b16 %v1739, %v1738
          %v1755 = vpack.c.b16 %v1741, %v1740
          %v1756 = vpack.c.b16 %v1743, %v1742
          %v1757 = vpack.c.b16 %v1745, %v1744
          %v1758 = vpack.c.b16 %v1747, %v1746
          %v1759 = vpack.c.b16 %v1749, %v1748
          %v1760 = vpack.c.b16 %v1751, %v1750
          %v1761 = vpack.c.b16 %v1753, %v1752
          %v1763 = vsel %vm1616, %v1730, 0
          %v1766 = vsel %vm1616, %v1731, 0
          %v1769 = vsel %vm1616, %v1732, 0
          %v1772 = vsel %vm1616, %v1733, 0
          %v1775 = vsel %vm1616, %v1734, 0
          %v1778 = vsel %vm1616, %v1735, 0
          %v1781 = vsel %vm1616, %v1736, 0
          %v1784 = vsel %vm1616, %v1737, 0
          %v1787 = vsel %vm1616, %v1754, 0
          %v1790 = vsel %vm1616, %v1755, 0
          %v1793 = vsel %vm1616, %v1756, 0
          %v1796 = vsel %vm1616, %v1757, 0
          %v1799 = vsel %vm1616, %v1758, 0
          %v1802 = vsel %vm1616, %v1759, 0
          %v1805 = vsel %vm1616, %v1760, 0
          %v1808 = vsel %vm1616, %v1761, 0
          %1810 = vmatpush.bf16.xpose.msra.mxu0 %v1808
          %1811 = vmatpush.bf16.xpose.msra.mxu0 %v1805
          %1812 = vmatpush.bf16.xpose.msra.mxu0 %v1802
          %1813 = vmatpush.bf16.xpose.msra.mxu0 %v1799
          %1814 = vmatpush.bf16.xpose.msra.mxu0 %v1796
          %1815 = vmatpush.bf16.xpose.msra.mxu0 %v1793
          %1816 = vmatpush.bf16.xpose.msra.mxu0 %v1790
          %1817 = vmatpush.bf16.xpose.msra.mxu0 %v1787
          %1818 = vmatmul.bf16.gmra.mxu0 %v1763
          %v1819 = vpop.f32.mrf.mxu0
          %v1820 = vadd.f32 0.0, %v1819
          %v1821 = vpop.f32.mrf.mxu0
          %v1822 = vadd.f32 0.0, %v1821
          %1823 = vmatmul.bf16.gmra.mxu0 %v1766
          %v1824 = vpop.f32.mrf.mxu0
          %v1825 = vadd.f32 0.0, %v1824
          %v1826 = vpop.f32.mrf.mxu0
          %v1827 = vadd.f32 0.0, %v1826
          %1828 = vmatmul.bf16.gmra.mxu0 %v1769
          %v1829 = vpop.f32.mrf.mxu0
          %v1830 = vadd.f32 0.0, %v1829
          %v1831 = vpop.f32.mrf.mxu0
          %v1832 = vadd.f32 0.0, %v1831
          %1833 = vmatmul.bf16.gmra.mxu0 %v1772
          %v1834 = vpop.f32.mrf.mxu0
          %v1835 = vadd.f32 0.0, %v1834
          %v1836 = vpop.f32.mrf.mxu0
          %v1837 = vadd.f32 0.0, %v1836
          %1838 = vmatmul.bf16.gmra.mxu0 %v1775
          %v1839 = vpop.f32.mrf.mxu0
          %v1840 = vadd.f32 0.0, %v1839
          %v1841 = vpop.f32.mrf.mxu0
          %v1842 = vadd.f32 0.0, %v1841
          %1843 = vmatmul.bf16.gmra.mxu0 %v1778
          %v1844 = vpop.f32.mrf.mxu0
          %v1845 = vadd.f32 0.0, %v1844
          %v1846 = vpop.f32.mrf.mxu0
          %v1847 = vadd.f32 0.0, %v1846
          %1848 = vmatmul.bf16.gmra.mxu0 %v1781
          %v1849 = vpop.f32.mrf.mxu0
          %v1850 = vadd.f32 0.0, %v1849
          %v1851 = vpop.f32.mrf.mxu0
          %v1852 = vadd.f32 0.0, %v1851
          %1853 = vmatmul.bf16.gmra.mxu0 %v1784
          %v1854 = vpop.f32.mrf.mxu0
          %v1855 = vadd.f32 0.0, %v1854
          %v1856 = vpop.f32.mrf.mxu0
          %v1857 = vadd.f32 0.0, %v1856
          %1858 = vdwg.mxu0
          %v1859 = vunpack.c.l.b16 %v1329
          %v1860 = vunpack.c.l.b16 %v1331
          %v1861 = vunpack.c.l.b16 %v1333
          %v1862 = vunpack.c.l.b16 %v1335
          %v1863 = vunpack.c.l.b16 %v1337
          %v1864 = vunpack.c.l.b16 %v1339
          %v1865 = vunpack.c.l.b16 %v1341
          %v1866 = vunpack.c.l.b16 %v1343
          %v1867 = vunpack.c.l.b16 %v1345
          %v1868 = vunpack.c.l.b16 %v1347
          %v1869 = vunpack.c.l.b16 %v1349
          %v1870 = vunpack.c.l.b16 %v1351
          %v1871 = vunpack.c.l.b16 %v1353
          %v1872 = vunpack.c.l.b16 %v1355
          %v1873 = vunpack.c.l.b16 %v1357
          %v1874 = vunpack.c.l.b16 %v1359
          %v1875 = vpack.c.b16 %v1860, %v1859
          %v1876 = vpack.c.b16 %v1862, %v1861
          %v1877 = vpack.c.b16 %v1864, %v1863
          %v1878 = vpack.c.b16 %v1866, %v1865
          %v1879 = vpack.c.b16 %v1868, %v1867
          %v1880 = vpack.c.b16 %v1870, %v1869
          %v1881 = vpack.c.b16 %v1872, %v1871
          %v1882 = vpack.c.b16 %v1874, %v1873
          %v1883 = vunpack.c.l.b16 %v1424
          %v1884 = vunpack.c.l.b16 %v1425
          %v1885 = vunpack.c.l.b16 %v1426
          %v1886 = vunpack.c.l.b16 %v1427
          %v1887 = vunpack.c.l.b16 %v1428
          %v1888 = vunpack.c.l.b16 %v1429
          %v1889 = vunpack.c.l.b16 %v1430
          %v1890 = vunpack.c.l.b16 %v1431
          %v1891 = vunpack.c.l.b16 %v1432
          %v1892 = vunpack.c.l.b16 %v1433
          %v1893 = vunpack.c.l.b16 %v1434
          %v1894 = vunpack.c.l.b16 %v1435
          %v1895 = vunpack.c.l.b16 %v1436
          %v1896 = vunpack.c.l.b16 %v1437
          %v1897 = vunpack.c.l.b16 %v1438
          %v1898 = vunpack.c.l.b16 %v1439
          %v1899 = vpack.c.b16 %v1884, %v1883
          %v1900 = vpack.c.b16 %v1886, %v1885
          %v1901 = vpack.c.b16 %v1888, %v1887
          %v1902 = vpack.c.b16 %v1890, %v1889
          %v1903 = vpack.c.b16 %v1892, %v1891
          %v1904 = vpack.c.b16 %v1894, %v1893
          %v1905 = vpack.c.b16 %v1896, %v1895
          %v1906 = vpack.c.b16 %v1898, %v1897
          %v1908 = vsel %vm1616, %v1875, 0
          %v1911 = vsel %vm1616, %v1876, 0
          %v1914 = vsel %vm1616, %v1877, 0
          %v1917 = vsel %vm1616, %v1878, 0
          %v1920 = vsel %vm1616, %v1879, 0
          %v1923 = vsel %vm1616, %v1880, 0
          %v1926 = vsel %vm1616, %v1881, 0
          %v1929 = vsel %vm1616, %v1882, 0
          %v1932 = vsel %vm1616, %v1899, 0
          %v1935 = vsel %vm1616, %v1900, 0
          %v1938 = vsel %vm1616, %v1901, 0
          %v1941 = vsel %vm1616, %v1902, 0
          %v1944 = vsel %vm1616, %v1903, 0
          %v1947 = vsel %vm1616, %v1904, 0
          %v1950 = vsel %vm1616, %v1905, 0
          %v1953 = vsel %vm1616, %v1906, 0
          %1955 = vmatpush.bf16.xpose.msra.mxu0 %v1953
          %1956 = vmatpush.bf16.xpose.msra.mxu0 %v1950
          %1957 = vmatpush.bf16.xpose.msra.mxu0 %v1947
          %1958 = vmatpush.bf16.xpose.msra.mxu0 %v1944
          %1959 = vmatpush.bf16.xpose.msra.mxu0 %v1941
          %1960 = vmatpush.bf16.xpose.msra.mxu0 %v1938
          %1961 = vmatpush.bf16.xpose.msra.mxu0 %v1935
          %1962 = vmatpush.bf16.xpose.msra.mxu0 %v1932
          %1963 = vmatmul.bf16.gmra.mxu0 %v1908
          %v1964 = vpop.f32.mrf.mxu0
          %v1965 = vadd.f32 0.0, %v1964
          %v1966 = vpop.f32.mrf.mxu0
          %v1967 = vadd.f32 0.0, %v1966
          %1968 = vmatmul.bf16.gmra.mxu0 %v1911
          %v1969 = vpop.f32.mrf.mxu0
          %v1970 = vadd.f32 0.0, %v1969
          %v1971 = vpop.f32.mrf.mxu0
          %v1972 = vadd.f32 0.0, %v1971
          %1973 = vmatmul.bf16.gmra.mxu0 %v1914
          %v1974 = vpop.f32.mrf.mxu0
          %v1975 = vadd.f32 0.0, %v1974
          %v1976 = vpop.f32.mrf.mxu0
          %v1977 = vadd.f32 0.0, %v1976
          %1978 = vmatmul.bf16.gmra.mxu0 %v1917
          %v1979 = vpop.f32.mrf.mxu0
          %v1980 = vadd.f32 0.0, %v1979
          %v1981 = vpop.f32.mrf.mxu0
          %v1982 = vadd.f32 0.0, %v1981
          %1983 = vmatmul.bf16.gmra.mxu0 %v1920
          %v1984 = vpop.f32.mrf.mxu0
          %v1985 = vadd.f32 0.0, %v1984
          %v1986 = vpop.f32.mrf.mxu0
          %v1987 = vadd.f32 0.0, %v1986
          %1988 = vmatmul.bf16.gmra.mxu0 %v1923
          %v1989 = vpop.f32.mrf.mxu0
          %v1990 = vadd.f32 0.0, %v1989
          %v1991 = vpop.f32.mrf.mxu0
          %v1992 = vadd.f32 0.0, %v1991
          %1993 = vmatmul.bf16.gmra.mxu0 %v1926
          %v1994 = vpop.f32.mrf.mxu0
          %v1995 = vadd.f32 0.0, %v1994
          %v1996 = vpop.f32.mrf.mxu0
          %v1997 = vadd.f32 0.0, %v1996
          %1998 = vmatmul.bf16.gmra.mxu0 %v1929
          %v1999 = vpop.f32.mrf.mxu0
          %v2000 = vadd.f32 0.0, %v1999
          %v2001 = vpop.f32.mrf.mxu0
          %v2002 = vadd.f32 0.0, %v2001
          %2003 = vdwg.mxu0
          %v2004 = vunpack.c.l.b16 %v1361
          %v2005 = vunpack.c.l.b16 %v1363
          %v2006 = vunpack.c.l.b16 %v1365
          %v2007 = vunpack.c.l.b16 %v1367
          %v2008 = vunpack.c.l.b16 %v1369
          %v2009 = vunpack.c.l.b16 %v1371
          %v2010 = vunpack.c.l.b16 %v1373
          %v2011 = vunpack.c.l.b16 %v1375
          %v2012 = vunpack.c.l.b16 %v1377
          %v2013 = vunpack.c.l.b16 %v1379
          %v2014 = vunpack.c.l.b16 %v1381
          %v2015 = vunpack.c.l.b16 %v1383
          %v2016 = vunpack.c.l.b16 %v1385
          %v2017 = vunpack.c.l.b16 %v1387
          %v2018 = vunpack.c.l.b16 %v1389
          %v2019 = vunpack.c.l.b16 %v1391
          %v2020 = vpack.c.b16 %v2005, %v2004
          %v2021 = vpack.c.b16 %v2007, %v2006
          %v2022 = vpack.c.b16 %v2009, %v2008
          %v2023 = vpack.c.b16 %v2011, %v2010
          %v2024 = vpack.c.b16 %v2013, %v2012
          %v2025 = vpack.c.b16 %v2015, %v2014
          %v2026 = vpack.c.b16 %v2017, %v2016
          %v2027 = vpack.c.b16 %v2019, %v2018
          %v2028 = vunpack.c.l.b16 %v1440
          %v2029 = vunpack.c.l.b16 %v1441
          %v2030 = vunpack.c.l.b16 %v1442
          %v2031 = vunpack.c.l.b16 %v1443
          %v2032 = vunpack.c.l.b16 %v1444
          %v2033 = vunpack.c.l.b16 %v1445
          %v2034 = vunpack.c.l.b16 %v1446
          %v2035 = vunpack.c.l.b16 %v1447
          %v2036 = vunpack.c.l.b16 %v1448
          %v2037 = vunpack.c.l.b16 %v1449
          %v2038 = vunpack.c.l.b16 %v1450
          %v2039 = vunpack.c.l.b16 %v1451
          %v2040 = vunpack.c.l.b16 %v1452
          %v2041 = vunpack.c.l.b16 %v1453
          %v2042 = vunpack.c.l.b16 %v1454
          %v2043 = vunpack.c.l.b16 %v1455
          %v2044 = vpack.c.b16 %v2029, %v2028
          %v2045 = vpack.c.b16 %v2031, %v2030
          %v2046 = vpack.c.b16 %v2033, %v2032
          %v2047 = vpack.c.b16 %v2035, %v2034
          %v2048 = vpack.c.b16 %v2037, %v2036
          %v2049 = vpack.c.b16 %v2039, %v2038
          %v2050 = vpack.c.b16 %v2041, %v2040
          %v2051 = vpack.c.b16 %v2043, %v2042
          %v2053 = vsel %vm1616, %v2020, 0
          %v2056 = vsel %vm1616, %v2021, 0
          %v2059 = vsel %vm1616, %v2022, 0
          %v2062 = vsel %vm1616, %v2023, 0
          %v2065 = vsel %vm1616, %v2024, 0
          %v2068 = vsel %vm1616, %v2025, 0
          %v2071 = vsel %vm1616, %v2026, 0
          %v2074 = vsel %vm1616, %v2027, 0
          %v2077 = vsel %vm1616, %v2044, 0
          %v2080 = vsel %vm1616, %v2045, 0
          %v2083 = vsel %vm1616, %v2046, 0
          %v2086 = vsel %vm1616, %v2047, 0
          %v2089 = vsel %vm1616, %v2048, 0
          %v2092 = vsel %vm1616, %v2049, 0
          %v2095 = vsel %vm1616, %v2050, 0
          %v2098 = vsel %vm1616, %v2051, 0
          %2100 = vmatpush.bf16.xpose.msra.mxu0 %v2098
          %2101 = vmatpush.bf16.xpose.msra.mxu0 %v2095
          %2102 = vmatpush.bf16.xpose.msra.mxu0 %v2092
          %2103 = vmatpush.bf16.xpose.msra.mxu0 %v2089
          %2104 = vmatpush.bf16.xpose.msra.mxu0 %v2086
          %2105 = vmatpush.bf16.xpose.msra.mxu0 %v2083
          %2106 = vmatpush.bf16.xpose.msra.mxu0 %v2080
          %2107 = vmatpush.bf16.xpose.msra.mxu0 %v2077
          %2108 = vmatmul.bf16.gmra.mxu0 %v2053
          %v2109 = vpop.f32.mrf.mxu0
          %v2110 = vadd.f32 0.0, %v2109
          %v2111 = vpop.f32.mrf.mxu0
          %v2112 = vadd.f32 0.0, %v2111
          %2113 = vmatmul.bf16.gmra.mxu0 %v2056
          %v2114 = vpop.f32.mrf.mxu0
          %v2115 = vadd.f32 0.0, %v2114
          %v2116 = vpop.f32.mrf.mxu0
          %v2117 = vadd.f32 0.0, %v2116
          %2118 = vmatmul.bf16.gmra.mxu0 %v2059
          %v2119 = vpop.f32.mrf.mxu0
          %v2120 = vadd.f32 0.0, %v2119
          %v2121 = vpop.f32.mrf.mxu0
          %v2122 = vadd.f32 0.0, %v2121
          %2123 = vmatmul.bf16.gmra.mxu0 %v2062
          %v2124 = vpop.f32.mrf.mxu0
          %v2125 = vadd.f32 0.0, %v2124
          %v2126 = vpop.f32.mrf.mxu0
          %v2127 = vadd.f32 0.0, %v2126
          %2128 = vmatmul.bf16.gmra.mxu0 %v2065
          %v2129 = vpop.f32.mrf.mxu0
          %v2130 = vadd.f32 0.0, %v2129
          %v2131 = vpop.f32.mrf.mxu0
          %v2132 = vadd.f32 0.0, %v2131
          %2133 = vmatmul.bf16.gmra.mxu0 %v2068
          %v2134 = vpop.f32.mrf.mxu0
          %v2135 = vadd.f32 0.0, %v2134
          %v2136 = vpop.f32.mrf.mxu0
          %v2137 = vadd.f32 0.0, %v2136
          %2138 = vmatmul.bf16.gmra.mxu0 %v2071
          %v2139 = vpop.f32.mrf.mxu0
          %v2140 = vadd.f32 0.0, %v2139
          %v2141 = vpop.f32.mrf.mxu0
          %v2142 = vadd.f32 0.0, %v2141
          %2143 = vmatmul.bf16.gmra.mxu0 %v2074
          %v2144 = vpop.f32.mrf.mxu0
          %v2145 = vadd.f32 0.0, %v2144
          %v2146 = vpop.f32.mrf.mxu0
          %v2147 = vadd.f32 0.0, %v2146
          %2148 = vdwg.mxu0
          %v2149 = vlaneseq
          %v2150 = vand.u32 %v2149, 127
          %vm2151 = vcmp.lt.s32.totalorder %v2150, 8
          %v2152 = vsel %vm2151, 1, 0
          %vm2153 = vcmp.eq.s32.totalorder %v2152, 1
          %v2154 = vsel %vm2153, %v1675, -1e+30
          %v2155 = vsel %vm2153, %v1677, -1e+30
          %v2156 = vsel %vm2153, %v1680, -1e+30
          %v2157 = vsel %vm2153, %v1682, -1e+30
          %v2158 = vsel %vm2153, %v1685, -1e+30
          %v2159 = vsel %vm2153, %v1687, -1e+30
          %v2160 = vsel %vm2153, %v1690, -1e+30
          %v2161 = vsel %vm2153, %v1692, -1e+30
          %v2162 = vsel %vm2153, %v1695, -1e+30
          %v2163 = vsel %vm2153, %v1697, -1e+30
          %v2164 = vsel %vm2153, %v1700, -1e+30
          %v2165 = vsel %vm2153, %v1702, -1e+30
          %v2166 = vsel %vm2153, %v1705, -1e+30
          %v2167 = vsel %vm2153, %v1707, -1e+30
          %v2168 = vsel %vm2153, %v1710, -1e+30
          %v2169 = vsel %vm2153, %v1712, -1e+30
          %v2170 = vsel %vm2153, %v1820, -1e+30
          %v2171 = vsel %vm2153, %v1822, -1e+30
          %v2172 = vsel %vm2153, %v1825, -1e+30
          %v2173 = vsel %vm2153, %v1827, -1e+30
          %v2174 = vsel %vm2153, %v1830, -1e+30
          %v2175 = vsel %vm2153, %v1832, -1e+30
          %v2176 = vsel %vm2153, %v1835, -1e+30
          %v2177 = vsel %vm2153, %v1837, -1e+30
          %v2178 = vsel %vm2153, %v1840, -1e+30
          %v2179 = vsel %vm2153, %v1842, -1e+30
          %v2180 = vsel %vm2153, %v1845, -1e+30
          %v2181 = vsel %vm2153, %v1847, -1e+30
          %v2182 = vsel %vm2153, %v1850, -1e+30
          %v2183 = vsel %vm2153, %v1852, -1e+30
          %v2184 = vsel %vm2153, %v1855, -1e+30
          %v2185 = vsel %vm2153, %v1857, -1e+30
          %v2186 = vsel %vm2153, %v1965, -1e+30
          %v2187 = vsel %vm2153, %v1967, -1e+30
          %v2188 = vsel %vm2153, %v1970, -1e+30
          %v2189 = vsel %vm2153, %v1972, -1e+30
          %v2190 = vsel %vm2153, %v1975, -1e+30
          %v2191 = vsel %vm2153, %v1977, -1e+30
          %v2192 = vsel %vm2153, %v1980, -1e+30
          %v2193 = vsel %vm2153, %v1982, -1e+30
          %v2194 = vsel %vm2153, %v1985, -1e+30
          %v2195 = vsel %vm2153, %v1987, -1e+30
          %v2196 = vsel %vm2153, %v1990, -1e+30
          %v2197 = vsel %vm2153, %v1992, -1e+30
          %v2198 = vsel %vm2153, %v1995, -1e+30
          %v2199 = vsel %vm2153, %v1997, -1e+30
          %v2200 = vsel %vm2153, %v2000, -1e+30
          %v2201 = vsel %vm2153, %v2002, -1e+30
          %v2202 = vsel %vm2153, %v2110, -1e+30
          %v2203 = vsel %vm2153, %v2112, -1e+30
          %v2204 = vsel %vm2153, %v2115, -1e+30
          %v2205 = vsel %vm2153, %v2117, -1e+30
          %v2206 = vsel %vm2153, %v2120, -1e+30
          %v2207 = vsel %vm2153, %v2122, -1e+30
          %v2208 = vsel %vm2153, %v2125, -1e+30
          %v2209 = vsel %vm2153, %v2127, -1e+30
          %v2210 = vsel %vm2153, %v2130, -1e+30
          %v2211 = vsel %vm2153, %v2132, -1e+30
          %v2212 = vsel %vm2153, %v2135, -1e+30
          %v2213 = vsel %vm2153, %v2137, -1e+30
          %v2214 = vsel %vm2153, %v2140, -1e+30
          %v2215 = vsel %vm2153, %v2142, -1e+30
          %v2216 = vsel %vm2153, %v2145, -1e+30
          %v2217 = vsel %vm2153, %v2147, -1e+30
          %2218 = vmax.xlane.f32.xlu0 %v2154
          %v2219 = vpop.xlane.xlu0 %2218
          %2220 = vmax.xlane.f32.xlu0 %v2155
          %v2221 = vpop.xlane.xlu0 %2220
          %2222 = vmax.xlane.f32.xlu0 %v2156
          %v2223 = vpop.xlane.xlu0 %2222
          %2224 = vmax.xlane.f32.xlu0 %v2157
          %v2225 = vpop.xlane.xlu0 %2224
          %2226 = vmax.xlane.f32.xlu0 %v2158
          %v2227 = vpop.xlane.xlu0 %2226
          %2228 = vmax.xlane.f32.xlu0 %v2159
          %v2229 = vpop.xlane.xlu0 %2228
          %2230 = vmax.xlane.f32.xlu0 %v2160
          %v2231 = vpop.xlane.xlu0 %2230
          %2232 = vmax.xlane.f32.xlu0 %v2161
          %v2233 = vpop.xlane.xlu0 %2232
          %2234 = vmax.xlane.f32.xlu0 %v2162
          %v2235 = vpop.xlane.xlu0 %2234
          %2236 = vmax.xlane.f32.xlu0 %v2163
          %v2237 = vpop.xlane.xlu0 %2236
          %2238 = vmax.xlane.f32.xlu0 %v2164
          %v2239 = vpop.xlane.xlu0 %2238
          %2240 = vmax.xlane.f32.xlu0 %v2165
          %v2241 = vpop.xlane.xlu0 %2240
          %2242 = vmax.xlane.f32.xlu0 %v2166
          %v2243 = vpop.xlane.xlu0 %2242
          %2244 = vmax.xlane.f32.xlu0 %v2167
          %v2245 = vpop.xlane.xlu0 %2244
          %2246 = vmax.xlane.f32.xlu0 %v2168
          %v2247 = vpop.xlane.xlu0 %2246
          %2248 = vmax.xlane.f32.xlu0 %v2169
          %v2249 = vpop.xlane.xlu0 %2248
          %2250 = vmax.xlane.f32.xlu0 %v2170
          %v2251 = vpop.xlane.xlu0 %2250
          %2252 = vmax.xlane.f32.xlu0 %v2171
          %v2253 = vpop.xlane.xlu0 %2252
          %2254 = vmax.xlane.f32.xlu0 %v2172
          %v2255 = vpop.xlane.xlu0 %2254
          %2256 = vmax.xlane.f32.xlu0 %v2173
          %v2257 = vpop.xlane.xlu0 %2256
          %2258 = vmax.xlane.f32.xlu0 %v2174
          %v2259 = vpop.xlane.xlu0 %2258
          %2260 = vmax.xlane.f32.xlu0 %v2175
          %v2261 = vpop.xlane.xlu0 %2260
          %2262 = vmax.xlane.f32.xlu0 %v2176
          %v2263 = vpop.xlane.xlu0 %2262
          %2264 = vmax.xlane.f32.xlu0 %v2177
          %v2265 = vpop.xlane.xlu0 %2264
          %2266 = vmax.xlane.f32.xlu0 %v2178
          %v2267 = vpop.xlane.xlu0 %2266
          %2268 = vmax.xlane.f32.xlu0 %v2179
          %v2269 = vpop.xlane.xlu0 %2268
          %2270 = vmax.xlane.f32.xlu0 %v2180
          %v2271 = vpop.xlane.xlu0 %2270
          %2272 = vmax.xlane.f32.xlu0 %v2181
          %v2273 = vpop.xlane.xlu0 %2272
          %2274 = vmax.xlane.f32.xlu0 %v2182
          %v2275 = vpop.xlane.xlu0 %2274
          %2276 = vmax.xlane.f32.xlu0 %v2183
          %v2277 = vpop.xlane.xlu0 %2276
          %2278 = vmax.xlane.f32.xlu0 %v2184
          %v2279 = vpop.xlane.xlu0 %2278
          %2280 = vmax.xlane.f32.xlu0 %v2185
          %v2281 = vpop.xlane.xlu0 %2280
          %2282 = vmax.xlane.f32.xlu0 %v2186
          %v2283 = vpop.xlane.xlu0 %2282
          %2284 = vmax.xlane.f32.xlu0 %v2187
          %v2285 = vpop.xlane.xlu0 %2284
          %2286 = vmax.xlane.f32.xlu0 %v2188
          %v2287 = vpop.xlane.xlu0 %2286
          %2288 = vmax.xlane.f32.xlu0 %v2189
          %v2289 = vpop.xlane.xlu0 %2288
          %2290 = vmax.xlane.f32.xlu0 %v2190
          %v2291 = vpop.xlane.xlu0 %2290
          %2292 = vmax.xlane.f32.xlu0 %v2191
          %v2293 = vpop.xlane.xlu0 %2292
          %2294 = vmax.xlane.f32.xlu0 %v2192
          %v2295 = vpop.xlane.xlu0 %2294
          %2296 = vmax.xlane.f32.xlu0 %v2193
          %v2297 = vpop.xlane.xlu0 %2296
          %2298 = vmax.xlane.f32.xlu0 %v2194
          %v2299 = vpop.xlane.xlu0 %2298
          %2300 = vmax.xlane.f32.xlu0 %v2195
          %v2301 = vpop.xlane.xlu0 %2300
          %2302 = vmax.xlane.f32.xlu0 %v2196
          %v2303 = vpop.xlane.xlu0 %2302
          %2304 = vmax.xlane.f32.xlu0 %v2197
          %v2305 = vpop.xlane.xlu0 %2304
          %2306 = vmax.xlane.f32.xlu0 %v2198
          %v2307 = vpop.xlane.xlu0 %2306
          %2308 = vmax.xlane.f32.xlu0 %v2199
          %v2309 = vpop.xlane.xlu0 %2308
          %2310 = vmax.xlane.f32.xlu0 %v2200
          %v2311 = vpop.xlane.xlu0 %2310
          %2312 = vmax.xlane.f32.xlu0 %v2201
          %v2313 = vpop.xlane.xlu0 %2312
          %2314 = vmax.xlane.f32.xlu0 %v2202
          %v2315 = vpop.xlane.xlu0 %2314
          %2316 = vmax.xlane.f32.xlu0 %v2203
          %v2317 = vpop.xlane.xlu0 %2316
          %2318 = vmax.xlane.f32.xlu0 %v2204
          %v2319 = vpop.xlane.xlu0 %2318
          %2320 = vmax.xlane.f32.xlu0 %v2205
          %v2321 = vpop.xlane.xlu0 %2320
          %2322 = vmax.xlane.f32.xlu0 %v2206
          %v2323 = vpop.xlane.xlu0 %2322
          %2324 = vmax.xlane.f32.xlu0 %v2207
          %v2325 = vpop.xlane.xlu0 %2324
          %2326 = vmax.xlane.f32.xlu0 %v2208
          %v2327 = vpop.xlane.xlu0 %2326
          %2328 = vmax.xlane.f32.xlu0 %v2209
          %v2329 = vpop.xlane.xlu0 %2328
          %2330 = vmax.xlane.f32.xlu0 %v2210
          %v2331 = vpop.xlane.xlu0 %2330
          %2332 = vmax.xlane.f32.xlu0 %v2211
          %v2333 = vpop.xlane.xlu0 %2332
          %2334 = vmax.xlane.f32.xlu0 %v2212
          %v2335 = vpop.xlane.xlu0 %2334
          %2336 = vmax.xlane.f32.xlu0 %v2213
          %v2337 = vpop.xlane.xlu0 %2336
          %2338 = vmax.xlane.f32.xlu0 %v2214
          %v2339 = vpop.xlane.xlu0 %2338
          %2340 = vmax.xlane.f32.xlu0 %v2215
          %v2341 = vpop.xlane.xlu0 %2340
          %2342 = vmax.xlane.f32.xlu0 %v2216
          %v2343 = vpop.xlane.xlu0 %2342
          %2344 = vmax.xlane.f32.xlu0 %v2217
          %v2345 = vpop.xlane.xlu0 %2344
          %v2346 = vsub.f32 %v2154, %v2219
          %v2347 = vsub.f32 %v2155, %v2221
          %v2348 = vsub.f32 %v2156, %v2223
          %v2349 = vsub.f32 %v2157, %v2225
          %v2350 = vsub.f32 %v2158, %v2227
          %v2351 = vsub.f32 %v2159, %v2229
          %v2352 = vsub.f32 %v2160, %v2231
          %v2353 = vsub.f32 %v2161, %v2233
          %v2354 = vsub.f32 %v2162, %v2235
          %v2355 = vsub.f32 %v2163, %v2237
          %v2356 = vsub.f32 %v2164, %v2239
          %v2357 = vsub.f32 %v2165, %v2241
          %v2358 = vsub.f32 %v2166, %v2243
          %v2359 = vsub.f32 %v2167, %v2245
          %v2360 = vsub.f32 %v2168, %v2247
          %v2361 = vsub.f32 %v2169, %v2249
          %v2362 = vsub.f32 %v2170, %v2251
          %v2363 = vsub.f32 %v2171, %v2253
          %v2364 = vsub.f32 %v2172, %v2255
          %v2365 = vsub.f32 %v2173, %v2257
          %v2366 = vsub.f32 %v2174, %v2259
          %v2367 = vsub.f32 %v2175, %v2261
          %v2368 = vsub.f32 %v2176, %v2263
          %v2369 = vsub.f32 %v2177, %v2265
          %v2370 = vsub.f32 %v2178, %v2267
          %v2371 = vsub.f32 %v2179, %v2269
          %v2372 = vsub.f32 %v2180, %v2271
          %v2373 = vsub.f32 %v2181, %v2273
          %v2374 = vsub.f32 %v2182, %v2275
          %v2375 = vsub.f32 %v2183, %v2277
          %v2376 = vsub.f32 %v2184, %v2279
          %v2377 = vsub.f32 %v2185, %v2281
          %v2378 = vsub.f32 %v2186, %v2283
          %v2379 = vsub.f32 %v2187, %v2285
          %v2380 = vsub.f32 %v2188, %v2287
          %v2381 = vsub.f32 %v2189, %v2289
          %v2382 = vsub.f32 %v2190, %v2291
          %v2383 = vsub.f32 %v2191, %v2293
          %v2384 = vsub.f32 %v2192, %v2295
          %v2385 = vsub.f32 %v2193, %v2297
          %v2386 = vsub.f32 %v2194, %v2299
          %v2387 = vsub.f32 %v2195, %v2301
          %v2388 = vsub.f32 %v2196, %v2303
          %v2389 = vsub.f32 %v2197, %v2305
          %v2390 = vsub.f32 %v2198, %v2307
          %v2391 = vsub.f32 %v2199, %v2309
          %v2392 = vsub.f32 %v2200, %v2311
          %v2393 = vsub.f32 %v2201, %v2313
          %v2394 = vsub.f32 %v2202, %v2315
          %v2395 = vsub.f32 %v2203, %v2317
          %v2396 = vsub.f32 %v2204, %v2319
          %v2397 = vsub.f32 %v2205, %v2321
          %v2398 = vsub.f32 %v2206, %v2323
          %v2399 = vsub.f32 %v2207, %v2325
          %v2400 = vsub.f32 %v2208, %v2327
          %v2401 = vsub.f32 %v2209, %v2329
          %v2402 = vsub.f32 %v2210, %v2331
          %v2403 = vsub.f32 %v2211, %v2333
          %v2404 = vsub.f32 %v2212, %v2335
          %v2405 = vsub.f32 %v2213, %v2337
          %v2406 = vsub.f32 %v2214, %v2339
          %v2407 = vsub.f32 %v2215, %v2341
          %v2408 = vsub.f32 %v2216, %v2343
          %v2409 = vsub.f32 %v2217, %v2345
          %v2410 = vmul.f32 %v2346, 1.442695
          %v2411 = vpow.pop %v2410
          %v2412 = vmul.f32 %v2347, 1.442695
          %v2413 = vpow.pop %v2412
          %v2414 = vmul.f32 %v2348, 1.442695
          %v2415 = vpow.pop %v2414
          %v2416 = vmul.f32 %v2349, 1.442695
          %v2417 = vpow.pop %v2416
          %v2418 = vmul.f32 %v2350, 1.442695
          %v2419 = vpow.pop %v2418
          %v2420 = vmul.f32 %v2351, 1.442695
          %v2421 = vpow.pop %v2420
          %v2422 = vmul.f32 %v2352, 1.442695
          %v2423 = vpow.pop %v2422
          %v2424 = vmul.f32 %v2353, 1.442695
          %v2425 = vpow.pop %v2424
          %v2426 = vmul.f32 %v2354, 1.442695
          %v2427 = vpow.pop %v2426
          %v2428 = vmul.f32 %v2355, 1.442695
          %v2429 = vpow.pop %v2428
          %v2430 = vmul.f32 %v2356, 1.442695
          %v2431 = vpow.pop %v2430
          %v2432 = vmul.f32 %v2357, 1.442695
          %v2433 = vpow.pop %v2432
          %v2434 = vmul.f32 %v2358, 1.442695
          %v2435 = vpow.pop %v2434
          %v2436 = vmul.f32 %v2359, 1.442695
          %v2437 = vpow.pop %v2436
          %v2438 = vmul.f32 %v2360, 1.442695
          %v2439 = vpow.pop %v2438
          %v2440 = vmul.f32 %v2361, 1.442695
          %v2441 = vpow.pop %v2440
          %v2442 = vmul.f32 %v2362, 1.442695
          %v2443 = vpow.pop %v2442
          %v2444 = vmul.f32 %v2363, 1.442695
          %v2445 = vpow.pop %v2444
          %v2446 = vmul.f32 %v2364, 1.442695
          %v2447 = vpow.pop %v2446
          %v2448 = vmul.f32 %v2365, 1.442695
          %v2449 = vpow.pop %v2448
          %v2450 = vmul.f32 %v2366, 1.442695
          %v2451 = vpow.pop %v2450
          %v2452 = vmul.f32 %v2367, 1.442695
          %v2453 = vpow.pop %v2452
          %v2454 = vmul.f32 %v2368, 1.442695
          %v2455 = vpow.pop %v2454
          %v2456 = vmul.f32 %v2369, 1.442695
          %v2457 = vpow.pop %v2456
          %v2458 = vmul.f32 %v2370, 1.442695
          %v2459 = vpow.pop %v2458
          %v2460 = vmul.f32 %v2371, 1.442695
          %v2461 = vpow.pop %v2460
          %v2462 = vmul.f32 %v2372, 1.442695
          %v2463 = vpow.pop %v2462
          %v2464 = vmul.f32 %v2373, 1.442695
          %v2465 = vpow.pop %v2464
          %v2466 = vmul.f32 %v2374, 1.442695
          %v2467 = vpow.pop %v2466
          %v2468 = vmul.f32 %v2375, 1.442695
          %v2469 = vpow.pop %v2468
          %v2470 = vmul.f32 %v2376, 1.442695
          %v2471 = vpow.pop %v2470
          %v2472 = vmul.f32 %v2377, 1.442695
          %v2473 = vpow.pop %v2472
          %v2474 = vmul.f32 %v2378, 1.442695
          %v2475 = vpow.pop %v2474
          %v2476 = vmul.f32 %v2379, 1.442695
          %v2477 = vpow.pop %v2476
          %v2478 = vmul.f32 %v2380, 1.442695
          %v2479 = vpow.pop %v2478
          %v2480 = vmul.f32 %v2381, 1.442695
          %v2481 = vpow.pop %v2480
          %v2482 = vmul.f32 %v2382, 1.442695
          %v2483 = vpow.pop %v2482
          %v2484 = vmul.f32 %v2383, 1.442695
          %v2485 = vpow.pop %v2484
          %v2486 = vmul.f32 %v2384, 1.442695
          %v2487 = vpow.pop %v2486
          %v2488 = vmul.f32 %v2385, 1.442695
          %v2489 = vpow.pop %v2488
          %v2490 = vmul.f32 %v2386, 1.442695
          %v2491 = vpow.pop %v2490
          %v2492 = vmul.f32 %v2387, 1.442695
          %v2493 = vpow.pop %v2492
          %v2494 = vmul.f32 %v2388, 1.442695
          %v2495 = vpow.pop %v2494
          %v2496 = vmul.f32 %v2389, 1.442695
          %v2497 = vpow.pop %v2496
          %v2498 = vmul.f32 %v2390, 1.442695
          %v2499 = vpow.pop %v2498
          %v2500 = vmul.f32 %v2391, 1.442695
          %v2501 = vpow.pop %v2500
          %v2502 = vmul.f32 %v2392, 1.442695
          %v2503 = vpow.pop %v2502
          %v2504 = vmul.f32 %v2393, 1.442695
          %v2505 = vpow.pop %v2504
          %v2506 = vmul.f32 %v2394, 1.442695
          %v2507 = vpow.pop %v2506
          %v2508 = vmul.f32 %v2395, 1.442695
          %v2509 = vpow.pop %v2508
          %v2510 = vmul.f32 %v2396, 1.442695
          %v2511 = vpow.pop %v2510
          %v2512 = vmul.f32 %v2397, 1.442695
          %v2513 = vpow.pop %v2512
          %v2514 = vmul.f32 %v2398, 1.442695
          %v2515 = vpow.pop %v2514
          %v2516 = vmul.f32 %v2399, 1.442695
          %v2517 = vpow.pop %v2516
          %v2518 = vmul.f32 %v2400, 1.442695
          %v2519 = vpow.pop %v2518
          %v2520 = vmul.f32 %v2401, 1.442695
          %v2521 = vpow.pop %v2520
          %v2522 = vmul.f32 %v2402, 1.442695
          %v2523 = vpow.pop %v2522
          %v2524 = vmul.f32 %v2403, 1.442695
          %v2525 = vpow.pop %v2524
          %v2526 = vmul.f32 %v2404, 1.442695
          %v2527 = vpow.pop %v2526
          %v2528 = vmul.f32 %v2405, 1.442695
          %v2529 = vpow.pop %v2528
          %v2530 = vmul.f32 %v2406, 1.442695
          %v2531 = vpow.pop %v2530
          %v2532 = vmul.f32 %v2407, 1.442695
          %v2533 = vpow.pop %v2532
          %v2534 = vmul.f32 %v2408, 1.442695
          %v2535 = vpow.pop %v2534
          %v2536 = vmul.f32 %v2409, 1.442695
          %v2537 = vpow.pop %v2536
          %2538 = vadd.xlane.f32.xlu0 %v2411
          %v2539 = vpop.xlane.xlu0 %2538
          %2540 = vadd.xlane.f32.xlu0 %v2413
          %v2541 = vpop.xlane.xlu0 %2540
          %2542 = vadd.xlane.f32.xlu0 %v2415
          %v2543 = vpop.xlane.xlu0 %2542
          %2544 = vadd.xlane.f32.xlu0 %v2417
          %v2545 = vpop.xlane.xlu0 %2544
          %2546 = vadd.xlane.f32.xlu0 %v2419
          %v2547 = vpop.xlane.xlu0 %2546
          %2548 = vadd.xlane.f32.xlu0 %v2421
          %v2549 = vpop.xlane.xlu0 %2548
          %2550 = vadd.xlane.f32.xlu0 %v2423
          %v2551 = vpop.xlane.xlu0 %2550
          %2552 = vadd.xlane.f32.xlu0 %v2425
          %v2553 = vpop.xlane.xlu0 %2552
          %2554 = vadd.xlane.f32.xlu0 %v2427
          %v2555 = vpop.xlane.xlu0 %2554
          %2556 = vadd.xlane.f32.xlu0 %v2429
          %v2557 = vpop.xlane.xlu0 %2556
          %2558 = vadd.xlane.f32.xlu0 %v2431
          %v2559 = vpop.xlane.xlu0 %2558
          %2560 = vadd.xlane.f32.xlu0 %v2433
          %v2561 = vpop.xlane.xlu0 %2560
          %2562 = vadd.xlane.f32.xlu0 %v2435
          %v2563 = vpop.xlane.xlu0 %2562
          %2564 = vadd.xlane.f32.xlu0 %v2437
          %v2565 = vpop.xlane.xlu0 %2564
          %2566 = vadd.xlane.f32.xlu0 %v2439
          %v2567 = vpop.xlane.xlu0 %2566
          %2568 = vadd.xlane.f32.xlu0 %v2441
          %v2569 = vpop.xlane.xlu0 %2568
          %2570 = vadd.xlane.f32.xlu0 %v2443
          %v2571 = vpop.xlane.xlu0 %2570
          %2572 = vadd.xlane.f32.xlu0 %v2445
          %v2573 = vpop.xlane.xlu0 %2572
          %2574 = vadd.xlane.f32.xlu0 %v2447
          %v2575 = vpop.xlane.xlu0 %2574
          %2576 = vadd.xlane.f32.xlu0 %v2449
          %v2577 = vpop.xlane.xlu0 %2576
          %2578 = vadd.xlane.f32.xlu0 %v2451
          %v2579 = vpop.xlane.xlu0 %2578
          %2580 = vadd.xlane.f32.xlu0 %v2453
          %v2581 = vpop.xlane.xlu0 %2580
          %2582 = vadd.xlane.f32.xlu0 %v2455
          %v2583 = vpop.xlane.xlu0 %2582
          %2584 = vadd.xlane.f32.xlu0 %v2457
          %v2585 = vpop.xlane.xlu0 %2584
          %2586 = vadd.xlane.f32.xlu0 %v2459
          %v2587 = vpop.xlane.xlu0 %2586
          %2588 = vadd.xlane.f32.xlu0 %v2461
          %v2589 = vpop.xlane.xlu0 %2588
          %2590 = vadd.xlane.f32.xlu0 %v2463
          %v2591 = vpop.xlane.xlu0 %2590
          %2592 = vadd.xlane.f32.xlu0 %v2465
          %v2593 = vpop.xlane.xlu0 %2592
          %2594 = vadd.xlane.f32.xlu0 %v2467
          %v2595 = vpop.xlane.xlu0 %2594
          %2596 = vadd.xlane.f32.xlu0 %v2469
          %v2597 = vpop.xlane.xlu0 %2596
          %2598 = vadd.xlane.f32.xlu0 %v2471
          %v2599 = vpop.xlane.xlu0 %2598
          %2600 = vadd.xlane.f32.xlu0 %v2473
          %v2601 = vpop.xlane.xlu0 %2600
          %2602 = vadd.xlane.f32.xlu0 %v2475
          %v2603 = vpop.xlane.xlu0 %2602
          %2604 = vadd.xlane.f32.xlu0 %v2477
          %v2605 = vpop.xlane.xlu0 %2604
          %2606 = vadd.xlane.f32.xlu0 %v2479
          %v2607 = vpop.xlane.xlu0 %2606
          %2608 = vadd.xlane.f32.xlu0 %v2481
          %v2609 = vpop.xlane.xlu0 %2608
          %2610 = vadd.xlane.f32.xlu0 %v2483
          %v2611 = vpop.xlane.xlu0 %2610
          %2612 = vadd.xlane.f32.xlu0 %v2485
          %v2613 = vpop.xlane.xlu0 %2612
          %2614 = vadd.xlane.f32.xlu0 %v2487
          %v2615 = vpop.xlane.xlu0 %2614
          %2616 = vadd.xlane.f32.xlu0 %v2489
          %v2617 = vpop.xlane.xlu0 %2616
          %2618 = vadd.xlane.f32.xlu0 %v2491
          %v2619 = vpop.xlane.xlu0 %2618
          %2620 = vadd.xlane.f32.xlu0 %v2493
          %v2621 = vpop.xlane.xlu0 %2620
          %2622 = vadd.xlane.f32.xlu0 %v2495
          %v2623 = vpop.xlane.xlu0 %2622
          %2624 = vadd.xlane.f32.xlu0 %v2497
          %v2625 = vpop.xlane.xlu0 %2624
          %2626 = vadd.xlane.f32.xlu0 %v2499
          %v2627 = vpop.xlane.xlu0 %2626
          %2628 = vadd.xlane.f32.xlu0 %v2501
          %v2629 = vpop.xlane.xlu0 %2628
          %2630 = vadd.xlane.f32.xlu0 %v2503
          %v2631 = vpop.xlane.xlu0 %2630
          %2632 = vadd.xlane.f32.xlu0 %v2505
          %v2633 = vpop.xlane.xlu0 %2632
          %2634 = vadd.xlane.f32.xlu0 %v2507
          %v2635 = vpop.xlane.xlu0 %2634
          %2636 = vadd.xlane.f32.xlu0 %v2509
          %v2637 = vpop.xlane.xlu0 %2636
          %2638 = vadd.xlane.f32.xlu0 %v2511
          %v2639 = vpop.xlane.xlu0 %2638
          %2640 = vadd.xlane.f32.xlu0 %v2513
          %v2641 = vpop.xlane.xlu0 %2640
          %2642 = vadd.xlane.f32.xlu0 %v2515
          %v2643 = vpop.xlane.xlu0 %2642
          %2644 = vadd.xlane.f32.xlu0 %v2517
          %v2645 = vpop.xlane.xlu0 %2644
          %2646 = vadd.xlane.f32.xlu0 %v2519
          %v2647 = vpop.xlane.xlu0 %2646
          %2648 = vadd.xlane.f32.xlu0 %v2521
          %v2649 = vpop.xlane.xlu0 %2648
          %2650 = vadd.xlane.f32.xlu0 %v2523
          %v2651 = vpop.xlane.xlu0 %2650
          %2652 = vadd.xlane.f32.xlu0 %v2525
          %v2653 = vpop.xlane.xlu0 %2652
          %2654 = vadd.xlane.f32.xlu0 %v2527
          %v2655 = vpop.xlane.xlu0 %2654
          %2656 = vadd.xlane.f32.xlu0 %v2529
          %v2657 = vpop.xlane.xlu0 %2656
          %2658 = vadd.xlane.f32.xlu0 %v2531
          %v2659 = vpop.xlane.xlu0 %2658
          %2660 = vadd.xlane.f32.xlu0 %v2533
          %v2661 = vpop.xlane.xlu0 %2660
          %2662 = vadd.xlane.f32.xlu0 %v2535
          %v2663 = vpop.xlane.xlu0 %2662
          %2664 = vadd.xlane.f32.xlu0 %v2537
          %v2665 = vpop.xlane.xlu0 %2664
          %v2666 = vrcp.pop %v2539
          %v2667 = vrcp.pop %v2541
          %v2668 = vrcp.pop %v2543
          %v2669 = vrcp.pop %v2545
          %v2670 = vrcp.pop %v2547
          %v2671 = vrcp.pop %v2549
          %v2672 = vrcp.pop %v2551
          %v2673 = vrcp.pop %v2553
          %v2674 = vrcp.pop %v2555
          %v2675 = vrcp.pop %v2557
          %v2676 = vrcp.pop %v2559
          %v2677 = vrcp.pop %v2561
          %v2678 = vrcp.pop %v2563
          %v2679 = vrcp.pop %v2565
          %v2680 = vrcp.pop %v2567
          %v2681 = vrcp.pop %v2569
          %v2682 = vrcp.pop %v2571
          %v2683 = vrcp.pop %v2573
          %v2684 = vrcp.pop %v2575
          %v2685 = vrcp.pop %v2577
          %v2686 = vrcp.pop %v2579
          %v2687 = vrcp.pop %v2581
          %v2688 = vrcp.pop %v2583
          %v2689 = vrcp.pop %v2585
          %v2690 = vrcp.pop %v2587
          %v2691 = vrcp.pop %v2589
          %v2692 = vrcp.pop %v2591
          %v2693 = vrcp.pop %v2593
          %v2694 = vrcp.pop %v2595
          %v2695 = vrcp.pop %v2597
          %v2696 = vrcp.pop %v2599
          %v2697 = vrcp.pop %v2601
          %v2698 = vrcp.pop %v2603
          %v2699 = vrcp.pop %v2605
          %v2700 = vrcp.pop %v2607
          %v2701 = vrcp.pop %v2609
          %v2702 = vrcp.pop %v2611
          %v2703 = vrcp.pop %v2613
          %v2704 = vrcp.pop %v2615
          %v2705 = vrcp.pop %v2617
          %v2706 = vrcp.pop %v2619
          %v2707 = vrcp.pop %v2621
          %v2708 = vrcp.pop %v2623
          %v2709 = vrcp.pop %v2625
          %v2710 = vrcp.pop %v2627
          %v2711 = vrcp.pop %v2629
          %v2712 = vrcp.pop %v2631
          %v2713 = vrcp.pop %v2633
          %v2714 = vrcp.pop %v2635
          %v2715 = vrcp.pop %v2637
          %v2716 = vrcp.pop %v2639
          %v2717 = vrcp.pop %v2641
          %v2718 = vrcp.pop %v2643
          %v2719 = vrcp.pop %v2645
          %v2720 = vrcp.pop %v2647
          %v2721 = vrcp.pop %v2649
          %v2722 = vrcp.pop %v2651
          %v2723 = vrcp.pop %v2653
          %v2724 = vrcp.pop %v2655
          %v2725 = vrcp.pop %v2657
          %v2726 = vrcp.pop %v2659
          %v2727 = vrcp.pop %v2661
          %v2728 = vrcp.pop %v2663
          %v2729 = vrcp.pop %v2665
          %v2730 = vmul.f32 %v2411, %v2666
          %v2731 = vmul.f32 %v2413, %v2667
          %v2732 = vmul.f32 %v2415, %v2668
          %v2733 = vmul.f32 %v2417, %v2669
          %v2734 = vmul.f32 %v2419, %v2670
          %v2735 = vmul.f32 %v2421, %v2671
          %v2736 = vmul.f32 %v2423, %v2672
          %v2737 = vmul.f32 %v2425, %v2673
          %v2738 = vmul.f32 %v2427, %v2674
          %v2739 = vmul.f32 %v2429, %v2675
          %v2740 = vmul.f32 %v2431, %v2676
          %v2741 = vmul.f32 %v2433, %v2677
          %v2742 = vmul.f32 %v2435, %v2678
          %v2743 = vmul.f32 %v2437, %v2679
          %v2744 = vmul.f32 %v2439, %v2680
          %v2745 = vmul.f32 %v2441, %v2681
          %v2746 = vmul.f32 %v2443, %v2682
          %v2747 = vmul.f32 %v2445, %v2683
          %v2748 = vmul.f32 %v2447, %v2684
          %v2749 = vmul.f32 %v2449, %v2685
          %v2750 = vmul.f32 %v2451, %v2686
          %v2751 = vmul.f32 %v2453, %v2687
          %v2752 = vmul.f32 %v2455, %v2688
          %v2753 = vmul.f32 %v2457, %v2689
          %v2754 = vmul.f32 %v2459, %v2690
          %v2755 = vmul.f32 %v2461, %v2691
          %v2756 = vmul.f32 %v2463, %v2692
          %v2757 = vmul.f32 %v2465, %v2693
          %v2758 = vmul.f32 %v2467, %v2694
          %v2759 = vmul.f32 %v2469, %v2695
          %v2760 = vmul.f32 %v2471, %v2696
          %v2761 = vmul.f32 %v2473, %v2697
          %v2762 = vmul.f32 %v2475, %v2698
          %v2763 = vmul.f32 %v2477, %v2699
          %v2764 = vmul.f32 %v2479, %v2700
          %v2765 = vmul.f32 %v2481, %v2701
          %v2766 = vmul.f32 %v2483, %v2702
          %v2767 = vmul.f32 %v2485, %v2703
          %v2768 = vmul.f32 %v2487, %v2704
          %v2769 = vmul.f32 %v2489, %v2705
          %v2770 = vmul.f32 %v2491, %v2706
          %v2771 = vmul.f32 %v2493, %v2707
          %v2772 = vmul.f32 %v2495, %v2708
          %v2773 = vmul.f32 %v2497, %v2709
          %v2774 = vmul.f32 %v2499, %v2710
          %v2775 = vmul.f32 %v2501, %v2711
          %v2776 = vmul.f32 %v2503, %v2712
          %v2777 = vmul.f32 %v2505, %v2713
          %v2778 = vmul.f32 %v2507, %v2714
          %v2779 = vmul.f32 %v2509, %v2715
          %v2780 = vmul.f32 %v2511, %v2716
          %v2781 = vmul.f32 %v2513, %v2717
          %v2782 = vmul.f32 %v2515, %v2718
          %v2783 = vmul.f32 %v2517, %v2719
          %v2784 = vmul.f32 %v2519, %v2720
          %v2785 = vmul.f32 %v2521, %v2721
          %v2786 = vmul.f32 %v2523, %v2722
          %v2787 = vmul.f32 %v2525, %v2723
          %v2788 = vmul.f32 %v2527, %v2724
          %v2789 = vmul.f32 %v2529, %v2725
          %v2790 = vmul.f32 %v2531, %v2726
          %v2791 = vmul.f32 %v2533, %v2727
          %v2792 = vmul.f32 %v2535, %v2728
          %v2793 = vmul.f32 %v2537, %v2729
          %v2794 = vpack.c.bf16 %v2730, %v2730
          %v2795 = vpack.c.bf16 %v2731, %v2731
          %v2796 = vpack.c.bf16 %v2732, %v2732
          %v2797 = vpack.c.bf16 %v2733, %v2733
          %v2798 = vpack.c.bf16 %v2734, %v2734
          %v2799 = vpack.c.bf16 %v2735, %v2735
          %v2800 = vpack.c.bf16 %v2736, %v2736
          %v2801 = vpack.c.bf16 %v2737, %v2737
          %v2802 = vpack.c.bf16 %v2738, %v2738
          %v2803 = vpack.c.bf16 %v2739, %v2739
          %v2804 = vpack.c.bf16 %v2740, %v2740
          %v2805 = vpack.c.bf16 %v2741, %v2741
          %v2806 = vpack.c.bf16 %v2742, %v2742
          %v2807 = vpack.c.bf16 %v2743, %v2743
          %v2808 = vpack.c.bf16 %v2744, %v2744
          %v2809 = vpack.c.bf16 %v2745, %v2745
          %v2810 = vpack.c.bf16 %v2746, %v2746
          %v2811 = vpack.c.bf16 %v2747, %v2747
          %v2812 = vpack.c.bf16 %v2748, %v2748
          %v2813 = vpack.c.bf16 %v2749, %v2749
          %v2814 = vpack.c.bf16 %v2750, %v2750
          %v2815 = vpack.c.bf16 %v2751, %v2751
          %v2816 = vpack.c.bf16 %v2752, %v2752
          %v2817 = vpack.c.bf16 %v2753, %v2753
          %v2818 = vpack.c.bf16 %v2754, %v2754
          %v2819 = vpack.c.bf16 %v2755, %v2755
          %v2820 = vpack.c.bf16 %v2756, %v2756
          %v2821 = vpack.c.bf16 %v2757, %v2757
          %v2822 = vpack.c.bf16 %v2758, %v2758
          %v2823 = vpack.c.bf16 %v2759, %v2759
          %v2824 = vpack.c.bf16 %v2760, %v2760
          %v2825 = vpack.c.bf16 %v2761, %v2761
          %v2826 = vpack.c.bf16 %v2762, %v2762
          %v2827 = vpack.c.bf16 %v2763, %v2763
          %v2828 = vpack.c.bf16 %v2764, %v2764
          %v2829 = vpack.c.bf16 %v2765, %v2765
          %v2830 = vpack.c.bf16 %v2766, %v2766
          %v2831 = vpack.c.bf16 %v2767, %v2767
          %v2832 = vpack.c.bf16 %v2768, %v2768
          %v2833 = vpack.c.bf16 %v2769, %v2769
          %v2834 = vpack.c.bf16 %v2770, %v2770
          %v2835 = vpack.c.bf16 %v2771, %v2771
          %v2836 = vpack.c.bf16 %v2772, %v2772
          %v2837 = vpack.c.bf16 %v2773, %v2773
          %v2838 = vpack.c.bf16 %v2774, %v2774
          %v2839 = vpack.c.bf16 %v2775, %v2775
          %v2840 = vpack.c.bf16 %v2776, %v2776
          %v2841 = vpack.c.bf16 %v2777, %v2777
          %v2842 = vpack.c.bf16 %v2778, %v2778
          %v2843 = vpack.c.bf16 %v2779, %v2779
          %v2844 = vpack.c.bf16 %v2780, %v2780
          %v2845 = vpack.c.bf16 %v2781, %v2781
          %v2846 = vpack.c.bf16 %v2782, %v2782
          %v2847 = vpack.c.bf16 %v2783, %v2783
          %v2848 = vpack.c.bf16 %v2784, %v2784
          %v2849 = vpack.c.bf16 %v2785, %v2785
          %v2850 = vpack.c.bf16 %v2786, %v2786
          %v2851 = vpack.c.bf16 %v2787, %v2787
          %v2852 = vpack.c.bf16 %v2788, %v2788
          %v2853 = vpack.c.bf16 %v2789, %v2789
          %v2854 = vpack.c.bf16 %v2790, %v2790
          %v2855 = vpack.c.bf16 %v2791, %v2791
          %v2856 = vpack.c.bf16 %v2792, %v2792
          %v2857 = vpack.c.bf16 %v2793, %v2793
          %v2874 = vunpack.c.l.b16 %v2794
          %v2875 = vunpack.c.l.b16 %v2795
          %v2876 = vunpack.c.l.b16 %v2796
          %v2877 = vunpack.c.l.b16 %v2797
          %v2878 = vunpack.c.l.b16 %v2798
          %v2879 = vunpack.c.l.b16 %v2799
          %v2880 = vunpack.c.l.b16 %v2800
          %v2881 = vunpack.c.l.b16 %v2801
          %v2882 = vunpack.c.l.b16 %v2802
          %v2883 = vunpack.c.l.b16 %v2803
          %v2884 = vunpack.c.l.b16 %v2804
          %v2885 = vunpack.c.l.b16 %v2805
          %v2886 = vunpack.c.l.b16 %v2806
          %v2887 = vunpack.c.l.b16 %v2807
          %v2888 = vunpack.c.l.b16 %v2808
          %v2889 = vunpack.c.l.b16 %v2809
          %v2890 = vpack.c.b16 %v2875, %v2874
          %v2891 = vpack.c.b16 %v2877, %v2876
          %v2892 = vpack.c.b16 %v2879, %v2878
          %v2893 = vpack.c.b16 %v2881, %v2880
          %v2894 = vpack.c.b16 %v2883, %v2882
          %v2895 = vpack.c.b16 %v2885, %v2884
          %v2896 = vpack.c.b16 %v2887, %v2886
          %v2897 = vpack.c.b16 %v2889, %v2888
          %v2906 = vunpack.c.l.b16 %v1249
          %v2907 = vunpack.c.l.b16 %v1251
          %v2908 = vunpack.c.l.b16 %v1253
          %v2909 = vunpack.c.l.b16 %v1255
          %v2910 = vunpack.c.l.b16 %v1257
          %v2911 = vunpack.c.l.b16 %v1259
          %v2912 = vunpack.c.l.b16 %v1261
          %v2913 = vunpack.c.l.b16 %v1263
          %v2914 = vunpack.c.l.b16 %v1265
          %v2915 = vunpack.c.l.b16 %v1267
          %v2916 = vunpack.c.l.b16 %v1269
          %v2917 = vunpack.c.l.b16 %v1271
          %v2918 = vunpack.c.l.b16 %v1273
          %v2919 = vunpack.c.l.b16 %v1275
          %v2920 = vunpack.c.l.b16 %v1277
          %v2921 = vunpack.c.l.b16 %v1279
          %v2922 = vpack.c.b16 %v2907, %v2906
          %v2923 = vpack.c.b16 %v2909, %v2908
          %v2924 = vpack.c.b16 %v2911, %v2910
          %v2925 = vpack.c.b16 %v2913, %v2912
          %v2926 = vpack.c.b16 %v2915, %v2914
          %v2927 = vpack.c.b16 %v2917, %v2916
          %v2928 = vpack.c.b16 %v2919, %v2918
          %v2929 = vpack.c.b16 %v2921, %v2920
          %2938 = vmatpush.bf16.msra.mxu0 %v2929
          %2939 = vmatpush.bf16.msra.mxu0 %v2928
          %2940 = vmatpush.bf16.msra.mxu0 %v2927
          %2941 = vmatpush.bf16.msra.mxu0 %v2926
          %2942 = vmatpush.bf16.msra.mxu0 %v2925
          %2943 = vmatpush.bf16.msra.mxu0 %v2924
          %2944 = vmatpush.bf16.msra.mxu0 %v2923
          %2945 = vmatpush.bf16.msra.mxu0 %v2922
          %2946 = vmatmul.bf16.gmra.mxu0 %v2890
          %v2947 = vpop.f32.mrf.mxu0
          %v2948 = vadd.f32 0.0, %v2947
          %v2949 = vpop.f32.mrf.mxu0
          %v2950 = vadd.f32 0.0, %v2949
          %2951 = vmatmul.bf16.gmra.mxu0 %v2891
          %v2952 = vpop.f32.mrf.mxu0
          %v2953 = vadd.f32 0.0, %v2952
          %v2954 = vpop.f32.mrf.mxu0
          %v2955 = vadd.f32 0.0, %v2954
          %2956 = vmatmul.bf16.gmra.mxu0 %v2892
          %v2957 = vpop.f32.mrf.mxu0
          %v2958 = vadd.f32 0.0, %v2957
          %v2959 = vpop.f32.mrf.mxu0
          %v2960 = vadd.f32 0.0, %v2959
          %2961 = vmatmul.bf16.gmra.mxu0 %v2893
          %v2962 = vpop.f32.mrf.mxu0
          %v2963 = vadd.f32 0.0, %v2962
          %v2964 = vpop.f32.mrf.mxu0
          %v2965 = vadd.f32 0.0, %v2964
          %2966 = vmatmul.bf16.gmra.mxu0 %v2894
          %v2967 = vpop.f32.mrf.mxu0
          %v2968 = vadd.f32 0.0, %v2967
          %v2969 = vpop.f32.mrf.mxu0
          %v2970 = vadd.f32 0.0, %v2969
          %2971 = vmatmul.bf16.gmra.mxu0 %v2895
          %v2972 = vpop.f32.mrf.mxu0
          %v2973 = vadd.f32 0.0, %v2972
          %v2974 = vpop.f32.mrf.mxu0
          %v2975 = vadd.f32 0.0, %v2974
          %2976 = vmatmul.bf16.gmra.mxu0 %v2896
          %v2977 = vpop.f32.mrf.mxu0
          %v2978 = vadd.f32 0.0, %v2977
          %v2979 = vpop.f32.mrf.mxu0
          %v2980 = vadd.f32 0.0, %v2979
          %2981 = vmatmul.bf16.gmra.mxu0 %v2897
          %v2982 = vpop.f32.mrf.mxu0
          %v2983 = vadd.f32 0.0, %v2982
          %v2984 = vpop.f32.mrf.mxu0
          %v2985 = vadd.f32 0.0, %v2984
          %2986 = vdwg.mxu0
          %v3003 = vunpack.c.l.b16 %v2810
          %v3004 = vunpack.c.l.b16 %v2811
          %v3005 = vunpack.c.l.b16 %v2812
          %v3006 = vunpack.c.l.b16 %v2813
          %v3007 = vunpack.c.l.b16 %v2814
          %v3008 = vunpack.c.l.b16 %v2815
          %v3009 = vunpack.c.l.b16 %v2816
          %v3010 = vunpack.c.l.b16 %v2817
          %v3011 = vunpack.c.l.b16 %v2818
          %v3012 = vunpack.c.l.b16 %v2819
          %v3013 = vunpack.c.l.b16 %v2820
          %v3014 = vunpack.c.l.b16 %v2821
          %v3015 = vunpack.c.l.b16 %v2822
          %v3016 = vunpack.c.l.b16 %v2823
          %v3017 = vunpack.c.l.b16 %v2824
          %v3018 = vunpack.c.l.b16 %v2825
          %v3019 = vpack.c.b16 %v3004, %v3003
          %v3020 = vpack.c.b16 %v3006, %v3005
          %v3021 = vpack.c.b16 %v3008, %v3007
          %v3022 = vpack.c.b16 %v3010, %v3009
          %v3023 = vpack.c.b16 %v3012, %v3011
          %v3024 = vpack.c.b16 %v3014, %v3013
          %v3025 = vpack.c.b16 %v3016, %v3015
          %v3026 = vpack.c.b16 %v3018, %v3017
          %v3035 = vunpack.c.l.b16 %v1473
          %v3036 = vunpack.c.l.b16 %v1475
          %v3037 = vunpack.c.l.b16 %v1477
          %v3038 = vunpack.c.l.b16 %v1479
          %v3039 = vunpack.c.l.b16 %v1481
          %v3040 = vunpack.c.l.b16 %v1483
          %v3041 = vunpack.c.l.b16 %v1485
          %v3042 = vunpack.c.l.b16 %v1487
          %v3043 = vunpack.c.l.b16 %v1489
          %v3044 = vunpack.c.l.b16 %v1491
          %v3045 = vunpack.c.l.b16 %v1493
          %v3046 = vunpack.c.l.b16 %v1495
          %v3047 = vunpack.c.l.b16 %v1497
          %v3048 = vunpack.c.l.b16 %v1499
          %v3049 = vunpack.c.l.b16 %v1501
          %v3050 = vunpack.c.l.b16 %v1503
          %v3051 = vpack.c.b16 %v3036, %v3035
          %v3052 = vpack.c.b16 %v3038, %v3037
          %v3053 = vpack.c.b16 %v3040, %v3039
          %v3054 = vpack.c.b16 %v3042, %v3041
          %v3055 = vpack.c.b16 %v3044, %v3043
          %v3056 = vpack.c.b16 %v3046, %v3045
          %v3057 = vpack.c.b16 %v3048, %v3047
          %v3058 = vpack.c.b16 %v3050, %v3049
          %3067 = vmatpush.bf16.msra.mxu0 %v3058
          %3068 = vmatpush.bf16.msra.mxu0 %v3057
          %3069 = vmatpush.bf16.msra.mxu0 %v3056
          %3070 = vmatpush.bf16.msra.mxu0 %v3055
          %3071 = vmatpush.bf16.msra.mxu0 %v3054
          %3072 = vmatpush.bf16.msra.mxu0 %v3053
          %3073 = vmatpush.bf16.msra.mxu0 %v3052
          %3074 = vmatpush.bf16.msra.mxu0 %v3051
          %3075 = vmatmul.bf16.gmra.mxu0 %v3019
          %v3076 = vpop.f32.mrf.mxu0
          %v3077 = vadd.f32 0.0, %v3076
          %v3078 = vpop.f32.mrf.mxu0
          %v3079 = vadd.f32 0.0, %v3078
          %3080 = vmatmul.bf16.gmra.mxu0 %v3020
          %v3081 = vpop.f32.mrf.mxu0
          %v3082 = vadd.f32 0.0, %v3081
          %v3083 = vpop.f32.mrf.mxu0
          %v3084 = vadd.f32 0.0, %v3083
          %3085 = vmatmul.bf16.gmra.mxu0 %v3021
          %v3086 = vpop.f32.mrf.mxu0
          %v3087 = vadd.f32 0.0, %v3086
          %v3088 = vpop.f32.mrf.mxu0
          %v3089 = vadd.f32 0.0, %v3088
          %3090 = vmatmul.bf16.gmra.mxu0 %v3022
          %v3091 = vpop.f32.mrf.mxu0
          %v3092 = vadd.f32 0.0, %v3091
          %v3093 = vpop.f32.mrf.mxu0
          %v3094 = vadd.f32 0.0, %v3093
          %3095 = vmatmul.bf16.gmra.mxu0 %v3023
          %v3096 = vpop.f32.mrf.mxu0
          %v3097 = vadd.f32 0.0, %v3096
          %v3098 = vpop.f32.mrf.mxu0
          %v3099 = vadd.f32 0.0, %v3098
          %3100 = vmatmul.bf16.gmra.mxu0 %v3024
          %v3101 = vpop.f32.mrf.mxu0
          %v3102 = vadd.f32 0.0, %v3101
          %v3103 = vpop.f32.mrf.mxu0
          %v3104 = vadd.f32 0.0, %v3103
          %3105 = vmatmul.bf16.gmra.mxu0 %v3025
          %v3106 = vpop.f32.mrf.mxu0
          %v3107 = vadd.f32 0.0, %v3106
          %v3108 = vpop.f32.mrf.mxu0
          %v3109 = vadd.f32 0.0, %v3108
          %3110 = vmatmul.bf16.gmra.mxu0 %v3026
          %v3111 = vpop.f32.mrf.mxu0
          %v3112 = vadd.f32 0.0, %v3111
          %v3113 = vpop.f32.mrf.mxu0
          %v3114 = vadd.f32 0.0, %v3113
          %3115 = vdwg.mxu0
          %v3132 = vunpack.c.l.b16 %v2826
          %v3133 = vunpack.c.l.b16 %v2827
          %v3134 = vunpack.c.l.b16 %v2828
          %v3135 = vunpack.c.l.b16 %v2829
          %v3136 = vunpack.c.l.b16 %v2830
          %v3137 = vunpack.c.l.b16 %v2831
          %v3138 = vunpack.c.l.b16 %v2832
          %v3139 = vunpack.c.l.b16 %v2833
          %v3140 = vunpack.c.l.b16 %v2834
          %v3141 = vunpack.c.l.b16 %v2835
          %v3142 = vunpack.c.l.b16 %v2836
          %v3143 = vunpack.c.l.b16 %v2837
          %v3144 = vunpack.c.l.b16 %v2838
          %v3145 = vunpack.c.l.b16 %v2839
          %v3146 = vunpack.c.l.b16 %v2840
          %v3147 = vunpack.c.l.b16 %v2841
          %v3148 = vpack.c.b16 %v3133, %v3132
          %v3149 = vpack.c.b16 %v3135, %v3134
          %v3150 = vpack.c.b16 %v3137, %v3136
          %v3151 = vpack.c.b16 %v3139, %v3138
          %v3152 = vpack.c.b16 %v3141, %v3140
          %v3153 = vpack.c.b16 %v3143, %v3142
          %v3154 = vpack.c.b16 %v3145, %v3144
          %v3155 = vpack.c.b16 %v3147, %v3146
          %v3164 = vunpack.c.l.b16 %v1505
          %v3165 = vunpack.c.l.b16 %v1507
          %v3166 = vunpack.c.l.b16 %v1509
          %v3167 = vunpack.c.l.b16 %v1511
          %v3168 = vunpack.c.l.b16 %v1513
          %v3169 = vunpack.c.l.b16 %v1515
          %v3170 = vunpack.c.l.b16 %v1517
          %v3171 = vunpack.c.l.b16 %v1519
          %v3172 = vunpack.c.l.b16 %v1521
          %v3173 = vunpack.c.l.b16 %v1523
          %v3174 = vunpack.c.l.b16 %v1525
          %v3175 = vunpack.c.l.b16 %v1527
          %v3176 = vunpack.c.l.b16 %v1529
          %v3177 = vunpack.c.l.b16 %v1531
          %v3178 = vunpack.c.l.b16 %v1533
          %v3179 = vunpack.c.l.b16 %v1535
          %v3180 = vpack.c.b16 %v3165, %v3164
          %v3181 = vpack.c.b16 %v3167, %v3166
          %v3182 = vpack.c.b16 %v3169, %v3168
          %v3183 = vpack.c.b16 %v3171, %v3170
          %v3184 = vpack.c.b16 %v3173, %v3172
          %v3185 = vpack.c.b16 %v3175, %v3174
          %v3186 = vpack.c.b16 %v3177, %v3176
          %v3187 = vpack.c.b16 %v3179, %v3178
          %3196 = vmatpush.bf16.msra.mxu0 %v3187
          %3197 = vmatpush.bf16.msra.mxu0 %v3186
          %3198 = vmatpush.bf16.msra.mxu0 %v3185
          %3199 = vmatpush.bf16.msra.mxu0 %v3184
          %3200 = vmatpush.bf16.msra.mxu0 %v3183
          %3201 = vmatpush.bf16.msra.mxu0 %v3182
          %3202 = vmatpush.bf16.msra.mxu0 %v3181
          %3203 = vmatpush.bf16.msra.mxu0 %v3180
          %3204 = vmatmul.bf16.gmra.mxu0 %v3148
          %v3205 = vpop.f32.mrf.mxu0
          %v3206 = vadd.f32 0.0, %v3205
          %v3207 = vpop.f32.mrf.mxu0
          %v3208 = vadd.f32 0.0, %v3207
          %3209 = vmatmul.bf16.gmra.mxu0 %v3149
          %v3210 = vpop.f32.mrf.mxu0
          %v3211 = vadd.f32 0.0, %v3210
          %v3212 = vpop.f32.mrf.mxu0
          %v3213 = vadd.f32 0.0, %v3212
          %3214 = vmatmul.bf16.gmra.mxu0 %v3150
          %v3215 = vpop.f32.mrf.mxu0
          %v3216 = vadd.f32 0.0, %v3215
          %v3217 = vpop.f32.mrf.mxu0
          %v3218 = vadd.f32 0.0, %v3217
          %3219 = vmatmul.bf16.gmra.mxu0 %v3151
          %v3220 = vpop.f32.mrf.mxu0
          %v3221 = vadd.f32 0.0, %v3220
          %v3222 = vpop.f32.mrf.mxu0
          %v3223 = vadd.f32 0.0, %v3222
          %3224 = vmatmul.bf16.gmra.mxu0 %v3152
          %v3225 = vpop.f32.mrf.mxu0
          %v3226 = vadd.f32 0.0, %v3225
          %v3227 = vpop.f32.mrf.mxu0
          %v3228 = vadd.f32 0.0, %v3227
          %3229 = vmatmul.bf16.gmra.mxu0 %v3153
          %v3230 = vpop.f32.mrf.mxu0
          %v3231 = vadd.f32 0.0, %v3230
          %v3232 = vpop.f32.mrf.mxu0
          %v3233 = vadd.f32 0.0, %v3232
          %3234 = vmatmul.bf16.gmra.mxu0 %v3154
          %v3235 = vpop.f32.mrf.mxu0
          %v3236 = vadd.f32 0.0, %v3235
          %v3237 = vpop.f32.mrf.mxu0
          %v3238 = vadd.f32 0.0, %v3237
          %3239 = vmatmul.bf16.gmra.mxu0 %v3155
          %v3240 = vpop.f32.mrf.mxu0
          %v3241 = vadd.f32 0.0, %v3240
          %v3242 = vpop.f32.mrf.mxu0
          %v3243 = vadd.f32 0.0, %v3242
          %3244 = vdwg.mxu0
          %v3261 = vunpack.c.l.b16 %v2842
          %v3262 = vunpack.c.l.b16 %v2843
          %v3263 = vunpack.c.l.b16 %v2844
          %v3264 = vunpack.c.l.b16 %v2845
          %v3265 = vunpack.c.l.b16 %v2846
          %v3266 = vunpack.c.l.b16 %v2847
          %v3267 = vunpack.c.l.b16 %v2848
          %v3268 = vunpack.c.l.b16 %v2849
          %v3269 = vunpack.c.l.b16 %v2850
          %v3270 = vunpack.c.l.b16 %v2851
          %v3271 = vunpack.c.l.b16 %v2852
          %v3272 = vunpack.c.l.b16 %v2853
          %v3273 = vunpack.c.l.b16 %v2854
          %v3274 = vunpack.c.l.b16 %v2855
          %v3275 = vunpack.c.l.b16 %v2856
          %v3276 = vunpack.c.l.b16 %v2857
          %v3277 = vpack.c.b16 %v3262, %v3261
          %v3278 = vpack.c.b16 %v3264, %v3263
          %v3279 = vpack.c.b16 %v3266, %v3265
          %v3280 = vpack.c.b16 %v3268, %v3267
          %v3281 = vpack.c.b16 %v3270, %v3269
          %v3282 = vpack.c.b16 %v3272, %v3271
          %v3283 = vpack.c.b16 %v3274, %v3273
          %v3284 = vpack.c.b16 %v3276, %v3275
          %v3293 = vunpack.c.l.b16 %v1537
          %v3294 = vunpack.c.l.b16 %v1539
          %v3295 = vunpack.c.l.b16 %v1541
          %v3296 = vunpack.c.l.b16 %v1543
          %v3297 = vunpack.c.l.b16 %v1545
          %v3298 = vunpack.c.l.b16 %v1547
          %v3299 = vunpack.c.l.b16 %v1549
          %v3300 = vunpack.c.l.b16 %v1551
          %v3301 = vunpack.c.l.b16 %v1553
          %v3302 = vunpack.c.l.b16 %v1555
          %v3303 = vunpack.c.l.b16 %v1557
          %v3304 = vunpack.c.l.b16 %v1559
          %v3305 = vunpack.c.l.b16 %v1561
          %v3306 = vunpack.c.l.b16 %v1563
          %v3307 = vunpack.c.l.b16 %v1565
          %v3308 = vunpack.c.l.b16 %v1567
          %v3309 = vpack.c.b16 %v3294, %v3293
          %v3310 = vpack.c.b16 %v3296, %v3295
          %v3311 = vpack.c.b16 %v3298, %v3297
          %v3312 = vpack.c.b16 %v3300, %v3299
          %v3313 = vpack.c.b16 %v3302, %v3301
          %v3314 = vpack.c.b16 %v3304, %v3303
          %v3315 = vpack.c.b16 %v3306, %v3305
          %v3316 = vpack.c.b16 %v3308, %v3307
          %3325 = vmatpush.bf16.msra.mxu0 %v3316
          %3326 = vmatpush.bf16.msra.mxu0 %v3315
          %3327 = vmatpush.bf16.msra.mxu0 %v3314
          %3328 = vmatpush.bf16.msra.mxu0 %v3313
          %3329 = vmatpush.bf16.msra.mxu0 %v3312
          %3330 = vmatpush.bf16.msra.mxu0 %v3311
          %3331 = vmatpush.bf16.msra.mxu0 %v3310
          %3332 = vmatpush.bf16.msra.mxu0 %v3309
          %3333 = vmatmul.bf16.gmra.mxu0 %v3277
          %v3334 = vpop.f32.mrf.mxu0
          %v3335 = vadd.f32 0.0, %v3334
          %v3336 = vpop.f32.mrf.mxu0
          %v3337 = vadd.f32 0.0, %v3336
          %3338 = vmatmul.bf16.gmra.mxu0 %v3278
          %v3339 = vpop.f32.mrf.mxu0
          %v3340 = vadd.f32 0.0, %v3339
          %v3341 = vpop.f32.mrf.mxu0
          %v3342 = vadd.f32 0.0, %v3341
          %3343 = vmatmul.bf16.gmra.mxu0 %v3279
          %v3344 = vpop.f32.mrf.mxu0
          %v3345 = vadd.f32 0.0, %v3344
          %v3346 = vpop.f32.mrf.mxu0
          %v3347 = vadd.f32 0.0, %v3346
          %3348 = vmatmul.bf16.gmra.mxu0 %v3280
          %v3349 = vpop.f32.mrf.mxu0
          %v3350 = vadd.f32 0.0, %v3349
          %v3351 = vpop.f32.mrf.mxu0
          %v3352 = vadd.f32 0.0, %v3351
          %3353 = vmatmul.bf16.gmra.mxu0 %v3281
          %v3354 = vpop.f32.mrf.mxu0
          %v3355 = vadd.f32 0.0, %v3354
          %v3356 = vpop.f32.mrf.mxu0
          %v3357 = vadd.f32 0.0, %v3356
          %3358 = vmatmul.bf16.gmra.mxu0 %v3282
          %v3359 = vpop.f32.mrf.mxu0
          %v3360 = vadd.f32 0.0, %v3359
          %v3361 = vpop.f32.mrf.mxu0
          %v3362 = vadd.f32 0.0, %v3361
          %3363 = vmatmul.bf16.gmra.mxu0 %v3283
          %v3364 = vpop.f32.mrf.mxu0
          %v3365 = vadd.f32 0.0, %v3364
          %v3366 = vpop.f32.mrf.mxu0
          %v3367 = vadd.f32 0.0, %v3366
          %3368 = vmatmul.bf16.gmra.mxu0 %v3284
          %v3369 = vpop.f32.mrf.mxu0
          %v3370 = vadd.f32 0.0, %v3369
          %v3371 = vpop.f32.mrf.mxu0
          %v3372 = vadd.f32 0.0, %v3371
          %3373 = vdwg.mxu0
          %v3374 = vpack.c.bf16 %v2948, %v2948
          %v3375 = vpack.c.bf16 %v2950, %v2950
          %v3376 = vpack.c.bf16 %v2953, %v2953
          %v3377 = vpack.c.bf16 %v2955, %v2955
          %v3378 = vpack.c.bf16 %v2958, %v2958
          %v3379 = vpack.c.bf16 %v2960, %v2960
          %v3380 = vpack.c.bf16 %v2963, %v2963
          %v3381 = vpack.c.bf16 %v2965, %v2965
          %v3382 = vpack.c.bf16 %v2968, %v2968
          %v3383 = vpack.c.bf16 %v2970, %v2970
          %v3384 = vpack.c.bf16 %v2973, %v2973
          %v3385 = vpack.c.bf16 %v2975, %v2975
          %v3386 = vpack.c.bf16 %v2978, %v2978
          %v3387 = vpack.c.bf16 %v2980, %v2980
          %v3388 = vpack.c.bf16 %v2983, %v2983
          %v3389 = vpack.c.bf16 %v2985, %v2985
          %v3390 = vpack.c.bf16 %v3077, %v3077
          %v3391 = vpack.c.bf16 %v3079, %v3079
          %v3392 = vpack.c.bf16 %v3082, %v3082
          %v3393 = vpack.c.bf16 %v3084, %v3084
          %v3394 = vpack.c.bf16 %v3087, %v3087
          %v3395 = vpack.c.bf16 %v3089, %v3089
          %v3396 = vpack.c.bf16 %v3092, %v3092
          %v3397 = vpack.c.bf16 %v3094, %v3094
          %v3398 = vpack.c.bf16 %v3097, %v3097
          %v3399 = vpack.c.bf16 %v3099, %v3099
          %v3400 = vpack.c.bf16 %v3102, %v3102
          %v3401 = vpack.c.bf16 %v3104, %v3104
          %v3402 = vpack.c.bf16 %v3107, %v3107
          %v3403 = vpack.c.bf16 %v3109, %v3109
          %v3404 = vpack.c.bf16 %v3112, %v3112
          %v3405 = vpack.c.bf16 %v3114, %v3114
          %v3406 = vpack.c.bf16 %v3206, %v3206
          %v3407 = vpack.c.bf16 %v3208, %v3208
          %v3408 = vpack.c.bf16 %v3211, %v3211
          %v3409 = vpack.c.bf16 %v3213, %v3213
          %v3410 = vpack.c.bf16 %v3216, %v3216
          %v3411 = vpack.c.bf16 %v3218, %v3218
          %v3412 = vpack.c.bf16 %v3221, %v3221
          %v3413 = vpack.c.bf16 %v3223, %v3223
          %v3414 = vpack.c.bf16 %v3226, %v3226
          %v3415 = vpack.c.bf16 %v3228, %v3228
          %v3416 = vpack.c.bf16 %v3231, %v3231
          %v3417 = vpack.c.bf16 %v3233, %v3233
          %v3418 = vpack.c.bf16 %v3236, %v3236
          %v3419 = vpack.c.bf16 %v3238, %v3238
          %v3420 = vpack.c.bf16 %v3241, %v3241
          %v3421 = vpack.c.bf16 %v3243, %v3243
          %v3422 = vpack.c.bf16 %v3335, %v3335
          %v3423 = vpack.c.bf16 %v3337, %v3337
          %v3424 = vpack.c.bf16 %v3340, %v3340
          %v3425 = vpack.c.bf16 %v3342, %v3342
          %v3426 = vpack.c.bf16 %v3345, %v3345
          %v3427 = vpack.c.bf16 %v3347, %v3347
          %v3428 = vpack.c.bf16 %v3350, %v3350
          %v3429 = vpack.c.bf16 %v3352, %v3352
          %v3430 = vpack.c.bf16 %v3355, %v3355
          %v3431 = vpack.c.bf16 %v3357, %v3357
          %v3432 = vpack.c.bf16 %v3360, %v3360
          %v3433 = vpack.c.bf16 %v3362, %v3362
          %v3434 = vpack.c.bf16 %v3365, %v3365
          %v3435 = vpack.c.bf16 %v3367, %v3367
          %v3436 = vpack.c.bf16 %v3370, %v3370
          %v3437 = vpack.c.bf16 %v3372, %v3372
          %v3454 = vunpack.c.l.b16 %v3374
          %v3455 = vunpack.c.l.b16 %v3375
          %v3456 = vunpack.c.l.b16 %v3376
          %v3457 = vunpack.c.l.b16 %v3377
          %v3458 = vunpack.c.l.b16 %v3378
          %v3459 = vunpack.c.l.b16 %v3379
          %v3460 = vunpack.c.l.b16 %v3380
          %v3461 = vunpack.c.l.b16 %v3381
          %v3462 = vunpack.c.l.b16 %v3382
          %v3463 = vunpack.c.l.b16 %v3383
          %v3464 = vunpack.c.l.b16 %v3384
          %v3465 = vunpack.c.l.b16 %v3385
          %v3466 = vunpack.c.l.b16 %v3386
          %v3467 = vunpack.c.l.b16 %v3387
          %v3468 = vunpack.c.l.b16 %v3388
          %v3469 = vunpack.c.l.b16 %v3389
          %v3470 = vpack.c.b16 %v3455, %v3454
          %v3471 = vpack.c.b16 %v3457, %v3456
          %v3472 = vpack.c.b16 %v3459, %v3458
          %v3473 = vpack.c.b16 %v3461, %v3460
          %v3474 = vpack.c.b16 %v3463, %v3462
          %v3475 = vpack.c.b16 %v3465, %v3464
          %v3476 = vpack.c.b16 %v3467, %v3466
          %v3477 = vpack.c.b16 %v3469, %v3468
          %v3494 = vunpack.c.l.b16 %v3390
          %v3495 = vunpack.c.l.b16 %v3391
          %v3496 = vunpack.c.l.b16 %v3392
          %v3497 = vunpack.c.l.b16 %v3393
          %v3498 = vunpack.c.l.b16 %v3394
          %v3499 = vunpack.c.l.b16 %v3395
          %v3500 = vunpack.c.l.b16 %v3396
          %v3501 = vunpack.c.l.b16 %v3397
          %v3502 = vunpack.c.l.b16 %v3398
          %v3503 = vunpack.c.l.b16 %v3399
          %v3504 = vunpack.c.l.b16 %v3400
          %v3505 = vunpack.c.l.b16 %v3401
          %v3506 = vunpack.c.l.b16 %v3402
          %v3507 = vunpack.c.l.b16 %v3403
          %v3508 = vunpack.c.l.b16 %v3404
          %v3509 = vunpack.c.l.b16 %v3405
          %v3510 = vpack.c.b16 %v3495, %v3494
          %v3511 = vpack.c.b16 %v3497, %v3496
          %v3512 = vpack.c.b16 %v3499, %v3498
          %v3513 = vpack.c.b16 %v3501, %v3500
          %v3514 = vpack.c.b16 %v3503, %v3502
          %v3515 = vpack.c.b16 %v3505, %v3504
          %v3516 = vpack.c.b16 %v3507, %v3506
          %v3517 = vpack.c.b16 %v3509, %v3508
          %3518 = vrot.lane.b32.xlu0 %v3510, 32
          %v3519 = vpop.permute.xlu0 %3518
          %3520 = vrot.lane.b32.xlu0 %v3511, 32
          %v3521 = vpop.permute.xlu0 %3520
          %3522 = vrot.lane.b32.xlu0 %v3512, 32
          %v3523 = vpop.permute.xlu0 %3522
          %3524 = vrot.lane.b32.xlu0 %v3513, 32
          %v3525 = vpop.permute.xlu0 %3524
          %3526 = vrot.lane.b32.xlu0 %v3514, 32
          %v3527 = vpop.permute.xlu0 %3526
          %3528 = vrot.lane.b32.xlu0 %v3515, 32
          %v3529 = vpop.permute.xlu0 %3528
          %3530 = vrot.lane.b32.xlu0 %v3516, 32
          %v3531 = vpop.permute.xlu0 %3530
          %3532 = vrot.lane.b32.xlu0 %v3517, 32
          %v3533 = vpop.permute.xlu0 %3532
          %v3550 = vunpack.c.l.b16 %v3406
          %v3551 = vunpack.c.l.b16 %v3407
          %v3552 = vunpack.c.l.b16 %v3408
          %v3553 = vunpack.c.l.b16 %v3409
          %v3554 = vunpack.c.l.b16 %v3410
          %v3555 = vunpack.c.l.b16 %v3411
          %v3556 = vunpack.c.l.b16 %v3412
          %v3557 = vunpack.c.l.b16 %v3413
          %v3558 = vunpack.c.l.b16 %v3414
          %v3559 = vunpack.c.l.b16 %v3415
          %v3560 = vunpack.c.l.b16 %v3416
          %v3561 = vunpack.c.l.b16 %v3417
          %v3562 = vunpack.c.l.b16 %v3418
          %v3563 = vunpack.c.l.b16 %v3419
          %v3564 = vunpack.c.l.b16 %v3420
          %v3565 = vunpack.c.l.b16 %v3421
          %v3566 = vpack.c.b16 %v3551, %v3550
          %v3567 = vpack.c.b16 %v3553, %v3552
          %v3568 = vpack.c.b16 %v3555, %v3554
          %v3569 = vpack.c.b16 %v3557, %v3556
          %v3570 = vpack.c.b16 %v3559, %v3558
          %v3571 = vpack.c.b16 %v3561, %v3560
          %v3572 = vpack.c.b16 %v3563, %v3562
          %v3573 = vpack.c.b16 %v3565, %v3564
          %3574 = vrot.lane.b32.xlu0 %v3566, 64
          %v3575 = vpop.permute.xlu0 %3574
          %3576 = vrot.lane.b32.xlu0 %v3567, 64
          %v3577 = vpop.permute.xlu0 %3576
          %3578 = vrot.lane.b32.xlu0 %v3568, 64
          %v3579 = vpop.permute.xlu0 %3578
          %3580 = vrot.lane.b32.xlu0 %v3569, 64
          %v3581 = vpop.permute.xlu0 %3580
          %3582 = vrot.lane.b32.xlu0 %v3570, 64
          %v3583 = vpop.permute.xlu0 %3582
          %3584 = vrot.lane.b32.xlu0 %v3571, 64
          %v3585 = vpop.permute.xlu0 %3584
          %3586 = vrot.lane.b32.xlu0 %v3572, 64
          %v3587 = vpop.permute.xlu0 %3586
          %3588 = vrot.lane.b32.xlu0 %v3573, 64
          %v3589 = vpop.permute.xlu0 %3588
          %v3606 = vunpack.c.l.b16 %v3422
          %v3607 = vunpack.c.l.b16 %v3423
          %v3608 = vunpack.c.l.b16 %v3424
          %v3609 = vunpack.c.l.b16 %v3425
          %v3610 = vunpack.c.l.b16 %v3426
          %v3611 = vunpack.c.l.b16 %v3427
          %v3612 = vunpack.c.l.b16 %v3428
          %v3613 = vunpack.c.l.b16 %v3429
          %v3614 = vunpack.c.l.b16 %v3430
          %v3615 = vunpack.c.l.b16 %v3431
          %v3616 = vunpack.c.l.b16 %v3432
          %v3617 = vunpack.c.l.b16 %v3433
          %v3618 = vunpack.c.l.b16 %v3434
          %v3619 = vunpack.c.l.b16 %v3435
          %v3620 = vunpack.c.l.b16 %v3436
          %v3621 = vunpack.c.l.b16 %v3437
          %v3622 = vpack.c.b16 %v3607, %v3606
          %v3623 = vpack.c.b16 %v3609, %v3608
          %v3624 = vpack.c.b16 %v3611, %v3610
          %v3625 = vpack.c.b16 %v3613, %v3612
          %v3626 = vpack.c.b16 %v3615, %v3614
          %v3627 = vpack.c.b16 %v3617, %v3616
          %v3628 = vpack.c.b16 %v3619, %v3618
          %v3629 = vpack.c.b16 %v3621, %v3620
          %3630 = vrot.lane.b32.xlu0 %v3622, 96
          %v3631 = vpop.permute.xlu0 %3630
          %3632 = vrot.lane.b32.xlu0 %v3623, 96
          %v3633 = vpop.permute.xlu0 %3632
          %3634 = vrot.lane.b32.xlu0 %v3624, 96
          %v3635 = vpop.permute.xlu0 %3634
          %3636 = vrot.lane.b32.xlu0 %v3625, 96
          %v3637 = vpop.permute.xlu0 %3636
          %3638 = vrot.lane.b32.xlu0 %v3626, 96
          %v3639 = vpop.permute.xlu0 %3638
          %3640 = vrot.lane.b32.xlu0 %v3627, 96
          %v3641 = vpop.permute.xlu0 %3640
          %3642 = vrot.lane.b32.xlu0 %v3628, 96
          %v3643 = vpop.permute.xlu0 %3642
          %3644 = vrot.lane.b32.xlu0 %v3629, 96
          %v3645 = vpop.permute.xlu0 %3644
          %v3648 = vsel %vm1616, %v3470, %v3519
          %v3651 = vsel %vm1616, %v3471, %v3521
          %v3654 = vsel %vm1616, %v3472, %v3523
          %v3657 = vsel %vm1616, %v3473, %v3525
          %v3660 = vsel %vm1616, %v3474, %v3527
          %v3663 = vsel %vm1616, %v3475, %v3529
          %v3666 = vsel %vm1616, %v3476, %v3531
          %v3669 = vsel %vm1616, %v3477, %v3533
          %vm3670 = vcmask 523264
          %v3672 = vsel %vm3670, %v3648, %v3575
          %v3674 = vsel %vm3670, %v3651, %v3577
          %v3676 = vsel %vm3670, %v3654, %v3579
          %v3678 = vsel %vm3670, %v3657, %v3581
          %v3680 = vsel %vm3670, %v3660, %v3583
          %v3682 = vsel %vm3670, %v3663, %v3585
          %v3684 = vsel %vm3670, %v3666, %v3587
          %v3686 = vsel %vm3670, %v3669, %v3589
          %vm3687 = vcmask 785408
          %v3689 = vsel %vm3687, %v3672, %v3631
          %v3692 = vsel %vm3687, %v3674, %v3633
          %v3695 = vsel %vm3687, %v3676, %v3635
          %v3698 = vsel %vm3687, %v3678, %v3637
          %v3701 = vsel %vm3687, %v3680, %v3639
          %v3704 = vsel %vm3687, %v3682, %v3641
          %v3707 = vsel %vm3687, %v3684, %v3643
          %v3710 = vsel %vm3687, %v3686, %v3645
          %v3712 = vld [vmem:[#allocation10] sm:$0xf]
          %v3713 = vld [vmem:[#allocation10 + $0x4] sm:$0xf]
          %v3714 = vld [vmem:[#allocation10 + $0x8] sm:$0xf]
          %v3715 = vld [vmem:[#allocation10 + $0xc] sm:$0xf]
          %v3716 = vld [vmem:[#allocation10 + $0x10] sm:$0xf]
          %v3717 = vld [vmem:[#allocation10 + $0x14] sm:$0xf]
          %v3718 = vld [vmem:[#allocation10 + $0x18] sm:$0xf]
          %v3719 = vld [vmem:[#allocation10 + $0x1c] sm:$0xf]
          %v3720 = vld [vmem:[#allocation10 + $0x20] sm:$0xf]
          %v3721 = vld [vmem:[#allocation10 + $0x24] sm:$0xf]
          %v3722 = vld [vmem:[#allocation10 + $0x28] sm:$0xf]
          %v3723 = vld [vmem:[#allocation10 + $0x2c] sm:$0xf]
          %v3724 = vld [vmem:[#allocation10 + $0x30] sm:$0xf]
          %v3725 = vld [vmem:[#allocation10 + $0x34] sm:$0xf]
          %v3726 = vld [vmem:[#allocation10 + $0x38] sm:$0xf]
          %v3727 = vld [vmem:[#allocation10 + $0x3c] sm:$0xf]
          %v3728 = vld [vmem:[%s5] sm:$0x1]
          %v3730 = vperm.slane %v3728, 0
          %v3748 = vunpack.c.l.b16 %v3712
          %v3749 = vunpack.c.l.b16 %v3713
          %v3750 = vunpack.c.l.b16 %v3714
          %v3751 = vunpack.c.l.b16 %v3715
          %v3752 = vunpack.c.l.b16 %v3716
          %v3753 = vunpack.c.l.b16 %v3717
          %v3754 = vunpack.c.l.b16 %v3718
          %v3755 = vunpack.c.l.b16 %v3719
          %v3756 = vunpack.c.l.b16 %v3720
          %v3757 = vunpack.c.l.b16 %v3721
          %v3758 = vunpack.c.l.b16 %v3722
          %v3759 = vunpack.c.l.b16 %v3723
          %v3760 = vunpack.c.l.b16 %v3724
          %v3761 = vunpack.c.l.b16 %v3725
          %v3762 = vunpack.c.l.b16 %v3726
          %v3763 = vunpack.c.l.b16 %v3727
          %v3764 = vpack.c.b16 %v3749, %v3748
          %v3765 = vpack.c.b16 %v3751, %v3750
          %v3766 = vpack.c.b16 %v3753, %v3752
          %v3767 = vpack.c.b16 %v3755, %v3754
          %v3768 = vpack.c.b16 %v3757, %v3756
          %v3769 = vpack.c.b16 %v3759, %v3758
          %v3770 = vpack.c.b16 %v3761, %v3760
          %v3771 = vpack.c.b16 %v3763, %v3762
          %3780 = vmatpush.bf16.msra.mxu0 %v3771
          %3781 = vmatpush.bf16.msra.mxu0 %v3770
          %3782 = vmatpush.bf16.msra.mxu0 %v3769
          %3783 = vmatpush.bf16.msra.mxu0 %v3768
          %3784 = vmatpush.bf16.msra.mxu0 %v3767
          %3785 = vmatpush.bf16.msra.mxu0 %v3766
          %3786 = vmatpush.bf16.msra.mxu0 %v3765
          %3787 = vmatpush.bf16.msra.mxu0 %v3764
          %3788 = vmatmul.bf16.gmra.mxu0 %v3689
          %v3789 = vpop.f32.mrf.mxu0
          %v3790 = vadd.f32 %v3730, %v3789
          %v3791 = vpop.f32.mrf.mxu0
          %v3792 = vadd.f32 %v3730, %v3791
          %3793 = vmatmul.bf16.gmra.mxu0 %v3692
          %v3794 = vpop.f32.mrf.mxu0
          %v3795 = vadd.f32 %v3730, %v3794
          %v3796 = vpop.f32.mrf.mxu0
          %v3797 = vadd.f32 %v3730, %v3796
          %3798 = vmatmul.bf16.gmra.mxu0 %v3695
          %v3799 = vpop.f32.mrf.mxu0
          %v3800 = vadd.f32 %v3730, %v3799
          %v3801 = vpop.f32.mrf.mxu0
          %v3802 = vadd.f32 %v3730, %v3801
          %3803 = vmatmul.bf16.gmra.mxu0 %v3698
          %v3804 = vpop.f32.mrf.mxu0
          %v3805 = vadd.f32 %v3730, %v3804
          %v3806 = vpop.f32.mrf.mxu0
          %v3807 = vadd.f32 %v3730, %v3806
          %3808 = vmatmul.bf16.gmra.mxu0 %v3701
          %v3809 = vpop.f32.mrf.mxu0
          %v3810 = vadd.f32 %v3730, %v3809
          %v3811 = vpop.f32.mrf.mxu0
          %v3812 = vadd.f32 %v3730, %v3811
          %3813 = vmatmul.bf16.gmra.mxu0 %v3704
          %v3814 = vpop.f32.mrf.mxu0
          %v3815 = vadd.f32 %v3730, %v3814
          %v3816 = vpop.f32.mrf.mxu0
          %v3817 = vadd.f32 %v3730, %v3816
          %3818 = vmatmul.bf16.gmra.mxu0 %v3707
          %v3819 = vpop.f32.mrf.mxu0
          %v3820 = vadd.f32 %v3730, %v3819
          %v3821 = vpop.f32.mrf.mxu0
          %v3822 = vadd.f32 %v3730, %v3821
          %3823 = vmatmul.bf16.gmra.mxu0 %v3710
          %v3824 = vpop.f32.mrf.mxu0
          %v3825 = vadd.f32 %v3730, %v3824
          %v3826 = vpop.f32.mrf.mxu0
          %v3827 = vadd.f32 %v3730, %v3826
          %3828 = vdwg.mxu0
          %v3829 = vadd.f32 %v550, %v3790
          %v3830 = vadd.f32 %v551, %v3792
          %v3831 = vadd.f32 %v552, %v3795
          %v3832 = vadd.f32 %v553, %v3797
          %v3833 = vadd.f32 %v554, %v3800
          %v3834 = vadd.f32 %v555, %v3802
          %v3835 = vadd.f32 %v556, %v3805
          %v3836 = vadd.f32 %v557, %v3807
          %v3837 = vadd.f32 %v558, %v3810
          %v3838 = vadd.f32 %v559, %v3812
          %v3839 = vadd.f32 %v560, %v3815
          %v3840 = vadd.f32 %v561, %v3817
          %v3841 = vadd.f32 %v562, %v3820
          %v3842 = vadd.f32 %v563, %v3822
          %v3843 = vadd.f32 %v564, %v3825
          %v3844 = vadd.f32 %v565, %v3827
          %3845 = vst [vmem:[%s542] sm:$0xff] %v3829
          %3846 = vst [vmem:[%s542 + $0x8] sm:$0xff] %v3830
          %3847 = vst [vmem:[%s542 + $0x10] sm:$0xff] %v3831
          %3848 = vst [vmem:[%s542 + $0x18] sm:$0xff] %v3832
          %3849 = vst [vmem:[%s542 + $0x20] sm:$0xff] %v3833
          %3850 = vst [vmem:[%s542 + $0x28] sm:$0xff] %v3834
          %3851 = vst [vmem:[%s542 + $0x30] sm:$0xff] %v3835
          %3852 = vst [vmem:[%s542 + $0x38] sm:$0xff] %v3836
          %3853 = vst [vmem:[%s542 + $0x40] sm:$0xff] %v3837
          %3854 = vst [vmem:[%s542 + $0x48] sm:$0xff] %v3838
          %3855 = vst [vmem:[%s542 + $0x50] sm:$0xff] %v3839
          %3856 = vst [vmem:[%s542 + $0x58] sm:$0xff] %v3840
          %3857 = vst [vmem:[%s542 + $0x60] sm:$0xff] %v3841
          %3858 = vst [vmem:[%s542 + $0x68] sm:$0xff] %v3842
          %3859 = vst [vmem:[%s542 + $0x70] sm:$0xff] %v3843
          %3860 = vst [vmem:[%s542 + $0x78] sm:$0xff] %v3844
          %v3861 = vld [vmem:[%s6] sm:$0x1]
          %v3862 = vld [vmem:[%s7] sm:$0x1]
          %3863 = vadd.xlane.f32.xlu0 %v3829
          %v3864 = vpop.xlane.xlu0 %3863
          %3865 = vadd.xlane.f32.xlu0 %v3830
          %v3866 = vpop.xlane.xlu0 %3865
          %3867 = vadd.xlane.f32.xlu0 %v3831
          %v3868 = vpop.xlane.xlu0 %3867
          %3869 = vadd.xlane.f32.xlu0 %v3832
          %v3870 = vpop.xlane.xlu0 %3869
          %3871 = vadd.xlane.f32.xlu0 %v3833
          %v3872 = vpop.xlane.xlu0 %3871
          %3873 = vadd.xlane.f32.xlu0 %v3834
          %v3874 = vpop.xlane.xlu0 %3873
          %3875 = vadd.xlane.f32.xlu0 %v3835
          %v3876 = vpop.xlane.xlu0 %3875
          %3877 = vadd.xlane.f32.xlu0 %v3836
          %v3878 = vpop.xlane.xlu0 %3877
          %3879 = vadd.xlane.f32.xlu0 %v3837
          %v3880 = vpop.xlane.xlu0 %3879
          %3881 = vadd.xlane.f32.xlu0 %v3838
          %v3882 = vpop.xlane.xlu0 %3881
          %3883 = vadd.xlane.f32.xlu0 %v3839
          %v3884 = vpop.xlane.xlu0 %3883
          %3885 = vadd.xlane.f32.xlu0 %v3840
          %v3886 = vpop.xlane.xlu0 %3885
          %3887 = vadd.xlane.f32.xlu0 %v3841
          %v3888 = vpop.xlane.xlu0 %3887
          %3889 = vadd.xlane.f32.xlu0 %v3842
          %v3890 = vpop.xlane.xlu0 %3889
          %3891 = vadd.xlane.f32.xlu0 %v3843
          %v3892 = vpop.xlane.xlu0 %3891
          %3893 = vadd.xlane.f32.xlu0 %v3844
          %v3894 = vpop.xlane.xlu0 %3893
          %v3895 = vmul.f32 %v3864, %v606
          %v3896 = vmul.f32 %v3866, %v606
          %v3897 = vmul.f32 %v3868, %v606
          %v3898 = vmul.f32 %v3870, %v606
          %v3899 = vmul.f32 %v3872, %v606
          %v3900 = vmul.f32 %v3874, %v606
          %v3901 = vmul.f32 %v3876, %v606
          %v3902 = vmul.f32 %v3878, %v606
          %v3903 = vmul.f32 %v3880, %v606
          %v3904 = vmul.f32 %v3882, %v606
          %v3905 = vmul.f32 %v3884, %v606
          %v3906 = vmul.f32 %v3886, %v606
          %v3907 = vmul.f32 %v3888, %v606
          %v3908 = vmul.f32 %v3890, %v606
          %v3909 = vmul.f32 %v3892, %v606
          %v3910 = vmul.f32 %v3894, %v606
          %v3911 = vsub.f32 %v3829, %v3895
          %v3912 = vsub.f32 %v3830, %v3896
          %v3913 = vsub.f32 %v3831, %v3897
          %v3914 = vsub.f32 %v3832, %v3898
          %v3915 = vsub.f32 %v3833, %v3899
          %v3916 = vsub.f32 %v3834, %v3900
          %v3917 = vsub.f32 %v3835, %v3901
          %v3918 = vsub.f32 %v3836, %v3902
          %v3919 = vsub.f32 %v3837, %v3903
          %v3920 = vsub.f32 %v3838, %v3904
          %v3921 = vsub.f32 %v3839, %v3905
          %v3922 = vsub.f32 %v3840, %v3906
          %v3923 = vsub.f32 %v3841, %v3907
          %v3924 = vsub.f32 %v3842, %v3908
          %v3925 = vsub.f32 %v3843, %v3909
          %v3926 = vsub.f32 %v3844, %v3910
          %v3927 = vmul.f32 %v3911, %v3911
          %v3928 = vmul.f32 %v3912, %v3912
          %v3929 = vmul.f32 %v3913, %v3913
          %v3930 = vmul.f32 %v3914, %v3914
          %v3931 = vmul.f32 %v3915, %v3915
          %v3932 = vmul.f32 %v3916, %v3916
          %v3933 = vmul.f32 %v3917, %v3917
          %v3934 = vmul.f32 %v3918, %v3918
          %v3935 = vmul.f32 %v3919, %v3919
          %v3936 = vmul.f32 %v3920, %v3920
          %v3937 = vmul.f32 %v3921, %v3921
          %v3938 = vmul.f32 %v3922, %v3922
          %v3939 = vmul.f32 %v3923, %v3923
          %v3940 = vmul.f32 %v3924, %v3924
          %v3941 = vmul.f32 %v3925, %v3925
          %v3942 = vmul.f32 %v3926, %v3926
          %3943 = vadd.xlane.f32.xlu0 %v3927
          %v3944 = vpop.xlane.xlu0 %3943
          %3945 = vadd.xlane.f32.xlu0 %v3928
          %v3946 = vpop.xlane.xlu0 %3945
          %3947 = vadd.xlane.f32.xlu0 %v3929
          %v3948 = vpop.xlane.xlu0 %3947
          %3949 = vadd.xlane.f32.xlu0 %v3930
          %v3950 = vpop.xlane.xlu0 %3949
          %3951 = vadd.xlane.f32.xlu0 %v3931
          %v3952 = vpop.xlane.xlu0 %3951
          %3953 = vadd.xlane.f32.xlu0 %v3932
          %v3954 = vpop.xlane.xlu0 %3953
          %3955 = vadd.xlane.f32.xlu0 %v3933
          %v3956 = vpop.xlane.xlu0 %3955
          %3957 = vadd.xlane.f32.xlu0 %v3934
          %v3958 = vpop.xlane.xlu0 %3957
          %3959 = vadd.xlane.f32.xlu0 %v3935
          %v3960 = vpop.xlane.xlu0 %3959
          %3961 = vadd.xlane.f32.xlu0 %v3936
          %v3962 = vpop.xlane.xlu0 %3961
          %3963 = vadd.xlane.f32.xlu0 %v3937
          %v3964 = vpop.xlane.xlu0 %3963
          %3965 = vadd.xlane.f32.xlu0 %v3938
          %v3966 = vpop.xlane.xlu0 %3965
          %3967 = vadd.xlane.f32.xlu0 %v3939
          %v3968 = vpop.xlane.xlu0 %3967
          %3969 = vadd.xlane.f32.xlu0 %v3940
          %v3970 = vpop.xlane.xlu0 %3969
          %3971 = vadd.xlane.f32.xlu0 %v3941
          %v3972 = vpop.xlane.xlu0 %3971
          %3973 = vadd.xlane.f32.xlu0 %v3942
          %v3974 = vpop.xlane.xlu0 %3973
          %v3975 = vmul.f32 %v3944, %v606
          %v3976 = vmul.f32 %v3946, %v606
          %v3977 = vmul.f32 %v3948, %v606
          %v3978 = vmul.f32 %v3950, %v606
          %v3979 = vmul.f32 %v3952, %v606
          %v3980 = vmul.f32 %v3954, %v606
          %v3981 = vmul.f32 %v3956, %v606
          %v3982 = vmul.f32 %v3958, %v606
          %v3983 = vmul.f32 %v3960, %v606
          %v3984 = vmul.f32 %v3962, %v606
          %v3985 = vmul.f32 %v3964, %v606
          %v3986 = vmul.f32 %v3966, %v606
          %v3987 = vmul.f32 %v3968, %v606
          %v3988 = vmul.f32 %v3970, %v606
          %v3989 = vmul.f32 %v3972, %v606
          %v3990 = vmul.f32 %v3974, %v606
          %v3991 = vadd.f32 %v3975, 1e-05
          %v3992 = vadd.f32 %v3976, 1e-05
          %v3993 = vadd.f32 %v3977, 1e-05
          %v3994 = vadd.f32 %v3978, 1e-05
          %v3995 = vadd.f32 %v3979, 1e-05
          %v3996 = vadd.f32 %v3980, 1e-05
          %v3997 = vadd.f32 %v3981, 1e-05
          %v3998 = vadd.f32 %v3982, 1e-05
          %v3999 = vadd.f32 %v3983, 1e-05
          %v4000 = vadd.f32 %v3984, 1e-05
          %v4001 = vadd.f32 %v3985, 1e-05
          %v4002 = vadd.f32 %v3986, 1e-05
          %v4003 = vadd.f32 %v3987, 1e-05
          %v4004 = vadd.f32 %v3988, 1e-05
          %v4005 = vadd.f32 %v3989, 1e-05
          %v4006 = vadd.f32 %v3990, 1e-05
          %v4007 = vrsqrt.pop %v3991
          %v4008 = vmul.f32 %v4007, %v3991
          %v4009 = vmul.f32 %v4008, %v4007
          %v4010 = vmul.f32 0.5, %v4009
          %v4011 = vsub.f32 1.5, %v4010
          %v4012 = vmul.f32 %v4007, %v4011
          %vm4013 = vweird.f32 %v3991
          %vm4014 = vweird.f32 %v4007
          %vm4015 = vmor %vm4013, %vm4014
          %v4016 = vsel %vm4015, %v4007, %v4012
          %v4017 = vrsqrt.pop %v3992
          %v4018 = vmul.f32 %v4017, %v3992
          %v4019 = vmul.f32 %v4018, %v4017
          %v4020 = vmul.f32 0.5, %v4019
          %v4021 = vsub.f32 1.5, %v4020
          %v4022 = vmul.f32 %v4017, %v4021
          %vm4023 = vweird.f32 %v3992
          %vm4024 = vweird.f32 %v4017
          %vm4025 = vmor %vm4023, %vm4024
          %v4026 = vsel %vm4025, %v4017, %v4022
          %v4027 = vrsqrt.pop %v3993
          %v4028 = vmul.f32 %v4027, %v3993
          %v4029 = vmul.f32 %v4028, %v4027
          %v4030 = vmul.f32 0.5, %v4029
          %v4031 = vsub.f32 1.5, %v4030
          %v4032 = vmul.f32 %v4027, %v4031
          %vm4033 = vweird.f32 %v3993
          %vm4034 = vweird.f32 %v4027
          %vm4035 = vmor %vm4033, %vm4034
          %v4036 = vsel %vm4035, %v4027, %v4032
          %v4037 = vrsqrt.pop %v3994
          %v4038 = vmul.f32 %v4037, %v3994
          %v4039 = vmul.f32 %v4038, %v4037
          %v4040 = vmul.f32 0.5, %v4039
          %v4041 = vsub.f32 1.5, %v4040
          %v4042 = vmul.f32 %v4037, %v4041
          %vm4043 = vweird.f32 %v3994
          %vm4044 = vweird.f32 %v4037
          %vm4045 = vmor %vm4043, %vm4044
          %v4046 = vsel %vm4045, %v4037, %v4042
          %v4047 = vrsqrt.pop %v3995
          %v4048 = vmul.f32 %v4047, %v3995
          %v4049 = vmul.f32 %v4048, %v4047
          %v4050 = vmul.f32 0.5, %v4049
          %v4051 = vsub.f32 1.5, %v4050
          %v4052 = vmul.f32 %v4047, %v4051
          %vm4053 = vweird.f32 %v3995
          %vm4054 = vweird.f32 %v4047
          %vm4055 = vmor %vm4053, %vm4054
          %v4056 = vsel %vm4055, %v4047, %v4052
          %v4057 = vrsqrt.pop %v3996
          %v4058 = vmul.f32 %v4057, %v3996
          %v4059 = vmul.f32 %v4058, %v4057
          %v4060 = vmul.f32 0.5, %v4059
          %v4061 = vsub.f32 1.5, %v4060
          %v4062 = vmul.f32 %v4057, %v4061
          %vm4063 = vweird.f32 %v3996
          %vm4064 = vweird.f32 %v4057
          %vm4065 = vmor %vm4063, %vm4064
          %v4066 = vsel %vm4065, %v4057, %v4062
          %v4067 = vrsqrt.pop %v3997
          %v4068 = vmul.f32 %v4067, %v3997
          %v4069 = vmul.f32 %v4068, %v4067
          %v4070 = vmul.f32 0.5, %v4069
          %v4071 = vsub.f32 1.5, %v4070
          %v4072 = vmul.f32 %v4067, %v4071
          %vm4073 = vweird.f32 %v3997
          %vm4074 = vweird.f32 %v4067
          %vm4075 = vmor %vm4073, %vm4074
          %v4076 = vsel %vm4075, %v4067, %v4072
          %v4077 = vrsqrt.pop %v3998
          %v4078 = vmul.f32 %v4077, %v3998
          %v4079 = vmul.f32 %v4078, %v4077
          %v4080 = vmul.f32 0.5, %v4079
          %v4081 = vsub.f32 1.5, %v4080
          %v4082 = vmul.f32 %v4077, %v4081
          %vm4083 = vweird.f32 %v3998
          %vm4084 = vweird.f32 %v4077
          %vm4085 = vmor %vm4083, %vm4084
          %v4086 = vsel %vm4085, %v4077, %v4082
          %v4087 = vrsqrt.pop %v3999
          %v4088 = vmul.f32 %v4087, %v3999
          %v4089 = vmul.f32 %v4088, %v4087
          %v4090 = vmul.f32 0.5, %v4089
          %v4091 = vsub.f32 1.5, %v4090
          %v4092 = vmul.f32 %v4087, %v4091
          %vm4093 = vweird.f32 %v3999
          %vm4094 = vweird.f32 %v4087
          %vm4095 = vmor %vm4093, %vm4094
          %v4096 = vsel %vm4095, %v4087, %v4092
          %v4097 = vrsqrt.pop %v4000
          %v4098 = vmul.f32 %v4097, %v4000
          %v4099 = vmul.f32 %v4098, %v4097
          %v4100 = vmul.f32 0.5, %v4099
          %v4101 = vsub.f32 1.5, %v4100
          %v4102 = vmul.f32 %v4097, %v4101
          %vm4103 = vweird.f32 %v4000
          %vm4104 = vweird.f32 %v4097
          %vm4105 = vmor %vm4103, %vm4104
          %v4106 = vsel %vm4105, %v4097, %v4102
          %v4107 = vrsqrt.pop %v4001
          %v4108 = vmul.f32 %v4107, %v4001
          %v4109 = vmul.f32 %v4108, %v4107
          %v4110 = vmul.f32 0.5, %v4109
          %v4111 = vsub.f32 1.5, %v4110
          %v4112 = vmul.f32 %v4107, %v4111
          %vm4113 = vweird.f32 %v4001
          %vm4114 = vweird.f32 %v4107
          %vm4115 = vmor %vm4113, %vm4114
          %v4116 = vsel %vm4115, %v4107, %v4112
          %v4117 = vrsqrt.pop %v4002
          %v4118 = vmul.f32 %v4117, %v4002
          %v4119 = vmul.f32 %v4118, %v4117
          %v4120 = vmul.f32 0.5, %v4119
          %v4121 = vsub.f32 1.5, %v4120
          %v4122 = vmul.f32 %v4117, %v4121
          %vm4123 = vweird.f32 %v4002
          %vm4124 = vweird.f32 %v4117
          %vm4125 = vmor %vm4123, %vm4124
          %v4126 = vsel %vm4125, %v4117, %v4122
          %v4127 = vrsqrt.pop %v4003
          %v4128 = vmul.f32 %v4127, %v4003
          %v4129 = vmul.f32 %v4128, %v4127
          %v4130 = vmul.f32 0.5, %v4129
          %v4131 = vsub.f32 1.5, %v4130
          %v4132 = vmul.f32 %v4127, %v4131
          %vm4133 = vweird.f32 %v4003
          %vm4134 = vweird.f32 %v4127
          %vm4135 = vmor %vm4133, %vm4134
          %v4136 = vsel %vm4135, %v4127, %v4132
          %v4137 = vrsqrt.pop %v4004
          %v4138 = vmul.f32 %v4137, %v4004
          %v4139 = vmul.f32 %v4138, %v4137
          %v4140 = vmul.f32 0.5, %v4139
          %v4141 = vsub.f32 1.5, %v4140
          %v4142 = vmul.f32 %v4137, %v4141
          %vm4143 = vweird.f32 %v4004
          %vm4144 = vweird.f32 %v4137
          %vm4145 = vmor %vm4143, %vm4144
          %v4146 = vsel %vm4145, %v4137, %v4142
          %v4147 = vrsqrt.pop %v4005
          %v4148 = vmul.f32 %v4147, %v4005
          %v4149 = vmul.f32 %v4148, %v4147
          %v4150 = vmul.f32 0.5, %v4149
          %v4151 = vsub.f32 1.5, %v4150
          %v4152 = vmul.f32 %v4147, %v4151
          %vm4153 = vweird.f32 %v4005
          %vm4154 = vweird.f32 %v4147
          %vm4155 = vmor %vm4153, %vm4154
          %v4156 = vsel %vm4155, %v4147, %v4152
          %v4157 = vrsqrt.pop %v4006
          %v4158 = vmul.f32 %v4157, %v4006
          %v4159 = vmul.f32 %v4158, %v4157
          %v4160 = vmul.f32 0.5, %v4159
          %v4161 = vsub.f32 1.5, %v4160
          %v4162 = vmul.f32 %v4157, %v4161
          %vm4163 = vweird.f32 %v4006
          %vm4164 = vweird.f32 %v4157
          %vm4165 = vmor %vm4163, %vm4164
          %v4166 = vsel %vm4165, %v4157, %v4162
          %v4167 = vmul.f32 %v3911, %v4016
          %v4168 = vmul.f32 %v3912, %v4026
          %v4169 = vmul.f32 %v3913, %v4036
          %v4170 = vmul.f32 %v3914, %v4046
          %v4171 = vmul.f32 %v3915, %v4056
          %v4172 = vmul.f32 %v3916, %v4066
          %v4173 = vmul.f32 %v3917, %v4076
          %v4174 = vmul.f32 %v3918, %v4086
          %v4175 = vmul.f32 %v3919, %v4096
          %v4176 = vmul.f32 %v3920, %v4106
          %v4177 = vmul.f32 %v3921, %v4116
          %v4178 = vmul.f32 %v3922, %v4126
          %v4179 = vmul.f32 %v3923, %v4136
          %v4180 = vmul.f32 %v3924, %v4146
          %v4181 = vmul.f32 %v3925, %v4156
          %v4182 = vmul.f32 %v3926, %v4166
          %v4184 = vperm.slane %v3861, 0
          %v4186 = vmul.f32 %v4167, %v4184
          %v4187 = vmul.f32 %v4168, %v4184
          %v4188 = vmul.f32 %v4169, %v4184
          %v4189 = vmul.f32 %v4170, %v4184
          %v4190 = vmul.f32 %v4171, %v4184
          %v4191 = vmul.f32 %v4172, %v4184
          %v4192 = vmul.f32 %v4173, %v4184
          %v4193 = vmul.f32 %v4174, %v4184
          %v4194 = vmul.f32 %v4175, %v4184
          %v4195 = vmul.f32 %v4176, %v4184
          %v4196 = vmul.f32 %v4177, %v4184
          %v4197 = vmul.f32 %v4178, %v4184
          %v4198 = vmul.f32 %v4179, %v4184
          %v4199 = vmul.f32 %v4180, %v4184
          %v4200 = vmul.f32 %v4181, %v4184
          %v4201 = vmul.f32 %v4182, %v4184
          %v4203 = vperm.slane %v3862, 0
          %v4205 = vadd.f32 %v4186, %v4203
          %v4206 = vadd.f32 %v4187, %v4203
          %v4207 = vadd.f32 %v4188, %v4203
          %v4208 = vadd.f32 %v4189, %v4203
          %v4209 = vadd.f32 %v4190, %v4203
          %v4210 = vadd.f32 %v4191, %v4203
          %v4211 = vadd.f32 %v4192, %v4203
          %v4212 = vadd.f32 %v4193, %v4203
          %v4213 = vadd.f32 %v4194, %v4203
          %v4214 = vadd.f32 %v4195, %v4203
          %v4215 = vadd.f32 %v4196, %v4203
          %v4216 = vadd.f32 %v4197, %v4203
          %v4217 = vadd.f32 %v4198, %v4203
          %v4218 = vadd.f32 %v4199, %v4203
          %v4219 = vadd.f32 %v4200, %v4203
          %v4220 = vadd.f32 %v4201, %v4203
          %v4221 = vtanh.pop %v4205
          %v4222 = vtanh.pop %v4206
          %v4223 = vtanh.pop %v4207
          %v4224 = vtanh.pop %v4208
          %v4225 = vtanh.pop %v4209
          %v4226 = vtanh.pop %v4210
          %v4227 = vtanh.pop %v4211
          %v4228 = vtanh.pop %v4212
          %v4229 = vtanh.pop %v4213
          %v4230 = vtanh.pop %v4214
          %v4231 = vtanh.pop %v4215
          %v4232 = vtanh.pop %v4216
          %v4233 = vtanh.pop %v4217
          %v4234 = vtanh.pop %v4218
          %v4235 = vtanh.pop %v4219
          %v4236 = vtanh.pop %v4220
          %4237 = vst [vmem:[#allocation2] sm:$0xf] 1065369472
          %4238 = vst [vmem:[#allocation2 + $0x10] sm:$0xf] 1065369472
          %4239 = vst [vmem:[#allocation2 + $0x20] sm:$0xf] 1065369472
          %4240 = vst [vmem:[#allocation2 + $0x30] sm:$0xf] 1065369472
          %4241 = vst [vmem:[#allocation2 + $0x40] sm:$0xf] 1065369472
          %4242 = vst [vmem:[#allocation2 + $0x50] sm:$0xf] 1065369472
          %4243 = vst [vmem:[#allocation2 + $0x60] sm:$0xf] 1065369472
          %4244 = vst [vmem:[#allocation2 + $0x70] sm:$0xf] 1065369472
          %4245 = vst [vmem:[#allocation2 + $0x80] sm:$0xf] 1065369472
          %4246 = vst [vmem:[#allocation2 + $0x90] sm:$0xf] 1065369472
          %4247 = vst [vmem:[#allocation2 + $0xa0] sm:$0xf] 1065369472
          %4248 = vst [vmem:[#allocation2 + $0xb0] sm:$0xf] 1065369472
          %4249 = vst [vmem:[#allocation2 + $0xc0] sm:$0xf] 1065369472
          %4250 = vst [vmem:[#allocation2 + $0xd0] sm:$0xf] 1065369472
          %4251 = vst [vmem:[#allocation2 + $0xe0] sm:$0xf] 1065369472
          %4252 = vst [vmem:[#allocation2 + $0xf0] sm:$0xf] 1065369472
          %v4253 = vpack.c.bf16 %v4221, %v4221
          %v4254 = vpack.c.bf16 %v4222, %v4222
          %v4255 = vpack.c.bf16 %v4223, %v4223
          %v4256 = vpack.c.bf16 %v4224, %v4224
          %v4257 = vpack.c.bf16 %v4225, %v4225
          %v4258 = vpack.c.bf16 %v4226, %v4226
          %v4259 = vpack.c.bf16 %v4227, %v4227
          %v4260 = vpack.c.bf16 %v4228, %v4228
          %v4261 = vpack.c.bf16 %v4229, %v4229
          %v4262 = vpack.c.bf16 %v4230, %v4230
          %v4263 = vpack.c.bf16 %v4231, %v4231
          %v4264 = vpack.c.bf16 %v4232, %v4232
          %v4265 = vpack.c.bf16 %v4233, %v4233
          %v4266 = vpack.c.bf16 %v4234, %v4234
          %v4267 = vpack.c.bf16 %v4235, %v4235
          %v4268 = vpack.c.bf16 %v4236, %v4236
          %4269 = vst [vmem:[#allocation2 + $0x4] sm:$0xf] %v4253
          %4270 = vst [vmem:[#allocation2 + $0x14] sm:$0xf] %v4254
          %4271 = vst [vmem:[#allocation2 + $0x24] sm:$0xf] %v4255
          %4272 = vst [vmem:[#allocation2 + $0x34] sm:$0xf] %v4256
          %4273 = vst [vmem:[#allocation2 + $0x44] sm:$0xf] %v4257
          %4274 = vst [vmem:[#allocation2 + $0x54] sm:$0xf] %v4258
          %4275 = vst [vmem:[#allocation2 + $0x64] sm:$0xf] %v4259
          %4276 = vst [vmem:[#allocation2 + $0x74] sm:$0xf] %v4260
          %4277 = vst [vmem:[#allocation2 + $0x84] sm:$0xf] %v4261
          %4278 = vst [vmem:[#allocation2 + $0x94] sm:$0xf] %v4262
          %4279 = vst [vmem:[#allocation2 + $0xa4] sm:$0xf] %v4263
          %4280 = vst [vmem:[#allocation2 + $0xb4] sm:$0xf] %v4264
          %4281 = vst [vmem:[#allocation2 + $0xc4] sm:$0xf] %v4265
          %4282 = vst [vmem:[#allocation2 + $0xd4] sm:$0xf] %v4266
          %4283 = vst [vmem:[#allocation2 + $0xe4] sm:$0xf] %v4267
          %4284 = vst [vmem:[#allocation2 + $0xf4] sm:$0xf] %v4268
          %v4285 = vmul.f32 %v4221, 2.0
          %v4286 = vmul.f32 %v4222, 2.0
          %v4287 = vmul.f32 %v4223, 2.0
          %v4288 = vmul.f32 %v4224, 2.0
          %v4289 = vmul.f32 %v4225, 2.0
          %v4290 = vmul.f32 %v4226, 2.0
          %v4291 = vmul.f32 %v4227, 2.0
          %v4292 = vmul.f32 %v4228, 2.0
          %v4293 = vmul.f32 %v4229, 2.0
          %v4294 = vmul.f32 %v4230, 2.0
          %v4295 = vmul.f32 %v4231, 2.0
          %v4296 = vmul.f32 %v4232, 2.0
          %v4297 = vmul.f32 %v4233, 2.0
          %v4298 = vmul.f32 %v4234, 2.0
          %v4299 = vmul.f32 %v4235, 2.0
          %v4300 = vmul.f32 %v4236, 2.0
          %v4301 = vmul.f32 %v4285, %v4221
          %v4302 = vmul.f32 %v4286, %v4222
          %v4303 = vmul.f32 %v4287, %v4223
          %v4304 = vmul.f32 %v4288, %v4224
          %v4305 = vmul.f32 %v4289, %v4225
          %v4306 = vmul.f32 %v4290, %v4226
          %v4307 = vmul.f32 %v4291, %v4227
          %v4308 = vmul.f32 %v4292, %v4228
          %v4309 = vmul.f32 %v4293, %v4229
          %v4310 = vmul.f32 %v4294, %v4230
          %v4311 = vmul.f32 %v4295, %v4231
          %v4312 = vmul.f32 %v4296, %v4232
          %v4313 = vmul.f32 %v4297, %v4233
          %v4314 = vmul.f32 %v4298, %v4234
          %v4315 = vmul.f32 %v4299, %v4235
          %v4316 = vmul.f32 %v4300, %v4236
          %v4317 = vsub.f32 %v4301, 1.0
          %v4318 = vsub.f32 %v4302, 1.0
          %v4319 = vsub.f32 %v4303, 1.0
          %v4320 = vsub.f32 %v4304, 1.0
          %v4321 = vsub.f32 %v4305, 1.0
          %v4322 = vsub.f32 %v4306, 1.0
          %v4323 = vsub.f32 %v4307, 1.0
          %v4324 = vsub.f32 %v4308, 1.0
          %v4325 = vsub.f32 %v4309, 1.0
          %v4326 = vsub.f32 %v4310, 1.0
          %v4327 = vsub.f32 %v4311, 1.0
          %v4328 = vsub.f32 %v4312, 1.0
          %v4329 = vsub.f32 %v4313, 1.0
          %v4330 = vsub.f32 %v4314, 1.0
          %v4331 = vsub.f32 %v4315, 1.0
          %v4332 = vsub.f32 %v4316, 1.0
          %v4333 = vpack.c.bf16 %v4317, %v4317
          %v4334 = vpack.c.bf16 %v4318, %v4318
          %v4335 = vpack.c.bf16 %v4319, %v4319
          %v4336 = vpack.c.bf16 %v4320, %v4320
          %v4337 = vpack.c.bf16 %v4321, %v4321
          %v4338 = vpack.c.bf16 %v4322, %v4322
          %v4339 = vpack.c.bf16 %v4323, %v4323
          %v4340 = vpack.c.bf16 %v4324, %v4324
          %v4341 = vpack.c.bf16 %v4325, %v4325
          %v4342 = vpack.c.bf16 %v4326, %v4326
          %v4343 = vpack.c.bf16 %v4327, %v4327
          %v4344 = vpack.c.bf16 %v4328, %v4328
          %v4345 = vpack.c.bf16 %v4329, %v4329
          %v4346 = vpack.c.bf16 %v4330, %v4330
          %v4347 = vpack.c.bf16 %v4331, %v4331
          %v4348 = vpack.c.bf16 %v4332, %v4332
          %4349 = vst [vmem:[#allocation2 + $0x8] sm:$0xf] %v4333
          %4350 = vst [vmem:[#allocation2 + $0x18] sm:$0xf] %v4334
          %4351 = vst [vmem:[#allocation2 + $0x28] sm:$0xf] %v4335
          %4352 = vst [vmem:[#allocation2 + $0x38] sm:$0xf] %v4336
          %4353 = vst [vmem:[#allocation2 + $0x48] sm:$0xf] %v4337
          %4354 = vst [vmem:[#allocation2 + $0x58] sm:$0xf] %v4338
          %4355 = vst [vmem:[#allocation2 + $0x68] sm:$0xf] %v4339
          %4356 = vst [vmem:[#allocation2 + $0x78] sm:$0xf] %v4340
          %4357 = vst [vmem:[#allocation2 + $0x88] sm:$0xf] %v4341
          %4358 = vst [vmem:[#allocation2 + $0x98] sm:$0xf] %v4342
          %4359 = vst [vmem:[#allocation2 + $0xa8] sm:$0xf] %v4343
          %4360 = vst [vmem:[#allocation2 + $0xb8] sm:$0xf] %v4344
          %4361 = vst [vmem:[#allocation2 + $0xc8] sm:$0xf] %v4345
          %4362 = vst [vmem:[#allocation2 + $0xd8] sm:$0xf] %v4346
          %4363 = vst [vmem:[#allocation2 + $0xe8] sm:$0xf] %v4347
          %4364 = vst [vmem:[#allocation2 + $0xf8] sm:$0xf] %v4348
          %v4365 = vmul.f32 %v4285, %v4317
          %v4366 = vmul.f32 %v4286, %v4318
          %v4367 = vmul.f32 %v4287, %v4319
          %v4368 = vmul.f32 %v4288, %v4320
          %v4369 = vmul.f32 %v4289, %v4321
          %v4370 = vmul.f32 %v4290, %v4322
          %v4371 = vmul.f32 %v4291, %v4323
          %v4372 = vmul.f32 %v4292, %v4324
          %v4373 = vmul.f32 %v4293, %v4325
          %v4374 = vmul.f32 %v4294, %v4326
          %v4375 = vmul.f32 %v4295, %v4327
          %v4376 = vmul.f32 %v4296, %v4328
          %v4377 = vmul.f32 %v4297, %v4329
          %v4378 = vmul.f32 %v4298, %v4330
          %v4379 = vmul.f32 %v4299, %v4331
          %v4380 = vmul.f32 %v4300, %v4332
          %v4381 = vsub.f32 %v4365, %v4221
          %v4382 = vsub.f32 %v4366, %v4222
          %v4383 = vsub.f32 %v4367, %v4223
          %v4384 = vsub.f32 %v4368, %v4224
          %v4385 = vsub.f32 %v4369, %v4225
          %v4386 = vsub.f32 %v4370, %v4226
          %v4387 = vsub.f32 %v4371, %v4227
          %v4388 = vsub.f32 %v4372, %v4228
          %v4389 = vsub.f32 %v4373, %v4229
          %v4390 = vsub.f32 %v4374, %v4230
          %v4391 = vsub.f32 %v4375, %v4231
          %v4392 = vsub.f32 %v4376, %v4232
          %v4393 = vsub.f32 %v4377, %v4233
          %v4394 = vsub.f32 %v4378, %v4234
          %v4395 = vsub.f32 %v4379, %v4235
          %v4396 = vsub.f32 %v4380, %v4236
          %v4397 = vpack.c.bf16 %v4381, %v4381
          %v4398 = vpack.c.bf16 %v4382, %v4382
          %v4399 = vpack.c.bf16 %v4383, %v4383
          %v4400 = vpack.c.bf16 %v4384, %v4384
          %v4401 = vpack.c.bf16 %v4385, %v4385
          %v4402 = vpack.c.bf16 %v4386, %v4386
          %v4403 = vpack.c.bf16 %v4387, %v4387
          %v4404 = vpack.c.bf16 %v4388, %v4388
          %v4405 = vpack.c.bf16 %v4389, %v4389
          %v4406 = vpack.c.bf16 %v4390, %v4390
          %v4407 = vpack.c.bf16 %v4391, %v4391
          %v4408 = vpack.c.bf16 %v4392, %v4392
          %v4409 = vpack.c.bf16 %v4393, %v4393
          %v4410 = vpack.c.bf16 %v4394, %v4394
          %v4411 = vpack.c.bf16 %v4395, %v4395
          %v4412 = vpack.c.bf16 %v4396, %v4396
          %4413 = vst [vmem:[#allocation2 + $0xc] sm:$0xf] %v4397
          %4414 = vst [vmem:[#allocation2 + $0x1c] sm:$0xf] %v4398
          %4415 = vst [vmem:[#allocation2 + $0x2c] sm:$0xf] %v4399
          %4416 = vst [vmem:[#allocation2 + $0x3c] sm:$0xf] %v4400
          %4417 = vst [vmem:[#allocation2 + $0x4c] sm:$0xf] %v4401
          %4418 = vst [vmem:[#allocation2 + $0x5c] sm:$0xf] %v4402
          %4419 = vst [vmem:[#allocation2 + $0x6c] sm:$0xf] %v4403
          %4420 = vst [vmem:[#allocation2 + $0x7c] sm:$0xf] %v4404
          %4421 = vst [vmem:[#allocation2 + $0x8c] sm:$0xf] %v4405
          %4422 = vst [vmem:[#allocation2 + $0x9c] sm:$0xf] %v4406
          %4423 = vst [vmem:[#allocation2 + $0xac] sm:$0xf] %v4407
          %4424 = vst [vmem:[#allocation2 + $0xbc] sm:$0xf] %v4408
          %4425 = vst [vmem:[#allocation2 + $0xcc] sm:$0xf] %v4409
          %4426 = vst [vmem:[#allocation2 + $0xdc] sm:$0xf] %v4410
          %4427 = vst [vmem:[#allocation2 + $0xec] sm:$0xf] %v4411
          %4428 = vst [vmem:[#allocation2 + $0xfc] sm:$0xf] %v4412
        $region88: #{tpu_custom_call.1} parent=59 // pred_fallthru
          _
        %v4429 = vld [vmem:[#allocation2] sm:$0xff]
        %v4430 = vld [vmem:[#allocation2 + $0x8] sm:$0xff]
        %v4431 = vld [vmem:[#allocation2 + $0x10] sm:$0xff]
        %v4432 = vld [vmem:[#allocation2 + $0x18] sm:$0xff]
        %v4433 = vld [vmem:[#allocation2 + $0x20] sm:$0xff]
        %v4434 = vld [vmem:[#allocation2 + $0x28] sm:$0xff]
        %v4435 = vld [vmem:[#allocation2 + $0x30] sm:$0xff]
        %v4436 = vld [vmem:[#allocation2 + $0x38] sm:$0xff]
        %v4437 = vld [vmem:[#allocation2 + $0x40] sm:$0xff]
        %v4438 = vld [vmem:[#allocation2 + $0x48] sm:$0xff]
        %v4439 = vld [vmem:[#allocation2 + $0x50] sm:$0xff]
        %v4440 = vld [vmem:[#allocation2 + $0x58] sm:$0xff]
        %v4441 = vld [vmem:[#allocation2 + $0x60] sm:$0xff]
        %v4442 = vld [vmem:[#allocation2 + $0x68] sm:$0xff]
        %v4443 = vld [vmem:[#allocation2 + $0x70] sm:$0xff]
        %v4444 = vld [vmem:[#allocation2 + $0x78] sm:$0xff]
        %v4445 = vld [vmem:[#allocation2 + $0x80] sm:$0xff]
        %v4446 = vld [vmem:[#allocation2 + $0x88] sm:$0xff]
        %v4447 = vld [vmem:[#allocation2 + $0x90] sm:$0xff]
        %v4448 = vld [vmem:[#allocation2 + $0x98] sm:$0xff]
        %v4449 = vld [vmem:[#allocation2 + $0xa0] sm:$0xff]
        %v4450 = vld [vmem:[#allocation2 + $0xa8] sm:$0xff]
        %v4451 = vld [vmem:[#allocation2 + $0xb0] sm:$0xff]
        %v4452 = vld [vmem:[#allocation2 + $0xb8] sm:$0xff]
        %v4453 = vld [vmem:[#allocation2 + $0xc0] sm:$0xff]
        %v4454 = vld [vmem:[#allocation2 + $0xc8] sm:$0xff]
        %v4455 = vld [vmem:[#allocation2 + $0xd0] sm:$0xff]
        %v4456 = vld [vmem:[#allocation2 + $0xd8] sm:$0xff]
        %v4457 = vld [vmem:[#allocation2 + $0xe0] sm:$0xff]
        %v4458 = vld [vmem:[#allocation2 + $0xe8] sm:$0xff]
        %v4459 = vld [vmem:[#allocation2 + $0xf0] sm:$0xff]
        %v4460 = vld [vmem:[#allocation2 + $0xf8] sm:$0xff]
        %v4461 = vld [vmem:[%s485] sm:$0xff]
        %v4462 = vld [vmem:[%s485 + $0x8] sm:$0xff]
        %v4463 = vld [vmem:[%s485 + $0x10] sm:$0xff]
        %v4464 = vld [vmem:[%s485 + $0x18] sm:$0xff]
        %v4465 = vld [vmem:[%s485 + $0x20] sm:$0xff]
        %v4466 = vld [vmem:[%s485 + $0x28] sm:$0xff]
        %v4467 = vld [vmem:[%s485 + $0x30] sm:$0xff]
        %v4468 = vld [vmem:[%s485 + $0x38] sm:$0xff]
        %v4469 = vld [vmem:[%s485 + $0x40] sm:$0xff]
        %v4470 = vld [vmem:[%s485 + $0x48] sm:$0xff]
        %v4471 = vld [vmem:[%s485 + $0x50] sm:$0xff]
        %v4472 = vld [vmem:[%s485 + $0x58] sm:$0xff]
        %v4473 = vld [vmem:[%s485 + $0x60] sm:$0xff]
        %v4474 = vld [vmem:[%s485 + $0x68] sm:$0xff]
        %v4475 = vld [vmem:[%s485 + $0x70] sm:$0xff]
        %v4476 = vld [vmem:[%s485 + $0x78] sm:$0xff]
        %v4477 = vld [vmem:[%s485 + $0x80] sm:$0xff]
        %v4478 = vld [vmem:[%s485 + $0x88] sm:$0xff]
        %v4479 = vld [vmem:[%s485 + $0x90] sm:$0xff]
        %v4480 = vld [vmem:[%s485 + $0x98] sm:$0xff]
        %v4481 = vld [vmem:[%s485 + $0xa0] sm:$0xff]
        %v4482 = vld [vmem:[%s485 + $0xa8] sm:$0xff]
        %v4483 = vld [vmem:[%s485 + $0xb0] sm:$0xff]
        %v4484 = vld [vmem:[%s485 + $0xb8] sm:$0xff]
        %v4485 = vld [vmem:[%s485 + $0xc0] sm:$0xff]
        %v4486 = vld [vmem:[%s485 + $0xc8] sm:$0xff]
        %v4487 = vld [vmem:[%s485 + $0xd0] sm:$0xff]
        %v4488 = vld [vmem:[%s485 + $0xd8] sm:$0xff]
        %v4489 = vld [vmem:[%s485 + $0xe0] sm:$0xff]
        %v4490 = vld [vmem:[%s485 + $0xe8] sm:$0xff]
        %v4491 = vld [vmem:[%s485 + $0xf0] sm:$0xff]
        %v4492 = vld [vmem:[%s485 + $0xf8] sm:$0xff]
        %v4493 = vld [vmem:[%s485 + $0x100] sm:$0xff]
        %v4494 = vld [vmem:[%s485 + $0x108] sm:$0xff]
        %v4495 = vld [vmem:[%s485 + $0x110] sm:$0xff]
        %v4496 = vld [vmem:[%s485 + $0x118] sm:$0xff]
        %v4497 = vld [vmem:[%s485 + $0x120] sm:$0xff]
        %v4498 = vld [vmem:[%s485 + $0x128] sm:$0xff]
        %v4499 = vld [vmem:[%s485 + $0x130] sm:$0xff]
        %v4500 = vld [vmem:[%s485 + $0x138] sm:$0xff]
        %v4501 = vld [vmem:[%s485 + $0x140] sm:$0xff]
        %v4502 = vld [vmem:[%s485 + $0x148] sm:$0xff]
        %v4503 = vld [vmem:[%s485 + $0x150] sm:$0xff]
        %v4504 = vld [vmem:[%s485 + $0x158] sm:$0xff]
        %v4505 = vld [vmem:[%s485 + $0x160] sm:$0xff]
        %v4506 = vld [vmem:[%s485 + $0x168] sm:$0xff]
        %v4507 = vld [vmem:[%s485 + $0x170] sm:$0xff]
        %v4508 = vld [vmem:[%s485 + $0x178] sm:$0xff]
        %v4509 = vld [vmem:[%s485 + $0x180] sm:$0xff]
        %v4510 = vld [vmem:[%s485 + $0x188] sm:$0xff]
        %v4511 = vld [vmem:[%s485 + $0x190] sm:$0xff]
        %v4512 = vld [vmem:[%s485 + $0x198] sm:$0xff]
        %v4513 = vld [vmem:[%s485 + $0x1a0] sm:$0xff]
        %v4514 = vld [vmem:[%s485 + $0x1a8] sm:$0xff]
        %v4515 = vld [vmem:[%s485 + $0x1b0] sm:$0xff]
        %v4516 = vld [vmem:[%s485 + $0x1b8] sm:$0xff]
        %v4517 = vld [vmem:[%s485 + $0x1c0] sm:$0xff]
        %v4518 = vld [vmem:[%s485 + $0x1c8] sm:$0xff]
        %v4519 = vld [vmem:[%s485 + $0x1d0] sm:$0xff]
        %v4520 = vld [vmem:[%s485 + $0x1d8] sm:$0xff]
        %v4521 = vld [vmem:[%s485 + $0x1e0] sm:$0xff]
        %v4522 = vld [vmem:[%s485 + $0x1e8] sm:$0xff]
        %v4523 = vld [vmem:[%s485 + $0x1f0] sm:$0xff]
        %v4524 = vld [vmem:[%s485 + $0x1f8] sm:$0xff]
        %v4557 = vunpack.c.l.b16 %v4429
        %v4558 = vunpack.c.h.b16 %v4429
        %v4559 = vunpack.c.l.b16 %v4430
        %v4560 = vunpack.c.h.b16 %v4430
        %v4561 = vunpack.c.l.b16 %v4431
        %v4562 = vunpack.c.h.b16 %v4431
        %v4563 = vunpack.c.l.b16 %v4432
        %v4564 = vunpack.c.h.b16 %v4432
        %v4565 = vunpack.c.l.b16 %v4433
        %v4566 = vunpack.c.h.b16 %v4433
        %v4567 = vunpack.c.l.b16 %v4434
        %v4568 = vunpack.c.h.b16 %v4434
        %v4569 = vunpack.c.l.b16 %v4435
        %v4570 = vunpack.c.h.b16 %v4435
        %v4571 = vunpack.c.l.b16 %v4436
        %v4572 = vunpack.c.h.b16 %v4436
        %v4573 = vunpack.c.l.b16 %v4437
        %v4574 = vunpack.c.h.b16 %v4437
        %v4575 = vunpack.c.l.b16 %v4438
        %v4576 = vunpack.c.h.b16 %v4438
        %v4577 = vunpack.c.l.b16 %v4439
        %v4578 = vunpack.c.h.b16 %v4439
        %v4579 = vunpack.c.l.b16 %v4440
        %v4580 = vunpack.c.h.b16 %v4440
        %v4581 = vunpack.c.l.b16 %v4441
        %v4582 = vunpack.c.h.b16 %v4441
        %v4583 = vunpack.c.l.b16 %v4442
        %v4584 = vunpack.c.h.b16 %v4442
        %v4585 = vunpack.c.l.b16 %v4443
        %v4586 = vunpack.c.h.b16 %v4443
        %v4587 = vunpack.c.l.b16 %v4444
        %v4588 = vunpack.c.h.b16 %v4444
        %v4589 = vunpack.c.l.b16 %v4445
        %v4590 = vunpack.c.h.b16 %v4445
        %v4591 = vunpack.c.l.b16 %v4446
        %v4592 = vunpack.c.h.b16 %v4446
        %v4593 = vunpack.c.l.b16 %v4447
        %v4594 = vunpack.c.h.b16 %v4447
        %v4595 = vunpack.c.l.b16 %v4448
        %v4596 = vunpack.c.h.b16 %v4448
        %v4597 = vunpack.c.l.b16 %v4449
        %v4598 = vunpack.c.h.b16 %v4449
        %v4599 = vunpack.c.l.b16 %v4450
        %v4600 = vunpack.c.h.b16 %v4450
        %v4601 = vunpack.c.l.b16 %v4451
        %v4602 = vunpack.c.h.b16 %v4451
        %v4603 = vunpack.c.l.b16 %v4452
        %v4604 = vunpack.c.h.b16 %v4452
        %v4605 = vunpack.c.l.b16 %v4453
        %v4606 = vunpack.c.h.b16 %v4453
        %v4607 = vunpack.c.l.b16 %v4454
        %v4608 = vunpack.c.h.b16 %v4454
        %v4609 = vunpack.c.l.b16 %v4455
        %v4610 = vunpack.c.h.b16 %v4455
        %v4611 = vunpack.c.l.b16 %v4456
        %v4612 = vunpack.c.h.b16 %v4456
        %v4613 = vunpack.c.l.b16 %v4457
        %v4614 = vunpack.c.h.b16 %v4457
        %v4615 = vunpack.c.l.b16 %v4458
        %v4616 = vunpack.c.h.b16 %v4458
        %v4617 = vunpack.c.l.b16 %v4459
        %v4618 = vunpack.c.h.b16 %v4459
        %v4619 = vunpack.c.l.b16 %v4460
        %v4620 = vunpack.c.h.b16 %v4460
        %v4621 = vpack.c.b16 %v4561, %v4557
        %v4622 = vpack.c.b16 %v4562, %v4558
        %v4623 = vpack.c.b16 %v4563, %v4559
        %v4624 = vpack.c.b16 %v4564, %v4560
        %v4625 = vpack.c.b16 %v4569, %v4565
        %v4626 = vpack.c.b16 %v4570, %v4566
        %v4627 = vpack.c.b16 %v4571, %v4567
        %v4628 = vpack.c.b16 %v4572, %v4568
        %v4629 = vpack.c.b16 %v4577, %v4573
        %v4630 = vpack.c.b16 %v4578, %v4574
        %v4631 = vpack.c.b16 %v4579, %v4575
        %v4632 = vpack.c.b16 %v4580, %v4576
        %v4633 = vpack.c.b16 %v4585, %v4581
        %v4634 = vpack.c.b16 %v4586, %v4582
        %v4635 = vpack.c.b16 %v4587, %v4583
        %v4636 = vpack.c.b16 %v4588, %v4584
        %v4637 = vpack.c.b16 %v4593, %v4589
        %v4638 = vpack.c.b16 %v4594, %v4590
        %v4639 = vpack.c.b16 %v4595, %v4591
        %v4640 = vpack.c.b16 %v4596, %v4592
        %v4641 = vpack.c.b16 %v4601, %v4597
        %v4642 = vpack.c.b16 %v4602, %v4598
        %v4643 = vpack.c.b16 %v4603, %v4599
        %v4644 = vpack.c.b16 %v4604, %v4600
        %v4645 = vpack.c.b16 %v4609, %v4605
        %v4646 = vpack.c.b16 %v4610, %v4606
        %v4647 = vpack.c.b16 %v4611, %v4607
        %v4648 = vpack.c.b16 %v4612, %v4608
        %v4649 = vpack.c.b16 %v4617, %v4613
        %v4650 = vpack.c.b16 %v4618, %v4614
        %v4651 = vpack.c.b16 %v4619, %v4615
        %v4652 = vpack.c.b16 %v4620, %v4616
        %v4749 = vunpack.c.l.b16 %v4461
        %v4750 = vunpack.c.h.b16 %v4461
        %v4751 = vunpack.c.l.b16 %v4462
        %v4752 = vunpack.c.h.b16 %v4462
        %v4753 = vunpack.c.l.b16 %v4463
        %v4754 = vunpack.c.h.b16 %v4463
        %v4755 = vunpack.c.l.b16 %v4464
        %v4756 = vunpack.c.h.b16 %v4464
        %v4757 = vunpack.c.l.b16 %v4465
        %v4758 = vunpack.c.h.b16 %v4465
        %v4759 = vunpack.c.l.b16 %v4466
        %v4760 = vunpack.c.h.b16 %v4466
        %v4761 = vunpack.c.l.b16 %v4467
        %v4762 = vunpack.c.h.b16 %v4467
        %v4763 = vunpack.c.l.b16 %v4468
        %v4764 = vunpack.c.h.b16 %v4468
        %v4765 = vunpack.c.l.b16 %v4469
        %v4766 = vunpack.c.h.b16 %v4469
        %v4767 = vunpack.c.l.b16 %v4470
        %v4768 = vunpack.c.h.b16 %v4470
        %v4769 = vunpack.c.l.b16 %v4471
        %v4770 = vunpack.c.h.b16 %v4471
        %v4771 = vunpack.c.l.b16 %v4472
        %v4772 = vunpack.c.h.b16 %v4472
        %v4773 = vunpack.c.l.b16 %v4473
        %v4774 = vunpack.c.h.b16 %v4473
        %v4775 = vunpack.c.l.b16 %v4474
        %v4776 = vunpack.c.h.b16 %v4474
        %v4777 = vunpack.c.l.b16 %v4475
        %v4778 = vunpack.c.h.b16 %v4475
        %v4779 = vunpack.c.l.b16 %v4476
        %v4780 = vunpack.c.h.b16 %v4476
        %v4781 = vunpack.c.l.b16 %v4477
        %v4782 = vunpack.c.h.b16 %v4477
        %v4783 = vunpack.c.l.b16 %v4478
        %v4784 = vunpack.c.h.b16 %v4478
        %v4785 = vunpack.c.l.b16 %v4479
        %v4786 = vunpack.c.h.b16 %v4479
        %v4787 = vunpack.c.l.b16 %v4480
        %v4788 = vunpack.c.h.b16 %v4480
        %v4789 = vunpack.c.l.b16 %v4481
        %v4790 = vunpack.c.h.b16 %v4481
        %v4791 = vunpack.c.l.b16 %v4482
        %v4792 = vunpack.c.h.b16 %v4482
        %v4793 = vunpack.c.l.b16 %v4483
        %v4794 = vunpack.c.h.b16 %v4483
        %v4795 = vunpack.c.l.b16 %v4484
        %v4796 = vunpack.c.h.b16 %v4484
        %v4797 = vunpack.c.l.b16 %v4485
        %v4798 = vunpack.c.h.b16 %v4485
        %v4799 = vunpack.c.l.b16 %v4486
        %v4800 = vunpack.c.h.b16 %v4486
        %v4801 = vunpack.c.l.b16 %v4487
        %v4802 = vunpack.c.h.b16 %v4487
        %v4803 = vunpack.c.l.b16 %v4488
        %v4804 = vunpack.c.h.b16 %v4488
        %v4805 = vunpack.c.l.b16 %v4489
        %v4806 = vunpack.c.h.b16 %v4489
        %v4807 = vunpack.c.l.b16 %v4490
        %v4808 = vunpack.c.h.b16 %v4490
        %v4809 = vunpack.c.l.b16 %v4491
        %v4810 = vunpack.c.h.b16 %v4491
        %v4811 = vunpack.c.l.b16 %v4492
        %v4812 = vunpack.c.h.b16 %v4492
        %v4813 = vunpack.c.l.b16 %v4493
        %v4814 = vunpack.c.h.b16 %v4493
        %v4815 = vunpack.c.l.b16 %v4494
        %v4816 = vunpack.c.h.b16 %v4494
        %v4817 = vunpack.c.l.b16 %v4495
        %v4818 = vunpack.c.h.b16 %v4495
        %v4819 = vunpack.c.l.b16 %v4496
        %v4820 = vunpack.c.h.b16 %v4496
        %v4821 = vunpack.c.l.b16 %v4497
        %v4822 = vunpack.c.h.b16 %v4497
        %v4823 = vunpack.c.l.b16 %v4498
        %v4824 = vunpack.c.h.b16 %v4498
        %v4825 = vunpack.c.l.b16 %v4499
        %v4826 = vunpack.c.h.b16 %v4499
        %v4827 = vunpack.c.l.b16 %v4500
        %v4828 = vunpack.c.h.b16 %v4500
        %v4829 = vunpack.c.l.b16 %v4501
        %v4830 = vunpack.c.h.b16 %v4501
        %v4831 = vunpack.c.l.b16 %v4502
        %v4832 = vunpack.c.h.b16 %v4502
        %v4833 = vunpack.c.l.b16 %v4503
        %v4834 = vunpack.c.h.b16 %v4503
        %v4835 = vunpack.c.l.b16 %v4504
        %v4836 = vunpack.c.h.b16 %v4504
        %v4837 = vunpack.c.l.b16 %v4505
        %v4838 = vunpack.c.h.b16 %v4505
        %v4839 = vunpack.c.l.b16 %v4506
        %v4840 = vunpack.c.h.b16 %v4506
        %v4841 = vunpack.c.l.b16 %v4507
        %v4842 = vunpack.c.h.b16 %v4507
        %v4843 = vunpack.c.l.b16 %v4508
        %v4844 = vunpack.c.h.b16 %v4508
        %v4845 = vunpack.c.l.b16 %v4509
        %v4846 = vunpack.c.h.b16 %v4509
        %v4847 = vunpack.c.l.b16 %v4510
        %v4848 = vunpack.c.h.b16 %v4510
        %v4849 = vunpack.c.l.b16 %v4511
        %v4850 = vunpack.c.h.b16 %v4511
        %v4851 = vunpack.c.l.b16 %v4512
        %v4852 = vunpack.c.h.b16 %v4512
        %v4853 = vunpack.c.l.b16 %v4513
        %v4854 = vunpack.c.h.b16 %v4513
        %v4855 = vunpack.c.l.b16 %v4514
        %v4856 = vunpack.c.h.b16 %v4514
        %v4857 = vunpack.c.l.b16 %v4515
        %v4858 = vunpack.c.h.b16 %v4515
        %v4859 = vunpack.c.l.b16 %v4516
        %v4860 = vunpack.c.h.b16 %v4516
        %v4861 = vunpack.c.l.b16 %v4517
        %v4862 = vunpack.c.h.b16 %v4517
        %v4863 = vunpack.c.l.b16 %v4518
        %v4864 = vunpack.c.h.b16 %v4518
        %v4865 = vunpack.c.l.b16 %v4519
        %v4866 = vunpack.c.h.b16 %v4519
        %v4867 = vunpack.c.l.b16 %v4520
        %v4868 = vunpack.c.h.b16 %v4520
        %v4869 = vunpack.c.l.b16 %v4521
        %v4870 = vunpack.c.h.b16 %v4521
        %v4871 = vunpack.c.l.b16 %v4522
        %v4872 = vunpack.c.h.b16 %v4522
        %v4873 = vunpack.c.l.b16 %v4523
        %v4874 = vunpack.c.h.b16 %v4523
        %v4875 = vunpack.c.l.b16 %v4524
        %v4876 = vunpack.c.h.b16 %v4524
        %v4877 = vpack.c.b16 %v4751, %v4749
        %v4878 = vpack.c.b16 %v4752, %v4750
        %v4879 = vpack.c.b16 %v4755, %v4753
        %v4880 = vpack.c.b16 %v4756, %v4754
        %v4881 = vpack.c.b16 %v4759, %v4757
        %v4882 = vpack.c.b16 %v4760, %v4758
        %v4883 = vpack.c.b16 %v4763, %v4761
        %v4884 = vpack.c.b16 %v4764, %v4762
        %v4885 = vpack.c.b16 %v4767, %v4765
        %v4886 = vpack.c.b16 %v4768, %v4766
        %v4887 = vpack.c.b16 %v4771, %v4769
        %v4888 = vpack.c.b16 %v4772, %v4770
        %v4889 = vpack.c.b16 %v4775, %v4773
        %v4890 = vpack.c.b16 %v4776, %v4774
        %v4891 = vpack.c.b16 %v4779, %v4777
        %v4892 = vpack.c.b16 %v4780, %v4778
        %v4893 = vpack.c.b16 %v4783, %v4781
        %v4894 = vpack.c.b16 %v4784, %v4782
        %v4895 = vpack.c.b16 %v4787, %v4785
        %v4896 = vpack.c.b16 %v4788, %v4786
        %v4897 = vpack.c.b16 %v4791, %v4789
        %v4898 = vpack.c.b16 %v4792, %v4790
        %v4899 = vpack.c.b16 %v4795, %v4793
        %v4900 = vpack.c.b16 %v4796, %v4794
        %v4901 = vpack.c.b16 %v4799, %v4797
        %v4902 = vpack.c.b16 %v4800, %v4798
        %v4903 = vpack.c.b16 %v4803, %v4801
        %v4904 = vpack.c.b16 %v4804, %v4802
        %v4905 = vpack.c.b16 %v4807, %v4805
        %v4906 = vpack.c.b16 %v4808, %v4806
        %v4907 = vpack.c.b16 %v4811, %v4809
        %v4908 = vpack.c.b16 %v4812, %v4810
        %v4909 = vpack.c.b16 %v4815, %v4813
        %v4910 = vpack.c.b16 %v4816, %v4814
        %v4911 = vpack.c.b16 %v4819, %v4817
        %v4912 = vpack.c.b16 %v4820, %v4818
        %v4913 = vpack.c.b16 %v4823, %v4821
        %v4914 = vpack.c.b16 %v4824, %v4822
        %v4915 = vpack.c.b16 %v4827, %v4825
        %v4916 = vpack.c.b16 %v4828, %v4826
        %v4917 = vpack.c.b16 %v4831, %v4829
        %v4918 = vpack.c.b16 %v4832, %v4830
        %v4919 = vpack.c.b16 %v4835, %v4833
        %v4920 = vpack.c.b16 %v4836, %v4834
        %v4921 = vpack.c.b16 %v4839, %v4837
        %v4922 = vpack.c.b16 %v4840, %v4838
        %v4923 = vpack.c.b16 %v4843, %v4841
        %v4924 = vpack.c.b16 %v4844, %v4842
        %v4925 = vpack.c.b16 %v4847, %v4845
        %v4926 = vpack.c.b16 %v4848, %v4846
        %v4927 = vpack.c.b16 %v4851, %v4849
        %v4928 = vpack.c.b16 %v4852, %v4850
        %v4929 = vpack.c.b16 %v4855, %v4853
        %v4930 = vpack.c.b16 %v4856, %v4854
        %v4931 = vpack.c.b16 %v4859, %v4857
        %v4932 = vpack.c.b16 %v4860, %v4858
        %v4933 = vpack.c.b16 %v4863, %v4861
        %v4934 = vpack.c.b16 %v4864, %v4862
        %v4935 = vpack.c.b16 %v4867, %v4865
        %v4936 = vpack.c.b16 %v4868, %v4866
        %v4937 = vpack.c.b16 %v4871, %v4869
        %v4938 = vpack.c.b16 %v4872, %v4870
        %v4939 = vpack.c.b16 %v4875, %v4873
        %v4940 = vpack.c.b16 %v4876, %v4874
        %5005 = vmatpush.bf16.msra.mxu0 %v4891
        %5006 = vmatpush.bf16.msra.mxu0 %v4889
        %5007 = vmatpush.bf16.msra.mxu0 %v4887
        %5008 = vmatpush.bf16.msra.mxu0 %v4885
        %5009 = vmatpush.bf16.msra.mxu0 %v4883
        %5010 = vmatpush.bf16.msra.mxu0 %v4881
        %5011 = vmatpush.bf16.msra.mxu0 %v4879
        %5012 = vmatpush.bf16.msra.mxu0 %v4877
        %5013 = vmatmul.bf16.gmra.mxu0 %v4621
        %v5014 = vpop.f32.mrf.mxu0
        %v5015 = vadd.f32 0.0, %v5014
        %v5016 = vpop.f32.mrf.mxu0
        %v5017 = vadd.f32 0.0, %v5016
        %5018 = vmatmul.bf16.gmra.mxu0 %v4625
        %v5019 = vpop.f32.mrf.mxu0
        %v5020 = vadd.f32 0.0, %v5019
        %v5021 = vpop.f32.mrf.mxu0
        %v5022 = vadd.f32 0.0, %v5021
        %5023 = vmatmul.bf16.gmra.mxu0 %v4629
        %v5024 = vpop.f32.mrf.mxu0
        %v5025 = vadd.f32 0.0, %v5024
        %v5026 = vpop.f32.mrf.mxu0
        %v5027 = vadd.f32 0.0, %v5026
        %5028 = vmatmul.bf16.gmra.mxu0 %v4633
        %v5029 = vpop.f32.mrf.mxu0
        %v5030 = vadd.f32 0.0, %v5029
        %v5031 = vpop.f32.mrf.mxu0
        %v5032 = vadd.f32 0.0, %v5031
        %5033 = vmatmul.bf16.gmra.mxu0 %v4637
        %v5034 = vpop.f32.mrf.mxu0
        %v5035 = vadd.f32 0.0, %v5034
        %v5036 = vpop.f32.mrf.mxu0
        %v5037 = vadd.f32 0.0, %v5036
        %5038 = vmatmul.bf16.gmra.mxu0 %v4641
        %v5039 = vpop.f32.mrf.mxu0
        %v5040 = vadd.f32 0.0, %v5039
        %v5041 = vpop.f32.mrf.mxu0
        %v5042 = vadd.f32 0.0, %v5041
        %5043 = vmatmul.bf16.gmra.mxu0 %v4645
        %v5044 = vpop.f32.mrf.mxu0
        %v5045 = vadd.f32 0.0, %v5044
        %v5046 = vpop.f32.mrf.mxu0
        %v5047 = vadd.f32 0.0, %v5046
        %5048 = vmatmul.bf16.gmra.mxu0 %v4649
        %v5049 = vpop.f32.mrf.mxu0
        %v5050 = vadd.f32 0.0, %v5049
        %v5051 = vpop.f32.mrf.mxu0
        %v5052 = vadd.f32 0.0, %v5051
        %5053 = vdwg.mxu0
        %5054 = vmatpush.bf16.msra.mxu0 %v4907
        %5055 = vmatpush.bf16.msra.mxu0 %v4905
        %5056 = vmatpush.bf16.msra.mxu0 %v4903
        %5057 = vmatpush.bf16.msra.mxu0 %v4901
        %5058 = vmatpush.bf16.msra.mxu0 %v4899
        %5059 = vmatpush.bf16.msra.mxu0 %v4897
        %5060 = vmatpush.bf16.msra.mxu0 %v4895
        %5061 = vmatpush.bf16.msra.mxu0 %v4893
        %5062 = vmatmul.bf16.gmra.mxu0 %v4622
        %v5063 = vpop.f32.mrf.mxu0
        %v5064 = vadd.f32 %v5015, %v5063
        %v5065 = vpop.f32.mrf.mxu0
        %v5066 = vadd.f32 %v5017, %v5065
        %5067 = vmatmul.bf16.gmra.mxu0 %v4626
        %v5068 = vpop.f32.mrf.mxu0
        %v5069 = vadd.f32 %v5020, %v5068
        %v5070 = vpop.f32.mrf.mxu0
        %v5071 = vadd.f32 %v5022, %v5070
        %5072 = vmatmul.bf16.gmra.mxu0 %v4630
        %v5073 = vpop.f32.mrf.mxu0
        %v5074 = vadd.f32 %v5025, %v5073
        %v5075 = vpop.f32.mrf.mxu0
        %v5076 = vadd.f32 %v5027, %v5075
        %5077 = vmatmul.bf16.gmra.mxu0 %v4634
        %v5078 = vpop.f32.mrf.mxu0
        %v5079 = vadd.f32 %v5030, %v5078
        %v5080 = vpop.f32.mrf.mxu0
        %v5081 = vadd.f32 %v5032, %v5080
        %5082 = vmatmul.bf16.gmra.mxu0 %v4638
        %v5083 = vpop.f32.mrf.mxu0
        %v5084 = vadd.f32 %v5035, %v5083
        %v5085 = vpop.f32.mrf.mxu0
        %v5086 = vadd.f32 %v5037, %v5085
        %5087 = vmatmul.bf16.gmra.mxu0 %v4642
        %v5088 = vpop.f32.mrf.mxu0
        %v5089 = vadd.f32 %v5040, %v5088
        %v5090 = vpop.f32.mrf.mxu0
        %v5091 = vadd.f32 %v5042, %v5090
        %5092 = vmatmul.bf16.gmra.mxu0 %v4646
        %v5093 = vpop.f32.mrf.mxu0
        %v5094 = vadd.f32 %v5045, %v5093
        %v5095 = vpop.f32.mrf.mxu0
        %v5096 = vadd.f32 %v5047, %v5095
        %5097 = vmatmul.bf16.gmra.mxu0 %v4650
        %v5098 = vpop.f32.mrf.mxu0
        %v5099 = vadd.f32 %v5050, %v5098
        %v5100 = vpop.f32.mrf.mxu0
        %v5101 = vadd.f32 %v5052, %v5100
        %5102 = vdwg.mxu0
        %5103 = vmatpush.bf16.msra.mxu0 %v4923
        %5104 = vmatpush.bf16.msra.mxu0 %v4921
        %5105 = vmatpush.bf16.msra.mxu0 %v4919
        %5106 = vmatpush.bf16.msra.mxu0 %v4917
        %5107 = vmatpush.bf16.msra.mxu0 %v4915
        %5108 = vmatpush.bf16.msra.mxu0 %v4913
        %5109 = vmatpush.bf16.msra.mxu0 %v4911
        %5110 = vmatpush.bf16.msra.mxu0 %v4909
        %5111 = vmatmul.bf16.gmra.mxu0 %v4623
        %v5112 = vpop.f32.mrf.mxu0
        %v5113 = vadd.f32 %v5064, %v5112
        %v5114 = vpop.f32.mrf.mxu0
        %v5115 = vadd.f32 %v5066, %v5114
        %5116 = vmatmul.bf16.gmra.mxu0 %v4627
        %v5117 = vpop.f32.mrf.mxu0
        %v5118 = vadd.f32 %v5069, %v5117
        %v5119 = vpop.f32.mrf.mxu0
        %v5120 = vadd.f32 %v5071, %v5119
        %5121 = vmatmul.bf16.gmra.mxu0 %v4631
        %v5122 = vpop.f32.mrf.mxu0
        %v5123 = vadd.f32 %v5074, %v5122
        %v5124 = vpop.f32.mrf.mxu0
        %v5125 = vadd.f32 %v5076, %v5124
        %5126 = vmatmul.bf16.gmra.mxu0 %v4635
        %v5127 = vpop.f32.mrf.mxu0
        %v5128 = vadd.f32 %v5079, %v5127
        %v5129 = vpop.f32.mrf.mxu0
        %v5130 = vadd.f32 %v5081, %v5129
        %5131 = vmatmul.bf16.gmra.mxu0 %v4639
        %v5132 = vpop.f32.mrf.mxu0
        %v5133 = vadd.f32 %v5084, %v5132
        %v5134 = vpop.f32.mrf.mxu0
        %v5135 = vadd.f32 %v5086, %v5134
        %5136 = vmatmul.bf16.gmra.mxu0 %v4643
        %v5137 = vpop.f32.mrf.mxu0
        %v5138 = vadd.f32 %v5089, %v5137
        %v5139 = vpop.f32.mrf.mxu0
        %v5140 = vadd.f32 %v5091, %v5139
        %5141 = vmatmul.bf16.gmra.mxu0 %v4647
        %v5142 = vpop.f32.mrf.mxu0
        %v5143 = vadd.f32 %v5094, %v5142
        %v5144 = vpop.f32.mrf.mxu0
        %v5145 = vadd.f32 %v5096, %v5144
        %5146 = vmatmul.bf16.gmra.mxu0 %v4651
        %v5147 = vpop.f32.mrf.mxu0
        %v5148 = vadd.f32 %v5099, %v5147
        %v5149 = vpop.f32.mrf.mxu0
        %v5150 = vadd.f32 %v5101, %v5149
        %5151 = vdwg.mxu0
        %5152 = vmatpush.bf16.msra.mxu0 %v4939
        %5153 = vmatpush.bf16.msra.mxu0 %v4937
        %5154 = vmatpush.bf16.msra.mxu0 %v4935
        %5155 = vmatpush.bf16.msra.mxu0 %v4933
        %5156 = vmatpush.bf16.msra.mxu0 %v4931
        %5157 = vmatpush.bf16.msra.mxu0 %v4929
        %5158 = vmatpush.bf16.msra.mxu0 %v4927
        %5159 = vmatpush.bf16.msra.mxu0 %v4925
        %5160 = vmatmul.bf16.gmra.mxu0 %v4624
        %v5161 = vpop.f32.mrf.mxu0
        %v5162 = vadd.f32 %v5113, %v5161
        %v5163 = vpop.f32.mrf.mxu0
        %v5164 = vadd.f32 %v5115, %v5163
        %5165 = vmatmul.bf16.gmra.mxu0 %v4628
        %v5166 = vpop.f32.mrf.mxu0
        %v5167 = vadd.f32 %v5118, %v5166
        %v5168 = vpop.f32.mrf.mxu0
        %v5169 = vadd.f32 %v5120, %v5168
        %5170 = vmatmul.bf16.gmra.mxu0 %v4632
        %v5171 = vpop.f32.mrf.mxu0
        %v5172 = vadd.f32 %v5123, %v5171
        %v5173 = vpop.f32.mrf.mxu0
        %v5174 = vadd.f32 %v5125, %v5173
        %5175 = vmatmul.bf16.gmra.mxu0 %v4636
        %v5176 = vpop.f32.mrf.mxu0
        %v5177 = vadd.f32 %v5128, %v5176
        %v5178 = vpop.f32.mrf.mxu0
        %v5179 = vadd.f32 %v5130, %v5178
        %5180 = vmatmul.bf16.gmra.mxu0 %v4640
        %v5181 = vpop.f32.mrf.mxu0
        %v5182 = vadd.f32 %v5133, %v5181
        %v5183 = vpop.f32.mrf.mxu0
        %v5184 = vadd.f32 %v5135, %v5183
        %5185 = vmatmul.bf16.gmra.mxu0 %v4644
        %v5186 = vpop.f32.mrf.mxu0
        %v5187 = vadd.f32 %v5138, %v5186
        %v5188 = vpop.f32.mrf.mxu0
        %v5189 = vadd.f32 %v5140, %v5188
        %5190 = vmatmul.bf16.gmra.mxu0 %v4648
        %v5191 = vpop.f32.mrf.mxu0
        %v5192 = vadd.f32 %v5143, %v5191
        %v5193 = vpop.f32.mrf.mxu0
        %v5194 = vadd.f32 %v5145, %v5193
        %5195 = vmatmul.bf16.gmra.mxu0 %v4652
        %v5196 = vpop.f32.mrf.mxu0
        %v5197 = vadd.f32 %v5148, %v5196
        %v5198 = vpop.f32.mrf.mxu0
        %v5199 = vadd.f32 %v5150, %v5198
        %5200 = vdwg.mxu0
        %5201 = vmatpush.bf16.msra.mxu0 %v4892
        %5202 = vmatpush.bf16.msra.mxu0 %v4890
        %5203 = vmatpush.bf16.msra.mxu0 %v4888
        %5204 = vmatpush.bf16.msra.mxu0 %v4886
        %5205 = vmatpush.bf16.msra.mxu0 %v4884
        %5206 = vmatpush.bf16.msra.mxu0 %v4882
        %5207 = vmatpush.bf16.msra.mxu0 %v4880
        %5208 = vmatpush.bf16.msra.mxu0 %v4878
        %5209 = vmatmul.bf16.gmra.mxu0 %v4621
        %v5210 = vpop.f32.mrf.mxu0
        %v5211 = vadd.f32 0.0, %v5210
        %v5212 = vpop.f32.mrf.mxu0
        %v5213 = vadd.f32 0.0, %v5212
        %5214 = vmatmul.bf16.gmra.mxu0 %v4625
        %v5215 = vpop.f32.mrf.mxu0
        %v5216 = vadd.f32 0.0, %v5215
        %v5217 = vpop.f32.mrf.mxu0
        %v5218 = vadd.f32 0.0, %v5217
        %5219 = vmatmul.bf16.gmra.mxu0 %v4629
        %v5220 = vpop.f32.mrf.mxu0
        %v5221 = vadd.f32 0.0, %v5220
        %v5222 = vpop.f32.mrf.mxu0
        %v5223 = vadd.f32 0.0, %v5222
        %5224 = vmatmul.bf16.gmra.mxu0 %v4633
        %v5225 = vpop.f32.mrf.mxu0
        %v5226 = vadd.f32 0.0, %v5225
        %v5227 = vpop.f32.mrf.mxu0
        %v5228 = vadd.f32 0.0, %v5227
        %5229 = vmatmul.bf16.gmra.mxu0 %v4637
        %v5230 = vpop.f32.mrf.mxu0
        %v5231 = vadd.f32 0.0, %v5230
        %v5232 = vpop.f32.mrf.mxu0
        %v5233 = vadd.f32 0.0, %v5232
        %5234 = vmatmul.bf16.gmra.mxu0 %v4641
        %v5235 = vpop.f32.mrf.mxu0
        %v5236 = vadd.f32 0.0, %v5235
        %v5237 = vpop.f32.mrf.mxu0
        %v5238 = vadd.f32 0.0, %v5237
        %5239 = vmatmul.bf16.gmra.mxu0 %v4645
        %v5240 = vpop.f32.mrf.mxu0
        %v5241 = vadd.f32 0.0, %v5240
        %v5242 = vpop.f32.mrf.mxu0
        %v5243 = vadd.f32 0.0, %v5242
        %5244 = vmatmul.bf16.gmra.mxu0 %v4649
        %v5245 = vpop.f32.mrf.mxu0
        %v5246 = vadd.f32 0.0, %v5245
        %v5247 = vpop.f32.mrf.mxu0
        %v5248 = vadd.f32 0.0, %v5247
        %5249 = vdwg.mxu0
        %5250 = vmatpush.bf16.msra.mxu0 %v4908
        %5251 = vmatpush.bf16.msra.mxu0 %v4906
        %5252 = vmatpush.bf16.msra.mxu0 %v4904
        %5253 = vmatpush.bf16.msra.mxu0 %v4902
        %5254 = vmatpush.bf16.msra.mxu0 %v4900
        %5255 = vmatpush.bf16.msra.mxu0 %v4898
        %5256 = vmatpush.bf16.msra.mxu0 %v4896
        %5257 = vmatpush.bf16.msra.mxu0 %v4894
        %5258 = vmatmul.bf16.gmra.mxu0 %v4622
        %v5259 = vpop.f32.mrf.mxu0
        %v5260 = vadd.f32 %v5211, %v5259
        %v5261 = vpop.f32.mrf.mxu0
        %v5262 = vadd.f32 %v5213, %v5261
        %5263 = vmatmul.bf16.gmra.mxu0 %v4626
        %v5264 = vpop.f32.mrf.mxu0
        %v5265 = vadd.f32 %v5216, %v5264
        %v5266 = vpop.f32.mrf.mxu0
        %v5267 = vadd.f32 %v5218, %v5266
        %5268 = vmatmul.bf16.gmra.mxu0 %v4630
        %v5269 = vpop.f32.mrf.mxu0
        %v5270 = vadd.f32 %v5221, %v5269
        %v5271 = vpop.f32.mrf.mxu0
        %v5272 = vadd.f32 %v5223, %v5271
        %5273 = vmatmul.bf16.gmra.mxu0 %v4634
        %v5274 = vpop.f32.mrf.mxu0
        %v5275 = vadd.f32 %v5226, %v5274
        %v5276 = vpop.f32.mrf.mxu0
        %v5277 = vadd.f32 %v5228, %v5276
        %5278 = vmatmul.bf16.gmra.mxu0 %v4638
        %v5279 = vpop.f32.mrf.mxu0
        %v5280 = vadd.f32 %v5231, %v5279
        %v5281 = vpop.f32.mrf.mxu0
        %v5282 = vadd.f32 %v5233, %v5281
        %5283 = vmatmul.bf16.gmra.mxu0 %v4642
        %v5284 = vpop.f32.mrf.mxu0
        %v5285 = vadd.f32 %v5236, %v5284
        %v5286 = vpop.f32.mrf.mxu0
        %v5287 = vadd.f32 %v5238, %v5286
        %5288 = vmatmul.bf16.gmra.mxu0 %v4646
        %v5289 = vpop.f32.mrf.mxu0
        %v5290 = vadd.f32 %v5241, %v5289
        %v5291 = vpop.f32.mrf.mxu0
        %v5292 = vadd.f32 %v5243, %v5291
        %5293 = vmatmul.bf16.gmra.mxu0 %v4650
        %v5294 = vpop.f32.mrf.mxu0
        %v5295 = vadd.f32 %v5246, %v5294
        %v5296 = vpop.f32.mrf.mxu0
        %v5297 = vadd.f32 %v5248, %v5296
        %5298 = vdwg.mxu0
        %5299 = vmatpush.bf16.msra.mxu0 %v4924
        %5300 = vmatpush.bf16.msra.mxu0 %v4922
        %5301 = vmatpush.bf16.msra.mxu0 %v4920
        %5302 = vmatpush.bf16.msra.mxu0 %v4918
        %5303 = vmatpush.bf16.msra.mxu0 %v4916
        %5304 = vmatpush.bf16.msra.mxu0 %v4914
        %5305 = vmatpush.bf16.msra.mxu0 %v4912
        %5306 = vmatpush.bf16.msra.mxu0 %v4910
        %5307 = vmatmul.bf16.gmra.mxu0 %v4623
        %v5308 = vpop.f32.mrf.mxu0
        %v5309 = vadd.f32 %v5260, %v5308
        %v5310 = vpop.f32.mrf.mxu0
        %v5311 = vadd.f32 %v5262, %v5310
        %5312 = vmatmul.bf16.gmra.mxu0 %v4627
        %v5313 = vpop.f32.mrf.mxu0
        %v5314 = vadd.f32 %v5265, %v5313
        %v5315 = vpop.f32.mrf.mxu0
        %v5316 = vadd.f32 %v5267, %v5315
        %5317 = vmatmul.bf16.gmra.mxu0 %v4631
        %v5318 = vpop.f32.mrf.mxu0
        %v5319 = vadd.f32 %v5270, %v5318
        %v5320 = vpop.f32.mrf.mxu0
        %v5321 = vadd.f32 %v5272, %v5320
        %5322 = vmatmul.bf16.gmra.mxu0 %v4635
        %v5323 = vpop.f32.mrf.mxu0
        %v5324 = vadd.f32 %v5275, %v5323
        %v5325 = vpop.f32.mrf.mxu0
        %v5326 = vadd.f32 %v5277, %v5325
        %5327 = vmatmul.bf16.gmra.mxu0 %v4639
        %v5328 = vpop.f32.mrf.mxu0
        %v5329 = vadd.f32 %v5280, %v5328
        %v5330 = vpop.f32.mrf.mxu0
        %v5331 = vadd.f32 %v5282, %v5330
        %5332 = vmatmul.bf16.gmra.mxu0 %v4643
        %v5333 = vpop.f32.mrf.mxu0
        %v5334 = vadd.f32 %v5285, %v5333
        %v5335 = vpop.f32.mrf.mxu0
        %v5336 = vadd.f32 %v5287, %v5335
        %5337 = vmatmul.bf16.gmra.mxu0 %v4647
        %v5338 = vpop.f32.mrf.mxu0
        %v5339 = vadd.f32 %v5290, %v5338
        %v5340 = vpop.f32.mrf.mxu0
        %v5341 = vadd.f32 %v5292, %v5340
        %5342 = vmatmul.bf16.gmra.mxu0 %v4651
        %v5343 = vpop.f32.mrf.mxu0
        %v5344 = vadd.f32 %v5295, %v5343
        %v5345 = vpop.f32.mrf.mxu0
        %v5346 = vadd.f32 %v5297, %v5345
        %5347 = vdwg.mxu0
        %5348 = vmatpush.bf16.msra.mxu0 %v4940
        %5349 = vmatpush.bf16.msra.mxu0 %v4938
        %5350 = vmatpush.bf16.msra.mxu0 %v4936
        %5351 = vmatpush.bf16.msra.mxu0 %v4934
        %5352 = vmatpush.bf16.msra.mxu0 %v4932
        %5353 = vmatpush.bf16.msra.mxu0 %v4930
        %5354 = vmatpush.bf16.msra.mxu0 %v4928
        %5355 = vmatpush.bf16.msra.mxu0 %v4926
        %5356 = vmatmul.bf16.gmra.mxu0 %v4624
        %v5357 = vpop.f32.mrf.mxu0
        %v5358 = vadd.f32 %v5309, %v5357
        %v5359 = vpop.f32.mrf.mxu0
        %v5360 = vadd.f32 %v5311, %v5359
        %5361 = vmatmul.bf16.gmra.mxu0 %v4628
        %v5362 = vpop.f32.mrf.mxu0
        %v5363 = vadd.f32 %v5314, %v5362
        %v5364 = vpop.f32.mrf.mxu0
        %v5365 = vadd.f32 %v5316, %v5364
        %5366 = vmatmul.bf16.gmra.mxu0 %v4632
        %v5367 = vpop.f32.mrf.mxu0
        %v5368 = vadd.f32 %v5319, %v5367
        %v5369 = vpop.f32.mrf.mxu0
        %v5370 = vadd.f32 %v5321, %v5369
        %5371 = vmatmul.bf16.gmra.mxu0 %v4636
        %v5372 = vpop.f32.mrf.mxu0
        %v5373 = vadd.f32 %v5324, %v5372
        %v5374 = vpop.f32.mrf.mxu0
        %v5375 = vadd.f32 %v5326, %v5374
        %5376 = vmatmul.bf16.gmra.mxu0 %v4640
        %v5377 = vpop.f32.mrf.mxu0
        %v5378 = vadd.f32 %v5329, %v5377
        %v5379 = vpop.f32.mrf.mxu0
        %v5380 = vadd.f32 %v5331, %v5379
        %5381 = vmatmul.bf16.gmra.mxu0 %v4644
        %v5382 = vpop.f32.mrf.mxu0
        %v5383 = vadd.f32 %v5334, %v5382
        %v5384 = vpop.f32.mrf.mxu0
        %v5385 = vadd.f32 %v5336, %v5384
        %5386 = vmatmul.bf16.gmra.mxu0 %v4648
        %v5387 = vpop.f32.mrf.mxu0
        %v5388 = vadd.f32 %v5339, %v5387
        %v5389 = vpop.f32.mrf.mxu0
        %v5390 = vadd.f32 %v5341, %v5389
        %5391 = vmatmul.bf16.gmra.mxu0 %v4652
        %v5392 = vpop.f32.mrf.mxu0
        %v5393 = vadd.f32 %v5344, %v5392
        %v5394 = vpop.f32.mrf.mxu0
        %v5395 = vadd.f32 %v5346, %v5394
        %5396 = vdwg.mxu0
        %v5397 = vtanh.pop %v5162
        %v5398 = vtanh.pop %v5358
        %v5399 = vtanh.pop %v5164
        %v5400 = vtanh.pop %v5360
        %v5401 = vtanh.pop %v5167
        %v5402 = vtanh.pop %v5363
        %v5403 = vtanh.pop %v5169
        %v5404 = vtanh.pop %v5365
        %v5405 = vtanh.pop %v5172
        %v5406 = vtanh.pop %v5368
        %v5407 = vtanh.pop %v5174
        %v5408 = vtanh.pop %v5370
        %v5409 = vtanh.pop %v5177
        %v5410 = vtanh.pop %v5373
        %v5411 = vtanh.pop %v5179
        %v5412 = vtanh.pop %v5375
        %v5413 = vtanh.pop %v5182
        %v5414 = vtanh.pop %v5378
        %v5415 = vtanh.pop %v5184
        %v5416 = vtanh.pop %v5380
        %v5417 = vtanh.pop %v5187
        %v5418 = vtanh.pop %v5383
        %v5419 = vtanh.pop %v5189
        %v5420 = vtanh.pop %v5385
        %v5421 = vtanh.pop %v5192
        %v5422 = vtanh.pop %v5388
        %v5423 = vtanh.pop %v5194
        %v5424 = vtanh.pop %v5390
        %v5425 = vtanh.pop %v5197
        %v5426 = vtanh.pop %v5393
        %v5427 = vtanh.pop %v5199
        %v5428 = vtanh.pop %v5395
        %5429 = vst [vmem:[#allocation3] sm:$0xff] 1065369472
        %5430 = vst [vmem:[#allocation3 + $0x20] sm:$0xff] 1065369472
        %5431 = vst [vmem:[#allocation3 + $0x40] sm:$0xff] 1065369472
        %5432 = vst [vmem:[#allocation3 + $0x60] sm:$0xff] 1065369472
        %5433 = vst [vmem:[#allocation3 + $0x80] sm:$0xff] 1065369472
        %5434 = vst [vmem:[#allocation3 + $0xa0] sm:$0xff] 1065369472
        %5435 = vst [vmem:[#allocation3 + $0xc0] sm:$0xff] 1065369472
        %5436 = vst [vmem:[#allocation3 + $0xe0] sm:$0xff] 1065369472
        %5437 = vst [vmem:[#allocation3 + $0x100] sm:$0xff] 1065369472
        %5438 = vst [vmem:[#allocation3 + $0x120] sm:$0xff] 1065369472
        %5439 = vst [vmem:[#allocation3 + $0x140] sm:$0xff] 1065369472
        %5440 = vst [vmem:[#allocation3 + $0x160] sm:$0xff] 1065369472
        %5441 = vst [vmem:[#allocation3 + $0x180] sm:$0xff] 1065369472
        %5442 = vst [vmem:[#allocation3 + $0x1a0] sm:$0xff] 1065369472
        %5443 = vst [vmem:[#allocation3 + $0x1c0] sm:$0xff] 1065369472
        %5444 = vst [vmem:[#allocation3 + $0x1e0] sm:$0xff] 1065369472
        %v5445 = vpack.c.bf16 %v5398, %v5397
        %v5446 = vpack.c.bf16 %v5400, %v5399
        %v5447 = vpack.c.bf16 %v5402, %v5401
        %v5448 = vpack.c.bf16 %v5404, %v5403
        %v5449 = vpack.c.bf16 %v5406, %v5405
        %v5450 = vpack.c.bf16 %v5408, %v5407
        %v5451 = vpack.c.bf16 %v5410, %v5409
        %v5452 = vpack.c.bf16 %v5412, %v5411
        %v5453 = vpack.c.bf16 %v5414, %v5413
        %v5454 = vpack.c.bf16 %v5416, %v5415
        %v5455 = vpack.c.bf16 %v5418, %v5417
        %v5456 = vpack.c.bf16 %v5420, %v5419
        %v5457 = vpack.c.bf16 %v5422, %v5421
        %v5458 = vpack.c.bf16 %v5424, %v5423
        %v5459 = vpack.c.bf16 %v5426, %v5425
        %v5460 = vpack.c.bf16 %v5428, %v5427
        %5461 = vst [vmem:[#allocation3 + $0x8] sm:$0xff] %v5445
        %5462 = vst [vmem:[#allocation3 + $0x28] sm:$0xff] %v5446
        %5463 = vst [vmem:[#allocation3 + $0x48] sm:$0xff] %v5447
        %5464 = vst [vmem:[#allocation3 + $0x68] sm:$0xff] %v5448
        %5465 = vst [vmem:[#allocation3 + $0x88] sm:$0xff] %v5449
        %5466 = vst [vmem:[#allocation3 + $0xa8] sm:$0xff] %v5450
        %5467 = vst [vmem:[#allocation3 + $0xc8] sm:$0xff] %v5451
        %5468 = vst [vmem:[#allocation3 + $0xe8] sm:$0xff] %v5452
        %5469 = vst [vmem:[#allocation3 + $0x108] sm:$0xff] %v5453
        %5470 = vst [vmem:[#allocation3 + $0x128] sm:$0xff] %v5454
        %5471 = vst [vmem:[#allocation3 + $0x148] sm:$0xff] %v5455
        %5472 = vst [vmem:[#allocation3 + $0x168] sm:$0xff] %v5456
        %5473 = vst [vmem:[#allocation3 + $0x188] sm:$0xff] %v5457
        %5474 = vst [vmem:[#allocation3 + $0x1a8] sm:$0xff] %v5458
        %5475 = vst [vmem:[#allocation3 + $0x1c8] sm:$0xff] %v5459
        %5476 = vst [vmem:[#allocation3 + $0x1e8] sm:$0xff] %v5460
        %v5477 = vmul.f32 %v5397, 2.0
        %v5478 = vmul.f32 %v5398, 2.0
        %v5479 = vmul.f32 %v5399, 2.0
        %v5480 = vmul.f32 %v5400, 2.0
        %v5481 = vmul.f32 %v5401, 2.0
        %v5482 = vmul.f32 %v5402, 2.0
        %v5483 = vmul.f32 %v5403, 2.0
        %v5484 = vmul.f32 %v5404, 2.0
        %v5485 = vmul.f32 %v5405, 2.0
        %v5486 = vmul.f32 %v5406, 2.0
        %v5487 = vmul.f32 %v5407, 2.0
        %v5488 = vmul.f32 %v5408, 2.0
        %v5489 = vmul.f32 %v5409, 2.0
        %v5490 = vmul.f32 %v5410, 2.0
        %v5491 = vmul.f32 %v5411, 2.0
        %v5492 = vmul.f32 %v5412, 2.0
        %v5493 = vmul.f32 %v5413, 2.0
        %v5494 = vmul.f32 %v5414, 2.0
        %v5495 = vmul.f32 %v5415, 2.0
        %v5496 = vmul.f32 %v5416, 2.0
        %v5497 = vmul.f32 %v5417, 2.0
        %v5498 = vmul.f32 %v5418, 2.0
        %v5499 = vmul.f32 %v5419, 2.0
        %v5500 = vmul.f32 %v5420, 2.0
        %v5501 = vmul.f32 %v5421, 2.0
        %v5502 = vmul.f32 %v5422, 2.0
        %v5503 = vmul.f32 %v5423, 2.0
        %v5504 = vmul.f32 %v5424, 2.0
        %v5505 = vmul.f32 %v5425, 2.0
        %v5506 = vmul.f32 %v5426, 2.0
        %v5507 = vmul.f32 %v5427, 2.0
        %v5508 = vmul.f32 %v5428, 2.0
        %v5509 = vmul.f32 %v5477, %v5397
        %v5510 = vmul.f32 %v5478, %v5398
        %v5511 = vmul.f32 %v5479, %v5399
        %v5512 = vmul.f32 %v5480, %v5400
        %v5513 = vmul.f32 %v5481, %v5401
        %v5514 = vmul.f32 %v5482, %v5402
        %v5515 = vmul.f32 %v5483, %v5403
        %v5516 = vmul.f32 %v5484, %v5404
        %v5517 = vmul.f32 %v5485, %v5405
        %v5518 = vmul.f32 %v5486, %v5406
        %v5519 = vmul.f32 %v5487, %v5407
        %v5520 = vmul.f32 %v5488, %v5408
        %v5521 = vmul.f32 %v5489, %v5409
        %v5522 = vmul.f32 %v5490, %v5410
        %v5523 = vmul.f32 %v5491, %v5411
        %v5524 = vmul.f32 %v5492, %v5412
        %v5525 = vmul.f32 %v5493, %v5413
        %v5526 = vmul.f32 %v5494, %v5414
        %v5527 = vmul.f32 %v5495, %v5415
        %v5528 = vmul.f32 %v5496, %v5416
        %v5529 = vmul.f32 %v5497, %v5417
        %v5530 = vmul.f32 %v5498, %v5418
        %v5531 = vmul.f32 %v5499, %v5419
        %v5532 = vmul.f32 %v5500, %v5420
        %v5533 = vmul.f32 %v5501, %v5421
        %v5534 = vmul.f32 %v5502, %v5422
        %v5535 = vmul.f32 %v5503, %v5423
        %v5536 = vmul.f32 %v5504, %v5424
        %v5537 = vmul.f32 %v5505, %v5425
        %v5538 = vmul.f32 %v5506, %v5426
        %v5539 = vmul.f32 %v5507, %v5427
        %v5540 = vmul.f32 %v5508, %v5428
        %v5541 = vsub.f32 %v5509, 1.0
        %v5542 = vsub.f32 %v5510, 1.0
        %v5543 = vsub.f32 %v5511, 1.0
        %v5544 = vsub.f32 %v5512, 1.0
        %v5545 = vsub.f32 %v5513, 1.0
        %v5546 = vsub.f32 %v5514, 1.0
        %v5547 = vsub.f32 %v5515, 1.0
        %v5548 = vsub.f32 %v5516, 1.0
        %v5549 = vsub.f32 %v5517, 1.0
        %v5550 = vsub.f32 %v5518, 1.0
        %v5551 = vsub.f32 %v5519, 1.0
        %v5552 = vsub.f32 %v5520, 1.0
        %v5553 = vsub.f32 %v5521, 1.0
        %v5554 = vsub.f32 %v5522, 1.0
        %v5555 = vsub.f32 %v5523, 1.0
        %v5556 = vsub.f32 %v5524, 1.0
        %v5557 = vsub.f32 %v5525, 1.0
        %v5558 = vsub.f32 %v5526, 1.0
        %v5559 = vsub.f32 %v5527, 1.0
        %v5560 = vsub.f32 %v5528, 1.0
        %v5561 = vsub.f32 %v5529, 1.0
        %v5562 = vsub.f32 %v5530, 1.0
        %v5563 = vsub.f32 %v5531, 1.0
        %v5564 = vsub.f32 %v5532, 1.0
        %v5565 = vsub.f32 %v5533, 1.0
        %v5566 = vsub.f32 %v5534, 1.0
        %v5567 = vsub.f32 %v5535, 1.0
        %v5568 = vsub.f32 %v5536, 1.0
        %v5569 = vsub.f32 %v5537, 1.0
        %v5570 = vsub.f32 %v5538, 1.0
        %v5571 = vsub.f32 %v5539, 1.0
        %v5572 = vsub.f32 %v5540, 1.0
        %v5573 = vpack.c.bf16 %v5542, %v5541
        %v5574 = vpack.c.bf16 %v5544, %v5543
        %v5575 = vpack.c.bf16 %v5546, %v5545
        %v5576 = vpack.c.bf16 %v5548, %v5547
        %v5577 = vpack.c.bf16 %v5550, %v5549
        %v5578 = vpack.c.bf16 %v5552, %v5551
        %v5579 = vpack.c.bf16 %v5554, %v5553
        %v5580 = vpack.c.bf16 %v5556, %v5555
        %v5581 = vpack.c.bf16 %v5558, %v5557
        %v5582 = vpack.c.bf16 %v5560, %v5559
        %v5583 = vpack.c.bf16 %v5562, %v5561
        %v5584 = vpack.c.bf16 %v5564, %v5563
        %v5585 = vpack.c.bf16 %v5566, %v5565
        %v5586 = vpack.c.bf16 %v5568, %v5567
        %v5587 = vpack.c.bf16 %v5570, %v5569
        %v5588 = vpack.c.bf16 %v5572, %v5571
        %5589 = vst [vmem:[#allocation3 + $0x10] sm:$0xff] %v5573
        %5590 = vst [vmem:[#allocation3 + $0x30] sm:$0xff] %v5574
        %5591 = vst [vmem:[#allocation3 + $0x50] sm:$0xff] %v5575
        %5592 = vst [vmem:[#allocation3 + $0x70] sm:$0xff] %v5576
        %5593 = vst [vmem:[#allocation3 + $0x90] sm:$0xff] %v5577
        %5594 = vst [vmem:[#allocation3 + $0xb0] sm:$0xff] %v5578
        %5595 = vst [vmem:[#allocation3 + $0xd0] sm:$0xff] %v5579
        %5596 = vst [vmem:[#allocation3 + $0xf0] sm:$0xff] %v5580
        %5597 = vst [vmem:[#allocation3 + $0x110] sm:$0xff] %v5581
        %5598 = vst [vmem:[#allocation3 + $0x130] sm:$0xff] %v5582
        %5599 = vst [vmem:[#allocation3 + $0x150] sm:$0xff] %v5583
        %5600 = vst [vmem:[#allocation3 + $0x170] sm:$0xff] %v5584
        %5601 = vst [vmem:[#allocation3 + $0x190] sm:$0xff] %v5585
        %5602 = vst [vmem:[#allocation3 + $0x1b0] sm:$0xff] %v5586
        %5603 = vst [vmem:[#allocation3 + $0x1d0] sm:$0xff] %v5587
        %5604 = vst [vmem:[#allocation3 + $0x1f0] sm:$0xff] %v5588
        %v5605 = vmul.f32 %v5477, %v5541
        %v5606 = vmul.f32 %v5478, %v5542
        %v5607 = vmul.f32 %v5479, %v5543
        %v5608 = vmul.f32 %v5480, %v5544
        %v5609 = vmul.f32 %v5481, %v5545
        %v5610 = vmul.f32 %v5482, %v5546
        %v5611 = vmul.f32 %v5483, %v5547
        %v5612 = vmul.f32 %v5484, %v5548
        %v5613 = vmul.f32 %v5485, %v5549
        %v5614 = vmul.f32 %v5486, %v5550
        %v5615 = vmul.f32 %v5487, %v5551
        %v5616 = vmul.f32 %v5488, %v5552
        %v5617 = vmul.f32 %v5489, %v5553
        %v5618 = vmul.f32 %v5490, %v5554
        %v5619 = vmul.f32 %v5491, %v5555
        %v5620 = vmul.f32 %v5492, %v5556
        %v5621 = vmul.f32 %v5493, %v5557
        %v5622 = vmul.f32 %v5494, %v5558
        %v5623 = vmul.f32 %v5495, %v5559
        %v5624 = vmul.f32 %v5496, %v5560
        %v5625 = vmul.f32 %v5497, %v5561
        %v5626 = vmul.f32 %v5498, %v5562
        %v5627 = vmul.f32 %v5499, %v5563
        %v5628 = vmul.f32 %v5500, %v5564
        %v5629 = vmul.f32 %v5501, %v5565
        %v5630 = vmul.f32 %v5502, %v5566
        %v5631 = vmul.f32 %v5503, %v5567
        %v5632 = vmul.f32 %v5504, %v5568
        %v5633 = vmul.f32 %v5505, %v5569
        %v5634 = vmul.f32 %v5506, %v5570
        %v5635 = vmul.f32 %v5507, %v5571
        %v5636 = vmul.f32 %v5508, %v5572
        %v5637 = vsub.f32 %v5605, %v5397
        %v5638 = vsub.f32 %v5606, %v5398
        %v5639 = vsub.f32 %v5607, %v5399
        %v5640 = vsub.f32 %v5608, %v5400
        %v5641 = vsub.f32 %v5609, %v5401
        %v5642 = vsub.f32 %v5610, %v5402
        %v5643 = vsub.f32 %v5611, %v5403
        %v5644 = vsub.f32 %v5612, %v5404
        %v5645 = vsub.f32 %v5613, %v5405
        %v5646 = vsub.f32 %v5614, %v5406
        %v5647 = vsub.f32 %v5615, %v5407
        %v5648 = vsub.f32 %v5616, %v5408
        %v5649 = vsub.f32 %v5617, %v5409
        %v5650 = vsub.f32 %v5618, %v5410
        %v5651 = vsub.f32 %v5619, %v5411
        %v5652 = vsub.f32 %v5620, %v5412
        %v5653 = vsub.f32 %v5621, %v5413
        %v5654 = vsub.f32 %v5622, %v5414
        %v5655 = vsub.f32 %v5623, %v5415
        %v5656 = vsub.f32 %v5624, %v5416
        %v5657 = vsub.f32 %v5625, %v5417
        %v5658 = vsub.f32 %v5626, %v5418
        %v5659 = vsub.f32 %v5627, %v5419
        %v5660 = vsub.f32 %v5628, %v5420
        %v5661 = vsub.f32 %v5629, %v5421
        %v5662 = vsub.f32 %v5630, %v5422
        %v5663 = vsub.f32 %v5631, %v5423
        %v5664 = vsub.f32 %v5632, %v5424
        %v5665 = vsub.f32 %v5633, %v5425
        %v5666 = vsub.f32 %v5634, %v5426
        %v5667 = vsub.f32 %v5635, %v5427
        %v5668 = vsub.f32 %v5636, %v5428
        %v5669 = vpack.c.bf16 %v5638, %v5637
        %v5670 = vpack.c.bf16 %v5640, %v5639
        %v5671 = vpack.c.bf16 %v5642, %v5641
        %v5672 = vpack.c.bf16 %v5644, %v5643
        %v5673 = vpack.c.bf16 %v5646, %v5645
        %v5674 = vpack.c.bf16 %v5648, %v5647
        %v5675 = vpack.c.bf16 %v5650, %v5649
        %v5676 = vpack.c.bf16 %v5652, %v5651
        %v5677 = vpack.c.bf16 %v5654, %v5653
        %v5678 = vpack.c.bf16 %v5656, %v5655
        %v5679 = vpack.c.bf16 %v5658, %v5657
        %v5680 = vpack.c.bf16 %v5660, %v5659
        %v5681 = vpack.c.bf16 %v5662, %v5661
        %v5682 = vpack.c.bf16 %v5664, %v5663
        %v5683 = vpack.c.bf16 %v5666, %v5665
        %v5684 = vpack.c.bf16 %v5668, %v5667
        %5685 = vst [vmem:[#allocation3 + $0x18] sm:$0xff] %v5669
        %5686 = vst [vmem:[#allocation3 + $0x38] sm:$0xff] %v5670
        %5687 = vst [vmem:[#allocation3 + $0x58] sm:$0xff] %v5671
        %5688 = vst [vmem:[#allocation3 + $0x78] sm:$0xff] %v5672
        %5689 = vst [vmem:[#allocation3 + $0x98] sm:$0xff] %v5673
        %5690 = vst [vmem:[#allocation3 + $0xb8] sm:$0xff] %v5674
        %5691 = vst [vmem:[#allocation3 + $0xd8] sm:$0xff] %v5675
        %5692 = vst [vmem:[#allocation3 + $0xf8] sm:$0xff] %v5676
        %5693 = vst [vmem:[#allocation3 + $0x118] sm:$0xff] %v5677
        %5694 = vst [vmem:[#allocation3 + $0x138] sm:$0xff] %v5678
        %5695 = vst [vmem:[#allocation3 + $0x158] sm:$0xff] %v5679
        %5696 = vst [vmem:[#allocation3 + $0x178] sm:$0xff] %v5680
        %5697 = vst [vmem:[#allocation3 + $0x198] sm:$0xff] %v5681
        %5698 = vst [vmem:[#allocation3 + $0x1b8] sm:$0xff] %v5682
        %5699 = vst [vmem:[#allocation3 + $0x1d8] sm:$0xff] %v5683
        %5700 = vst [vmem:[#allocation3 + $0x1f8] sm:$0xff] %v5684
        %v5701 = vld [vmem:[%s495] sm:$0xf]
        %v5702 = vld [vmem:[%s495 + $0x4] sm:$0xf]
        %v5703 = vld [vmem:[%s495 + $0x8] sm:$0xf]
        %v5704 = vld [vmem:[%s495 + $0xc] sm:$0xf]
        %v5705 = vld [vmem:[%s495 + $0x10] sm:$0xf]
        %v5706 = vld [vmem:[%s495 + $0x14] sm:$0xf]
        %v5707 = vld [vmem:[%s495 + $0x18] sm:$0xf]
        %v5708 = vld [vmem:[%s495 + $0x1c] sm:$0xf]
        %v5709 = vld [vmem:[%s495 + $0x20] sm:$0xf]
        %v5710 = vld [vmem:[%s495 + $0x24] sm:$0xf]
        %v5711 = vld [vmem:[%s495 + $0x28] sm:$0xf]
        %v5712 = vld [vmem:[%s495 + $0x2c] sm:$0xf]
        %v5713 = vld [vmem:[%s495 + $0x30] sm:$0xf]
        %v5714 = vld [vmem:[%s495 + $0x34] sm:$0xf]
        %v5715 = vld [vmem:[%s495 + $0x38] sm:$0xf]
        %v5716 = vld [vmem:[%s495 + $0x3c] sm:$0xf]
        %v5717 = vld [vmem:[%s495 + $0x40] sm:$0xf]
        %v5718 = vld [vmem:[%s495 + $0x44] sm:$0xf]
        %v5719 = vld [vmem:[%s495 + $0x48] sm:$0xf]
        %v5720 = vld [vmem:[%s495 + $0x4c] sm:$0xf]
        %v5721 = vld [vmem:[%s495 + $0x50] sm:$0xf]
        %v5722 = vld [vmem:[%s495 + $0x54] sm:$0xf]
        %v5723 = vld [vmem:[%s495 + $0x58] sm:$0xf]
        %v5724 = vld [vmem:[%s495 + $0x5c] sm:$0xf]
        %v5725 = vld [vmem:[%s495 + $0x60] sm:$0xf]
        %v5726 = vld [vmem:[%s495 + $0x64] sm:$0xf]
        %v5727 = vld [vmem:[%s495 + $0x68] sm:$0xf]
        %v5728 = vld [vmem:[%s495 + $0x6c] sm:$0xf]
        %v5729 = vld [vmem:[%s495 + $0x70] sm:$0xf]
        %v5730 = vld [vmem:[%s495 + $0x74] sm:$0xf]
        %v5731 = vld [vmem:[%s495 + $0x78] sm:$0xf]
        %v5732 = vld [vmem:[%s495 + $0x7c] sm:$0xf]
        %v5733 = vld [vmem:[%s495 + $0x80] sm:$0xf]
        %v5734 = vld [vmem:[%s495 + $0x84] sm:$0xf]
        %v5735 = vld [vmem:[%s495 + $0x88] sm:$0xf]
        %v5736 = vld [vmem:[%s495 + $0x8c] sm:$0xf]
        %v5737 = vld [vmem:[%s495 + $0x90] sm:$0xf]
        %v5738 = vld [vmem:[%s495 + $0x94] sm:$0xf]
        %v5739 = vld [vmem:[%s495 + $0x98] sm:$0xf]
        %v5740 = vld [vmem:[%s495 + $0x9c] sm:$0xf]
        %v5741 = vld [vmem:[%s495 + $0xa0] sm:$0xf]
        %v5742 = vld [vmem:[%s495 + $0xa4] sm:$0xf]
        %v5743 = vld [vmem:[%s495 + $0xa8] sm:$0xf]
        %v5744 = vld [vmem:[%s495 + $0xac] sm:$0xf]
        %v5745 = vld [vmem:[%s495 + $0xb0] sm:$0xf]
        %v5746 = vld [vmem:[%s495 + $0xb4] sm:$0xf]
        %v5747 = vld [vmem:[%s495 + $0xb8] sm:$0xf]
        %v5748 = vld [vmem:[%s495 + $0xbc] sm:$0xf]
        %v5749 = vld [vmem:[%s495 + $0xc0] sm:$0xf]
        %v5750 = vld [vmem:[%s495 + $0xc4] sm:$0xf]
        %v5751 = vld [vmem:[%s495 + $0xc8] sm:$0xf]
        %v5752 = vld [vmem:[%s495 + $0xcc] sm:$0xf]
        %v5753 = vld [vmem:[%s495 + $0xd0] sm:$0xf]
        %v5754 = vld [vmem:[%s495 + $0xd4] sm:$0xf]
        %v5755 = vld [vmem:[%s495 + $0xd8] sm:$0xf]
        %v5756 = vld [vmem:[%s495 + $0xdc] sm:$0xf]
        %v5757 = vld [vmem:[%s495 + $0xe0] sm:$0xf]
        %v5758 = vld [vmem:[%s495 + $0xe4] sm:$0xf]
        %v5759 = vld [vmem:[%s495 + $0xe8] sm:$0xf]
        %v5760 = vld [vmem:[%s495 + $0xec] sm:$0xf]
        %v5761 = vld [vmem:[%s495 + $0xf0] sm:$0xf]
        %v5762 = vld [vmem:[%s495 + $0xf4] sm:$0xf]
        %v5763 = vld [vmem:[%s495 + $0xf8] sm:$0xf]
        %v5764 = vld [vmem:[%s495 + $0xfc] sm:$0xf]
        %v5765 = vld [vmem:[%s495 + $0x100] sm:$0xf]
        %v5766 = vld [vmem:[%s495 + $0x104] sm:$0xf]
        %v5767 = vld [vmem:[%s495 + $0x108] sm:$0xf]
        %v5768 = vld [vmem:[%s495 + $0x10c] sm:$0xf]
        %v5769 = vld [vmem:[%s495 + $0x110] sm:$0xf]
        %v5770 = vld [vmem:[%s495 + $0x114] sm:$0xf]
        %v5771 = vld [vmem:[%s495 + $0x118] sm:$0xf]
        %v5772 = vld [vmem:[%s495 + $0x11c] sm:$0xf]
        %v5773 = vld [vmem:[%s495 + $0x120] sm:$0xf]
        %v5774 = vld [vmem:[%s495 + $0x124] sm:$0xf]
        %v5775 = vld [vmem:[%s495 + $0x128] sm:$0xf]
        %v5776 = vld [vmem:[%s495 + $0x12c] sm:$0xf]
        %v5777 = vld [vmem:[%s495 + $0x130] sm:$0xf]
        %v5778 = vld [vmem:[%s495 + $0x134] sm:$0xf]
        %v5779 = vld [vmem:[%s495 + $0x138] sm:$0xf]
        %v5780 = vld [vmem:[%s495 + $0x13c] sm:$0xf]
        %v5781 = vld [vmem:[%s495 + $0x140] sm:$0xf]
        %v5782 = vld [vmem:[%s495 + $0x144] sm:$0xf]
        %v5783 = vld [vmem:[%s495 + $0x148] sm:$0xf]
        %v5784 = vld [vmem:[%s495 + $0x14c] sm:$0xf]
        %v5785 = vld [vmem:[%s495 + $0x150] sm:$0xf]
        %v5786 = vld [vmem:[%s495 + $0x154] sm:$0xf]
        %v5787 = vld [vmem:[%s495 + $0x158] sm:$0xf]
        %v5788 = vld [vmem:[%s495 + $0x15c] sm:$0xf]
        %v5789 = vld [vmem:[%s495 + $0x160] sm:$0xf]
        %v5790 = vld [vmem:[%s495 + $0x164] sm:$0xf]
        %v5791 = vld [vmem:[%s495 + $0x168] sm:$0xf]
        %v5792 = vld [vmem:[%s495 + $0x16c] sm:$0xf]
        %v5793 = vld [vmem:[%s495 + $0x170] sm:$0xf]
        %v5794 = vld [vmem:[%s495 + $0x174] sm:$0xf]
        %v5795 = vld [vmem:[%s495 + $0x178] sm:$0xf]
        %v5796 = vld [vmem:[%s495 + $0x17c] sm:$0xf]
        %v5797 = vld [vmem:[%s495 + $0x180] sm:$0xf]
        %v5798 = vld [vmem:[%s495 + $0x184] sm:$0xf]
        %v5799 = vld [vmem:[%s495 + $0x188] sm:$0xf]
        %v5800 = vld [vmem:[%s495 + $0x18c] sm:$0xf]
        %v5801 = vld [vmem:[%s495 + $0x190] sm:$0xf]
        %v5802 = vld [vmem:[%s495 + $0x194] sm:$0xf]
        %v5803 = vld [vmem:[%s495 + $0x198] sm:$0xf]
        %v5804 = vld [vmem:[%s495 + $0x19c] sm:$0xf]
        %v5805 = vld [vmem:[%s495 + $0x1a0] sm:$0xf]
        %v5806 = vld [vmem:[%s495 + $0x1a4] sm:$0xf]
        %v5807 = vld [vmem:[%s495 + $0x1a8] sm:$0xf]
        %v5808 = vld [vmem:[%s495 + $0x1ac] sm:$0xf]
        %v5809 = vld [vmem:[%s495 + $0x1b0] sm:$0xf]
        %v5810 = vld [vmem:[%s495 + $0x1b4] sm:$0xf]
        %v5811 = vld [vmem:[%s495 + $0x1b8] sm:$0xf]
        %v5812 = vld [vmem:[%s495 + $0x1bc] sm:$0xf]
        %v5813 = vld [vmem:[%s495 + $0x1c0] sm:$0xf]
        %v5814 = vld [vmem:[%s495 + $0x1c4] sm:$0xf]
        %v5815 = vld [vmem:[%s495 + $0x1c8] sm:$0xf]
        %v5816 = vld [vmem:[%s495 + $0x1cc] sm:$0xf]
        %v5817 = vld [vmem:[%s495 + $0x1d0] sm:$0xf]
        %v5818 = vld [vmem:[%s495 + $0x1d4] sm:$0xf]
        %v5819 = vld [vmem:[%s495 + $0x1d8] sm:$0xf]
        %v5820 = vld [vmem:[%s495 + $0x1dc] sm:$0xf]
        %v5821 = vld [vmem:[%s495 + $0x1e0] sm:$0xf]
        %v5822 = vld [vmem:[%s495 + $0x1e4] sm:$0xf]
        %v5823 = vld [vmem:[%s495 + $0x1e8] sm:$0xf]
        %v5824 = vld [vmem:[%s495 + $0x1ec] sm:$0xf]
        %v5825 = vld [vmem:[%s495 + $0x1f0] sm:$0xf]
        %v5826 = vld [vmem:[%s495 + $0x1f4] sm:$0xf]
        %v5827 = vld [vmem:[%s495 + $0x1f8] sm:$0xf]
        %v5828 = vld [vmem:[%s495 + $0x1fc] sm:$0xf]
        %v5829 = vld [vmem:[#allocation3] sm:$0xff]
        %v5830 = vld [vmem:[#allocation3 + $0x8] sm:$0xff]
        %v5831 = vld [vmem:[#allocation3 + $0x10] sm:$0xff]
        %v5832 = vld [vmem:[#allocation3 + $0x18] sm:$0xff]
        %v5833 = vld [vmem:[#allocation3 + $0x20] sm:$0xff]
        %v5834 = vld [vmem:[#allocation3 + $0x28] sm:$0xff]
        %v5835 = vld [vmem:[#allocation3 + $0x30] sm:$0xff]
        %v5836 = vld [vmem:[#allocation3 + $0x38] sm:$0xff]
        %v5837 = vld [vmem:[#allocation3 + $0x40] sm:$0xff]
        %v5838 = vld [vmem:[#allocation3 + $0x48] sm:$0xff]
        %v5839 = vld [vmem:[#allocation3 + $0x50] sm:$0xff]
        %v5840 = vld [vmem:[#allocation3 + $0x58] sm:$0xff]
        %v5841 = vld [vmem:[#allocation3 + $0x60] sm:$0xff]
        %v5842 = vld [vmem:[#allocation3 + $0x68] sm:$0xff]
        %v5843 = vld [vmem:[#allocation3 + $0x70] sm:$0xff]
        %v5844 = vld [vmem:[#allocation3 + $0x78] sm:$0xff]
        %v5845 = vld [vmem:[#allocation3 + $0x80] sm:$0xff]
        %v5846 = vld [vmem:[#allocation3 + $0x88] sm:$0xff]
        %v5847 = vld [vmem:[#allocation3 + $0x90] sm:$0xff]
        %v5848 = vld [vmem:[#allocation3 + $0x98] sm:$0xff]
        %v5849 = vld [vmem:[#allocation3 + $0xa0] sm:$0xff]
        %v5850 = vld [vmem:[#allocation3 + $0xa8] sm:$0xff]
        %v5851 = vld [vmem:[#allocation3 + $0xb0] sm:$0xff]
        %v5852 = vld [vmem:[#allocation3 + $0xb8] sm:$0xff]
        %v5853 = vld [vmem:[#allocation3 + $0xc0] sm:$0xff]
        %v5854 = vld [vmem:[#allocation3 + $0xc8] sm:$0xff]
        %v5855 = vld [vmem:[#allocation3 + $0xd0] sm:$0xff]
        %v5856 = vld [vmem:[#allocation3 + $0xd8] sm:$0xff]
        %v5857 = vld [vmem:[#allocation3 + $0xe0] sm:$0xff]
        %v5858 = vld [vmem:[#allocation3 + $0xe8] sm:$0xff]
        %v5859 = vld [vmem:[#allocation3 + $0xf0] sm:$0xff]
        %v5860 = vld [vmem:[#allocation3 + $0xf8] sm:$0xff]
        %v5861 = vld [vmem:[#allocation3 + $0x100] sm:$0xff]
        %v5862 = vld [vmem:[#allocation3 + $0x108] sm:$0xff]
        %v5863 = vld [vmem:[#allocation3 + $0x110] sm:$0xff]
        %v5864 = vld [vmem:[#allocation3 + $0x118] sm:$0xff]
        %v5865 = vld [vmem:[#allocation3 + $0x120] sm:$0xff]
        %v5866 = vld [vmem:[#allocation3 + $0x128] sm:$0xff]
        %v5867 = vld [vmem:[#allocation3 + $0x130] sm:$0xff]
        %v5868 = vld [vmem:[#allocation3 + $0x138] sm:$0xff]
        %v5869 = vld [vmem:[#allocation3 + $0x140] sm:$0xff]
        %v5870 = vld [vmem:[#allocation3 + $0x148] sm:$0xff]
        %v5871 = vld [vmem:[#allocation3 + $0x150] sm:$0xff]
        %v5872 = vld [vmem:[#allocation3 + $0x158] sm:$0xff]
        %v5873 = vld [vmem:[#allocation3 + $0x160] sm:$0xff]
        %v5874 = vld [vmem:[#allocation3 + $0x168] sm:$0xff]
        %v5875 = vld [vmem:[#allocation3 + $0x170] sm:$0xff]
        %v5876 = vld [vmem:[#allocation3 + $0x178] sm:$0xff]
        %v5877 = vld [vmem:[#allocation3 + $0x180] sm:$0xff]
        %v5878 = vld [vmem:[#allocation3 + $0x188] sm:$0xff]
        %v5879 = vld [vmem:[#allocation3 + $0x190] sm:$0xff]
        %v5880 = vld [vmem:[#allocation3 + $0x198] sm:$0xff]
        %v5881 = vld [vmem:[#allocation3 + $0x1a0] sm:$0xff]
        %v5882 = vld [vmem:[#allocation3 + $0x1a8] sm:$0xff]
        %v5883 = vld [vmem:[#allocation3 + $0x1b0] sm:$0xff]
        %v5884 = vld [vmem:[#allocation3 + $0x1b8] sm:$0xff]
        %v5885 = vld [vmem:[#allocation3 + $0x1c0] sm:$0xff]
        %v5886 = vld [vmem:[#allocation3 + $0x1c8] sm:$0xff]
        %v5887 = vld [vmem:[#allocation3 + $0x1d0] sm:$0xff]
        %v5888 = vld [vmem:[#allocation3 + $0x1d8] sm:$0xff]
        %v5889 = vld [vmem:[#allocation3 + $0x1e0] sm:$0xff]
        %v5890 = vld [vmem:[#allocation3 + $0x1e8] sm:$0xff]
        %v5891 = vld [vmem:[#allocation3 + $0x1f0] sm:$0xff]
        %v5892 = vld [vmem:[#allocation3 + $0x1f8] sm:$0xff]
        %v5957 = vunpack.c.l.b16 %v5829
        %v5958 = vunpack.c.h.b16 %v5829
        %v5959 = vunpack.c.l.b16 %v5830
        %v5960 = vunpack.c.h.b16 %v5830
        %v5961 = vunpack.c.l.b16 %v5831
        %v5962 = vunpack.c.h.b16 %v5831
        %v5963 = vunpack.c.l.b16 %v5832
        %v5964 = vunpack.c.h.b16 %v5832
        %v5965 = vunpack.c.l.b16 %v5833
        %v5966 = vunpack.c.h.b16 %v5833
        %v5967 = vunpack.c.l.b16 %v5834
        %v5968 = vunpack.c.h.b16 %v5834
        %v5969 = vunpack.c.l.b16 %v5835
        %v5970 = vunpack.c.h.b16 %v5835
        %v5971 = vunpack.c.l.b16 %v5836
        %v5972 = vunpack.c.h.b16 %v5836
        %v5973 = vunpack.c.l.b16 %v5837
        %v5974 = vunpack.c.h.b16 %v5837
        %v5975 = vunpack.c.l.b16 %v5838
        %v5976 = vunpack.c.h.b16 %v5838
        %v5977 = vunpack.c.l.b16 %v5839
        %v5978 = vunpack.c.h.b16 %v5839
        %v5979 = vunpack.c.l.b16 %v5840
        %v5980 = vunpack.c.h.b16 %v5840
        %v5981 = vunpack.c.l.b16 %v5841
        %v5982 = vunpack.c.h.b16 %v5841
        %v5983 = vunpack.c.l.b16 %v5842
        %v5984 = vunpack.c.h.b16 %v5842
        %v5985 = vunpack.c.l.b16 %v5843
        %v5986 = vunpack.c.h.b16 %v5843
        %v5987 = vunpack.c.l.b16 %v5844
        %v5988 = vunpack.c.h.b16 %v5844
        %v5989 = vunpack.c.l.b16 %v5845
        %v5990 = vunpack.c.h.b16 %v5845
        %v5991 = vunpack.c.l.b16 %v5846
        %v5992 = vunpack.c.h.b16 %v5846
        %v5993 = vunpack.c.l.b16 %v5847
        %v5994 = vunpack.c.h.b16 %v5847
        %v5995 = vunpack.c.l.b16 %v5848
        %v5996 = vunpack.c.h.b16 %v5848
        %v5997 = vunpack.c.l.b16 %v5849
        %v5998 = vunpack.c.h.b16 %v5849
        %v5999 = vunpack.c.l.b16 %v5850
        %v6000 = vunpack.c.h.b16 %v5850
        %v6001 = vunpack.c.l.b16 %v5851
        %v6002 = vunpack.c.h.b16 %v5851
        %v6003 = vunpack.c.l.b16 %v5852
        %v6004 = vunpack.c.h.b16 %v5852
        %v6005 = vunpack.c.l.b16 %v5853
        %v6006 = vunpack.c.h.b16 %v5853
        %v6007 = vunpack.c.l.b16 %v5854
        %v6008 = vunpack.c.h.b16 %v5854
        %v6009 = vunpack.c.l.b16 %v5855
        %v6010 = vunpack.c.h.b16 %v5855
        %v6011 = vunpack.c.l.b16 %v5856
        %v6012 = vunpack.c.h.b16 %v5856
        %v6013 = vunpack.c.l.b16 %v5857
        %v6014 = vunpack.c.h.b16 %v5857
        %v6015 = vunpack.c.l.b16 %v5858
        %v6016 = vunpack.c.h.b16 %v5858
        %v6017 = vunpack.c.l.b16 %v5859
        %v6018 = vunpack.c.h.b16 %v5859
        %v6019 = vunpack.c.l.b16 %v5860
        %v6020 = vunpack.c.h.b16 %v5860
        %v6021 = vunpack.c.l.b16 %v5861
        %v6022 = vunpack.c.h.b16 %v5861
        %v6023 = vunpack.c.l.b16 %v5862
        %v6024 = vunpack.c.h.b16 %v5862
        %v6025 = vunpack.c.l.b16 %v5863
        %v6026 = vunpack.c.h.b16 %v5863
        %v6027 = vunpack.c.l.b16 %v5864
        %v6028 = vunpack.c.h.b16 %v5864
        %v6029 = vunpack.c.l.b16 %v5865
        %v6030 = vunpack.c.h.b16 %v5865
        %v6031 = vunpack.c.l.b16 %v5866
        %v6032 = vunpack.c.h.b16 %v5866
        %v6033 = vunpack.c.l.b16 %v5867
        %v6034 = vunpack.c.h.b16 %v5867
        %v6035 = vunpack.c.l.b16 %v5868
        %v6036 = vunpack.c.h.b16 %v5868
        %v6037 = vunpack.c.l.b16 %v5869
        %v6038 = vunpack.c.h.b16 %v5869
        %v6039 = vunpack.c.l.b16 %v5870
        %v6040 = vunpack.c.h.b16 %v5870
        %v6041 = vunpack.c.l.b16 %v5871
        %v6042 = vunpack.c.h.b16 %v5871
        %v6043 = vunpack.c.l.b16 %v5872
        %v6044 = vunpack.c.h.b16 %v5872
        %v6045 = vunpack.c.l.b16 %v5873
        %v6046 = vunpack.c.h.b16 %v5873
        %v6047 = vunpack.c.l.b16 %v5874
        %v6048 = vunpack.c.h.b16 %v5874
        %v6049 = vunpack.c.l.b16 %v5875
        %v6050 = vunpack.c.h.b16 %v5875
        %v6051 = vunpack.c.l.b16 %v5876
        %v6052 = vunpack.c.h.b16 %v5876
        %v6053 = vunpack.c.l.b16 %v5877
        %v6054 = vunpack.c.h.b16 %v5877
        %v6055 = vunpack.c.l.b16 %v5878
        %v6056 = vunpack.c.h.b16 %v5878
        %v6057 = vunpack.c.l.b16 %v5879
        %v6058 = vunpack.c.h.b16 %v5879
        %v6059 = vunpack.c.l.b16 %v5880
        %v6060 = vunpack.c.h.b16 %v5880
        %v6061 = vunpack.c.l.b16 %v5881
        %v6062 = vunpack.c.h.b16 %v5881
        %v6063 = vunpack.c.l.b16 %v5882
        %v6064 = vunpack.c.h.b16 %v5882
        %v6065 = vunpack.c.l.b16 %v5883
        %v6066 = vunpack.c.h.b16 %v5883
        %v6067 = vunpack.c.l.b16 %v5884
        %v6068 = vunpack.c.h.b16 %v5884
        %v6069 = vunpack.c.l.b16 %v5885
        %v6070 = vunpack.c.h.b16 %v5885
        %v6071 = vunpack.c.l.b16 %v5886
        %v6072 = vunpack.c.h.b16 %v5886
        %v6073 = vunpack.c.l.b16 %v5887
        %v6074 = vunpack.c.h.b16 %v5887
        %v6075 = vunpack.c.l.b16 %v5888
        %v6076 = vunpack.c.h.b16 %v5888
        %v6077 = vunpack.c.l.b16 %v5889
        %v6078 = vunpack.c.h.b16 %v5889
        %v6079 = vunpack.c.l.b16 %v5890
        %v6080 = vunpack.c.h.b16 %v5890
        %v6081 = vunpack.c.l.b16 %v5891
        %v6082 = vunpack.c.h.b16 %v5891
        %v6083 = vunpack.c.l.b16 %v5892
        %v6084 = vunpack.c.h.b16 %v5892
        %v6085 = vpack.c.b16 %v5965, %v5957
        %v6086 = vpack.c.b16 %v5966, %v5958
        %v6087 = vpack.c.b16 %v5967, %v5959
        %v6088 = vpack.c.b16 %v5968, %v5960
        %v6089 = vpack.c.b16 %v5969, %v5961
        %v6090 = vpack.c.b16 %v5970, %v5962
        %v6091 = vpack.c.b16 %v5971, %v5963
        %v6092 = vpack.c.b16 %v5972, %v5964
        %v6093 = vpack.c.b16 %v5981, %v5973
        %v6094 = vpack.c.b16 %v5982, %v5974
        %v6095 = vpack.c.b16 %v5983, %v5975
        %v6096 = vpack.c.b16 %v5984, %v5976
        %v6097 = vpack.c.b16 %v5985, %v5977
        %v6098 = vpack.c.b16 %v5986, %v5978
        %v6099 = vpack.c.b16 %v5987, %v5979
        %v6100 = vpack.c.b16 %v5988, %v5980
        %v6101 = vpack.c.b16 %v5997, %v5989
        %v6102 = vpack.c.b16 %v5998, %v5990
        %v6103 = vpack.c.b16 %v5999, %v5991
        %v6104 = vpack.c.b16 %v6000, %v5992
        %v6105 = vpack.c.b16 %v6001, %v5993
        %v6106 = vpack.c.b16 %v6002, %v5994
        %v6107 = vpack.c.b16 %v6003, %v5995
        %v6108 = vpack.c.b16 %v6004, %v5996
        %v6109 = vpack.c.b16 %v6013, %v6005
        %v6110 = vpack.c.b16 %v6014, %v6006
        %v6111 = vpack.c.b16 %v6015, %v6007
        %v6112 = vpack.c.b16 %v6016, %v6008
        %v6113 = vpack.c.b16 %v6017, %v6009
        %v6114 = vpack.c.b16 %v6018, %v6010
        %v6115 = vpack.c.b16 %v6019, %v6011
        %v6116 = vpack.c.b16 %v6020, %v6012
        %v6117 = vpack.c.b16 %v6029, %v6021
        %v6118 = vpack.c.b16 %v6030, %v6022
        %v6119 = vpack.c.b16 %v6031, %v6023
        %v6120 = vpack.c.b16 %v6032, %v6024
        %v6121 = vpack.c.b16 %v6033, %v6025
        %v6122 = vpack.c.b16 %v6034, %v6026
        %v6123 = vpack.c.b16 %v6035, %v6027
        %v6124 = vpack.c.b16 %v6036, %v6028
        %v6125 = vpack.c.b16 %v6045, %v6037
        %v6126 = vpack.c.b16 %v6046, %v6038
        %v6127 = vpack.c.b16 %v6047, %v6039
        %v6128 = vpack.c.b16 %v6048, %v6040
        %v6129 = vpack.c.b16 %v6049, %v6041
        %v6130 = vpack.c.b16 %v6050, %v6042
        %v6131 = vpack.c.b16 %v6051, %v6043
        %v6132 = vpack.c.b16 %v6052, %v6044
        %v6133 = vpack.c.b16 %v6061, %v6053
        %v6134 = vpack.c.b16 %v6062, %v6054
        %v6135 = vpack.c.b16 %v6063, %v6055
        %v6136 = vpack.c.b16 %v6064, %v6056
        %v6137 = vpack.c.b16 %v6065, %v6057
        %v6138 = vpack.c.b16 %v6066, %v6058
        %v6139 = vpack.c.b16 %v6067, %v6059
        %v6140 = vpack.c.b16 %v6068, %v6060
        %v6141 = vpack.c.b16 %v6077, %v6069
        %v6142 = vpack.c.b16 %v6078, %v6070
        %v6143 = vpack.c.b16 %v6079, %v6071
        %v6144 = vpack.c.b16 %v6080, %v6072
        %v6145 = vpack.c.b16 %v6081, %v6073
        %v6146 = vpack.c.b16 %v6082, %v6074
        %v6147 = vpack.c.b16 %v6083, %v6075
        %v6148 = vpack.c.b16 %v6084, %v6076
        %v6341 = vunpack.c.l.b16 %v5701
        %v6342 = vunpack.c.l.b16 %v5702
        %v6343 = vunpack.c.l.b16 %v5703
        %v6344 = vunpack.c.l.b16 %v5704
        %v6345 = vunpack.c.l.b16 %v5705
        %v6346 = vunpack.c.l.b16 %v5706
        %v6347 = vunpack.c.l.b16 %v5707
        %v6348 = vunpack.c.l.b16 %v5708
        %v6349 = vunpack.c.l.b16 %v5709
        %v6350 = vunpack.c.l.b16 %v5710
        %v6351 = vunpack.c.l.b16 %v5711
        %v6352 = vunpack.c.l.b16 %v5712
        %v6353 = vunpack.c.l.b16 %v5713
        %v6354 = vunpack.c.l.b16 %v5714
        %v6355 = vunpack.c.l.b16 %v5715
        %v6356 = vunpack.c.l.b16 %v5716
        %v6357 = vunpack.c.l.b16 %v5717
        %v6358 = vunpack.c.l.b16 %v5718
        %v6359 = vunpack.c.l.b16 %v5719
        %v6360 = vunpack.c.l.b16 %v5720
        %v6361 = vunpack.c.l.b16 %v5721
        %v6362 = vunpack.c.l.b16 %v5722
        %v6363 = vunpack.c.l.b16 %v5723
        %v6364 = vunpack.c.l.b16 %v5724
        %v6365 = vunpack.c.l.b16 %v5725
        %v6366 = vunpack.c.l.b16 %v5726
        %v6367 = vunpack.c.l.b16 %v5727
        %v6368 = vunpack.c.l.b16 %v5728
        %v6369 = vunpack.c.l.b16 %v5729
        %v6370 = vunpack.c.l.b16 %v5730
        %v6371 = vunpack.c.l.b16 %v5731
        %v6372 = vunpack.c.l.b16 %v5732
        %v6373 = vunpack.c.l.b16 %v5733
        %v6374 = vunpack.c.l.b16 %v5734
        %v6375 = vunpack.c.l.b16 %v5735
        %v6376 = vunpack.c.l.b16 %v5736
        %v6377 = vunpack.c.l.b16 %v5737
        %v6378 = vunpack.c.l.b16 %v5738
        %v6379 = vunpack.c.l.b16 %v5739
        %v6380 = vunpack.c.l.b16 %v5740
        %v6381 = vunpack.c.l.b16 %v5741
        %v6382 = vunpack.c.l.b16 %v5742
        %v6383 = vunpack.c.l.b16 %v5743
        %v6384 = vunpack.c.l.b16 %v5744
        %v6385 = vunpack.c.l.b16 %v5745
        %v6386 = vunpack.c.l.b16 %v5746
        %v6387 = vunpack.c.l.b16 %v5747
        %v6388 = vunpack.c.l.b16 %v5748
        %v6389 = vunpack.c.l.b16 %v5749
        %v6390 = vunpack.c.l.b16 %v5750
        %v6391 = vunpack.c.l.b16 %v5751
        %v6392 = vunpack.c.l.b16 %v5752
        %v6393 = vunpack.c.l.b16 %v5753
        %v6394 = vunpack.c.l.b16 %v5754
        %v6395 = vunpack.c.l.b16 %v5755
        %v6396 = vunpack.c.l.b16 %v5756
        %v6397 = vunpack.c.l.b16 %v5757
        %v6398 = vunpack.c.l.b16 %v5758
        %v6399 = vunpack.c.l.b16 %v5759
        %v6400 = vunpack.c.l.b16 %v5760
        %v6401 = vunpack.c.l.b16 %v5761
        %v6402 = vunpack.c.l.b16 %v5762
        %v6403 = vunpack.c.l.b16 %v5763
        %v6404 = vunpack.c.l.b16 %v5764
        %v6405 = vunpack.c.l.b16 %v5765
        %v6406 = vunpack.c.l.b16 %v5766
        %v6407 = vunpack.c.l.b16 %v5767
        %v6408 = vunpack.c.l.b16 %v5768
        %v6409 = vunpack.c.l.b16 %v5769
        %v6410 = vunpack.c.l.b16 %v5770
        %v6411 = vunpack.c.l.b16 %v5771
        %v6412 = vunpack.c.l.b16 %v5772
        %v6413 = vunpack.c.l.b16 %v5773
        %v6414 = vunpack.c.l.b16 %v5774
        %v6415 = vunpack.c.l.b16 %v5775
        %v6416 = vunpack.c.l.b16 %v5776
        %v6417 = vunpack.c.l.b16 %v5777
        %v6418 = vunpack.c.l.b16 %v5778
        %v6419 = vunpack.c.l.b16 %v5779
        %v6420 = vunpack.c.l.b16 %v5780
        %v6421 = vunpack.c.l.b16 %v5781
        %v6422 = vunpack.c.l.b16 %v5782
        %v6423 = vunpack.c.l.b16 %v5783
        %v6424 = vunpack.c.l.b16 %v5784
        %v6425 = vunpack.c.l.b16 %v5785
        %v6426 = vunpack.c.l.b16 %v5786
        %v6427 = vunpack.c.l.b16 %v5787
        %v6428 = vunpack.c.l.b16 %v5788
        %v6429 = vunpack.c.l.b16 %v5789
        %v6430 = vunpack.c.l.b16 %v5790
        %v6431 = vunpack.c.l.b16 %v5791
        %v6432 = vunpack.c.l.b16 %v5792
        %v6433 = vunpack.c.l.b16 %v5793
        %v6434 = vunpack.c.l.b16 %v5794
        %v6435 = vunpack.c.l.b16 %v5795
        %v6436 = vunpack.c.l.b16 %v5796
        %v6437 = vunpack.c.l.b16 %v5797
        %v6438 = vunpack.c.l.b16 %v5798
        %v6439 = vunpack.c.l.b16 %v5799
        %v6440 = vunpack.c.l.b16 %v5800
        %v6441 = vunpack.c.l.b16 %v5801
        %v6442 = vunpack.c.l.b16 %v5802
        %v6443 = vunpack.c.l.b16 %v5803
        %v6444 = vunpack.c.l.b16 %v5804
        %v6445 = vunpack.c.l.b16 %v5805
        %v6446 = vunpack.c.l.b16 %v5806
        %v6447 = vunpack.c.l.b16 %v5807
        %v6448 = vunpack.c.l.b16 %v5808
        %v6449 = vunpack.c.l.b16 %v5809
        %v6450 = vunpack.c.l.b16 %v5810
        %v6451 = vunpack.c.l.b16 %v5811
        %v6452 = vunpack.c.l.b16 %v5812
        %v6453 = vunpack.c.l.b16 %v5813
        %v6454 = vunpack.c.l.b16 %v5814
        %v6455 = vunpack.c.l.b16 %v5815
        %v6456 = vunpack.c.l.b16 %v5816
        %v6457 = vunpack.c.l.b16 %v5817
        %v6458 = vunpack.c.l.b16 %v5818
        %v6459 = vunpack.c.l.b16 %v5819
        %v6460 = vunpack.c.l.b16 %v5820
        %v6461 = vunpack.c.l.b16 %v5821
        %v6462 = vunpack.c.l.b16 %v5822
        %v6463 = vunpack.c.l.b16 %v5823
        %v6464 = vunpack.c.l.b16 %v5824
        %v6465 = vunpack.c.l.b16 %v5825
        %v6466 = vunpack.c.l.b16 %v5826
        %v6467 = vunpack.c.l.b16 %v5827
        %v6468 = vunpack.c.l.b16 %v5828
        %v6469 = vpack.c.b16 %v6342, %v6341
        %v6470 = vpack.c.b16 %v6344, %v6343
        %v6471 = vpack.c.b16 %v6346, %v6345
        %v6472 = vpack.c.b16 %v6348, %v6347
        %v6473 = vpack.c.b16 %v6350, %v6349
        %v6474 = vpack.c.b16 %v6352, %v6351
        %v6475 = vpack.c.b16 %v6354, %v6353
        %v6476 = vpack.c.b16 %v6356, %v6355
        %v6477 = vpack.c.b16 %v6358, %v6357
        %v6478 = vpack.c.b16 %v6360, %v6359
        %v6479 = vpack.c.b16 %v6362, %v6361
        %v6480 = vpack.c.b16 %v6364, %v6363
        %v6481 = vpack.c.b16 %v6366, %v6365
        %v6482 = vpack.c.b16 %v6368, %v6367
        %v6483 = vpack.c.b16 %v6370, %v6369
        %v6484 = vpack.c.b16 %v6372, %v6371
        %v6485 = vpack.c.b16 %v6374, %v6373
        %v6486 = vpack.c.b16 %v6376, %v6375
        %v6487 = vpack.c.b16 %v6378, %v6377
        %v6488 = vpack.c.b16 %v6380, %v6379
        %v6489 = vpack.c.b16 %v6382, %v6381
        %v6490 = vpack.c.b16 %v6384, %v6383
        %v6491 = vpack.c.b16 %v6386, %v6385
        %v6492 = vpack.c.b16 %v6388, %v6387
        %v6493 = vpack.c.b16 %v6390, %v6389
        %v6494 = vpack.c.b16 %v6392, %v6391
        %v6495 = vpack.c.b16 %v6394, %v6393
        %v6496 = vpack.c.b16 %v6396, %v6395
        %v6497 = vpack.c.b16 %v6398, %v6397
        %v6498 = vpack.c.b16 %v6400, %v6399
        %v6499 = vpack.c.b16 %v6402, %v6401
        %v6500 = vpack.c.b16 %v6404, %v6403
        %v6501 = vpack.c.b16 %v6406, %v6405
        %v6502 = vpack.c.b16 %v6408, %v6407
        %v6503 = vpack.c.b16 %v6410, %v6409
        %v6504 = vpack.c.b16 %v6412, %v6411
        %v6505 = vpack.c.b16 %v6414, %v6413
        %v6506 = vpack.c.b16 %v6416, %v6415
        %v6507 = vpack.c.b16 %v6418, %v6417
        %v6508 = vpack.c.b16 %v6420, %v6419
        %v6509 = vpack.c.b16 %v6422, %v6421
        %v6510 = vpack.c.b16 %v6424, %v6423
        %v6511 = vpack.c.b16 %v6426, %v6425
        %v6512 = vpack.c.b16 %v6428, %v6427
        %v6513 = vpack.c.b16 %v6430, %v6429
        %v6514 = vpack.c.b16 %v6432, %v6431
        %v6515 = vpack.c.b16 %v6434, %v6433
        %v6516 = vpack.c.b16 %v6436, %v6435
        %v6517 = vpack.c.b16 %v6438, %v6437
        %v6518 = vpack.c.b16 %v6440, %v6439
        %v6519 = vpack.c.b16 %v6442, %v6441
        %v6520 = vpack.c.b16 %v6444, %v6443
        %v6521 = vpack.c.b16 %v6446, %v6445
        %v6522 = vpack.c.b16 %v6448, %v6447
        %v6523 = vpack.c.b16 %v6450, %v6449
        %v6524 = vpack.c.b16 %v6452, %v6451
        %v6525 = vpack.c.b16 %v6454, %v6453
        %v6526 = vpack.c.b16 %v6456, %v6455
        %v6527 = vpack.c.b16 %v6458, %v6457
        %v6528 = vpack.c.b16 %v6460, %v6459
        %v6529 = vpack.c.b16 %v6462, %v6461
        %v6530 = vpack.c.b16 %v6464, %v6463
        %v6531 = vpack.c.b16 %v6466, %v6465
        %v6532 = vpack.c.b16 %v6468, %v6467
        %6597 = vmatpush.bf16.msra.mxu0 %v6476
        %6598 = vmatpush.bf16.msra.mxu0 %v6475
        %6599 = vmatpush.bf16.msra.mxu0 %v6474
        %6600 = vmatpush.bf16.msra.mxu0 %v6473
        %6601 = vmatpush.bf16.msra.mxu0 %v6472
        %6602 = vmatpush.bf16.msra.mxu0 %v6471
        %6603 = vmatpush.bf16.msra.mxu0 %v6470
        %6604 = vmatpush.bf16.msra.mxu0 %v6469
        %6605 = vmatmul.bf16.gmra.mxu0 %v6085
        %v6606 = vpop.f32.mrf.mxu0
        %v6607 = vadd.f32 0.0, %v6606
        %v6608 = vpop.f32.mrf.mxu0
        %v6609 = vadd.f32 0.0, %v6608
        %6610 = vmatmul.bf16.gmra.mxu0 %v6093
        %v6611 = vpop.f32.mrf.mxu0
        %v6612 = vadd.f32 0.0, %v6611
        %v6613 = vpop.f32.mrf.mxu0
        %v6614 = vadd.f32 0.0, %v6613
        %6615 = vmatmul.bf16.gmra.mxu0 %v6101
        %v6616 = vpop.f32.mrf.mxu0
        %v6617 = vadd.f32 0.0, %v6616
        %v6618 = vpop.f32.mrf.mxu0
        %v6619 = vadd.f32 0.0, %v6618
        %6620 = vmatmul.bf16.gmra.mxu0 %v6109
        %v6621 = vpop.f32.mrf.mxu0
        %v6622 = vadd.f32 0.0, %v6621
        %v6623 = vpop.f32.mrf.mxu0
        %v6624 = vadd.f32 0.0, %v6623
        %6625 = vmatmul.bf16.gmra.mxu0 %v6117
        %v6626 = vpop.f32.mrf.mxu0
        %v6627 = vadd.f32 0.0, %v6626
        %v6628 = vpop.f32.mrf.mxu0
        %v6629 = vadd.f32 0.0, %v6628
        %6630 = vmatmul.bf16.gmra.mxu0 %v6125
        %v6631 = vpop.f32.mrf.mxu0
        %v6632 = vadd.f32 0.0, %v6631
        %v6633 = vpop.f32.mrf.mxu0
        %v6634 = vadd.f32 0.0, %v6633
        %6635 = vmatmul.bf16.gmra.mxu0 %v6133
        %v6636 = vpop.f32.mrf.mxu0
        %v6637 = vadd.f32 0.0, %v6636
        %v6638 = vpop.f32.mrf.mxu0
        %v6639 = vadd.f32 0.0, %v6638
        %6640 = vmatmul.bf16.gmra.mxu0 %v6141
        %v6641 = vpop.f32.mrf.mxu0
        %v6642 = vadd.f32 0.0, %v6641
        %v6643 = vpop.f32.mrf.mxu0
        %v6644 = vadd.f32 0.0, %v6643
        %6645 = vdwg.mxu0
        %6646 = vmatpush.bf16.msra.mxu0 %v6484
        %6647 = vmatpush.bf16.msra.mxu0 %v6483
        %6648 = vmatpush.bf16.msra.mxu0 %v6482
        %6649 = vmatpush.bf16.msra.mxu0 %v6481
        %6650 = vmatpush.bf16.msra.mxu0 %v6480
        %6651 = vmatpush.bf16.msra.mxu0 %v6479
        %6652 = vmatpush.bf16.msra.mxu0 %v6478
        %6653 = vmatpush.bf16.msra.mxu0 %v6477
        %6654 = vmatmul.bf16.gmra.mxu0 %v6086
        %v6655 = vpop.f32.mrf.mxu0
        %v6656 = vadd.f32 %v6607, %v6655
        %v6657 = vpop.f32.mrf.mxu0
        %v6658 = vadd.f32 %v6609, %v6657
        %6659 = vmatmul.bf16.gmra.mxu0 %v6094
        %v6660 = vpop.f32.mrf.mxu0
        %v6661 = vadd.f32 %v6612, %v6660
        %v6662 = vpop.f32.mrf.mxu0
        %v6663 = vadd.f32 %v6614, %v6662
        %6664 = vmatmul.bf16.gmra.mxu0 %v6102
        %v6665 = vpop.f32.mrf.mxu0
        %v6666 = vadd.f32 %v6617, %v6665
        %v6667 = vpop.f32.mrf.mxu0
        %v6668 = vadd.f32 %v6619, %v6667
        %6669 = vmatmul.bf16.gmra.mxu0 %v6110
        %v6670 = vpop.f32.mrf.mxu0
        %v6671 = vadd.f32 %v6622, %v6670
        %v6672 = vpop.f32.mrf.mxu0
        %v6673 = vadd.f32 %v6624, %v6672
        %6674 = vmatmul.bf16.gmra.mxu0 %v6118
        %v6675 = vpop.f32.mrf.mxu0
        %v6676 = vadd.f32 %v6627, %v6675
        %v6677 = vpop.f32.mrf.mxu0
        %v6678 = vadd.f32 %v6629, %v6677
        %6679 = vmatmul.bf16.gmra.mxu0 %v6126
        %v6680 = vpop.f32.mrf.mxu0
        %v6681 = vadd.f32 %v6632, %v6680
        %v6682 = vpop.f32.mrf.mxu0
        %v6683 = vadd.f32 %v6634, %v6682
        %6684 = vmatmul.bf16.gmra.mxu0 %v6134
        %v6685 = vpop.f32.mrf.mxu0
        %v6686 = vadd.f32 %v6637, %v6685
        %v6687 = vpop.f32.mrf.mxu0
        %v6688 = vadd.f32 %v6639, %v6687
        %6689 = vmatmul.bf16.gmra.mxu0 %v6142
        %v6690 = vpop.f32.mrf.mxu0
        %v6691 = vadd.f32 %v6642, %v6690
        %v6692 = vpop.f32.mrf.mxu0
        %v6693 = vadd.f32 %v6644, %v6692
        %6694 = vdwg.mxu0
        %6695 = vmatpush.bf16.msra.mxu0 %v6492
        %6696 = vmatpush.bf16.msra.mxu0 %v6491
        %6697 = vmatpush.bf16.msra.mxu0 %v6490
        %6698 = vmatpush.bf16.msra.mxu0 %v6489
        %6699 = vmatpush.bf16.msra.mxu0 %v6488
        %6700 = vmatpush.bf16.msra.mxu0 %v6487
        %6701 = vmatpush.bf16.msra.mxu0 %v6486
        %6702 = vmatpush.bf16.msra.mxu0 %v6485
        %6703 = vmatmul.bf16.gmra.mxu0 %v6087
        %v6704 = vpop.f32.mrf.mxu0
        %v6705 = vadd.f32 %v6656, %v6704
        %v6706 = vpop.f32.mrf.mxu0
        %v6707 = vadd.f32 %v6658, %v6706
        %6708 = vmatmul.bf16.gmra.mxu0 %v6095
        %v6709 = vpop.f32.mrf.mxu0
        %v6710 = vadd.f32 %v6661, %v6709
        %v6711 = vpop.f32.mrf.mxu0
        %v6712 = vadd.f32 %v6663, %v6711
        %6713 = vmatmul.bf16.gmra.mxu0 %v6103
        %v6714 = vpop.f32.mrf.mxu0
        %v6715 = vadd.f32 %v6666, %v6714
        %v6716 = vpop.f32.mrf.mxu0
        %v6717 = vadd.f32 %v6668, %v6716
        %6718 = vmatmul.bf16.gmra.mxu0 %v6111
        %v6719 = vpop.f32.mrf.mxu0
        %v6720 = vadd.f32 %v6671, %v6719
        %v6721 = vpop.f32.mrf.mxu0
        %v6722 = vadd.f32 %v6673, %v6721
        %6723 = vmatmul.bf16.gmra.mxu0 %v6119
        %v6724 = vpop.f32.mrf.mxu0
        %v6725 = vadd.f32 %v6676, %v6724
        %v6726 = vpop.f32.mrf.mxu0
        %v6727 = vadd.f32 %v6678, %v6726
        %6728 = vmatmul.bf16.gmra.mxu0 %v6127
        %v6729 = vpop.f32.mrf.mxu0
        %v6730 = vadd.f32 %v6681, %v6729
        %v6731 = vpop.f32.mrf.mxu0
        %v6732 = vadd.f32 %v6683, %v6731
        %6733 = vmatmul.bf16.gmra.mxu0 %v6135
        %v6734 = vpop.f32.mrf.mxu0
        %v6735 = vadd.f32 %v6686, %v6734
        %v6736 = vpop.f32.mrf.mxu0
        %v6737 = vadd.f32 %v6688, %v6736
        %6738 = vmatmul.bf16.gmra.mxu0 %v6143
        %v6739 = vpop.f32.mrf.mxu0
        %v6740 = vadd.f32 %v6691, %v6739
        %v6741 = vpop.f32.mrf.mxu0
        %v6742 = vadd.f32 %v6693, %v6741
        %6743 = vdwg.mxu0
        %6744 = vmatpush.bf16.msra.mxu0 %v6500
        %6745 = vmatpush.bf16.msra.mxu0 %v6499
        %6746 = vmatpush.bf16.msra.mxu0 %v6498
        %6747 = vmatpush.bf16.msra.mxu0 %v6497
        %6748 = vmatpush.bf16.msra.mxu0 %v6496
        %6749 = vmatpush.bf16.msra.mxu0 %v6495
        %6750 = vmatpush.bf16.msra.mxu0 %v6494
        %6751 = vmatpush.bf16.msra.mxu0 %v6493
        %6752 = vmatmul.bf16.gmra.mxu0 %v6088
        %v6753 = vpop.f32.mrf.mxu0
        %v6754 = vadd.f32 %v6705, %v6753
        %v6755 = vpop.f32.mrf.mxu0
        %v6756 = vadd.f32 %v6707, %v6755
        %6757 = vmatmul.bf16.gmra.mxu0 %v6096
        %v6758 = vpop.f32.mrf.mxu0
        %v6759 = vadd.f32 %v6710, %v6758
        %v6760 = vpop.f32.mrf.mxu0
        %v6761 = vadd.f32 %v6712, %v6760
        %6762 = vmatmul.bf16.gmra.mxu0 %v6104
        %v6763 = vpop.f32.mrf.mxu0
        %v6764 = vadd.f32 %v6715, %v6763
        %v6765 = vpop.f32.mrf.mxu0
        %v6766 = vadd.f32 %v6717, %v6765
        %6767 = vmatmul.bf16.gmra.mxu0 %v6112
        %v6768 = vpop.f32.mrf.mxu0
        %v6769 = vadd.f32 %v6720, %v6768
        %v6770 = vpop.f32.mrf.mxu0
        %v6771 = vadd.f32 %v6722, %v6770
        %6772 = vmatmul.bf16.gmra.mxu0 %v6120
        %v6773 = vpop.f32.mrf.mxu0
        %v6774 = vadd.f32 %v6725, %v6773
        %v6775 = vpop.f32.mrf.mxu0
        %v6776 = vadd.f32 %v6727, %v6775
        %6777 = vmatmul.bf16.gmra.mxu0 %v6128
        %v6778 = vpop.f32.mrf.mxu0
        %v6779 = vadd.f32 %v6730, %v6778
        %v6780 = vpop.f32.mrf.mxu0
        %v6781 = vadd.f32 %v6732, %v6780
        %6782 = vmatmul.bf16.gmra.mxu0 %v6136
        %v6783 = vpop.f32.mrf.mxu0
        %v6784 = vadd.f32 %v6735, %v6783
        %v6785 = vpop.f32.mrf.mxu0
        %v6786 = vadd.f32 %v6737, %v6785
        %6787 = vmatmul.bf16.gmra.mxu0 %v6144
        %v6788 = vpop.f32.mrf.mxu0
        %v6789 = vadd.f32 %v6740, %v6788
        %v6790 = vpop.f32.mrf.mxu0
        %v6791 = vadd.f32 %v6742, %v6790
        %6792 = vdwg.mxu0
        %6793 = vmatpush.bf16.msra.mxu0 %v6508
        %6794 = vmatpush.bf16.msra.mxu0 %v6507
        %6795 = vmatpush.bf16.msra.mxu0 %v6506
        %6796 = vmatpush.bf16.msra.mxu0 %v6505
        %6797 = vmatpush.bf16.msra.mxu0 %v6504
        %6798 = vmatpush.bf16.msra.mxu0 %v6503
        %6799 = vmatpush.bf16.msra.mxu0 %v6502
        %6800 = vmatpush.bf16.msra.mxu0 %v6501
        %6801 = vmatmul.bf16.gmra.mxu0 %v6089
        %v6802 = vpop.f32.mrf.mxu0
        %v6803 = vadd.f32 %v6754, %v6802
        %v6804 = vpop.f32.mrf.mxu0
        %v6805 = vadd.f32 %v6756, %v6804
        %6806 = vmatmul.bf16.gmra.mxu0 %v6097
        %v6807 = vpop.f32.mrf.mxu0
        %v6808 = vadd.f32 %v6759, %v6807
        %v6809 = vpop.f32.mrf.mxu0
        %v6810 = vadd.f32 %v6761, %v6809
        %6811 = vmatmul.bf16.gmra.mxu0 %v6105
        %v6812 = vpop.f32.mrf.mxu0
        %v6813 = vadd.f32 %v6764, %v6812
        %v6814 = vpop.f32.mrf.mxu0
        %v6815 = vadd.f32 %v6766, %v6814
        %6816 = vmatmul.bf16.gmra.mxu0 %v6113
        %v6817 = vpop.f32.mrf.mxu0
        %v6818 = vadd.f32 %v6769, %v6817
        %v6819 = vpop.f32.mrf.mxu0
        %v6820 = vadd.f32 %v6771, %v6819
        %6821 = vmatmul.bf16.gmra.mxu0 %v6121
        %v6822 = vpop.f32.mrf.mxu0
        %v6823 = vadd.f32 %v6774, %v6822
        %v6824 = vpop.f32.mrf.mxu0
        %v6825 = vadd.f32 %v6776, %v6824
        %6826 = vmatmul.bf16.gmra.mxu0 %v6129
        %v6827 = vpop.f32.mrf.mxu0
        %v6828 = vadd.f32 %v6779, %v6827
        %v6829 = vpop.f32.mrf.mxu0
        %v6830 = vadd.f32 %v6781, %v6829
        %6831 = vmatmul.bf16.gmra.mxu0 %v6137
        %v6832 = vpop.f32.mrf.mxu0
        %v6833 = vadd.f32 %v6784, %v6832
        %v6834 = vpop.f32.mrf.mxu0
        %v6835 = vadd.f32 %v6786, %v6834
        %6836 = vmatmul.bf16.gmra.mxu0 %v6145
        %v6837 = vpop.f32.mrf.mxu0
        %v6838 = vadd.f32 %v6789, %v6837
        %v6839 = vpop.f32.mrf.mxu0
        %v6840 = vadd.f32 %v6791, %v6839
        %6841 = vdwg.mxu0
        %6842 = vmatpush.bf16.msra.mxu0 %v6516
        %6843 = vmatpush.bf16.msra.mxu0 %v6515
        %6844 = vmatpush.bf16.msra.mxu0 %v6514
        %6845 = vmatpush.bf16.msra.mxu0 %v6513
        %6846 = vmatpush.bf16.msra.mxu0 %v6512
        %6847 = vmatpush.bf16.msra.mxu0 %v6511
        %6848 = vmatpush.bf16.msra.mxu0 %v6510
        %6849 = vmatpush.bf16.msra.mxu0 %v6509
        %6850 = vmatmul.bf16.gmra.mxu0 %v6090
        %v6851 = vpop.f32.mrf.mxu0
        %v6852 = vadd.f32 %v6803, %v6851
        %v6853 = vpop.f32.mrf.mxu0
        %v6854 = vadd.f32 %v6805, %v6853
        %6855 = vmatmul.bf16.gmra.mxu0 %v6098
        %v6856 = vpop.f32.mrf.mxu0
        %v6857 = vadd.f32 %v6808, %v6856
        %v6858 = vpop.f32.mrf.mxu0
        %v6859 = vadd.f32 %v6810, %v6858
        %6860 = vmatmul.bf16.gmra.mxu0 %v6106
        %v6861 = vpop.f32.mrf.mxu0
        %v6862 = vadd.f32 %v6813, %v6861
        %v6863 = vpop.f32.mrf.mxu0
        %v6864 = vadd.f32 %v6815, %v6863
        %6865 = vmatmul.bf16.gmra.mxu0 %v6114
        %v6866 = vpop.f32.mrf.mxu0
        %v6867 = vadd.f32 %v6818, %v6866
        %v6868 = vpop.f32.mrf.mxu0
        %v6869 = vadd.f32 %v6820, %v6868
        %6870 = vmatmul.bf16.gmra.mxu0 %v6122
        %v6871 = vpop.f32.mrf.mxu0
        %v6872 = vadd.f32 %v6823, %v6871
        %v6873 = vpop.f32.mrf.mxu0
        %v6874 = vadd.f32 %v6825, %v6873
        %6875 = vmatmul.bf16.gmra.mxu0 %v6130
        %v6876 = vpop.f32.mrf.mxu0
        %v6877 = vadd.f32 %v6828, %v6876
        %v6878 = vpop.f32.mrf.mxu0
        %v6879 = vadd.f32 %v6830, %v6878
        %6880 = vmatmul.bf16.gmra.mxu0 %v6138
        %v6881 = vpop.f32.mrf.mxu0
        %v6882 = vadd.f32 %v6833, %v6881
        %v6883 = vpop.f32.mrf.mxu0
        %v6884 = vadd.f32 %v6835, %v6883
        %6885 = vmatmul.bf16.gmra.mxu0 %v6146
        %v6886 = vpop.f32.mrf.mxu0
        %v6887 = vadd.f32 %v6838, %v6886
        %v6888 = vpop.f32.mrf.mxu0
        %v6889 = vadd.f32 %v6840, %v6888
        %6890 = vdwg.mxu0
        %6891 = vmatpush.bf16.msra.mxu0 %v6524
        %6892 = vmatpush.bf16.msra.mxu0 %v6523
        %6893 = vmatpush.bf16.msra.mxu0 %v6522
        %6894 = vmatpush.bf16.msra.mxu0 %v6521
        %6895 = vmatpush.bf16.msra.mxu0 %v6520
        %6896 = vmatpush.bf16.msra.mxu0 %v6519
        %6897 = vmatpush.bf16.msra.mxu0 %v6518
        %6898 = vmatpush.bf16.msra.mxu0 %v6517
        %6899 = vmatmul.bf16.gmra.mxu0 %v6091
        %v6900 = vpop.f32.mrf.mxu0
        %v6901 = vadd.f32 %v6852, %v6900
        %v6902 = vpop.f32.mrf.mxu0
        %v6903 = vadd.f32 %v6854, %v6902
        %6904 = vmatmul.bf16.gmra.mxu0 %v6099
        %v6905 = vpop.f32.mrf.mxu0
        %v6906 = vadd.f32 %v6857, %v6905
        %v6907 = vpop.f32.mrf.mxu0
        %v6908 = vadd.f32 %v6859, %v6907
        %6909 = vmatmul.bf16.gmra.mxu0 %v6107
        %v6910 = vpop.f32.mrf.mxu0
        %v6911 = vadd.f32 %v6862, %v6910
        %v6912 = vpop.f32.mrf.mxu0
        %v6913 = vadd.f32 %v6864, %v6912
        %6914 = vmatmul.bf16.gmra.mxu0 %v6115
        %v6915 = vpop.f32.mrf.mxu0
        %v6916 = vadd.f32 %v6867, %v6915
        %v6917 = vpop.f32.mrf.mxu0
        %v6918 = vadd.f32 %v6869, %v6917
        %6919 = vmatmul.bf16.gmra.mxu0 %v6123
        %v6920 = vpop.f32.mrf.mxu0
        %v6921 = vadd.f32 %v6872, %v6920
        %v6922 = vpop.f32.mrf.mxu0
        %v6923 = vadd.f32 %v6874, %v6922
        %6924 = vmatmul.bf16.gmra.mxu0 %v6131
        %v6925 = vpop.f32.mrf.mxu0
        %v6926 = vadd.f32 %v6877, %v6925
        %v6927 = vpop.f32.mrf.mxu0
        %v6928 = vadd.f32 %v6879, %v6927
        %6929 = vmatmul.bf16.gmra.mxu0 %v6139
        %v6930 = vpop.f32.mrf.mxu0
        %v6931 = vadd.f32 %v6882, %v6930
        %v6932 = vpop.f32.mrf.mxu0
        %v6933 = vadd.f32 %v6884, %v6932
        %6934 = vmatmul.bf16.gmra.mxu0 %v6147
        %v6935 = vpop.f32.mrf.mxu0
        %v6936 = vadd.f32 %v6887, %v6935
        %v6937 = vpop.f32.mrf.mxu0
        %v6938 = vadd.f32 %v6889, %v6937
        %6939 = vdwg.mxu0
        %6940 = vmatpush.bf16.msra.mxu0 %v6532
        %6941 = vmatpush.bf16.msra.mxu0 %v6531
        %6942 = vmatpush.bf16.msra.mxu0 %v6530
        %6943 = vmatpush.bf16.msra.mxu0 %v6529
        %6944 = vmatpush.bf16.msra.mxu0 %v6528
        %6945 = vmatpush.bf16.msra.mxu0 %v6527
        %6946 = vmatpush.bf16.msra.mxu0 %v6526
        %6947 = vmatpush.bf16.msra.mxu0 %v6525
        %6948 = vmatmul.bf16.gmra.mxu0 %v6092
        %v6949 = vpop.f32.mrf.mxu0
        %v6950 = vadd.f32 %v6901, %v6949
        %v6951 = vpop.f32.mrf.mxu0
        %v6952 = vadd.f32 %v6903, %v6951
        %6953 = vmatmul.bf16.gmra.mxu0 %v6100
        %v6954 = vpop.f32.mrf.mxu0
        %v6955 = vadd.f32 %v6906, %v6954
        %v6956 = vpop.f32.mrf.mxu0
        %v6957 = vadd.f32 %v6908, %v6956
        %6958 = vmatmul.bf16.gmra.mxu0 %v6108
        %v6959 = vpop.f32.mrf.mxu0
        %v6960 = vadd.f32 %v6911, %v6959
        %v6961 = vpop.f32.mrf.mxu0
        %v6962 = vadd.f32 %v6913, %v6961
        %6963 = vmatmul.bf16.gmra.mxu0 %v6116
        %v6964 = vpop.f32.mrf.mxu0
        %v6965 = vadd.f32 %v6916, %v6964
        %v6966 = vpop.f32.mrf.mxu0
        %v6967 = vadd.f32 %v6918, %v6966
        %6968 = vmatmul.bf16.gmra.mxu0 %v6124
        %v6969 = vpop.f32.mrf.mxu0
        %v6970 = vadd.f32 %v6921, %v6969
        %v6971 = vpop.f32.mrf.mxu0
        %v6972 = vadd.f32 %v6923, %v6971
        %6973 = vmatmul.bf16.gmra.mxu0 %v6132
        %v6974 = vpop.f32.mrf.mxu0
        %v6975 = vadd.f32 %v6926, %v6974
        %v6976 = vpop.f32.mrf.mxu0
        %v6977 = vadd.f32 %v6928, %v6976
        %6978 = vmatmul.bf16.gmra.mxu0 %v6140
        %v6979 = vpop.f32.mrf.mxu0
        %v6980 = vadd.f32 %v6931, %v6979
        %v6981 = vpop.f32.mrf.mxu0
        %v6982 = vadd.f32 %v6933, %v6981
        %6983 = vmatmul.bf16.gmra.mxu0 %v6148
        %v6984 = vpop.f32.mrf.mxu0
        %v6985 = vadd.f32 %v6936, %v6984
        %v6986 = vpop.f32.mrf.mxu0
        %v6987 = vadd.f32 %v6938, %v6986
        %6988 = vdwg.mxu0
        %v6989 = vld [vmem:[%s542] sm:$0xff]
        %v6990 = vld [vmem:[%s542 + $0x8] sm:$0xff]
        %v6991 = vld [vmem:[%s542 + $0x10] sm:$0xff]
        %v6992 = vld [vmem:[%s542 + $0x18] sm:$0xff]
        %v6993 = vld [vmem:[%s542 + $0x20] sm:$0xff]
        %v6994 = vld [vmem:[%s542 + $0x28] sm:$0xff]
        %v6995 = vld [vmem:[%s542 + $0x30] sm:$0xff]
        %v6996 = vld [vmem:[%s542 + $0x38] sm:$0xff]
        %v6997 = vld [vmem:[%s542 + $0x40] sm:$0xff]
        %v6998 = vld [vmem:[%s542 + $0x48] sm:$0xff]
        %v6999 = vld [vmem:[%s542 + $0x50] sm:$0xff]
        %v7000 = vld [vmem:[%s542 + $0x58] sm:$0xff]
        %v7001 = vld [vmem:[%s542 + $0x60] sm:$0xff]
        %v7002 = vld [vmem:[%s542 + $0x68] sm:$0xff]
        %v7003 = vld [vmem:[%s542 + $0x70] sm:$0xff]
        %v7004 = vld [vmem:[%s542 + $0x78] sm:$0xff]
        %v7005 = vadd.f32 %v6989, %v6950
        %v7006 = vadd.f32 %v6990, %v6952
        %v7007 = vadd.f32 %v6991, %v6955
        %v7008 = vadd.f32 %v6992, %v6957
        %v7009 = vadd.f32 %v6993, %v6960
        %v7010 = vadd.f32 %v6994, %v6962
        %v7011 = vadd.f32 %v6995, %v6965
        %v7012 = vadd.f32 %v6996, %v6967
        %v7013 = vadd.f32 %v6997, %v6970
        %v7014 = vadd.f32 %v6998, %v6972
        %v7015 = vadd.f32 %v6999, %v6975
        %v7016 = vadd.f32 %v7000, %v6977
        %v7017 = vadd.f32 %v7001, %v6980
        %v7018 = vadd.f32 %v7002, %v6982
        %v7019 = vadd.f32 %v7003, %v6985
        %v7020 = vadd.f32 %v7004, %v6987
        %7021 = vst [vmem:[%s542] sm:$0xff] %v7005
        %7022 = vst [vmem:[%s542 + $0x8] sm:$0xff] %v7006
        %7023 = vst [vmem:[%s542 + $0x10] sm:$0xff] %v7007
        %7024 = vst [vmem:[%s542 + $0x18] sm:$0xff] %v7008
        %7025 = vst [vmem:[%s542 + $0x20] sm:$0xff] %v7009
        %7026 = vst [vmem:[%s542 + $0x28] sm:$0xff] %v7010
        %7027 = vst [vmem:[%s542 + $0x30] sm:$0xff] %v7011
        %7028 = vst [vmem:[%s542 + $0x38] sm:$0xff] %v7012
        %7029 = vst [vmem:[%s542 + $0x40] sm:$0xff] %v7013
        %7030 = vst [vmem:[%s542 + $0x48] sm:$0xff] %v7014
        %7031 = vst [vmem:[%s542 + $0x50] sm:$0xff] %v7015
        %7032 = vst [vmem:[%s542 + $0x58] sm:$0xff] %v7016
        %7033 = vst [vmem:[%s542 + $0x60] sm:$0xff] %v7017
        %7034 = vst [vmem:[%s542 + $0x68] sm:$0xff] %v7018
        %7035 = vst [vmem:[%s542 + $0x70] sm:$0xff] %v7019
        %7036 = vst [vmem:[%s542 + $0x78] sm:$0xff] %v7020
        %s7037 = sand.u32 %s274, 1
        %s7038 = scalar_lea.sflag [#allocation6], %s7037
        %s7039 = sand.u32 %s274, 1
        %s7040 = smul.addr %s7039, 128
        %s7041 = scalar_lea.vmem [#allocation14], %s7040
        // Predicated region
        $region89: #{tpu_custom_call.1} parent=59 // pred_check
          %p7042 = pneg %p284
        $region90: #{tpu_custom_call.1} parent=59 // pred_check_branch
          %7044 = sbr.rel (%p7042) target = $region92
        $region91: #{tpu_custom_call.1} parent=59 // pred_region
          %7046 = vsyncadd %s7038, 0
          %s7047 = smul.addr %s33, 16
          %s7048 = smul.addr %s7047, 8
          %s7049 = scalar_lea.hbm %s10, %s7048
          %s7050 = sshll.u32 %s7041, 4
          %s7051 = int_to_ptr.vmem [resolvable:$true] %s7050
          %s7052 = sshll.u32 %s7049, 4
          %s7053 = int_to_ptr.hbm [resolvable:$true] %s7052
          %7058 = dma.vmem_to_hbm [thread:$0]  %s7051, 2048, %s7053, %s7038, 128, 128, 8
        $region92: #{tpu_custom_call.1} parent=59 // pred_fallthru
          _
      $region60: #{tpu_custom_call.1} parent=5 // pred_fallthru
        _
      %p7059 = scmp.le.s32.totalorder 2, %s24
      // Predicated region
      $region93: #{tpu_custom_call.1} parent=5 // pred_check
        %p7060 = pneg %p7059
      $region94: #{tpu_custom_call.1} parent=5 // pred_check_branch
        %7062 = sbr.rel (%p7060) target = $region96
      $region95: #{tpu_custom_call.1} parent=5 // pred_region
        %s7063 = ssub.s32 %s24, 2
        // Predicated region
        $region97: #{tpu_custom_call.1} parent=95 // pred_check
          %p7064 = pneg %p290
        $region98: #{tpu_custom_call.1} parent=95 // pred_check_branch
          %7066 = sbr.rel (%p7064) target = $region100
        $region99: #{tpu_custom_call.1} parent=95 // pred_region
          %s7067 = sand.u32 %s275, 1
          %s7068 = scalar_lea.sflag [#allocation6], %s7067
          %s7069 = sand.u32 %s275, 1
          %s7070 = smul.addr %s7069, 128
          %s7071 = scalar_lea.vmem [#allocation14], %s7070
          %7073 = dma.done %s7068, 2048
        $region100: #{tpu_custom_call.1} parent=95 // pred_fallthru
          _
      $region96: #{tpu_custom_call.1} parent=5 // pred_fallthru
        _
    $region6: #{tpu_custom_call.1} parent=1 // loop_footer
      %s28 = sadd.s32 1, %s24
    $region7: #{tpu_custom_call.1} parent=1 // loop_footer_branch
      %23 = sbr.rel target = $region3
    $region8: #{tpu_custom_call.1} parent=1 // loop_exit
      _
    %7074 = vsyncpa [#allocation5], 1
    %s7075 = scalar_lea.sflag [#allocation5], 1
    %7076 = vsyncpa %s7075, 1
    %7077 = vsyncpa [#allocation8], 1
    %7078 = vsyncpa [#allocation11], 1
    %7079 = vsyncpa [#allocation6], 1
    %s7080 = scalar_lea.sflag [#allocation6], 1
    %7081 = vsyncpa %s7080, 1

</llo_original>
